<compile_context>
chip_gen: v5e
topology: v5e:2x2
jax: 0.10.0
libtpu: 0.0.40
codegen_flags: <defaults>
</compile_context>

<pallas_src>
import jax
import jax.numpy as jnp
import numpy as np
from jax.experimental import pallas as pl
from jax.experimental.pallas import tpu as pltpu

LINEAR_N_SPLIT = 2   # output halves -> leading "parallel" grid axis (both TCs on v7x)
LINEAR_K_TILES = 2   # K tiles per half (review: sweep 2-3); tk = 18432 / 2 = 9216


# ----------------------------- Pallas kernels ------------------------------ #
def _gemm_bias_relu_kernel(x_ref, w_ref, b_ref, o_ref):
    """Single-shot  relu(X @ W + b)  (grid-less call: one block, write o_ref directly)."""
    acc = jnp.dot(x_ref[...], w_ref[...], preferred_element_type=jnp.float32)
    o_ref[...] = jnp.maximum(acc + b_ref[...], 0.0).astype(o_ref.dtype)


def _linear_bias_relu_kernel(x_ref, w_ref, b_ref, o_ref, acc_ref):
    """K-tiled  relu(X @ W_half + b_half)  for one 64-wide output half.

    grid = (halves["parallel"], k_tiles["arbitrary"]).  x_ref holds ALL K tiles
    (resident, constant index map); the current tile is selected with a leading-dim
    dynamic index.  f32 VMEM accumulator, f32 bias+ReLU epilogue.
    """
    k = pl.program_id(1)

    @pl.when(k == 0)
    def _():
        acc_ref[...] = jnp.zeros_like(acc_ref)

    acc_ref[...] += jnp.dot(x_ref[k], w_ref[...],
                            preferred_element_type=jnp.float32)

    @pl.when(k == pl.num_programs(1) - 1)
    def _():
        o_ref[...] = jnp.maximum(acc_ref[...] + b_ref[...], 0.0).astype(o_ref.dtype)


# ------------------------------ wrappers ----------------------------------- #
def gemm_bias_relu(x, w, b2d, *, out_dtype=jnp.float32):
    """relu(x @ w + b): grid-less pallas_call (whole problem is one VMEM block)."""
    M, K = x.shape
    Kw, Nout = w.shape
    assert K == Kw
    return pl.pallas_call(
        _gemm_bias_relu_kernel,
        out_shape=jax.ShapeDtypeStruct((M, Nout), out_dtype),
        in_specs=[
            pl.BlockSpec((M, K), lambda: (0, 0)),
            pl.BlockSpec((K, Nout), lambda: (0, 0)),
            pl.BlockSpec((1, Nout), lambda: (0, 0)),
        ],
        out_specs=pl.BlockSpec((M, Nout), lambda: (0, 0)),
    )(x, w, b2d)


def linear_bias_relu(x_flat, w_split, b_split, *, k_tiles=LINEAR_K_TILES):
    """relu(x @ W + b) with W pre-split into output halves.

    x_flat:  (N, K)            bf16
    w_split: (halves, K, Nh)   bf16   (contiguous HBM slab per half)
    b_split: (halves, 1, Nh)   f32
    returns: (N, halves*Nh)    f32
    """
    Nb, K = x_flat.shape
    halves, Kw, Nh = w_split.shape
    assert K == Kw and K % (k_tiles * 128) == 0
    tk = K // k_tiles

    # Resident LHS: one (k_tiles, Nb, tk) slab, fetched once (constant index map) and
    # indexed in-kernel.  The layout prep is a single ~72 KB XLA transpose per forward,
    # negligible next to the 4.7 MB weight stream.
    x_tiles = x_flat.reshape(Nb, k_tiles, tk).transpose(1, 0, 2)

    out3 = pl.pallas_call(
        _linear_bias_relu_kernel,
        out_shape=jax.ShapeDtypeStruct((halves, Nb, Nh), jnp.float32),
        grid_spec=pltpu.PrefetchScalarGridSpec(
            num_scalar_prefetch=0,
            grid=(halves, k_tiles),
            in_specs=[
                pl.BlockSpec((k_tiles, Nb, tk), lambda j, k: (0, 0, 0)),  # resident LHS
                pl.BlockSpec((None, tk, Nh), lambda j, k: (j, k, 0)),     # weight stream
                pl.BlockSpec((None, 1, Nh), lambda j, k: (j, 0, 0)),      # bias half
            ],
            out_specs=pl.BlockSpec((None, Nb, Nh), lambda j, k: (j, 0, 0)),
            scratch_shapes=[pltpu.VMEM((Nb, Nh), jnp.float32)],
        ),
        compiler_params=pltpu.CompilerParams(
            dimension_semantics=("parallel", "arbitrary")),
    )(x_tiles, w_split, b_split)

    # (halves, N, Nh) -> (N, halves*Nh); tiny (1 KB) XLA transpose.
    return out3.transpose(1, 0, 2).reshape(Nb, halves * Nh)


# ------------------------------ JAX glue ----------------------------------- #
def _im2col(x_nhwc, k):
    """x:(N,H,W,C) -> patches:(N*Ho*Wo, k*k*C), columns ordered (kh, kw, c)."""
    N, H, W, C = x_nhwc.shape
    Ho, Wo = H - k + 1, W - k + 1
    cols = []
    for di in range(k):
        for dj in range(k):
            cols.append(x_nhwc[:, di:di + Ho, dj:dj + Wo, :])
    patches = jnp.concatenate(cols, axis=-1)          # (N, Ho, Wo, k*k*C)
    return patches.reshape(N * Ho * Wo, k * k * C), Ho, Wo


def prepare_params(w1, b1, w2, b2, wl, bl, conv_out_hw, *, n_split=LINEAR_N_SPLIT):
    """One-time (init) weight repack from PyTorch layouts to kernel layouts.

    - conv weights OIHW -> (kh*kw*Cin, Cout) bf16 (matches _im2col column order)
    - linear weight (out, n_flatten) -> (K, out) bf16 with rows permuted from torch's
      (c, h, w) flatten order to NHWC (h, w, c) order, then split into `n_split`
      contiguous output halves -> (n_split, K, out//n_split): each half is a contiguous
      HBM slab so the per-core weight stream is unstrided.
    """
    co1, co2 = w1.shape[0], w2.shape[0]
    n_out = wl.shape[0]
    ho, wo = conv_out_hw
    assert n_out % n_split == 0
    nh = n_out // n_split

    w1f = jnp.transpose(w1, (2, 3, 1, 0)).reshape(-1, co1).astype(jnp.bfloat16)
    w2f = jnp.transpose(w2, (2, 3, 1, 0)).reshape(-1, co2).astype(jnp.bfloat16)

    wlk = (wl.reshape(n_out, co2, ho, wo)             # (out, c, h, w)
             .transpose(2, 3, 1, 0)                   # (h, w, c, out)
             .reshape(ho * wo * co2, n_out))          # (K, out), rows in NHWC order
    wlp = (wlk.reshape(ho * wo * co2, n_split, nh)
              .transpose(1, 0, 2)                     # (n_split, K, nh)
              .astype(jnp.bfloat16))
    blp = bl.reshape(n_split, 1, nh).astype(jnp.float32)

    return dict(
        w1f=w1f, b1=b1.reshape(1, -1).astype(jnp.float32),
        w2f=w2f, b2=b2.reshape(1, -1).astype(jnp.float32),
        wlp=wlp, blp=blp,
    )


def custom_cnn_forward(x_nchw, params):
    """Forward pass equivalent to CustomCNN.forward (PyTorch NCHW f32 input)."""
    N = x_nchw.shape[0]
    x = jnp.transpose(x_nchw, (0, 2, 3, 1)).astype(jnp.bfloat16)   # NCHW -> NHWC, bf16

    # conv1 (3x3, stride 1, VALID) + ReLU
    p1, Ho1, Wo1 = _im2col(x, 3)
    y1 = gemm_bias_relu(p1, params["w1f"], params["b1"], out_dtype=jnp.bfloat16)
    y1 = y1.reshape(N, Ho1, Wo1, -1)

    # conv2 (3x3, stride 1, VALID) + ReLU
    p2, Ho2, Wo2 = _im2col(y1, 3)
    y2 = gemm_bias_relu(p2, params["w2f"], params["b2"], out_dtype=jnp.bfloat16)

    # NHWC flatten is a free contiguous reshape; torch's NCHW flatten ordering is folded
    # into the row permutation of params["wlp"], so no activation transposes here.
    flat = y2.reshape(N, Ho2 * Wo2 * y2.shape[-1])

    # Linear(n_flatten, 128) + ReLU: weight-stream-bound; K-tiled + output-half-split.
    return linear_bias_relu(flat, params["wlp"], params["blp"],
                            k_tiles=LINEAR_K_TILES)


# --------------------------- pure-JAX reference ----------------------------- #
def _reference(x, w1, b1, w2, b2, wl, bl):
    p = jax.lax.Precision.HIGHEST
    dn = ('NCHW', 'OIHW', 'NCHW')
    y = jax.lax.conv_general_dilated(x, w1, (1, 1), 'VALID',
                                     dimension_numbers=dn, precision=p)
    y = jax.nn.relu(y + b1[None, :, None, None])
    y = jax.lax.conv_general_dilated(y, w2, (1, 1), 'VALID',
                                     dimension_numbers=dn, precision=p)
    y = jax.nn.relu(y + b2[None, :, None, None])
    y = y.reshape(y.shape[0], -1)
    return jax.nn.relu(jnp.dot(y, wl.T, precision=p) + bl)


# --------------------------------- main -------------------------------------- #
if __name__ == "__main__":
    key = jax.random.PRNGKey(0)
    ks = jax.random.split(key, 8)

    # observation_space.shape = (4, 16, 16)  ->  batch = 2
    N, C, H, W = 2, 4, 16, 16
    x = jax.random.normal(ks[0], (N, C, H, W), jnp.float32)

    # Deterministic synthetic parameters (PyTorch layouts: conv OIHW, linear (out, in))
    w1 = jax.random.normal(ks[1], (64, C, 3, 3), jnp.float32) / np.sqrt(C * 9)
    b1 = jax.random.normal(ks[2], (64,), jnp.float32) * 0.01
    w2 = jax.random.normal(ks[3], (128, 64, 3, 3), jnp.float32) / np.sqrt(64 * 9)
    b2 = jax.random.normal(ks[4], (128,), jnp.float32) * 0.01
    n_flatten = 128 * (H - 4) * (W - 4)               # 128 * 12 * 12 = 18432
    wl = jax.random.normal(ks[5], (128, n_flatten), jnp.float32) / np.sqrt(n_flatten)
    bl = jax.random.normal(ks[6], (128,), jnp.float32) * 0.01

    # One-time init-side weight repack (equivalent to storing module weights pre-packed).
    params = prepare_params(w1, b1, w2, b2, wl, bl, conv_out_hw=(H - 4, W - 4))

    fwd = jax.jit(custom_cnn_forward)
    out = jax.block_until_ready(fwd(x, params))
    assert out.shape == (N, 128) and out.dtype == jnp.float32

    ref = _reference(x, w1, b1, w2, b2, wl, bl)
    # Tolerance reflects bf16 MXU operands (f32 accumulation) vs. an f32 HIGHEST reference.
    np.testing.assert_allclose(np.asarray(out), np.asarray(ref), rtol=2e-2, atol=2e-2)
    print("KERNEL_OK")
</pallas_src>

<mosaic_0001>
module attributes {stable_mosaic.version = 11 : i64} {
  func.func @_gemm_bias_relu_kernel(%arg0: memref<392x36xbf16, #tpu.memory_space<vmem>>, %arg1: memref<36x64xbf16, #tpu.memory_space<vmem>>, %arg2: memref<1x64xf32, #tpu.memory_space<vmem>>, %arg3: memref<392x64xbf16, #tpu.memory_space<vmem>>) attributes {dimension_semantics = [], scalar_prefetch = 0 : i64, scratch_operands = 0 : i64, tpu.core_type = #tpu.core_type<tc>} {
    %c0 = arith.constant 0 : index
    %c0_0 = arith.constant 0 : index
    %0 = vector.load %arg0[%c0, %c0_0] : memref<392x36xbf16, #tpu.memory_space<vmem>>, vector<392x36xbf16>
    %c0_1 = arith.constant 0 : index
    %c0_2 = arith.constant 0 : index
    %1 = vector.load %arg1[%c0_1, %c0_2] : memref<36x64xbf16, #tpu.memory_space<vmem>>, vector<36x64xbf16>
    %cst = arith.constant dense<0.000000e+00> : vector<392x64xf32>
    %2 = tpu.matmul %0, %1, %cst {dimension_numbers = #tpu.dot_dimension_numbers<[1], [0], [0], [1], [0, 0, 1, 1], [], []>} : vector<392x36xbf16>, vector<36x64xbf16>, vector<392x64xf32> -> vector<392x64xf32>
    %c0_3 = arith.constant 0 : index
    %c0_4 = arith.constant 0 : index
    %3 = vector.load %arg2[%c0_3, %c0_4] : memref<1x64xf32, #tpu.memory_space<vmem>>, vector<1x64xf32>
    %4 = vector.broadcast %3 : vector<1x64xf32> to vector<392x64xf32>
    %5 = arith.addf %2, %4 : vector<392x64xf32>
    %cst_5 = arith.constant 0.000000e+00 : f32
    %6 = vector.broadcast %cst_5 : f32 to vector<392x64xf32>
    %7 = arith.maximumf %5, %6 : vector<392x64xf32>
    %8 = arith.truncf %7 : vector<392x64xf32> to vector<392x64xbf16>
    %c0_6 = arith.constant 0 : index
    %c0_7 = arith.constant 0 : index
    %9 = vector.load %arg3[%c0_6, %c0_7] : memref<392x64xbf16, #tpu.memory_space<vmem>>, vector<392x64xbf16>
    tpu.vector_store %arg3[%c0_6, %c0_7], %8 {strides = array<i32>} : memref<392x64xbf16, #tpu.memory_space<vmem>>, vector<392x64xbf16>,
    return
  }
}

module attributes {stable_mosaic.version = 11 : i64} {
  func.func @_gemm_bias_relu_kernel(%arg0: memref<288x576xbf16, #tpu.memory_space<vmem>>, %arg1: memref<576x128xbf16, #tpu.memory_space<vmem>>, %arg2: memref<1x128xf32, #tpu.memory_space<vmem>>, %arg3: memref<288x128xbf16, #tpu.memory_space<vmem>>) attributes {dimension_semantics = [], scalar_prefetch = 0 : i64, scratch_operands = 0 : i64, tpu.core_type = #tpu.core_type<tc>} {
    %c0 = arith.constant 0 : index
    %c0_0 = arith.constant 0 : index
    %0 = vector.load %arg0[%c0, %c0_0] : memref<288x576xbf16, #tpu.memory_space<vmem>>, vector<288x576xbf16>
    %c0_1 = arith.constant 0 : index
    %c0_2 = arith.constant 0 : index
    %1 = vector.load %arg1[%c0_1, %c0_2] : memref<576x128xbf16, #tpu.memory_space<vmem>>, vector<576x128xbf16>
    %cst = arith.constant dense<0.000000e+00> : vector<288x128xf32>
    %2 = tpu.matmul %0, %1, %cst {dimension_numbers = #tpu.dot_dimension_numbers<[1], [0], [0], [1], [0, 0, 1, 1], [], []>} : vector<288x576xbf16>, vector<576x128xbf16>, vector<288x128xf32> -> vector<288x128xf32>
    %c0_3 = arith.constant 0 : index
    %c0_4 = arith.constant 0 : index
    %3 = vector.load %arg2[%c0_3, %c0_4] : memref<1x128xf32, #tpu.memory_space<vmem>>, vector<1x128xf32>
    %4 = vector.broadcast %3 : vector<1x128xf32> to vector<288x128xf32>
    %5 = arith.addf %2, %4 : vector<288x128xf32>
    %cst_5 = arith.constant 0.000000e+00 : f32
    %6 = vector.broadcast %cst_5 : f32 to vector<288x128xf32>
    %7 = arith.maximumf %5, %6 : vector<288x128xf32>
    %8 = arith.truncf %7 : vector<288x128xf32> to vector<288x128xbf16>
    %c0_6 = arith.constant 0 : index
    %c0_7 = arith.constant 0 : index
    %9 = vector.load %arg3[%c0_6, %c0_7] : memref<288x128xbf16, #tpu.memory_space<vmem>>, vector<288x128xbf16>
    tpu.vector_store %arg3[%c0_6, %c0_7], %8 {strides = array<i32>} : memref<288x128xbf16, #tpu.memory_space<vmem>>, vector<288x128xbf16>,
    return
  }
}

module attributes {stable_mosaic.version = 11 : i64} {
  func.func @_linear_bias_relu_kernel(%arg0: i32, %arg1: i32, %arg2: memref<2x2x9216xbf16, #tpu.memory_space<vmem>>, %arg3: memref<1x9216x64xbf16, #tpu.memory_space<vmem>>, %arg4: memref<1x1x64xf32, #tpu.memory_space<vmem>>, %arg5: memref<1x2x64xf32, #tpu.memory_space<vmem>>, %arg6: memref<2x64xf32, #tpu.memory_space<vmem>>) attributes {dimension_semantics = [#tpu.dimension_semantics<parallel>, #tpu.dimension_semantics<arbitrary>], iteration_bounds = array<i64: 2, 2>, scalar_prefetch = 0 : i64, scratch_operands = 1 : i64, tpu.core_type = #tpu.core_type<tc>, window_params = [{pipeline_mode = #tpu.pipeline_mode<synchronous>, transform_indices = @transform_0, window_bounds = array<i64: 2, 2, 9216>}, {transform_indices = @transform_1, window_bounds = array<i64: 1, 9216, 64>}, {transform_indices = @transform_2, window_bounds = array<i64: 1, 1, 64>}, {transform_indices = @transform_3, window_bounds = array<i64: 1, 2, 64>}]} {
    %c0_i32 = arith.constant 0 : i32
    %0 = arith.cmpi eq, %arg1, %c0_i32 : i32
    %1 = arith.extui %0 : i1 to i32
    %c0_i32_0 = arith.constant 0 : i32
    %2 = arith.cmpi ne, %1, %c0_i32_0 : i32
    scf.if %2 {
      %cst_10 = arith.constant 0.000000e+00 : f32
      %15 = vector.broadcast %cst_10 : f32 to vector<2x64xf32>
      %c0_11 = arith.constant 0 : index
      %c0_12 = arith.constant 0 : index
      %16 = vector.load %arg6[%c0_11, %c0_12] : memref<2x64xf32, #tpu.memory_space<vmem>>, vector<2x64xf32>
      tpu.vector_store %arg6[%c0_11, %c0_12], %15 {strides = array<i32>} : memref<2x64xf32, #tpu.memory_space<vmem>>, vector<2x64xf32>,
    } else {
    }
    %c0 = arith.constant 0 : index
    %c0_1 = arith.constant 0 : index
    %3 = vector.load %arg6[%c0, %c0_1] : memref<2x64xf32, #tpu.memory_space<vmem>>, vector<2x64xf32>
    %4 = arith.index_cast %arg1 : i32 to index
    %c0_2 = arith.constant 0 : index
    %c0_3 = arith.constant 0 : index
    %5 = vector.load %arg2[%4, %c0_2, %c0_3] : memref<2x2x9216xbf16, #tpu.memory_space<vmem>>, vector<1x2x9216xbf16>
    %6 = vector.shape_cast %5 : vector<1x2x9216xbf16> to vector<2x9216xbf16>
    %c0_4 = arith.constant 0 : index
    %c0_5 = arith.constant 0 : index
    %c0_6 = arith.constant 0 : index
    %7 = vector.load %arg3[%c0_4, %c0_5, %c0_6] : memref<1x9216x64xbf16, #tpu.memory_space<vmem>>, vector<1x9216x64xbf16>
    %8 = vector.shape_cast %7 : vector<1x9216x64xbf16> to vector<9216x64xbf16>
    %cst = arith.constant dense<0.000000e+00> : vector<2x64xf32>
    %9 = tpu.matmul %6, %8, %cst {dimension_numbers = #tpu.dot_dimension_numbers<[1], [0], [0], [1], [0, 0, 1, 1], [], []>} : vector<2x9216xbf16>, vector<9216x64xbf16>, vector<2x64xf32> -> vector<2x64xf32>
    %10 = arith.addf %3, %9 : vector<2x64xf32>
    %c0_7 = arith.constant 0 : index
    %c0_8 = arith.constant 0 : index
    %11 = vector.load %arg6[%c0_7, %c0_8] : memref<2x64xf32, #tpu.memory_space<vmem>>, vector<2x64xf32>
    tpu.vector_store %arg6[%c0_7, %c0_8], %10 {strides = array<i32>} : memref<2x64xf32, #tpu.memory_space<vmem>>, vector<2x64xf32>,
    %c1_i32 = arith.constant 1 : i32
    %12 = arith.cmpi eq, %arg1, %c1_i32 : i32
    %13 = arith.extui %12 : i1 to i32
    %c0_i32_9 = arith.constant 0 : i32
    %14 = arith.cmpi ne, %13, %c0_i32_9 : i32
    scf.if %14 {
      %c0_10 = arith.constant 0 : index
      %c0_11 = arith.constant 0 : index
      %15 = vector.load %arg6[%c0_10, %c0_11] : memref<2x64xf32, #tpu.memory_space<vmem>>, vector<2x64xf32>
      %c0_12 = arith.constant 0 : index
      %c0_13 = arith.constant 0 : index
      %c0_14 = arith.constant 0 : index
      %16 = vector.load %arg4[%c0_12, %c0_13, %c0_14] : memref<1x1x64xf32, #tpu.memory_space<vmem>>, vector<1x1x64xf32>
      %17 = vector.shape_cast %16 : vector<1x1x64xf32> to vector<1x64xf32>
      %18 = vector.broadcast %17 : vector<1x64xf32> to vector<2x64xf32>
      %19 = arith.addf %15, %18 : vector<2x64xf32>
      %cst_15 = arith.constant 0.000000e+00 : f32
      %20 = vector.broadcast %cst_15 : f32 to vector<2x64xf32>
      %21 = arith.maximumf %19, %20 : vector<2x64xf32>
      %c0_16 = arith.constant 0 : index
      %c0_17 = arith.constant 0 : index
      %c0_18 = arith.constant 0 : index
      %22 = vector.load %arg5[%c0_16, %c0_17, %c0_18] : memref<1x2x64xf32, #tpu.memory_space<vmem>>, vector<1x2x64xf32>
      %23 = vector.shape_cast %22 : vector<1x2x64xf32> to vector<2x64xf32>
      %24 = vector.shape_cast %21 : vector<2x64xf32> to vector<1x2x64xf32>
      tpu.vector_store %arg5[%c0_16, %c0_17, %c0_18], %24 {strides = array<i32>} : memref<1x2x64xf32, #tpu.memory_space<vmem>>, vector<1x2x64xf32>,
    } else {
    }
    return
  }
  func.func @transform_0(%arg0: i32, %arg1: i32) -> (i32, i32, i32) {
    %c0_i32 = arith.constant 0 : i32
    %c0_i32_0 = arith.constant 0 : i32
    %c0_i32_1 = arith.constant 0 : i32
    %c0_i32_2 = arith.constant 0 : i32
    return %c0_i32, %c0_i32_0, %c0_i32_1 : i32, i32, i32
  }
  func.func @transform_1(%arg0: i32, %arg1: i32) -> (i32, i32, i32) {
    %c0_i32 = arith.constant 0 : i32
    %c0_i32_0 = arith.constant 0 : i32
    return %arg0, %arg1, %c0_i32 : i32, i32, i32
  }
  func.func @transform_2(%arg0: i32, %arg1: i32) -> (i32, i32, i32) {
    %c0_i32 = arith.constant 0 : i32
    %c0_i32_0 = arith.constant 0 : i32
    %c0_i32_1 = arith.constant 0 : i32
    return %arg0, %c0_i32, %c0_i32_0 : i32, i32, i32
  }
  func.func @transform_3(%arg0: i32, %arg1: i32) -> (i32, i32, i32) {
    %c0_i32 = arith.constant 0 : i32
    %c0_i32_0 = arith.constant 0 : i32
    %c0_i32_1 = arith.constant 0 : i32
    return %arg0, %c0_i32, %c0_i32_0 : i32, i32, i32
  }
}

</mosaic_0001>

<llo_original>
// kernel: custom_cnn_forward.3
$region0: #{custom_cnn_forward.3}
  #allocation0 [shape = 'u32[]', space=smem, size = 0x4, offset = 0x4, fixed_abs, tag = 'smem constant byte address 0x4 - core index']
  #allocation1 [shape = 'u32[72,128]{1,0:T(1,128)}', space=vmem, size = 0x9000, scoped, tag = 'internal scratch']
  %s0 = inlined_call_operand.vmem [shape: bf16[392,36], index: 0, kind: input, shape index: {}]
  %s1 = inlined_call_operand.hbm [shape: bf16[36,64], index: 1, kind: input, shape index: {}]
  %s2 = inlined_call_operand.hbm [shape: f32[1,64], index: 2, kind: input, shape index: {}]
  %s3 = inlined_call_operand.vmem [shape: bf16[392,64], index: 3, kind: output, shape index: {}]
  %s4 = sld [smem:[#allocation0]]
  $region30: #{custom_cnn_forward.3} parent=0
    _
  %s6 = ssub.s32 1, %s4
  %s7 = scalar_select 0, %s6, %s4
  $region1: #{custom_cnn_forward.3} parent=0
    #allocation2 [shape = 'u8[10240]{0}', space=vmem, size = 0x2800, scoped, tag = 'input window, operand 1, single buffered']
    #allocation3 [shape = 's32[1]{0}', space=sflag, size = 0x4, scoped, tag = 'scoped memory for custom_cnn_forward.3']
    #allocation4 [shape = 'u8[512]{0}', space=vmem, size = 0x400, scoped, tag = 'input window, operand 2, single buffered']
    #allocation5 [shape = 's32[1]{0}', space=sflag, size = 0x4, scoped, tag = 'scoped memory for custom_cnn_forward.3']
    %8 = vsyncpa [#allocation3], 0
    %9 = vsyncpa [#allocation5], 0
    // Predicated region
    $region2: #{custom_cnn_forward.3} parent=1 // pred_check
      _
    $region3: #{custom_cnn_forward.3} parent=1 // pred_check_branch
      %11 = sbr.rel (0) target = $region5
    $region4: #{custom_cnn_forward.3} parent=1 // pred_region
      _
    $region5: #{custom_cnn_forward.3} parent=1 // pred_fallthru
      _
    // Predicated region
    $region6: #{custom_cnn_forward.3} parent=1 // pred_check
      _
    $region7: #{custom_cnn_forward.3} parent=1 // pred_check_branch
      %13 = sbr.rel (0) target = $region9
    $region8: #{custom_cnn_forward.3} parent=1 // pred_region
      %15 = vsyncadd [#allocation3], 0
      %s16 = sshll.u32 %s1, 4
      %s17 = int_to_ptr.hbm [resolvable:$true] %s16
      %s18 = sshll.u32 [#allocation2], 4
      %s19 = int_to_ptr.vmem [resolvable:$true] %s18
      %24 = dma.hbm_to_vmem [thread:$0]  %s17, 320, %s19, [#allocation3], 64, 64, 4
    $region9: #{custom_cnn_forward.3} parent=1 // pred_fallthru
      _
    // Predicated region
    $region10: #{custom_cnn_forward.3} parent=1 // pred_check
      _
    $region11: #{custom_cnn_forward.3} parent=1 // pred_check_branch
      %26 = sbr.rel (0) target = $region13
    $region12: #{custom_cnn_forward.3} parent=1 // pred_region
      %28 = vsyncadd [#allocation5], 0
      %s30 = sshll.u32 %s2, 4
      %s31 = int_to_ptr.hbm [resolvable:$true] %s30
      %s32 = sshll.u32 [#allocation4], 4
      %s33 = int_to_ptr.vmem [resolvable:$true] %s32
      %35 = dma.hbm_to_vmem [thread:$0]  %s31, 16, %s33, [#allocation5]
    $region13: #{custom_cnn_forward.3} parent=1 // pred_fallthru
      _
    // Predicated region
    $region14: #{custom_cnn_forward.3} parent=1 // pred_check
      _
    $region15: #{custom_cnn_forward.3} parent=1 // pred_check_branch
      %37 = sbr.rel (0) target = $region17
    $region16: #{custom_cnn_forward.3} parent=1 // pred_region
      %39 = dma.done [#allocation3], 320
    $region17: #{custom_cnn_forward.3} parent=1 // pred_fallthru
      _
    // Predicated region
    $region18: #{custom_cnn_forward.3} parent=1 // pred_check
      _
    $region19: #{custom_cnn_forward.3} parent=1 // pred_check_branch
      %41 = sbr.rel (0) target = $region21
    $region20: #{custom_cnn_forward.3} parent=1 // pred_region
      %43 = dma.done [#allocation5], 16
    $region21: #{custom_cnn_forward.3} parent=1 // pred_fallthru
      _
    %v45 = vld [vmem:[%s0] sm:$0xf]
    %v46 = vld [vmem:[%s0 + $0x4] sm:$0xf]
    %v47 = vld [vmem:[%s0 + $0x8] sm:$0xf]
    %v48 = vld [vmem:[%s0 + $0xc] sm:$0xf]
    %v49 = vld [vmem:[%s0 + $0x10] sm:$0xf]
    %v50 = vld [vmem:[%s0 + $0x14] sm:$0xf]
    %v51 = vld [vmem:[%s0 + $0x18] sm:$0xf]
    %v52 = vld [vmem:[%s0 + $0x1c] sm:$0xf]
    %v53 = vld [vmem:[%s0 + $0x20] sm:$0xf]
    %v54 = vld [vmem:[%s0 + $0x24] sm:$0xf]
    %v55 = vld [vmem:[%s0 + $0x28] sm:$0xf]
    %v56 = vld [vmem:[%s0 + $0x2c] sm:$0xf]
    %v57 = vld [vmem:[%s0 + $0x30] sm:$0xf]
    %v58 = vld [vmem:[%s0 + $0x34] sm:$0xf]
    %v59 = vld [vmem:[%s0 + $0x38] sm:$0xf]
    %v60 = vld [vmem:[%s0 + $0x3c] sm:$0xf]
    %v61 = vld [vmem:[%s0 + $0x40] sm:$0xf]
    %v62 = vld [vmem:[%s0 + $0x44] sm:$0xf]
    %v63 = vld [vmem:[%s0 + $0x48] sm:$0xf]
    %v64 = vld [vmem:[%s0 + $0x4c] sm:$0xf]
    %v65 = vld [vmem:[%s0 + $0x50] sm:$0xf]
    %v66 = vld [vmem:[%s0 + $0x54] sm:$0xf]
    %v67 = vld [vmem:[%s0 + $0x58] sm:$0xf]
    %v68 = vld [vmem:[%s0 + $0x5c] sm:$0xf]
    %v69 = vld [vmem:[%s0 + $0x60] sm:$0xf]
    %v70 = vld [vmem:[%s0 + $0x64] sm:$0xf]
    %v71 = vld [vmem:[%s0 + $0x68] sm:$0xf]
    %v72 = vld [vmem:[%s0 + $0x6c] sm:$0xf]
    %v73 = vld [vmem:[%s0 + $0x70] sm:$0xf]
    %v74 = vld [vmem:[%s0 + $0x74] sm:$0xf]
    %v75 = vld [vmem:[%s0 + $0x78] sm:$0xf]
    %v76 = vld [vmem:[%s0 + $0x7c] sm:$0xf]
    %v77 = vld [vmem:[%s0 + $0x80] sm:$0xf]
    %v78 = vld [vmem:[%s0 + $0x84] sm:$0xf]
    %v79 = vld [vmem:[%s0 + $0x88] sm:$0xf]
    %v80 = vld [vmem:[%s0 + $0x8c] sm:$0xf]
    %v81 = vld [vmem:[%s0 + $0x90] sm:$0xf]
    %v82 = vld [vmem:[%s0 + $0x94] sm:$0xf]
    %v83 = vld [vmem:[%s0 + $0x98] sm:$0xf]
    %v84 = vld [vmem:[%s0 + $0x9c] sm:$0xf]
    %v85 = vld [vmem:[%s0 + $0xa0] sm:$0xf]
    %v86 = vld [vmem:[%s0 + $0xa4] sm:$0xf]
    %v87 = vld [vmem:[%s0 + $0xa8] sm:$0xf]
    %v88 = vld [vmem:[%s0 + $0xac] sm:$0xf]
    %v89 = vld [vmem:[%s0 + $0xb0] sm:$0xf]
    %v90 = vld [vmem:[%s0 + $0xb4] sm:$0xf]
    %v91 = vld [vmem:[%s0 + $0xb8] sm:$0xf]
    %v92 = vld [vmem:[%s0 + $0xbc] sm:$0xf]
    %v93 = vld [vmem:[%s0 + $0xc0] sm:$0xf]
    %v94 = vld [vmem:[#allocation2] sm:$0xf]
    %v95 = vld [vmem:[#allocation2 + $0x4] sm:$0xf]
    %v96 = vld [vmem:[#allocation2 + $0x8] sm:$0xf]
    %v97 = vld [vmem:[#allocation2 + $0xc] sm:$0xf]
    %v98 = vld [vmem:[#allocation2 + $0x10] sm:$0x3]
    %v99 = vld [vmem:[#allocation4] sm:$0x1]
    %v101 = vperm.slane %v99, 0
    %v152 = vunpack.c.l.b16 %v45
    %v153 = vunpack.c.l.b16 %v46
    %v154 = vunpack.c.l.b16 %v47
    %v155 = vunpack.c.l.b16 %v48
    %v156 = vunpack.c.l.b16 %v49
    %v157 = vunpack.c.l.b16 %v50
    %v158 = vunpack.c.l.b16 %v51
    %v159 = vunpack.c.l.b16 %v52
    %v160 = vunpack.c.l.b16 %v53
    %v161 = vunpack.c.l.b16 %v54
    %v162 = vunpack.c.l.b16 %v55
    %v163 = vunpack.c.l.b16 %v56
    %v164 = vunpack.c.l.b16 %v57
    %v165 = vunpack.c.l.b16 %v58
    %v166 = vunpack.c.l.b16 %v59
    %v167 = vunpack.c.l.b16 %v60
    %v168 = vunpack.c.l.b16 %v61
    %v169 = vunpack.c.l.b16 %v62
    %v170 = vunpack.c.l.b16 %v63
    %v171 = vunpack.c.l.b16 %v64
    %v172 = vunpack.c.l.b16 %v65
    %v173 = vunpack.c.l.b16 %v66
    %v174 = vunpack.c.l.b16 %v67
    %v175 = vunpack.c.l.b16 %v68
    %v176 = vunpack.c.l.b16 %v69
    %v177 = vunpack.c.l.b16 %v70
    %v178 = vunpack.c.l.b16 %v71
    %v179 = vunpack.c.l.b16 %v72
    %v180 = vunpack.c.l.b16 %v73
    %v181 = vunpack.c.l.b16 %v74
    %v182 = vunpack.c.l.b16 %v75
    %v183 = vunpack.c.l.b16 %v76
    %v184 = vunpack.c.l.b16 %v77
    %v185 = vunpack.c.l.b16 %v78
    %v186 = vunpack.c.l.b16 %v79
    %v187 = vunpack.c.l.b16 %v80
    %v188 = vunpack.c.l.b16 %v81
    %v189 = vunpack.c.l.b16 %v82
    %v190 = vunpack.c.l.b16 %v83
    %v191 = vunpack.c.l.b16 %v84
    %v192 = vunpack.c.l.b16 %v85
    %v193 = vunpack.c.l.b16 %v86
    %v194 = vunpack.c.l.b16 %v87
    %v195 = vunpack.c.l.b16 %v88
    %v196 = vunpack.c.l.b16 %v89
    %v197 = vunpack.c.l.b16 %v90
    %v198 = vunpack.c.l.b16 %v91
    %v199 = vunpack.c.l.b16 %v92
    %v200 = vunpack.c.l.b16 %v93
    %v201 = vpack.c.b16 %v153, %v152
    %v202 = vpack.c.b16 %v155, %v154
    %v203 = vpack.c.b16 %v157, %v156
    %v204 = vpack.c.b16 %v159, %v158
    %v205 = vpack.c.b16 %v161, %v160
    %v206 = vpack.c.b16 %v163, %v162
    %v207 = vpack.c.b16 %v165, %v164
    %v208 = vpack.c.b16 %v167, %v166
    %v209 = vpack.c.b16 %v169, %v168
    %v210 = vpack.c.b16 %v171, %v170
    %v211 = vpack.c.b16 %v173, %v172
    %v212 = vpack.c.b16 %v175, %v174
    %v213 = vpack.c.b16 %v177, %v176
    %v214 = vpack.c.b16 %v179, %v178
    %v215 = vpack.c.b16 %v181, %v180
    %v216 = vpack.c.b16 %v183, %v182
    %v217 = vpack.c.b16 %v185, %v184
    %v218 = vpack.c.b16 %v187, %v186
    %v219 = vpack.c.b16 %v189, %v188
    %v220 = vpack.c.b16 %v191, %v190
    %v221 = vpack.c.b16 %v193, %v192
    %v222 = vpack.c.b16 %v195, %v194
    %v223 = vpack.c.b16 %v197, %v196
    %v224 = vpack.c.b16 %v199, %v198
    %v225 = vpack.c.b16 %v200, %v200
    %v231 = vunpack.c.l.b16 %v94
    %v232 = vunpack.c.l.b16 %v95
    %v233 = vunpack.c.l.b16 %v96
    %v234 = vunpack.c.l.b16 %v97
    %v235 = vunpack.c.l.b16 %v98
    %v236 = vpack.c.b16 %v232, %v231
    %v237 = vpack.c.b16 %v234, %v233
    %v238 = vpack.c.b16 %v235, %v235
    %vm241 = vcmask 293888
    %v243 = vsel %vm241, %v201, 0
    %v246 = vsel %vm241, %v202, 0
    %v249 = vsel %vm241, %v203, 0
    %v252 = vsel %vm241, %v204, 0
    %v255 = vsel %vm241, %v205, 0
    %v258 = vsel %vm241, %v206, 0
    %v261 = vsel %vm241, %v207, 0
    %v264 = vsel %vm241, %v208, 0
    %v267 = vsel %vm241, %v209, 0
    %v270 = vsel %vm241, %v210, 0
    %v273 = vsel %vm241, %v211, 0
    %v276 = vsel %vm241, %v212, 0
    %v279 = vsel %vm241, %v213, 0
    %v282 = vsel %vm241, %v214, 0
    %v285 = vsel %vm241, %v215, 0
    %v288 = vsel %vm241, %v216, 0
    %v291 = vsel %vm241, %v217, 0
    %v294 = vsel %vm241, %v218, 0
    %v297 = vsel %vm241, %v219, 0
    %v300 = vsel %vm241, %v220, 0
    %v303 = vsel %vm241, %v221, 0
    %v306 = vsel %vm241, %v222, 0
    %v309 = vsel %vm241, %v223, 0
    %v312 = vsel %vm241, %v224, 0
    %v315 = vsel %vm241, %v225, 0
    %vm317 = vcmask 1041408
    %v319 = vsel %vm317, %v238, 0
    %321 = vmatpush.bf16.msra.mxu0 0
    %322 = vmatpush.bf16.msra.mxu0 0
    %323 = vmatpush.bf16.msra.mxu0 0
    %324 = vmatpush.bf16.msra.mxu0 0
    %325 = vmatpush.bf16.msra.mxu0 0
    %326 = vmatpush.bf16.msra.mxu0 %v319
    %327 = vmatpush.bf16.msra.mxu0 %v237
    %328 = vmatpush.bf16.msra.mxu0 %v236
    %329 = vmatmul.bf16.gmra.mxu0 %v243
    %v330 = vpop.f32.mrf.mxu0
    %v331 = vadd.f32 %v101, %v330
    %v332 = vpop.f32.mrf.mxu0
    %v333 = vadd.f32 %v101, %v332
    %334 = vmatmul.bf16.gmra.mxu0 %v246
    %v335 = vpop.f32.mrf.mxu0
    %v336 = vadd.f32 %v101, %v335
    %v337 = vpop.f32.mrf.mxu0
    %v338 = vadd.f32 %v101, %v337
    %339 = vmatmul.bf16.gmra.mxu0 %v249
    %v340 = vpop.f32.mrf.mxu0
    %v341 = vadd.f32 %v101, %v340
    %v342 = vpop.f32.mrf.mxu0
    %v343 = vadd.f32 %v101, %v342
    %344 = vmatmul.bf16.gmra.mxu0 %v252
    %v345 = vpop.f32.mrf.mxu0
    %v346 = vadd.f32 %v101, %v345
    %v347 = vpop.f32.mrf.mxu0
    %v348 = vadd.f32 %v101, %v347
    %349 = vmatmul.bf16.gmra.mxu0 %v255
    %v350 = vpop.f32.mrf.mxu0
    %v351 = vadd.f32 %v101, %v350
    %v352 = vpop.f32.mrf.mxu0
    %v353 = vadd.f32 %v101, %v352
    %354 = vmatmul.bf16.gmra.mxu0 %v258
    %v355 = vpop.f32.mrf.mxu0
    %v356 = vadd.f32 %v101, %v355
    %v357 = vpop.f32.mrf.mxu0
    %v358 = vadd.f32 %v101, %v357
    %359 = vmatmul.bf16.gmra.mxu0 %v261
    %v360 = vpop.f32.mrf.mxu0
    %v361 = vadd.f32 %v101, %v360
    %v362 = vpop.f32.mrf.mxu0
    %v363 = vadd.f32 %v101, %v362
    %364 = vmatmul.bf16.gmra.mxu0 %v264
    %v365 = vpop.f32.mrf.mxu0
    %v366 = vadd.f32 %v101, %v365
    %v367 = vpop.f32.mrf.mxu0
    %v368 = vadd.f32 %v101, %v367
    %369 = vmatmul.bf16.gmra.mxu0 %v267
    %v370 = vpop.f32.mrf.mxu0
    %v371 = vadd.f32 %v101, %v370
    %v372 = vpop.f32.mrf.mxu0
    %v373 = vadd.f32 %v101, %v372
    %374 = vmatmul.bf16.gmra.mxu0 %v270
    %v375 = vpop.f32.mrf.mxu0
    %v376 = vadd.f32 %v101, %v375
    %v377 = vpop.f32.mrf.mxu0
    %v378 = vadd.f32 %v101, %v377
    %379 = vmatmul.bf16.gmra.mxu0 %v273
    %v380 = vpop.f32.mrf.mxu0
    %v381 = vadd.f32 %v101, %v380
    %v382 = vpop.f32.mrf.mxu0
    %v383 = vadd.f32 %v101, %v382
    %384 = vmatmul.bf16.gmra.mxu0 %v276
    %v385 = vpop.f32.mrf.mxu0
    %v386 = vadd.f32 %v101, %v385
    %v387 = vpop.f32.mrf.mxu0
    %v388 = vadd.f32 %v101, %v387
    %389 = vmatmul.bf16.gmra.mxu0 %v279
    %v390 = vpop.f32.mrf.mxu0
    %v391 = vadd.f32 %v101, %v390
    %v392 = vpop.f32.mrf.mxu0
    %v393 = vadd.f32 %v101, %v392
    %394 = vmatmul.bf16.gmra.mxu0 %v282
    %v395 = vpop.f32.mrf.mxu0
    %v396 = vadd.f32 %v101, %v395
    %v397 = vpop.f32.mrf.mxu0
    %v398 = vadd.f32 %v101, %v397
    %399 = vmatmul.bf16.gmra.mxu0 %v285
    %v400 = vpop.f32.mrf.mxu0
    %v401 = vadd.f32 %v101, %v400
    %v402 = vpop.f32.mrf.mxu0
    %v403 = vadd.f32 %v101, %v402
    %404 = vmatmul.bf16.gmra.mxu0 %v288
    %v405 = vpop.f32.mrf.mxu0
    %v406 = vadd.f32 %v101, %v405
    %v407 = vpop.f32.mrf.mxu0
    %v408 = vadd.f32 %v101, %v407
    %409 = vmatmul.bf16.gmra.mxu0 %v291
    %v410 = vpop.f32.mrf.mxu0
    %v411 = vadd.f32 %v101, %v410
    %v412 = vpop.f32.mrf.mxu0
    %v413 = vadd.f32 %v101, %v412
    %414 = vmatmul.bf16.gmra.mxu0 %v294
    %v415 = vpop.f32.mrf.mxu0
    %v416 = vadd.f32 %v101, %v415
    %v417 = vpop.f32.mrf.mxu0
    %v418 = vadd.f32 %v101, %v417
    %419 = vmatmul.bf16.gmra.mxu0 %v297
    %v420 = vpop.f32.mrf.mxu0
    %v421 = vadd.f32 %v101, %v420
    %v422 = vpop.f32.mrf.mxu0
    %v423 = vadd.f32 %v101, %v422
    %424 = vmatmul.bf16.gmra.mxu0 %v300
    %v425 = vpop.f32.mrf.mxu0
    %v426 = vadd.f32 %v101, %v425
    %v427 = vpop.f32.mrf.mxu0
    %v428 = vadd.f32 %v101, %v427
    %429 = vmatmul.bf16.gmra.mxu0 %v303
    %v430 = vpop.f32.mrf.mxu0
    %v431 = vadd.f32 %v101, %v430
    %v432 = vpop.f32.mrf.mxu0
    %v433 = vadd.f32 %v101, %v432
    %434 = vmatmul.bf16.gmra.mxu0 %v306
    %v435 = vpop.f32.mrf.mxu0
    %v436 = vadd.f32 %v101, %v435
    %v437 = vpop.f32.mrf.mxu0
    %v438 = vadd.f32 %v101, %v437
    %439 = vmatmul.bf16.gmra.mxu0 %v309
    %v440 = vpop.f32.mrf.mxu0
    %v441 = vadd.f32 %v101, %v440
    %v442 = vpop.f32.mrf.mxu0
    %v443 = vadd.f32 %v101, %v442
    %444 = vmatmul.bf16.gmra.mxu0 %v312
    %v445 = vpop.f32.mrf.mxu0
    %v446 = vadd.f32 %v101, %v445
    %v447 = vpop.f32.mrf.mxu0
    %v448 = vadd.f32 %v101, %v447
    %449 = vmatmul.bf16.gmra.mxu0 %v315
    %v450 = vpop.f32.mrf.mxu0
    %v451 = vadd.f32 %v101, %v450
    %v452 = vpop.f32.mrf.mxu0
    %453 = vdwg.mxu0
    %v454 = vmax.f32 %v331, 0.0
    %v455 = vmax.f32 %v333, 0.0
    %v456 = vmax.f32 %v336, 0.0
    %v457 = vmax.f32 %v338, 0.0
    %v458 = vmax.f32 %v341, 0.0
    %v459 = vmax.f32 %v343, 0.0
    %v460 = vmax.f32 %v346, 0.0
    %v461 = vmax.f32 %v348, 0.0
    %v462 = vmax.f32 %v351, 0.0
    %v463 = vmax.f32 %v353, 0.0
    %v464 = vmax.f32 %v356, 0.0
    %v465 = vmax.f32 %v358, 0.0
    %v466 = vmax.f32 %v361, 0.0
    %v467 = vmax.f32 %v363, 0.0
    %v468 = vmax.f32 %v366, 0.0
    %v469 = vmax.f32 %v368, 0.0
    %v470 = vmax.f32 %v371, 0.0
    %v471 = vmax.f32 %v373, 0.0
    %v472 = vmax.f32 %v376, 0.0
    %v473 = vmax.f32 %v378, 0.0
    %v474 = vmax.f32 %v381, 0.0
    %v475 = vmax.f32 %v383, 0.0
    %v476 = vmax.f32 %v386, 0.0
    %v477 = vmax.f32 %v388, 0.0
    %v478 = vmax.f32 %v391, 0.0
    %v479 = vmax.f32 %v393, 0.0
    %v480 = vmax.f32 %v396, 0.0
    %v481 = vmax.f32 %v398, 0.0
    %v482 = vmax.f32 %v401, 0.0
    %v483 = vmax.f32 %v403, 0.0
    %v484 = vmax.f32 %v406, 0.0
    %v485 = vmax.f32 %v408, 0.0
    %v486 = vmax.f32 %v411, 0.0
    %v487 = vmax.f32 %v413, 0.0
    %v488 = vmax.f32 %v416, 0.0
    %v489 = vmax.f32 %v418, 0.0
    %v490 = vmax.f32 %v421, 0.0
    %v491 = vmax.f32 %v423, 0.0
    %v492 = vmax.f32 %v426, 0.0
    %v493 = vmax.f32 %v428, 0.0
    %v494 = vmax.f32 %v431, 0.0
    %v495 = vmax.f32 %v433, 0.0
    %v496 = vmax.f32 %v436, 0.0
    %v497 = vmax.f32 %v438, 0.0
    %v498 = vmax.f32 %v441, 0.0
    %v499 = vmax.f32 %v443, 0.0
    %v500 = vmax.f32 %v446, 0.0
    %v501 = vmax.f32 %v448, 0.0
    %v502 = vmax.f32 %v451, 0.0
    %v503 = vpack.c.bf16 %v454, %v454
    %v504 = vpack.c.bf16 %v455, %v455
    %v505 = vpack.c.bf16 %v456, %v456
    %v506 = vpack.c.bf16 %v457, %v457
    %v507 = vpack.c.bf16 %v458, %v458
    %v508 = vpack.c.bf16 %v459, %v459
    %v509 = vpack.c.bf16 %v460, %v460
    %v510 = vpack.c.bf16 %v461, %v461
    %v511 = vpack.c.bf16 %v462, %v462
    %v512 = vpack.c.bf16 %v463, %v463
    %v513 = vpack.c.bf16 %v464, %v464
    %v514 = vpack.c.bf16 %v465, %v465
    %v515 = vpack.c.bf16 %v466, %v466
    %v516 = vpack.c.bf16 %v467, %v467
    %v517 = vpack.c.bf16 %v468, %v468
    %v518 = vpack.c.bf16 %v469, %v469
    %v519 = vpack.c.bf16 %v470, %v470
    %v520 = vpack.c.bf16 %v471, %v471
    %v521 = vpack.c.bf16 %v472, %v472
    %v522 = vpack.c.bf16 %v473, %v473
    %v523 = vpack.c.bf16 %v474, %v474
    %v524 = vpack.c.bf16 %v475, %v475
    %v525 = vpack.c.bf16 %v476, %v476
    %v526 = vpack.c.bf16 %v477, %v477
    %v527 = vpack.c.bf16 %v478, %v478
    %v528 = vpack.c.bf16 %v479, %v479
    %v529 = vpack.c.bf16 %v480, %v480
    %v530 = vpack.c.bf16 %v481, %v481
    %v531 = vpack.c.bf16 %v482, %v482
    %v532 = vpack.c.bf16 %v483, %v483
    %v533 = vpack.c.bf16 %v484, %v484
    %v534 = vpack.c.bf16 %v485, %v485
    %v535 = vpack.c.bf16 %v486, %v486
    %v536 = vpack.c.bf16 %v487, %v487
    %v537 = vpack.c.bf16 %v488, %v488
    %v538 = vpack.c.bf16 %v489, %v489
    %v539 = vpack.c.bf16 %v490, %v490
    %v540 = vpack.c.bf16 %v491, %v491
    %v541 = vpack.c.bf16 %v492, %v492
    %v542 = vpack.c.bf16 %v493, %v493
    %v543 = vpack.c.bf16 %v494, %v494
    %v544 = vpack.c.bf16 %v495, %v495
    %v545 = vpack.c.bf16 %v496, %v496
    %v546 = vpack.c.bf16 %v497, %v497
    %v547 = vpack.c.bf16 %v498, %v498
    %v548 = vpack.c.bf16 %v499, %v499
    %v549 = vpack.c.bf16 %v500, %v500
    %v550 = vpack.c.bf16 %v501, %v501
    %v551 = vpack.c.bf16 %v502, %v502
    %vm552 = vcmask 519168
    %553 = vst.msk [vmem:[%s3] sm:$0xf] %vm552, %v503
    %554 = vst.msk [vmem:[%s3 + $0x4] sm:$0xf] %vm552, %v504
    %555 = vst.msk [vmem:[%s3 + $0x8] sm:$0xf] %vm552, %v505
    %556 = vst.msk [vmem:[%s3 + $0xc] sm:$0xf] %vm552, %v506
    %557 = vst.msk [vmem:[%s3 + $0x10] sm:$0xf] %vm552, %v507
    %558 = vst.msk [vmem:[%s3 + $0x14] sm:$0xf] %vm552, %v508
    %559 = vst.msk [vmem:[%s3 + $0x18] sm:$0xf] %vm552, %v509
    %560 = vst.msk [vmem:[%s3 + $0x1c] sm:$0xf] %vm552, %v510
    %561 = vst.msk [vmem:[%s3 + $0x20] sm:$0xf] %vm552, %v511
    %562 = vst.msk [vmem:[%s3 + $0x24] sm:$0xf] %vm552, %v512
    %563 = vst.msk [vmem:[%s3 + $0x28] sm:$0xf] %vm552, %v513
    %564 = vst.msk [vmem:[%s3 + $0x2c] sm:$0xf] %vm552, %v514
    %565 = vst.msk [vmem:[%s3 + $0x30] sm:$0xf] %vm552, %v515
    %566 = vst.msk [vmem:[%s3 + $0x34] sm:$0xf] %vm552, %v516
    %567 = vst.msk [vmem:[%s3 + $0x38] sm:$0xf] %vm552, %v517
    %568 = vst.msk [vmem:[%s3 + $0x3c] sm:$0xf] %vm552, %v518
    %569 = vst.msk [vmem:[%s3 + $0x40] sm:$0xf] %vm552, %v519
    %570 = vst.msk [vmem:[%s3 + $0x44] sm:$0xf] %vm552, %v520
    %571 = vst.msk [vmem:[%s3 + $0x48] sm:$0xf] %vm552, %v521
    %572 = vst.msk [vmem:[%s3 + $0x4c] sm:$0xf] %vm552, %v522
    %573 = vst.msk [vmem:[%s3 + $0x50] sm:$0xf] %vm552, %v523
    %574 = vst.msk [vmem:[%s3 + $0x54] sm:$0xf] %vm552, %v524
    %575 = vst.msk [vmem:[%s3 + $0x58] sm:$0xf] %vm552, %v525
    %576 = vst.msk [vmem:[%s3 + $0x5c] sm:$0xf] %vm552, %v526
    %577 = vst.msk [vmem:[%s3 + $0x60] sm:$0xf] %vm552, %v527
    %578 = vst.msk [vmem:[%s3 + $0x64] sm:$0xf] %vm552, %v528
    %579 = vst.msk [vmem:[%s3 + $0x68] sm:$0xf] %vm552, %v529
    %580 = vst.msk [vmem:[%s3 + $0x6c] sm:$0xf] %vm552, %v530
    %581 = vst.msk [vmem:[%s3 + $0x70] sm:$0xf] %vm552, %v531
    %582 = vst.msk [vmem:[%s3 + $0x74] sm:$0xf] %vm552, %v532
    %583 = vst.msk [vmem:[%s3 + $0x78] sm:$0xf] %vm552, %v533
    %584 = vst.msk [vmem:[%s3 + $0x7c] sm:$0xf] %vm552, %v534
    %585 = vst.msk [vmem:[%s3 + $0x80] sm:$0xf] %vm552, %v535
    %586 = vst.msk [vmem:[%s3 + $0x84] sm:$0xf] %vm552, %v536
    %587 = vst.msk [vmem:[%s3 + $0x88] sm:$0xf] %vm552, %v537
    %588 = vst.msk [vmem:[%s3 + $0x8c] sm:$0xf] %vm552, %v538
    %589 = vst.msk [vmem:[%s3 + $0x90] sm:$0xf] %vm552, %v539
    %590 = vst.msk [vmem:[%s3 + $0x94] sm:$0xf] %vm552, %v540
    %591 = vst.msk [vmem:[%s3 + $0x98] sm:$0xf] %vm552, %v541
    %592 = vst.msk [vmem:[%s3 + $0x9c] sm:$0xf] %vm552, %v542
    %593 = vst.msk [vmem:[%s3 + $0xa0] sm:$0xf] %vm552, %v543
    %594 = vst.msk [vmem:[%s3 + $0xa4] sm:$0xf] %vm552, %v544
    %595 = vst.msk [vmem:[%s3 + $0xa8] sm:$0xf] %vm552, %v545
    %596 = vst.msk [vmem:[%s3 + $0xac] sm:$0xf] %vm552, %v546
    %597 = vst.msk [vmem:[%s3 + $0xb0] sm:$0xf] %vm552, %v547
    %598 = vst.msk [vmem:[%s3 + $0xb4] sm:$0xf] %vm552, %v548
    %599 = vst.msk [vmem:[%s3 + $0xb8] sm:$0xf] %vm552, %v549
    %600 = vst.msk [vmem:[%s3 + $0xbc] sm:$0xf] %vm552, %v550
    %601 = vst.msk [vmem:[%s3 + $0xc0] sm:$0xf] %vm552, %v551
    // Predicated region
    $region22: #{custom_cnn_forward.3} parent=1 // pred_check
      _
    $region23: #{custom_cnn_forward.3} parent=1 // pred_check_branch
      %603 = sbr.rel (0) target = $region25
    $region24: #{custom_cnn_forward.3} parent=1 // pred_region
      _
    $region25: #{custom_cnn_forward.3} parent=1 // pred_fallthru
      _
    // Predicated region
    $region26: #{custom_cnn_forward.3} parent=1 // pred_check
      _
    $region27: #{custom_cnn_forward.3} parent=1 // pred_check_branch
      %605 = sbr.rel (0) target = $region29
    $region28: #{custom_cnn_forward.3} parent=1 // pred_region
      _
    $region29: #{custom_cnn_forward.3} parent=1 // pred_fallthru
      _
    %606 = vsyncpa [#allocation3], 1
    %607 = vsyncpa [#allocation5], 1

// kernel: custom_cnn_forward.4
$region0: #{custom_cnn_forward.4}
  #allocation0 [shape = 'u32[]', space=smem, size = 0x4, offset = 0x4, fixed_abs, tag = 'smem constant byte address 0x4 - core index']
  #allocation1 [shape = 'u32[72,128]{1,0:T(1,128)}', space=vmem, size = 0x9000, scoped, tag = 'internal scratch']
  %s0 = inlined_call_operand.vmem [shape: bf16[288,576], index: 0, kind: input, shape index: {}]
  %s1 = inlined_call_operand.hbm [shape: bf16[576,128], index: 1, kind: input, shape index: {}]
  %s2 = inlined_call_operand.hbm [shape: f32[1,128], index: 2, kind: input, shape index: {}]
  %s3 = inlined_call_operand.vmem [shape: bf16[288,128], index: 3, kind: output, shape index: {}]
  %s4 = sld [smem:[#allocation0]]
  $region30: #{custom_cnn_forward.4} parent=0
    _
  %s6 = ssub.s32 1, %s4
  %s7 = scalar_select 0, %s6, %s4
  $region1: #{custom_cnn_forward.4} parent=0
    #allocation2 [shape = 'u8[147456]{0}', space=vmem, size = 0x24000, scoped, tag = 'input window, operand 1, single buffered']
    #allocation3 [shape = 's32[1]{0}', space=sflag, size = 0x4, scoped, tag = 'scoped memory for custom_cnn_forward.4']
    #allocation4 [shape = 'u8[512]{0}', space=vmem, size = 0x400, scoped, tag = 'input window, operand 2, single buffered']
    #allocation5 [shape = 's32[1]{0}', space=sflag, size = 0x4, scoped, tag = 'scoped memory for custom_cnn_forward.4']
    %8 = vsyncpa [#allocation3], 0
    %9 = vsyncpa [#allocation5], 0
    // Predicated region
    $region2: #{custom_cnn_forward.4} parent=1 // pred_check
      _
    $region3: #{custom_cnn_forward.4} parent=1 // pred_check_branch
      %11 = sbr.rel (0) target = $region5
    $region4: #{custom_cnn_forward.4} parent=1 // pred_region
      _
    $region5: #{custom_cnn_forward.4} parent=1 // pred_fallthru
      _
    // Predicated region
    $region6: #{custom_cnn_forward.4} parent=1 // pred_check
      _
    $region7: #{custom_cnn_forward.4} parent=1 // pred_check_branch
      %13 = sbr.rel (0) target = $region9
    $region8: #{custom_cnn_forward.4} parent=1 // pred_region
      %15 = vsyncadd [#allocation3], 0
      %s16 = sshll.u32 %s1, 4
      %s17 = int_to_ptr.hbm [resolvable:$true] %s16
      %s18 = sshll.u32 [#allocation2], 4
      %s19 = int_to_ptr.vmem [resolvable:$true] %s18
      %24 = dma.hbm_to_vmem [thread:$0]  %s17, 4608, %s19, [#allocation3], 64, 64, 4
    $region9: #{custom_cnn_forward.4} parent=1 // pred_fallthru
      _
    // Predicated region
    $region10: #{custom_cnn_forward.4} parent=1 // pred_check
      _
    $region11: #{custom_cnn_forward.4} parent=1 // pred_check_branch
      %26 = sbr.rel (0) target = $region13
    $region12: #{custom_cnn_forward.4} parent=1 // pred_region
      %28 = vsyncadd [#allocation5], 0
      %s30 = sshll.u32 %s2, 4
      %s31 = int_to_ptr.hbm [resolvable:$true] %s30
      %s32 = sshll.u32 [#allocation4], 4
      %s33 = int_to_ptr.vmem [resolvable:$true] %s32
      %35 = dma.hbm_to_vmem [thread:$0]  %s31, 16, %s33, [#allocation5]
    $region13: #{custom_cnn_forward.4} parent=1 // pred_fallthru
      _
    // Predicated region
    $region14: #{custom_cnn_forward.4} parent=1 // pred_check
      _
    $region15: #{custom_cnn_forward.4} parent=1 // pred_check_branch
      %37 = sbr.rel (0) target = $region17
    $region16: #{custom_cnn_forward.4} parent=1 // pred_region
      %39 = dma.done [#allocation3], 4608
    $region17: #{custom_cnn_forward.4} parent=1 // pred_fallthru
      _
    // Predicated region
    $region18: #{custom_cnn_forward.4} parent=1 // pred_check
      _
    $region19: #{custom_cnn_forward.4} parent=1 // pred_check_branch
      %41 = sbr.rel (0) target = $region21
    $region20: #{custom_cnn_forward.4} parent=1 // pred_region
      %43 = dma.done [#allocation5], 16
    $region21: #{custom_cnn_forward.4} parent=1 // pred_fallthru
      _
    %v45 = vld [vmem:[%s0] sm:$0xff]
    %v46 = vld [vmem:[%s0 + $0x8] sm:$0xff]
    %v47 = vld [vmem:[%s0 + $0x10] sm:$0xf]
    %v48 = vld [vmem:[%s0 + $0x14] sm:$0xff]
    %v49 = vld [vmem:[%s0 + $0x1c] sm:$0xff]
    %v50 = vld [vmem:[%s0 + $0x24] sm:$0xf]
    %v51 = vld [vmem:[%s0 + $0x28] sm:$0xff]
    %v52 = vld [vmem:[%s0 + $0x30] sm:$0xff]
    %v53 = vld [vmem:[%s0 + $0x38] sm:$0xf]
    %v54 = vld [vmem:[%s0 + $0x3c] sm:$0xff]
    %v55 = vld [vmem:[%s0 + $0x44] sm:$0xff]
    %v56 = vld [vmem:[%s0 + $0x4c] sm:$0xf]
    %v57 = vld [vmem:[%s0 + $0x50] sm:$0xff]
    %v58 = vld [vmem:[%s0 + $0x58] sm:$0xff]
    %v59 = vld [vmem:[%s0 + $0x60] sm:$0xf]
    %v60 = vld [vmem:[%s0 + $0x64] sm:$0xff]
    %v61 = vld [vmem:[%s0 + $0x6c] sm:$0xff]
    %v62 = vld [vmem:[%s0 + $0x74] sm:$0xf]
    %v63 = vld [vmem:[%s0 + $0x78] sm:$0xff]
    %v64 = vld [vmem:[%s0 + $0x80] sm:$0xff]
    %v65 = vld [vmem:[%s0 + $0x88] sm:$0xf]
    %v66 = vld [vmem:[%s0 + $0x8c] sm:$0xff]
    %v67 = vld [vmem:[%s0 + $0x94] sm:$0xff]
    %v68 = vld [vmem:[%s0 + $0x9c] sm:$0xf]
    %v69 = vld [vmem:[%s0 + $0xa0] sm:$0xff]
    %v70 = vld [vmem:[%s0 + $0xa8] sm:$0xff]
    %v71 = vld [vmem:[%s0 + $0xb0] sm:$0xf]
    %v72 = vld [vmem:[%s0 + $0xb4] sm:$0xff]
    %v73 = vld [vmem:[%s0 + $0xbc] sm:$0xff]
    %v74 = vld [vmem:[%s0 + $0xc4] sm:$0xf]
    %v75 = vld [vmem:[%s0 + $0xc8] sm:$0xff]
    %v76 = vld [vmem:[%s0 + $0xd0] sm:$0xff]
    %v77 = vld [vmem:[%s0 + $0xd8] sm:$0xf]
    %v78 = vld [vmem:[%s0 + $0xdc] sm:$0xff]
    %v79 = vld [vmem:[%s0 + $0xe4] sm:$0xff]
    %v80 = vld [vmem:[%s0 + $0xec] sm:$0xf]
    %v81 = vld [vmem:[%s0 + $0xf0] sm:$0xff]
    %v82 = vld [vmem:[%s0 + $0xf8] sm:$0xff]
    %v83 = vld [vmem:[%s0 + $0x100] sm:$0xf]
    %v84 = vld [vmem:[%s0 + $0x104] sm:$0xff]
    %v85 = vld [vmem:[%s0 + $0x10c] sm:$0xff]
    %v86 = vld [vmem:[%s0 + $0x114] sm:$0xf]
    %v87 = vld [vmem:[%s0 + $0x118] sm:$0xff]
    %v88 = vld [vmem:[%s0 + $0x120] sm:$0xff]
    %v89 = vld [vmem:[%s0 + $0x128] sm:$0xf]
    %v90 = vld [vmem:[%s0 + $0x12c] sm:$0xff]
    %v91 = vld [vmem:[%s0 + $0x134] sm:$0xff]
    %v92 = vld [vmem:[%s0 + $0x13c] sm:$0xf]
    %v93 = vld [vmem:[%s0 + $0x140] sm:$0xff]
    %v94 = vld [vmem:[%s0 + $0x148] sm:$0xff]
    %v95 = vld [vmem:[%s0 + $0x150] sm:$0xf]
    %v96 = vld [vmem:[%s0 + $0x154] sm:$0xff]
    %v97 = vld [vmem:[%s0 + $0x15c] sm:$0xff]
    %v98 = vld [vmem:[%s0 + $0x164] sm:$0xf]
    %v99 = vld [vmem:[%s0 + $0x168] sm:$0xff]
    %v100 = vld [vmem:[%s0 + $0x170] sm:$0xff]
    %v101 = vld [vmem:[%s0 + $0x178] sm:$0xf]
    %v102 = vld [vmem:[%s0 + $0x17c] sm:$0xff]
    %v103 = vld [vmem:[%s0 + $0x184] sm:$0xff]
    %v104 = vld [vmem:[%s0 + $0x18c] sm:$0xf]
    %v105 = vld [vmem:[%s0 + $0x190] sm:$0xff]
    %v106 = vld [vmem:[%s0 + $0x198] sm:$0xff]
    %v107 = vld [vmem:[%s0 + $0x1a0] sm:$0xf]
    %v108 = vld [vmem:[%s0 + $0x1a4] sm:$0xff]
    %v109 = vld [vmem:[%s0 + $0x1ac] sm:$0xff]
    %v110 = vld [vmem:[%s0 + $0x1b4] sm:$0xf]
    %v111 = vld [vmem:[%s0 + $0x1b8] sm:$0xff]
    %v112 = vld [vmem:[%s0 + $0x1c0] sm:$0xff]
    %v113 = vld [vmem:[%s0 + $0x1c8] sm:$0xf]
    %v114 = vld [vmem:[%s0 + $0x1cc] sm:$0xff]
    %v115 = vld [vmem:[%s0 + $0x1d4] sm:$0xff]
    %v116 = vld [vmem:[%s0 + $0x1dc] sm:$0xf]
    %v117 = vld [vmem:[%s0 + $0x1e0] sm:$0xff]
    %v118 = vld [vmem:[%s0 + $0x1e8] sm:$0xff]
    %v119 = vld [vmem:[%s0 + $0x1f0] sm:$0xf]
    %v120 = vld [vmem:[%s0 + $0x1f4] sm:$0xff]
    %v121 = vld [vmem:[%s0 + $0x1fc] sm:$0xff]
    %v122 = vld [vmem:[%s0 + $0x204] sm:$0xf]
    %v123 = vld [vmem:[%s0 + $0x208] sm:$0xff]
    %v124 = vld [vmem:[%s0 + $0x210] sm:$0xff]
    %v125 = vld [vmem:[%s0 + $0x218] sm:$0xf]
    %v126 = vld [vmem:[%s0 + $0x21c] sm:$0xff]
    %v127 = vld [vmem:[%s0 + $0x224] sm:$0xff]
    %v128 = vld [vmem:[%s0 + $0x22c] sm:$0xf]
    %v129 = vld [vmem:[%s0 + $0x230] sm:$0xff]
    %v130 = vld [vmem:[%s0 + $0x238] sm:$0xff]
    %v131 = vld [vmem:[%s0 + $0x240] sm:$0xf]
    %v132 = vld [vmem:[%s0 + $0x244] sm:$0xff]
    %v133 = vld [vmem:[%s0 + $0x24c] sm:$0xff]
    %v134 = vld [vmem:[%s0 + $0x254] sm:$0xf]
    %v135 = vld [vmem:[%s0 + $0x258] sm:$0xff]
    %v136 = vld [vmem:[%s0 + $0x260] sm:$0xff]
    %v137 = vld [vmem:[%s0 + $0x268] sm:$0xf]
    %v138 = vld [vmem:[%s0 + $0x26c] sm:$0xff]
    %v139 = vld [vmem:[%s0 + $0x274] sm:$0xff]
    %v140 = vld [vmem:[%s0 + $0x27c] sm:$0xf]
    %v141 = vld [vmem:[%s0 + $0x280] sm:$0xff]
    %v142 = vld [vmem:[%s0 + $0x288] sm:$0xff]
    %v143 = vld [vmem:[%s0 + $0x290] sm:$0xf]
    %v144 = vld [vmem:[%s0 + $0x294] sm:$0xff]
    %v145 = vld [vmem:[%s0 + $0x29c] sm:$0xff]
    %v146 = vld [vmem:[%s0 + $0x2a4] sm:$0xf]
    %v147 = vld [vmem:[%s0 + $0x2a8] sm:$0xff]
    %v148 = vld [vmem:[%s0 + $0x2b0] sm:$0xff]
    %v149 = vld [vmem:[%s0 + $0x2b8] sm:$0xf]
    %v150 = vld [vmem:[%s0 + $0x2bc] sm:$0xff]
    %v151 = vld [vmem:[%s0 + $0x2c4] sm:$0xff]
    %v152 = vld [vmem:[%s0 + $0x2cc] sm:$0xf]
    %v153 = vld [vmem:[#allocation2] sm:$0xf]
    %v154 = vld [vmem:[#allocation2 + $0x4] sm:$0xf]
    %v155 = vld [vmem:[#allocation2 + $0x8] sm:$0xf]
    %v156 = vld [vmem:[#allocation2 + $0xc] sm:$0xf]
    %v157 = vld [vmem:[#allocation2 + $0x10] sm:$0xf]
    %v158 = vld [vmem:[#allocation2 + $0x14] sm:$0xf]
    %v159 = vld [vmem:[#allocation2 + $0x18] sm:$0xf]
    %v160 = vld [vmem:[#allocation2 + $0x1c] sm:$0xf]
    %v161 = vld [vmem:[#allocation2 + $0x20] sm:$0xf]
    %v162 = vld [vmem:[#allocation2 + $0x24] sm:$0xf]
    %v163 = vld [vmem:[#allocation2 + $0x28] sm:$0xf]
    %v164 = vld [vmem:[#allocation2 + $0x2c] sm:$0xf]
    %v165 = vld [vmem:[#allocation2 + $0x30] sm:$0xf]
    %v166 = vld [vmem:[#allocation2 + $0x34] sm:$0xf]
    %v167 = vld [vmem:[#allocation2 + $0x38] sm:$0xf]
    %v168 = vld [vmem:[#allocation2 + $0x3c] sm:$0xf]
    %v169 = vld [vmem:[#allocation2 + $0x40] sm:$0xf]
    %v170 = vld [vmem:[#allocation2 + $0x44] sm:$0xf]
    %v171 = vld [vmem:[#allocation2 + $0x48] sm:$0xf]
    %v172 = vld [vmem:[#allocation2 + $0x4c] sm:$0xf]
    %v173 = vld [vmem:[#allocation2 + $0x50] sm:$0xf]
    %v174 = vld [vmem:[#allocation2 + $0x54] sm:$0xf]
    %v175 = vld [vmem:[#allocation2 + $0x58] sm:$0xf]
    %v176 = vld [vmem:[#allocation2 + $0x5c] sm:$0xf]
    %v177 = vld [vmem:[#allocation2 + $0x60] sm:$0xf]
    %v178 = vld [vmem:[#allocation2 + $0x64] sm:$0xf]
    %v179 = vld [vmem:[#allocation2 + $0x68] sm:$0xf]
    %v180 = vld [vmem:[#allocation2 + $0x6c] sm:$0xf]
    %v181 = vld [vmem:[#allocation2 + $0x70] sm:$0xf]
    %v182 = vld [vmem:[#allocation2 + $0x74] sm:$0xf]
    %v183 = vld [vmem:[#allocation2 + $0x78] sm:$0xf]
    %v184 = vld [vmem:[#allocation2 + $0x7c] sm:$0xf]
    %v185 = vld [vmem:[#allocation2 + $0x80] sm:$0xf]
    %v186 = vld [vmem:[#allocation2 + $0x84] sm:$0xf]
    %v187 = vld [vmem:[#allocation2 + $0x88] sm:$0xf]
    %v188 = vld [vmem:[#allocation2 + $0x8c] sm:$0xf]
    %v189 = vld [vmem:[#allocation2 + $0x90] sm:$0xf]
    %v190 = vld [vmem:[#allocation2 + $0x94] sm:$0xf]
    %v191 = vld [vmem:[#allocation2 + $0x98] sm:$0xf]
    %v192 = vld [vmem:[#allocation2 + $0x9c] sm:$0xf]
    %v193 = vld [vmem:[#allocation2 + $0xa0] sm:$0xf]
    %v194 = vld [vmem:[#allocation2 + $0xa4] sm:$0xf]
    %v195 = vld [vmem:[#allocation2 + $0xa8] sm:$0xf]
    %v196 = vld [vmem:[#allocation2 + $0xac] sm:$0xf]
    %v197 = vld [vmem:[#allocation2 + $0xb0] sm:$0xf]
    %v198 = vld [vmem:[#allocation2 + $0xb4] sm:$0xf]
    %v199 = vld [vmem:[#allocation2 + $0xb8] sm:$0xf]
    %v200 = vld [vmem:[#allocation2 + $0xbc] sm:$0xf]
    %v201 = vld [vmem:[#allocation2 + $0xc0] sm:$0xf]
    %v202 = vld [vmem:[#allocation2 + $0xc4] sm:$0xf]
    %v203 = vld [vmem:[#allocation2 + $0xc8] sm:$0xf]
    %v204 = vld [vmem:[#allocation2 + $0xcc] sm:$0xf]
    %v205 = vld [vmem:[#allocation2 + $0xd0] sm:$0xf]
    %v206 = vld [vmem:[#allocation2 + $0xd4] sm:$0xf]
    %v207 = vld [vmem:[#allocation2 + $0xd8] sm:$0xf]
    %v208 = vld [vmem:[#allocation2 + $0xdc] sm:$0xf]
    %v209 = vld [vmem:[#allocation2 + $0xe0] sm:$0xf]
    %v210 = vld [vmem:[#allocation2 + $0xe4] sm:$0xf]
    %v211 = vld [vmem:[#allocation2 + $0xe8] sm:$0xf]
    %v212 = vld [vmem:[#allocation2 + $0xec] sm:$0xf]
    %v213 = vld [vmem:[#allocation2 + $0xf0] sm:$0xf]
    %v214 = vld [vmem:[#allocation2 + $0xf4] sm:$0xf]
    %v215 = vld [vmem:[#allocation2 + $0xf8] sm:$0xf]
    %v216 = vld [vmem:[#allocation2 + $0xfc] sm:$0xf]
    %v217 = vld [vmem:[#allocation2 + $0x100] sm:$0xf]
    %v218 = vld [vmem:[#allocation2 + $0x104] sm:$0xf]
    %v219 = vld [vmem:[#allocation2 + $0x108] sm:$0xf]
    %v220 = vld [vmem:[#allocation2 + $0x10c] sm:$0xf]
    %v221 = vld [vmem:[#allocation2 + $0x110] sm:$0xf]
    %v222 = vld [vmem:[#allocation2 + $0x114] sm:$0xf]
    %v223 = vld [vmem:[#allocation2 + $0x118] sm:$0xf]
    %v224 = vld [vmem:[#allocation2 + $0x11c] sm:$0xf]
    %v225 = vld [vmem:[#allocation4] sm:$0x1]
    %v227 = vperm.slane %v225, 0
    %v337 = vunpack.c.l.b16 %v45
    %v338 = vunpack.c.h.b16 %v45
    %v339 = vunpack.c.l.b16 %v46
    %v340 = vunpack.c.h.b16 %v46
    %v341 = vunpack.c.l.b16 %v47
    %v342 = vunpack.c.l.b16 %v48
    %v343 = vunpack.c.h.b16 %v48
    %v344 = vunpack.c.l.b16 %v49
    %v345 = vunpack.c.h.b16 %v49
    %v346 = vunpack.c.l.b16 %v50
    %v347 = vunpack.c.l.b16 %v51
    %v348 = vunpack.c.h.b16 %v51
    %v349 = vunpack.c.l.b16 %v52
    %v350 = vunpack.c.h.b16 %v52
    %v351 = vunpack.c.l.b16 %v53
    %v352 = vunpack.c.l.b16 %v54
    %v353 = vunpack.c.h.b16 %v54
    %v354 = vunpack.c.l.b16 %v55
    %v355 = vunpack.c.h.b16 %v55
    %v356 = vunpack.c.l.b16 %v56
    %v357 = vunpack.c.l.b16 %v57
    %v358 = vunpack.c.h.b16 %v57
    %v359 = vunpack.c.l.b16 %v58
    %v360 = vunpack.c.h.b16 %v58
    %v361 = vunpack.c.l.b16 %v59
    %v362 = vunpack.c.l.b16 %v60
    %v363 = vunpack.c.h.b16 %v60
    %v364 = vunpack.c.l.b16 %v61
    %v365 = vunpack.c.h.b16 %v61
    %v366 = vunpack.c.l.b16 %v62
    %v367 = vunpack.c.l.b16 %v63
    %v368 = vunpack.c.h.b16 %v63
    %v369 = vunpack.c.l.b16 %v64
    %v370 = vunpack.c.h.b16 %v64
    %v371 = vunpack.c.l.b16 %v65
    %v372 = vunpack.c.l.b16 %v66
    %v373 = vunpack.c.h.b16 %v66
    %v374 = vunpack.c.l.b16 %v67
    %v375 = vunpack.c.h.b16 %v67
    %v376 = vunpack.c.l.b16 %v68
    %v377 = vunpack.c.l.b16 %v69
    %v378 = vunpack.c.h.b16 %v69
    %v379 = vunpack.c.l.b16 %v70
    %v380 = vunpack.c.h.b16 %v70
    %v381 = vunpack.c.l.b16 %v71
    %v382 = vunpack.c.l.b16 %v72
    %v383 = vunpack.c.h.b16 %v72
    %v384 = vunpack.c.l.b16 %v73
    %v385 = vunpack.c.h.b16 %v73
    %v386 = vunpack.c.l.b16 %v74
    %v387 = vunpack.c.l.b16 %v75
    %v388 = vunpack.c.h.b16 %v75
    %v389 = vunpack.c.l.b16 %v76
    %v390 = vunpack.c.h.b16 %v76
    %v391 = vunpack.c.l.b16 %v77
    %v392 = vunpack.c.l.b16 %v78
    %v393 = vunpack.c.h.b16 %v78
    %v394 = vunpack.c.l.b16 %v79
    %v395 = vunpack.c.h.b16 %v79
    %v396 = vunpack.c.l.b16 %v80
    %v397 = vunpack.c.l.b16 %v81
    %v398 = vunpack.c.h.b16 %v81
    %v399 = vunpack.c.l.b16 %v82
    %v400 = vunpack.c.h.b16 %v82
    %v401 = vunpack.c.l.b16 %v83
    %v402 = vunpack.c.l.b16 %v84
    %v403 = vunpack.c.h.b16 %v84
    %v404 = vunpack.c.l.b16 %v85
    %v405 = vunpack.c.h.b16 %v85
    %v406 = vunpack.c.l.b16 %v86
    %v407 = vunpack.c.l.b16 %v87
    %v408 = vunpack.c.h.b16 %v87
    %v409 = vunpack.c.l.b16 %v88
    %v410 = vunpack.c.h.b16 %v88
    %v411 = vunpack.c.l.b16 %v89
    %v412 = vunpack.c.l.b16 %v90
    %v413 = vunpack.c.h.b16 %v90
    %v414 = vunpack.c.l.b16 %v91
    %v415 = vunpack.c.h.b16 %v91
    %v416 = vunpack.c.l.b16 %v92
    %v417 = vunpack.c.l.b16 %v93
    %v418 = vunpack.c.h.b16 %v93
    %v419 = vunpack.c.l.b16 %v94
    %v420 = vunpack.c.h.b16 %v94
    %v421 = vunpack.c.l.b16 %v95
    %v422 = vunpack.c.l.b16 %v96
    %v423 = vunpack.c.h.b16 %v96
    %v424 = vunpack.c.l.b16 %v97
    %v425 = vunpack.c.h.b16 %v97
    %v426 = vunpack.c.l.b16 %v98
    %v427 = vunpack.c.l.b16 %v99
    %v428 = vunpack.c.h.b16 %v99
    %v429 = vunpack.c.l.b16 %v100
    %v430 = vunpack.c.h.b16 %v100
    %v431 = vunpack.c.l.b16 %v101
    %v432 = vunpack.c.l.b16 %v102
    %v433 = vunpack.c.h.b16 %v102
    %v434 = vunpack.c.l.b16 %v103
    %v435 = vunpack.c.h.b16 %v103
    %v436 = vunpack.c.l.b16 %v104
    %v437 = vunpack.c.l.b16 %v105
    %v438 = vunpack.c.h.b16 %v105
    %v439 = vunpack.c.l.b16 %v106
    %v440 = vunpack.c.h.b16 %v106
    %v441 = vunpack.c.l.b16 %v107
    %v442 = vunpack.c.l.b16 %v108
    %v443 = vunpack.c.h.b16 %v108
    %v444 = vunpack.c.l.b16 %v109
    %v445 = vunpack.c.h.b16 %v109
    %v446 = vunpack.c.l.b16 %v110
    %v447 = vunpack.c.l.b16 %v111
    %v448 = vunpack.c.h.b16 %v111
    %v449 = vunpack.c.l.b16 %v112
    %v450 = vunpack.c.h.b16 %v112
    %v451 = vunpack.c.l.b16 %v113
    %v452 = vunpack.c.l.b16 %v114
    %v453 = vunpack.c.h.b16 %v114
    %v454 = vunpack.c.l.b16 %v115
    %v455 = vunpack.c.h.b16 %v115
    %v456 = vunpack.c.l.b16 %v116
    %v457 = vunpack.c.l.b16 %v117
    %v458 = vunpack.c.h.b16 %v117
    %v459 = vunpack.c.l.b16 %v118
    %v460 = vunpack.c.h.b16 %v118
    %v461 = vunpack.c.l.b16 %v119
    %v462 = vunpack.c.l.b16 %v120
    %v463 = vunpack.c.h.b16 %v120
    %v464 = vunpack.c.l.b16 %v121
    %v465 = vunpack.c.h.b16 %v121
    %v466 = vunpack.c.l.b16 %v122
    %v467 = vunpack.c.l.b16 %v123
    %v468 = vunpack.c.h.b16 %v123
    %v469 = vunpack.c.l.b16 %v124
    %v470 = vunpack.c.h.b16 %v124
    %v471 = vunpack.c.l.b16 %v125
    %v472 = vunpack.c.l.b16 %v126
    %v473 = vunpack.c.h.b16 %v126
    %v474 = vunpack.c.l.b16 %v127
    %v475 = vunpack.c.h.b16 %v127
    %v476 = vunpack.c.l.b16 %v128
    %v477 = vunpack.c.l.b16 %v129
    %v478 = vunpack.c.h.b16 %v129
    %v479 = vunpack.c.l.b16 %v130
    %v480 = vunpack.c.h.b16 %v130
    %v481 = vunpack.c.l.b16 %v131
    %v482 = vunpack.c.l.b16 %v132
    %v483 = vunpack.c.h.b16 %v132
    %v484 = vunpack.c.l.b16 %v133
    %v485 = vunpack.c.h.b16 %v133
    %v486 = vunpack.c.l.b16 %v134
    %v487 = vunpack.c.l.b16 %v135
    %v488 = vunpack.c.h.b16 %v135
    %v489 = vunpack.c.l.b16 %v136
    %v490 = vunpack.c.h.b16 %v136
    %v491 = vunpack.c.l.b16 %v137
    %v492 = vunpack.c.l.b16 %v138
    %v493 = vunpack.c.h.b16 %v138
    %v494 = vunpack.c.l.b16 %v139
    %v495 = vunpack.c.h.b16 %v139
    %v496 = vunpack.c.l.b16 %v140
    %v497 = vunpack.c.l.b16 %v141
    %v498 = vunpack.c.h.b16 %v141
    %v499 = vunpack.c.l.b16 %v142
    %v500 = vunpack.c.h.b16 %v142
    %v501 = vunpack.c.l.b16 %v143
    %v502 = vunpack.c.l.b16 %v144
    %v503 = vunpack.c.h.b16 %v144
    %v504 = vunpack.c.l.b16 %v145
    %v505 = vunpack.c.h.b16 %v145
    %v506 = vunpack.c.l.b16 %v146
    %v507 = vunpack.c.l.b16 %v147
    %v508 = vunpack.c.h.b16 %v147
    %v509 = vunpack.c.l.b16 %v148
    %v510 = vunpack.c.h.b16 %v148
    %v511 = vunpack.c.l.b16 %v149
    %v512 = vunpack.c.l.b16 %v150
    %v513 = vunpack.c.h.b16 %v150
    %v514 = vunpack.c.l.b16 %v151
    %v515 = vunpack.c.h.b16 %v151
    %v516 = vunpack.c.l.b16 %v152
    %v517 = vpack.c.b16 %v342, %v337
    %v518 = vpack.c.b16 %v343, %v338
    %v519 = vpack.c.b16 %v344, %v339
    %v520 = vpack.c.b16 %v345, %v340
    %v521 = vpack.c.b16 %v346, %v341
    %v522 = vpack.c.b16 %v352, %v347
    %v523 = vpack.c.b16 %v353, %v348
    %v524 = vpack.c.b16 %v354, %v349
    %v525 = vpack.c.b16 %v355, %v350
    %v526 = vpack.c.b16 %v356, %v351
    %v527 = vpack.c.b16 %v362, %v357
    %v528 = vpack.c.b16 %v363, %v358
    %v529 = vpack.c.b16 %v364, %v359
    %v530 = vpack.c.b16 %v365, %v360
    %v531 = vpack.c.b16 %v366, %v361
    %v532 = vpack.c.b16 %v372, %v367
    %v533 = vpack.c.b16 %v373, %v368
    %v534 = vpack.c.b16 %v374, %v369
    %v535 = vpack.c.b16 %v375, %v370
    %v536 = vpack.c.b16 %v376, %v371
    %v537 = vpack.c.b16 %v382, %v377
    %v538 = vpack.c.b16 %v383, %v378
    %v539 = vpack.c.b16 %v384, %v379
    %v540 = vpack.c.b16 %v385, %v380
    %v541 = vpack.c.b16 %v386, %v381
    %v542 = vpack.c.b16 %v392, %v387
    %v543 = vpack.c.b16 %v393, %v388
    %v544 = vpack.c.b16 %v394, %v389
    %v545 = vpack.c.b16 %v395, %v390
    %v546 = vpack.c.b16 %v396, %v391
    %v547 = vpack.c.b16 %v402, %v397
    %v548 = vpack.c.b16 %v403, %v398
    %v549 = vpack.c.b16 %v404, %v399
    %v550 = vpack.c.b16 %v405, %v400
    %v551 = vpack.c.b16 %v406, %v401
    %v552 = vpack.c.b16 %v412, %v407
    %v553 = vpack.c.b16 %v413, %v408
    %v554 = vpack.c.b16 %v414, %v409
    %v555 = vpack.c.b16 %v415, %v410
    %v556 = vpack.c.b16 %v416, %v411
    %v557 = vpack.c.b16 %v422, %v417
    %v558 = vpack.c.b16 %v423, %v418
    %v559 = vpack.c.b16 %v424, %v419
    %v560 = vpack.c.b16 %v425, %v420
    %v561 = vpack.c.b16 %v426, %v421
    %v562 = vpack.c.b16 %v432, %v427
    %v563 = vpack.c.b16 %v433, %v428
    %v564 = vpack.c.b16 %v434, %v429
    %v565 = vpack.c.b16 %v435, %v430
    %v566 = vpack.c.b16 %v436, %v431
    %v567 = vpack.c.b16 %v442, %v437
    %v568 = vpack.c.b16 %v443, %v438
    %v569 = vpack.c.b16 %v444, %v439
    %v570 = vpack.c.b16 %v445, %v440
    %v571 = vpack.c.b16 %v446, %v441
    %v572 = vpack.c.b16 %v452, %v447
    %v573 = vpack.c.b16 %v453, %v448
    %v574 = vpack.c.b16 %v454, %v449
    %v575 = vpack.c.b16 %v455, %v450
    %v576 = vpack.c.b16 %v456, %v451
    %v577 = vpack.c.b16 %v462, %v457
    %v578 = vpack.c.b16 %v463, %v458
    %v579 = vpack.c.b16 %v464, %v459
    %v580 = vpack.c.b16 %v465, %v460
    %v581 = vpack.c.b16 %v466, %v461
    %v582 = vpack.c.b16 %v472, %v467
    %v583 = vpack.c.b16 %v473, %v468
    %v584 = vpack.c.b16 %v474, %v469
    %v585 = vpack.c.b16 %v475, %v470
    %v586 = vpack.c.b16 %v476, %v471
    %v587 = vpack.c.b16 %v482, %v477
    %v588 = vpack.c.b16 %v483, %v478
    %v589 = vpack.c.b16 %v484, %v479
    %v590 = vpack.c.b16 %v485, %v480
    %v591 = vpack.c.b16 %v486, %v481
    %v592 = vpack.c.b16 %v492, %v487
    %v593 = vpack.c.b16 %v493, %v488
    %v594 = vpack.c.b16 %v494, %v489
    %v595 = vpack.c.b16 %v495, %v490
    %v596 = vpack.c.b16 %v496, %v491
    %v597 = vpack.c.b16 %v502, %v497
    %v598 = vpack.c.b16 %v503, %v498
    %v599 = vpack.c.b16 %v504, %v499
    %v600 = vpack.c.b16 %v505, %v500
    %v601 = vpack.c.b16 %v506, %v501
    %v602 = vpack.c.b16 %v512, %v507
    %v603 = vpack.c.b16 %v513, %v508
    %v604 = vpack.c.b16 %v514, %v509
    %v605 = vpack.c.b16 %v515, %v510
    %v606 = vpack.c.b16 %v516, %v511
    %v751 = vunpack.c.l.b16 %v153
    %v752 = vunpack.c.l.b16 %v154
    %v753 = vunpack.c.l.b16 %v155
    %v754 = vunpack.c.l.b16 %v156
    %v755 = vunpack.c.l.b16 %v157
    %v756 = vunpack.c.l.b16 %v158
    %v757 = vunpack.c.l.b16 %v159
    %v758 = vunpack.c.l.b16 %v160
    %v759 = vunpack.c.l.b16 %v161
    %v760 = vunpack.c.l.b16 %v162
    %v761 = vunpack.c.l.b16 %v163
    %v762 = vunpack.c.l.b16 %v164
    %v763 = vunpack.c.l.b16 %v165
    %v764 = vunpack.c.l.b16 %v166
    %v765 = vunpack.c.l.b16 %v167
    %v766 = vunpack.c.l.b16 %v168
    %v767 = vunpack.c.l.b16 %v169
    %v768 = vunpack.c.l.b16 %v170
    %v769 = vunpack.c.l.b16 %v171
    %v770 = vunpack.c.l.b16 %v172
    %v771 = vunpack.c.l.b16 %v173
    %v772 = vunpack.c.l.b16 %v174
    %v773 = vunpack.c.l.b16 %v175
    %v774 = vunpack.c.l.b16 %v176
    %v775 = vunpack.c.l.b16 %v177
    %v776 = vunpack.c.l.b16 %v178
    %v777 = vunpack.c.l.b16 %v179
    %v778 = vunpack.c.l.b16 %v180
    %v779 = vunpack.c.l.b16 %v181
    %v780 = vunpack.c.l.b16 %v182
    %v781 = vunpack.c.l.b16 %v183
    %v782 = vunpack.c.l.b16 %v184
    %v783 = vunpack.c.l.b16 %v185
    %v784 = vunpack.c.l.b16 %v186
    %v785 = vunpack.c.l.b16 %v187
    %v786 = vunpack.c.l.b16 %v188
    %v787 = vunpack.c.l.b16 %v189
    %v788 = vunpack.c.l.b16 %v190
    %v789 = vunpack.c.l.b16 %v191
    %v790 = vunpack.c.l.b16 %v192
    %v791 = vunpack.c.l.b16 %v193
    %v792 = vunpack.c.l.b16 %v194
    %v793 = vunpack.c.l.b16 %v195
    %v794 = vunpack.c.l.b16 %v196
    %v795 = vunpack.c.l.b16 %v197
    %v796 = vunpack.c.l.b16 %v198
    %v797 = vunpack.c.l.b16 %v199
    %v798 = vunpack.c.l.b16 %v200
    %v799 = vunpack.c.l.b16 %v201
    %v800 = vunpack.c.l.b16 %v202
    %v801 = vunpack.c.l.b16 %v203
    %v802 = vunpack.c.l.b16 %v204
    %v803 = vunpack.c.l.b16 %v205
    %v804 = vunpack.c.l.b16 %v206
    %v805 = vunpack.c.l.b16 %v207
    %v806 = vunpack.c.l.b16 %v208
    %v807 = vunpack.c.l.b16 %v209
    %v808 = vunpack.c.l.b16 %v210
    %v809 = vunpack.c.l.b16 %v211
    %v810 = vunpack.c.l.b16 %v212
    %v811 = vunpack.c.l.b16 %v213
    %v812 = vunpack.c.l.b16 %v214
    %v813 = vunpack.c.l.b16 %v215
    %v814 = vunpack.c.l.b16 %v216
    %v815 = vunpack.c.l.b16 %v217
    %v816 = vunpack.c.l.b16 %v218
    %v817 = vunpack.c.l.b16 %v219
    %v818 = vunpack.c.l.b16 %v220
    %v819 = vunpack.c.l.b16 %v221
    %v820 = vunpack.c.l.b16 %v222
    %v821 = vunpack.c.l.b16 %v223
    %v822 = vunpack.c.l.b16 %v224
    %v823 = vpack.c.b16 %v752, %v751
    %v824 = vpack.c.b16 %v754, %v753
    %v825 = vpack.c.b16 %v756, %v755
    %v826 = vpack.c.b16 %v758, %v757
    %v827 = vpack.c.b16 %v760, %v759
    %v828 = vpack.c.b16 %v762, %v761
    %v829 = vpack.c.b16 %v764, %v763
    %v830 = vpack.c.b16 %v766, %v765
    %v831 = vpack.c.b16 %v768, %v767
    %v832 = vpack.c.b16 %v770, %v769
    %v833 = vpack.c.b16 %v772, %v771
    %v834 = vpack.c.b16 %v774, %v773
    %v835 = vpack.c.b16 %v776, %v775
    %v836 = vpack.c.b16 %v778, %v777
    %v837 = vpack.c.b16 %v780, %v779
    %v838 = vpack.c.b16 %v782, %v781
    %v839 = vpack.c.b16 %v784, %v783
    %v840 = vpack.c.b16 %v786, %v785
    %v841 = vpack.c.b16 %v788, %v787
    %v842 = vpack.c.b16 %v790, %v789
    %v843 = vpack.c.b16 %v792, %v791
    %v844 = vpack.c.b16 %v794, %v793
    %v845 = vpack.c.b16 %v796, %v795
    %v846 = vpack.c.b16 %v798, %v797
    %v847 = vpack.c.b16 %v800, %v799
    %v848 = vpack.c.b16 %v802, %v801
    %v849 = vpack.c.b16 %v804, %v803
    %v850 = vpack.c.b16 %v806, %v805
    %v851 = vpack.c.b16 %v808, %v807
    %v852 = vpack.c.b16 %v810, %v809
    %v853 = vpack.c.b16 %v812, %v811
    %v854 = vpack.c.b16 %v814, %v813
    %v855 = vpack.c.b16 %v816, %v815
    %v856 = vpack.c.b16 %v818, %v817
    %v857 = vpack.c.b16 %v820, %v819
    %v858 = vpack.c.b16 %v822, %v821
    %vm895 = vcmask 523264
    %v897 = vsel %vm895, %v521, 0
    %v900 = vsel %vm895, %v526, 0
    %v903 = vsel %vm895, %v531, 0
    %v906 = vsel %vm895, %v536, 0
    %v909 = vsel %vm895, %v541, 0
    %v912 = vsel %vm895, %v546, 0
    %v915 = vsel %vm895, %v551, 0
    %v918 = vsel %vm895, %v556, 0
    %v921 = vsel %vm895, %v561, 0
    %v924 = vsel %vm895, %v566, 0
    %v927 = vsel %vm895, %v571, 0
    %v930 = vsel %vm895, %v576, 0
    %v933 = vsel %vm895, %v581, 0
    %v936 = vsel %vm895, %v586, 0
    %v939 = vsel %vm895, %v591, 0
    %v942 = vsel %vm895, %v596, 0
    %v945 = vsel %vm895, %v601, 0
    %v948 = vsel %vm895, %v606, 0
    %950 = vmatpush.bf16.msra.mxu0 %v830
    %951 = vmatpush.bf16.msra.mxu0 %v829
    %952 = vmatpush.bf16.msra.mxu0 %v828
    %953 = vmatpush.bf16.msra.mxu0 %v827
    %954 = vmatpush.bf16.msra.mxu0 %v826
    %955 = vmatpush.bf16.msra.mxu0 %v825
    %956 = vmatpush.bf16.msra.mxu0 %v824
    %957 = vmatpush.bf16.msra.mxu0 %v823
    %958 = vmatmul.bf16.gmra.mxu0 %v517
    %v959 = vpop.f32.mrf.mxu0
    %v960 = vadd.f32 %v227, %v959
    %v961 = vpop.f32.mrf.mxu0
    %v962 = vadd.f32 %v227, %v961
    %963 = vmatmul.bf16.gmra.mxu0 %v522
    %v964 = vpop.f32.mrf.mxu0
    %v965 = vadd.f32 %v227, %v964
    %v966 = vpop.f32.mrf.mxu0
    %v967 = vadd.f32 %v227, %v966
    %968 = vmatmul.bf16.gmra.mxu0 %v527
    %v969 = vpop.f32.mrf.mxu0
    %v970 = vadd.f32 %v227, %v969
    %v971 = vpop.f32.mrf.mxu0
    %v972 = vadd.f32 %v227, %v971
    %973 = vmatmul.bf16.gmra.mxu0 %v532
    %v974 = vpop.f32.mrf.mxu0
    %v975 = vadd.f32 %v227, %v974
    %v976 = vpop.f32.mrf.mxu0
    %v977 = vadd.f32 %v227, %v976
    %978 = vmatmul.bf16.gmra.mxu0 %v537
    %v979 = vpop.f32.mrf.mxu0
    %v980 = vadd.f32 %v227, %v979
    %v981 = vpop.f32.mrf.mxu0
    %v982 = vadd.f32 %v227, %v981
    %983 = vmatmul.bf16.gmra.mxu0 %v542
    %v984 = vpop.f32.mrf.mxu0
    %v985 = vadd.f32 %v227, %v984
    %v986 = vpop.f32.mrf.mxu0
    %v987 = vadd.f32 %v227, %v986
    %988 = vmatmul.bf16.gmra.mxu0 %v547
    %v989 = vpop.f32.mrf.mxu0
    %v990 = vadd.f32 %v227, %v989
    %v991 = vpop.f32.mrf.mxu0
    %v992 = vadd.f32 %v227, %v991
    %993 = vmatmul.bf16.gmra.mxu0 %v552
    %v994 = vpop.f32.mrf.mxu0
    %v995 = vadd.f32 %v227, %v994
    %v996 = vpop.f32.mrf.mxu0
    %v997 = vadd.f32 %v227, %v996
    %998 = vmatmul.bf16.gmra.mxu0 %v557
    %v999 = vpop.f32.mrf.mxu0
    %v1000 = vadd.f32 %v227, %v999
    %v1001 = vpop.f32.mrf.mxu0
    %v1002 = vadd.f32 %v227, %v1001
    %1003 = vmatmul.bf16.gmra.mxu0 %v562
    %v1004 = vpop.f32.mrf.mxu0
    %v1005 = vadd.f32 %v227, %v1004
    %v1006 = vpop.f32.mrf.mxu0
    %v1007 = vadd.f32 %v227, %v1006
    %1008 = vmatmul.bf16.gmra.mxu0 %v567
    %v1009 = vpop.f32.mrf.mxu0
    %v1010 = vadd.f32 %v227, %v1009
    %v1011 = vpop.f32.mrf.mxu0
    %v1012 = vadd.f32 %v227, %v1011
    %1013 = vmatmul.bf16.gmra.mxu0 %v572
    %v1014 = vpop.f32.mrf.mxu0
    %v1015 = vadd.f32 %v227, %v1014
    %v1016 = vpop.f32.mrf.mxu0
    %v1017 = vadd.f32 %v227, %v1016
    %1018 = vmatmul.bf16.gmra.mxu0 %v577
    %v1019 = vpop.f32.mrf.mxu0
    %v1020 = vadd.f32 %v227, %v1019
    %v1021 = vpop.f32.mrf.mxu0
    %v1022 = vadd.f32 %v227, %v1021
    %1023 = vmatmul.bf16.gmra.mxu0 %v582
    %v1024 = vpop.f32.mrf.mxu0
    %v1025 = vadd.f32 %v227, %v1024
    %v1026 = vpop.f32.mrf.mxu0
    %v1027 = vadd.f32 %v227, %v1026
    %1028 = vmatmul.bf16.gmra.mxu0 %v587
    %v1029 = vpop.f32.mrf.mxu0
    %v1030 = vadd.f32 %v227, %v1029
    %v1031 = vpop.f32.mrf.mxu0
    %v1032 = vadd.f32 %v227, %v1031
    %1033 = vmatmul.bf16.gmra.mxu0 %v592
    %v1034 = vpop.f32.mrf.mxu0
    %v1035 = vadd.f32 %v227, %v1034
    %v1036 = vpop.f32.mrf.mxu0
    %v1037 = vadd.f32 %v227, %v1036
    %1038 = vmatmul.bf16.gmra.mxu0 %v597
    %v1039 = vpop.f32.mrf.mxu0
    %v1040 = vadd.f32 %v227, %v1039
    %v1041 = vpop.f32.mrf.mxu0
    %v1042 = vadd.f32 %v227, %v1041
    %1043 = vmatmul.bf16.gmra.mxu0 %v602
    %v1044 = vpop.f32.mrf.mxu0
    %v1045 = vadd.f32 %v227, %v1044
    %v1046 = vpop.f32.mrf.mxu0
    %v1047 = vadd.f32 %v227, %v1046
    %1048 = vdwg.mxu0
    %1049 = vmatpush.bf16.msra.mxu0 %v838
    %1050 = vmatpush.bf16.msra.mxu0 %v837
    %1051 = vmatpush.bf16.msra.mxu0 %v836
    %1052 = vmatpush.bf16.msra.mxu0 %v835
    %1053 = vmatpush.bf16.msra.mxu0 %v834
    %1054 = vmatpush.bf16.msra.mxu0 %v833
    %1055 = vmatpush.bf16.msra.mxu0 %v832
    %1056 = vmatpush.bf16.msra.mxu0 %v831
    %1057 = vmatmul.bf16.gmra.mxu0 %v518
    %v1058 = vpop.f32.mrf.mxu0
    %v1059 = vadd.f32 %v960, %v1058
    %v1060 = vpop.f32.mrf.mxu0
    %v1061 = vadd.f32 %v962, %v1060
    %1062 = vmatmul.bf16.gmra.mxu0 %v523
    %v1063 = vpop.f32.mrf.mxu0
    %v1064 = vadd.f32 %v965, %v1063
    %v1065 = vpop.f32.mrf.mxu0
    %v1066 = vadd.f32 %v967, %v1065
    %1067 = vmatmul.bf16.gmra.mxu0 %v528
    %v1068 = vpop.f32.mrf.mxu0
    %v1069 = vadd.f32 %v970, %v1068
    %v1070 = vpop.f32.mrf.mxu0
    %v1071 = vadd.f32 %v972, %v1070
    %1072 = vmatmul.bf16.gmra.mxu0 %v533
    %v1073 = vpop.f32.mrf.mxu0
    %v1074 = vadd.f32 %v975, %v1073
    %v1075 = vpop.f32.mrf.mxu0
    %v1076 = vadd.f32 %v977, %v1075
    %1077 = vmatmul.bf16.gmra.mxu0 %v538
    %v1078 = vpop.f32.mrf.mxu0
    %v1079 = vadd.f32 %v980, %v1078
    %v1080 = vpop.f32.mrf.mxu0
    %v1081 = vadd.f32 %v982, %v1080
    %1082 = vmatmul.bf16.gmra.mxu0 %v543
    %v1083 = vpop.f32.mrf.mxu0
    %v1084 = vadd.f32 %v985, %v1083
    %v1085 = vpop.f32.mrf.mxu0
    %v1086 = vadd.f32 %v987, %v1085
    %1087 = vmatmul.bf16.gmra.mxu0 %v548
    %v1088 = vpop.f32.mrf.mxu0
    %v1089 = vadd.f32 %v990, %v1088
    %v1090 = vpop.f32.mrf.mxu0
    %v1091 = vadd.f32 %v992, %v1090
    %1092 = vmatmul.bf16.gmra.mxu0 %v553
    %v1093 = vpop.f32.mrf.mxu0
    %v1094 = vadd.f32 %v995, %v1093
    %v1095 = vpop.f32.mrf.mxu0
    %v1096 = vadd.f32 %v997, %v1095
    %1097 = vmatmul.bf16.gmra.mxu0 %v558
    %v1098 = vpop.f32.mrf.mxu0
    %v1099 = vadd.f32 %v1000, %v1098
    %v1100 = vpop.f32.mrf.mxu0
    %v1101 = vadd.f32 %v1002, %v1100
    %1102 = vmatmul.bf16.gmra.mxu0 %v563
    %v1103 = vpop.f32.mrf.mxu0
    %v1104 = vadd.f32 %v1005, %v1103
    %v1105 = vpop.f32.mrf.mxu0
    %v1106 = vadd.f32 %v1007, %v1105
    %1107 = vmatmul.bf16.gmra.mxu0 %v568
    %v1108 = vpop.f32.mrf.mxu0
    %v1109 = vadd.f32 %v1010, %v1108
    %v1110 = vpop.f32.mrf.mxu0
    %v1111 = vadd.f32 %v1012, %v1110
    %1112 = vmatmul.bf16.gmra.mxu0 %v573
    %v1113 = vpop.f32.mrf.mxu0
    %v1114 = vadd.f32 %v1015, %v1113
    %v1115 = vpop.f32.mrf.mxu0
    %v1116 = vadd.f32 %v1017, %v1115
    %1117 = vmatmul.bf16.gmra.mxu0 %v578
    %v1118 = vpop.f32.mrf.mxu0
    %v1119 = vadd.f32 %v1020, %v1118
    %v1120 = vpop.f32.mrf.mxu0
    %v1121 = vadd.f32 %v1022, %v1120
    %1122 = vmatmul.bf16.gmra.mxu0 %v583
    %v1123 = vpop.f32.mrf.mxu0
    %v1124 = vadd.f32 %v1025, %v1123
    %v1125 = vpop.f32.mrf.mxu0
    %v1126 = vadd.f32 %v1027, %v1125
    %1127 = vmatmul.bf16.gmra.mxu0 %v588
    %v1128 = vpop.f32.mrf.mxu0
    %v1129 = vadd.f32 %v1030, %v1128
    %v1130 = vpop.f32.mrf.mxu0
    %v1131 = vadd.f32 %v1032, %v1130
    %1132 = vmatmul.bf16.gmra.mxu0 %v593
    %v1133 = vpop.f32.mrf.mxu0
    %v1134 = vadd.f32 %v1035, %v1133
    %v1135 = vpop.f32.mrf.mxu0
    %v1136 = vadd.f32 %v1037, %v1135
    %1137 = vmatmul.bf16.gmra.mxu0 %v598
    %v1138 = vpop.f32.mrf.mxu0
    %v1139 = vadd.f32 %v1040, %v1138
    %v1140 = vpop.f32.mrf.mxu0
    %v1141 = vadd.f32 %v1042, %v1140
    %1142 = vmatmul.bf16.gmra.mxu0 %v603
    %v1143 = vpop.f32.mrf.mxu0
    %v1144 = vadd.f32 %v1045, %v1143
    %v1145 = vpop.f32.mrf.mxu0
    %v1146 = vadd.f32 %v1047, %v1145
    %1147 = vdwg.mxu0
    %1148 = vmatpush.bf16.msra.mxu0 %v846
    %1149 = vmatpush.bf16.msra.mxu0 %v845
    %1150 = vmatpush.bf16.msra.mxu0 %v844
    %1151 = vmatpush.bf16.msra.mxu0 %v843
    %1152 = vmatpush.bf16.msra.mxu0 %v842
    %1153 = vmatpush.bf16.msra.mxu0 %v841
    %1154 = vmatpush.bf16.msra.mxu0 %v840
    %1155 = vmatpush.bf16.msra.mxu0 %v839
    %1156 = vmatmul.bf16.gmra.mxu0 %v519
    %v1157 = vpop.f32.mrf.mxu0
    %v1158 = vadd.f32 %v1059, %v1157
    %v1159 = vpop.f32.mrf.mxu0
    %v1160 = vadd.f32 %v1061, %v1159
    %1161 = vmatmul.bf16.gmra.mxu0 %v524
    %v1162 = vpop.f32.mrf.mxu0
    %v1163 = vadd.f32 %v1064, %v1162
    %v1164 = vpop.f32.mrf.mxu0
    %v1165 = vadd.f32 %v1066, %v1164
    %1166 = vmatmul.bf16.gmra.mxu0 %v529
    %v1167 = vpop.f32.mrf.mxu0
    %v1168 = vadd.f32 %v1069, %v1167
    %v1169 = vpop.f32.mrf.mxu0
    %v1170 = vadd.f32 %v1071, %v1169
    %1171 = vmatmul.bf16.gmra.mxu0 %v534
    %v1172 = vpop.f32.mrf.mxu0
    %v1173 = vadd.f32 %v1074, %v1172
    %v1174 = vpop.f32.mrf.mxu0
    %v1175 = vadd.f32 %v1076, %v1174
    %1176 = vmatmul.bf16.gmra.mxu0 %v539
    %v1177 = vpop.f32.mrf.mxu0
    %v1178 = vadd.f32 %v1079, %v1177
    %v1179 = vpop.f32.mrf.mxu0
    %v1180 = vadd.f32 %v1081, %v1179
    %1181 = vmatmul.bf16.gmra.mxu0 %v544
    %v1182 = vpop.f32.mrf.mxu0
    %v1183 = vadd.f32 %v1084, %v1182
    %v1184 = vpop.f32.mrf.mxu0
    %v1185 = vadd.f32 %v1086, %v1184
    %1186 = vmatmul.bf16.gmra.mxu0 %v549
    %v1187 = vpop.f32.mrf.mxu0
    %v1188 = vadd.f32 %v1089, %v1187
    %v1189 = vpop.f32.mrf.mxu0
    %v1190 = vadd.f32 %v1091, %v1189
    %1191 = vmatmul.bf16.gmra.mxu0 %v554
    %v1192 = vpop.f32.mrf.mxu0
    %v1193 = vadd.f32 %v1094, %v1192
    %v1194 = vpop.f32.mrf.mxu0
    %v1195 = vadd.f32 %v1096, %v1194
    %1196 = vmatmul.bf16.gmra.mxu0 %v559
    %v1197 = vpop.f32.mrf.mxu0
    %v1198 = vadd.f32 %v1099, %v1197
    %v1199 = vpop.f32.mrf.mxu0
    %v1200 = vadd.f32 %v1101, %v1199
    %1201 = vmatmul.bf16.gmra.mxu0 %v564
    %v1202 = vpop.f32.mrf.mxu0
    %v1203 = vadd.f32 %v1104, %v1202
    %v1204 = vpop.f32.mrf.mxu0
    %v1205 = vadd.f32 %v1106, %v1204
    %1206 = vmatmul.bf16.gmra.mxu0 %v569
    %v1207 = vpop.f32.mrf.mxu0
    %v1208 = vadd.f32 %v1109, %v1207
    %v1209 = vpop.f32.mrf.mxu0
    %v1210 = vadd.f32 %v1111, %v1209
    %1211 = vmatmul.bf16.gmra.mxu0 %v574
    %v1212 = vpop.f32.mrf.mxu0
    %v1213 = vadd.f32 %v1114, %v1212
    %v1214 = vpop.f32.mrf.mxu0
    %v1215 = vadd.f32 %v1116, %v1214
    %1216 = vmatmul.bf16.gmra.mxu0 %v579
    %v1217 = vpop.f32.mrf.mxu0
    %v1218 = vadd.f32 %v1119, %v1217
    %v1219 = vpop.f32.mrf.mxu0
    %v1220 = vadd.f32 %v1121, %v1219
    %1221 = vmatmul.bf16.gmra.mxu0 %v584
    %v1222 = vpop.f32.mrf.mxu0
    %v1223 = vadd.f32 %v1124, %v1222
    %v1224 = vpop.f32.mrf.mxu0
    %v1225 = vadd.f32 %v1126, %v1224
    %1226 = vmatmul.bf16.gmra.mxu0 %v589
    %v1227 = vpop.f32.mrf.mxu0
    %v1228 = vadd.f32 %v1129, %v1227
    %v1229 = vpop.f32.mrf.mxu0
    %v1230 = vadd.f32 %v1131, %v1229
    %1231 = vmatmul.bf16.gmra.mxu0 %v594
    %v1232 = vpop.f32.mrf.mxu0
    %v1233 = vadd.f32 %v1134, %v1232
    %v1234 = vpop.f32.mrf.mxu0
    %v1235 = vadd.f32 %v1136, %v1234
    %1236 = vmatmul.bf16.gmra.mxu0 %v599
    %v1237 = vpop.f32.mrf.mxu0
    %v1238 = vadd.f32 %v1139, %v1237
    %v1239 = vpop.f32.mrf.mxu0
    %v1240 = vadd.f32 %v1141, %v1239
    %1241 = vmatmul.bf16.gmra.mxu0 %v604
    %v1242 = vpop.f32.mrf.mxu0
    %v1243 = vadd.f32 %v1144, %v1242
    %v1244 = vpop.f32.mrf.mxu0
    %v1245 = vadd.f32 %v1146, %v1244
    %1246 = vdwg.mxu0
    %1247 = vmatpush.bf16.msra.mxu0 %v854
    %1248 = vmatpush.bf16.msra.mxu0 %v853
    %1249 = vmatpush.bf16.msra.mxu0 %v852
    %1250 = vmatpush.bf16.msra.mxu0 %v851
    %1251 = vmatpush.bf16.msra.mxu0 %v850
    %1252 = vmatpush.bf16.msra.mxu0 %v849
    %1253 = vmatpush.bf16.msra.mxu0 %v848
    %1254 = vmatpush.bf16.msra.mxu0 %v847
    %1255 = vmatmul.bf16.gmra.mxu0 %v520
    %v1256 = vpop.f32.mrf.mxu0
    %v1257 = vadd.f32 %v1158, %v1256
    %v1258 = vpop.f32.mrf.mxu0
    %v1259 = vadd.f32 %v1160, %v1258
    %1260 = vmatmul.bf16.gmra.mxu0 %v525
    %v1261 = vpop.f32.mrf.mxu0
    %v1262 = vadd.f32 %v1163, %v1261
    %v1263 = vpop.f32.mrf.mxu0
    %v1264 = vadd.f32 %v1165, %v1263
    %1265 = vmatmul.bf16.gmra.mxu0 %v530
    %v1266 = vpop.f32.mrf.mxu0
    %v1267 = vadd.f32 %v1168, %v1266
    %v1268 = vpop.f32.mrf.mxu0
    %v1269 = vadd.f32 %v1170, %v1268
    %1270 = vmatmul.bf16.gmra.mxu0 %v535
    %v1271 = vpop.f32.mrf.mxu0
    %v1272 = vadd.f32 %v1173, %v1271
    %v1273 = vpop.f32.mrf.mxu0
    %v1274 = vadd.f32 %v1175, %v1273
    %1275 = vmatmul.bf16.gmra.mxu0 %v540
    %v1276 = vpop.f32.mrf.mxu0
    %v1277 = vadd.f32 %v1178, %v1276
    %v1278 = vpop.f32.mrf.mxu0
    %v1279 = vadd.f32 %v1180, %v1278
    %1280 = vmatmul.bf16.gmra.mxu0 %v545
    %v1281 = vpop.f32.mrf.mxu0
    %v1282 = vadd.f32 %v1183, %v1281
    %v1283 = vpop.f32.mrf.mxu0
    %v1284 = vadd.f32 %v1185, %v1283
    %1285 = vmatmul.bf16.gmra.mxu0 %v550
    %v1286 = vpop.f32.mrf.mxu0
    %v1287 = vadd.f32 %v1188, %v1286
    %v1288 = vpop.f32.mrf.mxu0
    %v1289 = vadd.f32 %v1190, %v1288
    %1290 = vmatmul.bf16.gmra.mxu0 %v555
    %v1291 = vpop.f32.mrf.mxu0
    %v1292 = vadd.f32 %v1193, %v1291
    %v1293 = vpop.f32.mrf.mxu0
    %v1294 = vadd.f32 %v1195, %v1293
    %1295 = vmatmul.bf16.gmra.mxu0 %v560
    %v1296 = vpop.f32.mrf.mxu0
    %v1297 = vadd.f32 %v1198, %v1296
    %v1298 = vpop.f32.mrf.mxu0
    %v1299 = vadd.f32 %v1200, %v1298
    %1300 = vmatmul.bf16.gmra.mxu0 %v565
    %v1301 = vpop.f32.mrf.mxu0
    %v1302 = vadd.f32 %v1203, %v1301
    %v1303 = vpop.f32.mrf.mxu0
    %v1304 = vadd.f32 %v1205, %v1303
    %1305 = vmatmul.bf16.gmra.mxu0 %v570
    %v1306 = vpop.f32.mrf.mxu0
    %v1307 = vadd.f32 %v1208, %v1306
    %v1308 = vpop.f32.mrf.mxu0
    %v1309 = vadd.f32 %v1210, %v1308
    %1310 = vmatmul.bf16.gmra.mxu0 %v575
    %v1311 = vpop.f32.mrf.mxu0
    %v1312 = vadd.f32 %v1213, %v1311
    %v1313 = vpop.f32.mrf.mxu0
    %v1314 = vadd.f32 %v1215, %v1313
    %1315 = vmatmul.bf16.gmra.mxu0 %v580
    %v1316 = vpop.f32.mrf.mxu0
    %v1317 = vadd.f32 %v1218, %v1316
    %v1318 = vpop.f32.mrf.mxu0
    %v1319 = vadd.f32 %v1220, %v1318
    %1320 = vmatmul.bf16.gmra.mxu0 %v585
    %v1321 = vpop.f32.mrf.mxu0
    %v1322 = vadd.f32 %v1223, %v1321
    %v1323 = vpop.f32.mrf.mxu0
    %v1324 = vadd.f32 %v1225, %v1323
    %1325 = vmatmul.bf16.gmra.mxu0 %v590
    %v1326 = vpop.f32.mrf.mxu0
    %v1327 = vadd.f32 %v1228, %v1326
    %v1328 = vpop.f32.mrf.mxu0
    %v1329 = vadd.f32 %v1230, %v1328
    %1330 = vmatmul.bf16.gmra.mxu0 %v595
    %v1331 = vpop.f32.mrf.mxu0
    %v1332 = vadd.f32 %v1233, %v1331
    %v1333 = vpop.f32.mrf.mxu0
    %v1334 = vadd.f32 %v1235, %v1333
    %1335 = vmatmul.bf16.gmra.mxu0 %v600
    %v1336 = vpop.f32.mrf.mxu0
    %v1337 = vadd.f32 %v1238, %v1336
    %v1338 = vpop.f32.mrf.mxu0
    %v1339 = vadd.f32 %v1240, %v1338
    %1340 = vmatmul.bf16.gmra.mxu0 %v605
    %v1341 = vpop.f32.mrf.mxu0
    %v1342 = vadd.f32 %v1243, %v1341
    %v1343 = vpop.f32.mrf.mxu0
    %v1344 = vadd.f32 %v1245, %v1343
    %1345 = vdwg.mxu0
    %1346 = vmatpush.bf16.msra.mxu0 0
    %1347 = vmatpush.bf16.msra.mxu0 0
    %1348 = vmatpush.bf16.msra.mxu0 0
    %1349 = vmatpush.bf16.msra.mxu0 0
    %1350 = vmatpush.bf16.msra.mxu0 %v858
    %1351 = vmatpush.bf16.msra.mxu0 %v857
    %1352 = vmatpush.bf16.msra.mxu0 %v856
    %1353 = vmatpush.bf16.msra.mxu0 %v855
    %1354 = vmatmul.bf16.gmra.mxu0 %v897
    %v1355 = vpop.f32.mrf.mxu0
    %v1356 = vadd.f32 %v1257, %v1355
    %v1357 = vpop.f32.mrf.mxu0
    %v1358 = vadd.f32 %v1259, %v1357
    %1359 = vmatmul.bf16.gmra.mxu0 %v900
    %v1360 = vpop.f32.mrf.mxu0
    %v1361 = vadd.f32 %v1262, %v1360
    %v1362 = vpop.f32.mrf.mxu0
    %v1363 = vadd.f32 %v1264, %v1362
    %1364 = vmatmul.bf16.gmra.mxu0 %v903
    %v1365 = vpop.f32.mrf.mxu0
    %v1366 = vadd.f32 %v1267, %v1365
    %v1367 = vpop.f32.mrf.mxu0
    %v1368 = vadd.f32 %v1269, %v1367
    %1369 = vmatmul.bf16.gmra.mxu0 %v906
    %v1370 = vpop.f32.mrf.mxu0
    %v1371 = vadd.f32 %v1272, %v1370
    %v1372 = vpop.f32.mrf.mxu0
    %v1373 = vadd.f32 %v1274, %v1372
    %1374 = vmatmul.bf16.gmra.mxu0 %v909
    %v1375 = vpop.f32.mrf.mxu0
    %v1376 = vadd.f32 %v1277, %v1375
    %v1377 = vpop.f32.mrf.mxu0
    %v1378 = vadd.f32 %v1279, %v1377
    %1379 = vmatmul.bf16.gmra.mxu0 %v912
    %v1380 = vpop.f32.mrf.mxu0
    %v1381 = vadd.f32 %v1282, %v1380
    %v1382 = vpop.f32.mrf.mxu0
    %v1383 = vadd.f32 %v1284, %v1382
    %1384 = vmatmul.bf16.gmra.mxu0 %v915
    %v1385 = vpop.f32.mrf.mxu0
    %v1386 = vadd.f32 %v1287, %v1385
    %v1387 = vpop.f32.mrf.mxu0
    %v1388 = vadd.f32 %v1289, %v1387
    %1389 = vmatmul.bf16.gmra.mxu0 %v918
    %v1390 = vpop.f32.mrf.mxu0
    %v1391 = vadd.f32 %v1292, %v1390
    %v1392 = vpop.f32.mrf.mxu0
    %v1393 = vadd.f32 %v1294, %v1392
    %1394 = vmatmul.bf16.gmra.mxu0 %v921
    %v1395 = vpop.f32.mrf.mxu0
    %v1396 = vadd.f32 %v1297, %v1395
    %v1397 = vpop.f32.mrf.mxu0
    %v1398 = vadd.f32 %v1299, %v1397
    %1399 = vmatmul.bf16.gmra.mxu0 %v924
    %v1400 = vpop.f32.mrf.mxu0
    %v1401 = vadd.f32 %v1302, %v1400
    %v1402 = vpop.f32.mrf.mxu0
    %v1403 = vadd.f32 %v1304, %v1402
    %1404 = vmatmul.bf16.gmra.mxu0 %v927
    %v1405 = vpop.f32.mrf.mxu0
    %v1406 = vadd.f32 %v1307, %v1405
    %v1407 = vpop.f32.mrf.mxu0
    %v1408 = vadd.f32 %v1309, %v1407
    %1409 = vmatmul.bf16.gmra.mxu0 %v930
    %v1410 = vpop.f32.mrf.mxu0
    %v1411 = vadd.f32 %v1312, %v1410
    %v1412 = vpop.f32.mrf.mxu0
    %v1413 = vadd.f32 %v1314, %v1412
    %1414 = vmatmul.bf16.gmra.mxu0 %v933
    %v1415 = vpop.f32.mrf.mxu0
    %v1416 = vadd.f32 %v1317, %v1415
    %v1417 = vpop.f32.mrf.mxu0
    %v1418 = vadd.f32 %v1319, %v1417
    %1419 = vmatmul.bf16.gmra.mxu0 %v936
    %v1420 = vpop.f32.mrf.mxu0
    %v1421 = vadd.f32 %v1322, %v1420
    %v1422 = vpop.f32.mrf.mxu0
    %v1423 = vadd.f32 %v1324, %v1422
    %1424 = vmatmul.bf16.gmra.mxu0 %v939
    %v1425 = vpop.f32.mrf.mxu0
    %v1426 = vadd.f32 %v1327, %v1425
    %v1427 = vpop.f32.mrf.mxu0
    %v1428 = vadd.f32 %v1329, %v1427
    %1429 = vmatmul.bf16.gmra.mxu0 %v942
    %v1430 = vpop.f32.mrf.mxu0
    %v1431 = vadd.f32 %v1332, %v1430
    %v1432 = vpop.f32.mrf.mxu0
    %v1433 = vadd.f32 %v1334, %v1432
    %1434 = vmatmul.bf16.gmra.mxu0 %v945
    %v1435 = vpop.f32.mrf.mxu0
    %v1436 = vadd.f32 %v1337, %v1435
    %v1437 = vpop.f32.mrf.mxu0
    %v1438 = vadd.f32 %v1339, %v1437
    %1439 = vmatmul.bf16.gmra.mxu0 %v948
    %v1440 = vpop.f32.mrf.mxu0
    %v1441 = vadd.f32 %v1342, %v1440
    %v1442 = vpop.f32.mrf.mxu0
    %v1443 = vadd.f32 %v1344, %v1442
    %1444 = vdwg.mxu0
    %v1445 = vmax.f32 %v1356, 0.0
    %v1446 = vmax.f32 %v1358, 0.0
    %v1447 = vmax.f32 %v1361, 0.0
    %v1448 = vmax.f32 %v1363, 0.0
    %v1449 = vmax.f32 %v1366, 0.0
    %v1450 = vmax.f32 %v1368, 0.0
    %v1451 = vmax.f32 %v1371, 0.0
    %v1452 = vmax.f32 %v1373, 0.0
    %v1453 = vmax.f32 %v1376, 0.0
    %v1454 = vmax.f32 %v1378, 0.0
    %v1455 = vmax.f32 %v1381, 0.0
    %v1456 = vmax.f32 %v1383, 0.0
    %v1457 = vmax.f32 %v1386, 0.0
    %v1458 = vmax.f32 %v1388, 0.0
    %v1459 = vmax.f32 %v1391, 0.0
    %v1460 = vmax.f32 %v1393, 0.0
    %v1461 = vmax.f32 %v1396, 0.0
    %v1462 = vmax.f32 %v1398, 0.0
    %v1463 = vmax.f32 %v1401, 0.0
    %v1464 = vmax.f32 %v1403, 0.0
    %v1465 = vmax.f32 %v1406, 0.0
    %v1466 = vmax.f32 %v1408, 0.0
    %v1467 = vmax.f32 %v1411, 0.0
    %v1468 = vmax.f32 %v1413, 0.0
    %v1469 = vmax.f32 %v1416, 0.0
    %v1470 = vmax.f32 %v1418, 0.0
    %v1471 = vmax.f32 %v1421, 0.0
    %v1472 = vmax.f32 %v1423, 0.0
    %v1473 = vmax.f32 %v1426, 0.0
    %v1474 = vmax.f32 %v1428, 0.0
    %v1475 = vmax.f32 %v1431, 0.0
    %v1476 = vmax.f32 %v1433, 0.0
    %v1477 = vmax.f32 %v1436, 0.0
    %v1478 = vmax.f32 %v1438, 0.0
    %v1479 = vmax.f32 %v1441, 0.0
    %v1480 = vmax.f32 %v1443, 0.0
    %v1481 = vpack.c.bf16 %v1445, %v1445
    %v1482 = vpack.c.bf16 %v1446, %v1446
    %v1483 = vpack.c.bf16 %v1447, %v1447
    %v1484 = vpack.c.bf16 %v1448, %v1448
    %v1485 = vpack.c.bf16 %v1449, %v1449
    %v1486 = vpack.c.bf16 %v1450, %v1450
    %v1487 = vpack.c.bf16 %v1451, %v1451
    %v1488 = vpack.c.bf16 %v1452, %v1452
    %v1489 = vpack.c.bf16 %v1453, %v1453
    %v1490 = vpack.c.bf16 %v1454, %v1454
    %v1491 = vpack.c.bf16 %v1455, %v1455
    %v1492 = vpack.c.bf16 %v1456, %v1456
    %v1493 = vpack.c.bf16 %v1457, %v1457
    %v1494 = vpack.c.bf16 %v1458, %v1458
    %v1495 = vpack.c.bf16 %v1459, %v1459
    %v1496 = vpack.c.bf16 %v1460, %v1460
    %v1497 = vpack.c.bf16 %v1461, %v1461
    %v1498 = vpack.c.bf16 %v1462, %v1462
    %v1499 = vpack.c.bf16 %v1463, %v1463
    %v1500 = vpack.c.bf16 %v1464, %v1464
    %v1501 = vpack.c.bf16 %v1465, %v1465
    %v1502 = vpack.c.bf16 %v1466, %v1466
    %v1503 = vpack.c.bf16 %v1467, %v1467
    %v1504 = vpack.c.bf16 %v1468, %v1468
    %v1505 = vpack.c.bf16 %v1469, %v1469
    %v1506 = vpack.c.bf16 %v1470, %v1470
    %v1507 = vpack.c.bf16 %v1471, %v1471
    %v1508 = vpack.c.bf16 %v1472, %v1472
    %v1509 = vpack.c.bf16 %v1473, %v1473
    %v1510 = vpack.c.bf16 %v1474, %v1474
    %v1511 = vpack.c.bf16 %v1475, %v1475
    %v1512 = vpack.c.bf16 %v1476, %v1476
    %v1513 = vpack.c.bf16 %v1477, %v1477
    %v1514 = vpack.c.bf16 %v1478, %v1478
    %v1515 = vpack.c.bf16 %v1479, %v1479
    %v1516 = vpack.c.bf16 %v1480, %v1480
    %1517 = vst [vmem:[%s3] sm:$0xf] %v1481
    %1518 = vst [vmem:[%s3 + $0x4] sm:$0xf] %v1482
    %1519 = vst [vmem:[%s3 + $0x8] sm:$0xf] %v1483
    %1520 = vst [vmem:[%s3 + $0xc] sm:$0xf] %v1484
    %1521 = vst [vmem:[%s3 + $0x10] sm:$0xf] %v1485
    %1522 = vst [vmem:[%s3 + $0x14] sm:$0xf] %v1486
    %1523 = vst [vmem:[%s3 + $0x18] sm:$0xf] %v1487
    %1524 = vst [vmem:[%s3 + $0x1c] sm:$0xf] %v1488
    %1525 = vst [vmem:[%s3 + $0x20] sm:$0xf] %v1489
    %1526 = vst [vmem:[%s3 + $0x24] sm:$0xf] %v1490
    %1527 = vst [vmem:[%s3 + $0x28] sm:$0xf] %v1491
    %1528 = vst [vmem:[%s3 + $0x2c] sm:$0xf] %v1492
    %1529 = vst [vmem:[%s3 + $0x30] sm:$0xf] %v1493
    %1530 = vst [vmem:[%s3 + $0x34] sm:$0xf] %v1494
    %1531 = vst [vmem:[%s3 + $0x38] sm:$0xf] %v1495
    %1532 = vst [vmem:[%s3 + $0x3c] sm:$0xf] %v1496
    %1533 = vst [vmem:[%s3 + $0x40] sm:$0xf] %v1497
    %1534 = vst [vmem:[%s3 + $0x44] sm:$0xf] %v1498
    %1535 = vst [vmem:[%s3 + $0x48] sm:$0xf] %v1499
    %1536 = vst [vmem:[%s3 + $0x4c] sm:$0xf] %v1500
    %1537 = vst [vmem:[%s3 + $0x50] sm:$0xf] %v1501
    %1538 = vst [vmem:[%s3 + $0x54] sm:$0xf] %v1502
    %1539 = vst [vmem:[%s3 + $0x58] sm:$0xf] %v1503
    %1540 = vst [vmem:[%s3 + $0x5c] sm:$0xf] %v1504
    %1541 = vst [vmem:[%s3 + $0x60] sm:$0xf] %v1505
    %1542 = vst [vmem:[%s3 + $0x64] sm:$0xf] %v1506
    %1543 = vst [vmem:[%s3 + $0x68] sm:$0xf] %v1507
    %1544 = vst [vmem:[%s3 + $0x6c] sm:$0xf] %v1508
    %1545 = vst [vmem:[%s3 + $0x70] sm:$0xf] %v1509
    %1546 = vst [vmem:[%s3 + $0x74] sm:$0xf] %v1510
    %1547 = vst [vmem:[%s3 + $0x78] sm:$0xf] %v1511
    %1548 = vst [vmem:[%s3 + $0x7c] sm:$0xf] %v1512
    %1549 = vst [vmem:[%s3 + $0x80] sm:$0xf] %v1513
    %1550 = vst [vmem:[%s3 + $0x84] sm:$0xf] %v1514
    %1551 = vst [vmem:[%s3 + $0x88] sm:$0xf] %v1515
    %1552 = vst [vmem:[%s3 + $0x8c] sm:$0xf] %v1516
    // Predicated region
    $region22: #{custom_cnn_forward.4} parent=1 // pred_check
      _
    $region23: #{custom_cnn_forward.4} parent=1 // pred_check_branch
      %1554 = sbr.rel (0) target = $region25
    $region24: #{custom_cnn_forward.4} parent=1 // pred_region
      _
    $region25: #{custom_cnn_forward.4} parent=1 // pred_fallthru
      _
    // Predicated region
    $region26: #{custom_cnn_forward.4} parent=1 // pred_check
      _
    $region27: #{custom_cnn_forward.4} parent=1 // pred_check_branch
      %1556 = sbr.rel (0) target = $region29
    $region28: #{custom_cnn_forward.4} parent=1 // pred_region
      _
    $region29: #{custom_cnn_forward.4} parent=1 // pred_fallthru
      _
    %1557 = vsyncpa [#allocation3], 1
    %1558 = vsyncpa [#allocation5], 1

// kernel: custom_cnn_forward.5
$region0: #{custom_cnn_forward.5}
  #allocation0 [shape = 'u32[]', space=smem, size = 0x4, offset = 0x4, fixed_abs, tag = 'smem constant byte address 0x4 - core index']
  #allocation1 [shape = 'u32[72,128]{1,0:T(1,128)}', space=vmem, size = 0x9000, scoped, tag = 'internal scratch']
  #allocation2 [shape = 'f32[2,64]{1,0:T(2,128)}', space=vmem, size = 0x400, scoped, tag = 'scratch operand']
  %s0 = inlined_call_operand.vmem [shape: bf16[2,2,9216], index: 0, kind: input, shape index: {}]
  %s1 = inlined_call_operand.vmem [shape: bf16[2,18432,64], index: 1, kind: input, shape index: {}]
  %s2 = inlined_call_operand.vmem [shape: f32[2,1,64], index: 2, kind: input, shape index: {}]
  %s3 = inlined_call_operand.vmem [shape: f32[2,2,64], index: 3, kind: output, shape index: {}]
  %s4 = sld [smem:[#allocation0]]
  $region53: #{custom_cnn_forward.5} parent=0
    _
  %s6 = ssub.s32 1, %s4
  %s7 = scalar_select 0, %s6, %s4
  loop: start=0, step=1, limit=6
  $region2: #{custom_cnn_forward.5} parent=0 // loop_pre_header
    _
  $region3: #{custom_cnn_forward.5} parent=0 // loop_header
    %s9 = sphi 0, %s13
    %p10 = scmp.ge.s32.totalorder %s9, 6
    %s16 = sphi 0, %s28
    %s17 = sphi 0, %s24
    %s18 = sphi 0, %s16
    %s19 = sphi 0, %s17
    %s20 = sphi 0, %s18
    %s21 = sphi 0, %s19
    %s29 = sphi 0, %s29
    %s31 = sphi 0, %s29
    %s32 = sphi 0, %s31
    %s46 = sphi 0, %s32
    %s54 = sphi 0, %s56
    %s57 = sphi 0, %s54
    %s58 = sphi 0, %s57
    %s74 = sphi 0, %s58
    %s80 = sphi 0, %s82
    %s83 = sphi 0, %s80
    %s84 = sphi 0, %s83
    %s100 = sphi 0, %s84
    %s106 = sphi 0, %s108
    %s109 = sphi 0, %s106
    %s110 = sphi 0, %s109
    %s126 = sphi 0, %s110
  $region4: #{custom_cnn_forward.5} parent=0 // loop_header_branch
    %12 = sbr.rel (%p10) target = $region8
  $region5: #{custom_cnn_forward.5} parent=0 // loop_body
    %s14 = ssub.s32 %s9, 1
    %s15 = ssub.s32 %s9, 2
    %s22 = sadd.s32 1, %s17
    %p23 = scmp.ge.s32.totalorder %s22, 2
    %s24 = scalar_select %p23, 0, %s22
    %s25 = sadd.s32 1, %s16
    %s26 = scalar_select %p23, %s25, %s16
    %p27 = scmp.ge.s32.totalorder %s26, 2
    %s28 = scalar_select %p27, 0, %s26
    %s30 = sadd.s32 %s29, 1
    %p33 = scmp.eq.s32.totalorder %s9, 3
    %p34 = scmp.ne.s32.totalorder %s29, %s31
    %p35 = scmp.eq.s32.totalorder %s9, 0
    %p36 = por %p34, %p35
    %p37 = scmp.ne.s32.totalorder %s29, %s31
    %p38 = scmp.eq.s32.totalorder %s14, 3
    %p39 = por %p37, %p38
    %p40 = scmp.ne.s32.totalorder %s31, %s32
    %p41 = scmp.eq.s32.totalorder %s14, 0
    %p42 = por %p40, %p41
    %p43 = scmp.ne.s32.totalorder %s31, %s32
    %p44 = scmp.eq.s32.totalorder %s15, 3
    %p45 = por %p43, %p44
    %p47 = scmp.ne.s32.totalorder %s32, %s46
    %p48 = scmp.eq.s32.totalorder %s15, 0
    %p49 = por %p47, %p48
    %s50 = ssub.s32 %s16, %s28
    %s51 = ssub.s32 %s17, %s24
    %s52 = sor.u32 %s50, %s51
    %p53 = scmp.eq.s32.totalorder %s52, 0
    %s55 = sadd.s32 %s54, 1
    %s56 = scalar_select %p53, %s54, %s55
    %p59 = pneg %p53
    %p60 = scmp.eq.s32.totalorder %s9, 3
    %p61 = por %p59, %p60
    %p62 = scmp.ne.s32.totalorder %s54, %s57
    %p63 = scmp.eq.s32.totalorder %s9, 0
    %p64 = por %p62, %p63
    %p65 = scmp.ne.s32.totalorder %s54, %s57
    %p66 = scmp.eq.s32.totalorder %s14, 3
    %p67 = por %p65, %p66
    %p68 = scmp.ne.s32.totalorder %s57, %s58
    %p69 = scmp.eq.s32.totalorder %s14, 0
    %p70 = por %p68, %p69
    %p71 = scmp.ne.s32.totalorder %s57, %s58
    %p72 = scmp.eq.s32.totalorder %s15, 3
    %p73 = por %p71, %p72
    %p75 = scmp.ne.s32.totalorder %s58, %s74
    %p76 = scmp.eq.s32.totalorder %s15, 0
    %p77 = por %p75, %p76
    %s78 = ssub.s32 %s16, %s28
    %p79 = scmp.eq.s32.totalorder %s78, 0
    %s81 = sadd.s32 %s80, 1
    %s82 = scalar_select %p79, %s80, %s81
    %p85 = pneg %p79
    %p86 = scmp.eq.s32.totalorder %s9, 3
    %p87 = por %p85, %p86
    %p88 = scmp.ne.s32.totalorder %s80, %s83
    %p89 = scmp.eq.s32.totalorder %s9, 0
    %p90 = por %p88, %p89
    %p91 = scmp.ne.s32.totalorder %s80, %s83
    %p92 = scmp.eq.s32.totalorder %s14, 3
    %p93 = por %p91, %p92
    %p94 = scmp.ne.s32.totalorder %s83, %s84
    %p95 = scmp.eq.s32.totalorder %s14, 0
    %p96 = por %p94, %p95
    %p97 = scmp.ne.s32.totalorder %s83, %s84
    %p98 = scmp.eq.s32.totalorder %s15, 3
    %p99 = por %p97, %p98
    %p101 = scmp.ne.s32.totalorder %s84, %s100
    %p102 = scmp.eq.s32.totalorder %s15, 0
    %p103 = por %p101, %p102
    %s104 = ssub.s32 %s16, %s28
    %p105 = scmp.eq.s32.totalorder %s104, 0
    %s107 = sadd.s32 %s106, 1
    %s108 = scalar_select %p105, %s106, %s107
    %p111 = pneg %p105
    %p112 = scmp.eq.s32.totalorder %s9, 3
    %p113 = por %p111, %p112
    %p114 = scmp.ne.s32.totalorder %s106, %s109
    %p115 = scmp.eq.s32.totalorder %s9, 0
    %p116 = por %p114, %p115
    %p117 = scmp.ne.s32.totalorder %s106, %s109
    %p118 = scmp.eq.s32.totalorder %s14, 3
    %p119 = por %p117, %p118
    %p120 = scmp.ne.s32.totalorder %s109, %s110
    %p121 = scmp.eq.s32.totalorder %s14, 0
    %p122 = por %p120, %p121
    %p123 = scmp.ne.s32.totalorder %s109, %s110
    %p124 = scmp.eq.s32.totalorder %s15, 3
    %p125 = por %p123, %p124
    %p127 = scmp.ne.s32.totalorder %s110, %s126
    %p128 = scmp.eq.s32.totalorder %s15, 0
    %p129 = por %p127, %p128
    %p130 = scmp.le.s32.totalorder 1, %s9
    %p131 = scmp.lt.s32.totalorder %s9, 5
    %p132 = pnand %p130, %p131
    %p133 = pneg %p132
    // Predicated region
    $region9: #{custom_cnn_forward.5} parent=5 // pred_check
      _
    $region10: #{custom_cnn_forward.5} parent=5 // pred_check_branch
      %135 = sbr.rel (%p132) target = $region12
    $region11: #{custom_cnn_forward.5} parent=5 // pred_region
      %s136 = ssub.s32 %s9, 1
      // Predicated region
      $region13: #{custom_cnn_forward.5} parent=11 // pred_check
        %p137 = pneg %p42
      $region14: #{custom_cnn_forward.5} parent=11 // pred_check_branch
        %139 = sbr.rel (%p137) target = $region16
      $region15: #{custom_cnn_forward.5} parent=11 // pred_region
        _
      $region16: #{custom_cnn_forward.5} parent=11 // pred_fallthru
        _
    $region12: #{custom_cnn_forward.5} parent=5 // pred_fallthru
      _
    %p140 = scmp.lt.s32.totalorder %s9, 4
    // Predicated region
    $region17: #{custom_cnn_forward.5} parent=5 // pred_check
      %p141 = pneg %p140
    $region18: #{custom_cnn_forward.5} parent=5 // pred_check_branch
      %143 = sbr.rel (%p141) target = $region20
    $region19: #{custom_cnn_forward.5} parent=5 // pred_region
      // Predicated region
      $region21: #{custom_cnn_forward.5} parent=19 // pred_check
        %p144 = pneg %p64
      $region22: #{custom_cnn_forward.5} parent=19 // pred_check_branch
        %146 = sbr.rel (%p144) target = $region24
      $region23: #{custom_cnn_forward.5} parent=19 // pred_region
        %s147 = smul.u32 1152, %s17
        %p148 = scmp.lt.s32.totalorder %s16, 1
        %s149 = scalar_select %p148, %s16, 1
        %p150 = scmp.lt.s32.totalorder %s147, 2303
        %s151 = scalar_select %p150, %s147, 2303
        %s152 = smul.addr %s149, 2304
        %s153 = sadd.s32 %s151, %s152
        %s154 = smul.addr %s153, 4
        %s155 = scalar_lea.vmem %s1, %s154
        %s156 = smul.u32 1152, %s17
      $region24: #{custom_cnn_forward.5} parent=19 // pred_fallthru
        _
      // Predicated region
      $region25: #{custom_cnn_forward.5} parent=19 // pred_check
        %p157 = pneg %p90
      $region26: #{custom_cnn_forward.5} parent=19 // pred_check_branch
        %159 = sbr.rel (%p157) target = $region28
      $region27: #{custom_cnn_forward.5} parent=19 // pred_region
        %p160 = scmp.lt.s32.totalorder %s16, 1
        %s161 = scalar_select %p160, %s16, 1
        %s162 = scalar_lea.vmem %s2, %s161
      $region28: #{custom_cnn_forward.5} parent=19 // pred_fallthru
        _
    $region20: #{custom_cnn_forward.5} parent=5 // pred_fallthru
      _
    %p163 = scmp.le.s32.totalorder 1, %s9
    %p164 = scmp.lt.s32.totalorder %s9, 5
    %p165 = pnand %p163, %p164
    %p166 = pneg %p165
    // Predicated region
    $region29: #{custom_cnn_forward.5} parent=5 // pred_check
      _
    $region30: #{custom_cnn_forward.5} parent=5 // pred_check_branch
      %168 = sbr.rel (%p165) target = $region32
    $region31: #{custom_cnn_forward.5} parent=5 // pred_region
      %s169 = ssub.s32 %s9, 1
      %p170 = pneg %p42
      %p171 = pneg %p39
      %s172 = smul.u32 1152, %s19
      %p173 = scmp.lt.s32.totalorder %s18, 1
      %s174 = scalar_select %p173, %s18, 1
      %p175 = scmp.lt.s32.totalorder %s172, 2303
      %s176 = scalar_select %p175, %s172, 2303
      %s177 = smul.addr %s174, 2304
      %s178 = sadd.s32 %s176, %s177
      %s179 = smul.addr %s178, 4
      %s180 = scalar_lea.vmem %s1, %s179
      %p181 = pneg %p70
      %p182 = pneg %p67
      %p183 = scmp.lt.s32.totalorder %s18, 1
      %s184 = scalar_select %p183, %s18, 1
      %s185 = scalar_lea.vmem %s2, %s184
      %p186 = pneg %p96
      %p187 = pneg %p93
      %p188 = pneg %p122
      %p189 = pneg %p119
      %p190 = scmp.lt.s32.totalorder %s18, 1
      %s191 = scalar_select %p190, %s18, 1
      %s192 = smul.addr %s191, 2
      %s193 = scalar_lea.vmem %s3, %s192
      %s194 = smul.u32 1152, %s19
      %p195 = scmp.lt.s32.totalorder %s18, 1
      %s196 = scalar_select %p195, %s18, 1
      %p197 = scmp.lt.s32.totalorder %s194, 2303
      %s198 = scalar_select %p197, %s194, 2303
      %s199 = smul.addr %s196, 2304
      %s200 = sadd.s32 %s198, %s199
      %s201 = smul.addr %s200, 4
      %s202 = scalar_lea.vmem %s1, %s201
      %s203 = smul.u32 1152, %s19
      %p204 = scmp.lt.s32.totalorder %s18, 1
      %s205 = scalar_select %p204, %s18, 1
      %s206 = scalar_lea.vmem %s2, %s205
      %p207 = scmp.lt.s32.totalorder %s18, 1
      %s208 = scalar_select %p207, %s18, 1
      %s209 = smul.addr %s208, 2
      %s210 = scalar_lea.vmem %s3, %s209
      %p211 = scmp.eq.s32.totalorder %s19, 0
      // Predicated region
      $region33: #{custom_cnn_forward.5} parent=31 // pred_check
        %p212 = pneg %p211
      $region34: #{custom_cnn_forward.5} parent=31 // pred_check_branch
        %214 = sbr.rel (%p212) target = $region36
      $region35: #{custom_cnn_forward.5} parent=31 // pred_region
        %vm215 = vcmask 517120
        %216 = vst.msk [vmem:[#allocation2] sm:$0x3] %vm215, 0.0
      $region36: #{custom_cnn_forward.5} parent=31 // pred_fallthru
        _
      %v217 = vld [vmem:[#allocation2] sm:$0x3]
      %s218 = smul.u32 %s19, 72
      %s219 = scalar_lea.vmem %s0, %s218
      %v220 = vld [vmem:[%s219] sm:$0xff]
      %v221 = vld [vmem:[%s219 + $0x8] sm:$0xff]
      %v222 = vld [vmem:[%s219 + $0x10] sm:$0xff]
      %v223 = vld [vmem:[%s219 + $0x18] sm:$0xff]
      %v224 = vld [vmem:[%s219 + $0x20] sm:$0xff]
      %v225 = vld [vmem:[%s219 + $0x28] sm:$0xff]
      %v226 = vld [vmem:[%s219 + $0x30] sm:$0xff]
      %v227 = vld [vmem:[%s219 + $0x38] sm:$0xff]
      %v228 = vld [vmem:[%s219 + $0x40] sm:$0xff]
      %v229 = vld [vmem:[%s202] sm:$0xf]
      %v230 = vld [vmem:[%s202 + $0x4] sm:$0xf]
      %v231 = vld [vmem:[%s202 + $0x8] sm:$0xf]
      %v232 = vld [vmem:[%s202 + $0xc] sm:$0xf]
      %v233 = vld [vmem:[%s202 + $0x10] sm:$0xf]
      %v234 = vld [vmem:[%s202 + $0x14] sm:$0xf]
      %v235 = vld [vmem:[%s202 + $0x18] sm:$0xf]
      %v236 = vld [vmem:[%s202 + $0x1c] sm:$0xf]
      %v237 = vld [vmem:[%s202 + $0x20] sm:$0xf]
      %v238 = vld [vmem:[%s202 + $0x24] sm:$0xf]
      %v239 = vld [vmem:[%s202 + $0x28] sm:$0xf]
      %v240 = vld [vmem:[%s202 + $0x2c] sm:$0xf]
      %v241 = vld [vmem:[%s202 + $0x30] sm:$0xf]
      %v242 = vld [vmem:[%s202 + $0x34] sm:$0xf]
      %v243 = vld [vmem:[%s202 + $0x38] sm:$0xf]
      %v244 = vld [vmem:[%s202 + $0x3c] sm:$0xf]
      %v245 = vld [vmem:[%s202 + $0x40] sm:$0xf]
      %v246 = vld [vmem:[%s202 + $0x44] sm:$0xf]
      %v247 = vld [vmem:[%s202 + $0x48] sm:$0xf]
      %v248 = vld [vmem:[%s202 + $0x4c] sm:$0xf]
      %v249 = vld [vmem:[%s202 + $0x50] sm:$0xf]
      %v250 = vld [vmem:[%s202 + $0x54] sm:$0xf]
      %v251 = vld [vmem:[%s202 + $0x58] sm:$0xf]
      %v252 = vld [vmem:[%s202 + $0x5c] sm:$0xf]
      %v253 = vld [vmem:[%s202 + $0x60] sm:$0xf]
      %v254 = vld [vmem:[%s202 + $0x64] sm:$0xf]
      %v255 = vld [vmem:[%s202 + $0x68] sm:$0xf]
      %v256 = vld [vmem:[%s202 + $0x6c] sm:$0xf]
      %v257 = vld [vmem:[%s202 + $0x70] sm:$0xf]
      %v258 = vld [vmem:[%s202 + $0x74] sm:$0xf]
      %v259 = vld [vmem:[%s202 + $0x78] sm:$0xf]
      %v260 = vld [vmem:[%s202 + $0x7c] sm:$0xf]
      %v261 = vld [vmem:[%s202 + $0x80] sm:$0xf]
      %v262 = vld [vmem:[%s202 + $0x84] sm:$0xf]
      %v263 = vld [vmem:[%s202 + $0x88] sm:$0xf]
      %v264 = vld [vmem:[%s202 + $0x8c] sm:$0xf]
      %v265 = vld [vmem:[%s202 + $0x90] sm:$0xf]
      %v266 = vld [vmem:[%s202 + $0x94] sm:$0xf]
      %v267 = vld [vmem:[%s202 + $0x98] sm:$0xf]
      %v268 = vld [vmem:[%s202 + $0x9c] sm:$0xf]
      %v269 = vld [vmem:[%s202 + $0xa0] sm:$0xf]
      %v270 = vld [vmem:[%s202 + $0xa4] sm:$0xf]
      %v271 = vld [vmem:[%s202 + $0xa8] sm:$0xf]
      %v272 = vld [vmem:[%s202 + $0xac] sm:$0xf]
      %v273 = vld [vmem:[%s202 + $0xb0] sm:$0xf]
      %v274 = vld [vmem:[%s202 + $0xb4] sm:$0xf]
      %v275 = vld [vmem:[%s202 + $0xb8] sm:$0xf]
      %v276 = vld [vmem:[%s202 + $0xbc] sm:$0xf]
      %v277 = vld [vmem:[%s202 + $0xc0] sm:$0xf]
      %v278 = vld [vmem:[%s202 + $0xc4] sm:$0xf]
      %v279 = vld [vmem:[%s202 + $0xc8] sm:$0xf]
      %v280 = vld [vmem:[%s202 + $0xcc] sm:$0xf]
      %v281 = vld [vmem:[%s202 + $0xd0] sm:$0xf]
      %v282 = vld [vmem:[%s202 + $0xd4] sm:$0xf]
      %v283 = vld [vmem:[%s202 + $0xd8] sm:$0xf]
      %v284 = vld [vmem:[%s202 + $0xdc] sm:$0xf]
      %v285 = vld [vmem:[%s202 + $0xe0] sm:$0xf]
      %v286 = vld [vmem:[%s202 + $0xe4] sm:$0xf]
      %v287 = vld [vmem:[%s202 + $0xe8] sm:$0xf]
      %v288 = vld [vmem:[%s202 + $0xec] sm:$0xf]
      %v289 = vld [vmem:[%s202 + $0xf0] sm:$0xf]
      %v290 = vld [vmem:[%s202 + $0xf4] sm:$0xf]
      %v291 = vld [vmem:[%s202 + $0xf8] sm:$0xf]
      %v292 = vld [vmem:[%s202 + $0xfc] sm:$0xf]
      %v293 = vld [vmem:[%s202 + $0x100] sm:$0xf]
      %v294 = vld [vmem:[%s202 + $0x104] sm:$0xf]
      %v295 = vld [vmem:[%s202 + $0x108] sm:$0xf]
      %v296 = vld [vmem:[%s202 + $0x10c] sm:$0xf]
      %v297 = vld [vmem:[%s202 + $0x110] sm:$0xf]
      %v298 = vld [vmem:[%s202 + $0x114] sm:$0xf]
      %v299 = vld [vmem:[%s202 + $0x118] sm:$0xf]
      %v300 = vld [vmem:[%s202 + $0x11c] sm:$0xf]
      %v301 = vld [vmem:[%s202 + $0x120] sm:$0xf]
      %v302 = vld [vmem:[%s202 + $0x124] sm:$0xf]
      %v303 = vld [vmem:[%s202 + $0x128] sm:$0xf]
      %v304 = vld [vmem:[%s202 + $0x12c] sm:$0xf]
      %v305 = vld [vmem:[%s202 + $0x130] sm:$0xf]
      %v306 = vld [vmem:[%s202 + $0x134] sm:$0xf]
      %v307 = vld [vmem:[%s202 + $0x138] sm:$0xf]
      %v308 = vld [vmem:[%s202 + $0x13c] sm:$0xf]
      %v309 = vld [vmem:[%s202 + $0x140] sm:$0xf]
      %v310 = vld [vmem:[%s202 + $0x144] sm:$0xf]
      %v311 = vld [vmem:[%s202 + $0x148] sm:$0xf]
      %v312 = vld [vmem:[%s202 + $0x14c] sm:$0xf]
      %v313 = vld [vmem:[%s202 + $0x150] sm:$0xf]
      %v314 = vld [vmem:[%s202 + $0x154] sm:$0xf]
      %v315 = vld [vmem:[%s202 + $0x158] sm:$0xf]
      %v316 = vld [vmem:[%s202 + $0x15c] sm:$0xf]
      %v317 = vld [vmem:[%s202 + $0x160] sm:$0xf]
      %v318 = vld [vmem:[%s202 + $0x164] sm:$0xf]
      %v319 = vld [vmem:[%s202 + $0x168] sm:$0xf]
      %v320 = vld [vmem:[%s202 + $0x16c] sm:$0xf]
      %v321 = vld [vmem:[%s202 + $0x170] sm:$0xf]
      %v322 = vld [vmem:[%s202 + $0x174] sm:$0xf]
      %v323 = vld [vmem:[%s202 + $0x178] sm:$0xf]
      %v324 = vld [vmem:[%s202 + $0x17c] sm:$0xf]
      %v325 = vld [vmem:[%s202 + $0x180] sm:$0xf]
      %v326 = vld [vmem:[%s202 + $0x184] sm:$0xf]
      %v327 = vld [vmem:[%s202 + $0x188] sm:$0xf]
      %v328 = vld [vmem:[%s202 + $0x18c] sm:$0xf]
      %v329 = vld [vmem:[%s202 + $0x190] sm:$0xf]
      %v330 = vld [vmem:[%s202 + $0x194] sm:$0xf]
      %v331 = vld [vmem:[%s202 + $0x198] sm:$0xf]
      %v332 = vld [vmem:[%s202 + $0x19c] sm:$0xf]
      %v333 = vld [vmem:[%s202 + $0x1a0] sm:$0xf]
      %v334 = vld [vmem:[%s202 + $0x1a4] sm:$0xf]
      %v335 = vld [vmem:[%s202 + $0x1a8] sm:$0xf]
      %v336 = vld [vmem:[%s202 + $0x1ac] sm:$0xf]
      %v337 = vld [vmem:[%s202 + $0x1b0] sm:$0xf]
      %v338 = vld [vmem:[%s202 + $0x1b4] sm:$0xf]
      %v339 = vld [vmem:[%s202 + $0x1b8] sm:$0xf]
      %v340 = vld [vmem:[%s202 + $0x1bc] sm:$0xf]
      %v341 = vld [vmem:[%s202 + $0x1c0] sm:$0xf]
      %v342 = vld [vmem:[%s202 + $0x1c4] sm:$0xf]
      %v343 = vld [vmem:[%s202 + $0x1c8] sm:$0xf]
      %v344 = vld [vmem:[%s202 + $0x1cc] sm:$0xf]
      %v345 = vld [vmem:[%s202 + $0x1d0] sm:$0xf]
      %v346 = vld [vmem:[%s202 + $0x1d4] sm:$0xf]
      %v347 = vld [vmem:[%s202 + $0x1d8] sm:$0xf]
      %v348 = vld [vmem:[%s202 + $0x1dc] sm:$0xf]
      %v349 = vld [vmem:[%s202 + $0x1e0] sm:$0xf]
      %v350 = vld [vmem:[%s202 + $0x1e4] sm:$0xf]
      %v351 = vld [vmem:[%s202 + $0x1e8] sm:$0xf]
      %v352 = vld [vmem:[%s202 + $0x1ec] sm:$0xf]
      %v353 = vld [vmem:[%s202 + $0x1f0] sm:$0xf]
      %v354 = vld [vmem:[%s202 + $0x1f4] sm:$0xf]
      %v355 = vld [vmem:[%s202 + $0x1f8] sm:$0xf]
      %v356 = vld [vmem:[%s202 + $0x1fc] sm:$0xf]
      %v357 = vld [vmem:[%s202 + $0x200] sm:$0xf]
      %v358 = vld [vmem:[%s202 + $0x204] sm:$0xf]
      %v359 = vld [vmem:[%s202 + $0x208] sm:$0xf]
      %v360 = vld [vmem:[%s202 + $0x20c] sm:$0xf]
      %v361 = vld [vmem:[%s202 + $0x210] sm:$0xf]
      %v362 = vld [vmem:[%s202 + $0x214] sm:$0xf]
      %v363 = vld [vmem:[%s202 + $0x218] sm:$0xf]
      %v364 = vld [vmem:[%s202 + $0x21c] sm:$0xf]
      %v365 = vld [vmem:[%s202 + $0x220] sm:$0xf]
      %v366 = vld [vmem:[%s202 + $0x224] sm:$0xf]
      %v367 = vld [vmem:[%s202 + $0x228] sm:$0xf]
      %v368 = vld [vmem:[%s202 + $0x22c] sm:$0xf]
      %v369 = vld [vmem:[%s202 + $0x230] sm:$0xf]
      %v370 = vld [vmem:[%s202 + $0x234] sm:$0xf]
      %v371 = vld [vmem:[%s202 + $0x238] sm:$0xf]
      %v372 = vld [vmem:[%s202 + $0x23c] sm:$0xf]
      %v373 = vld [vmem:[%s202 + $0x240] sm:$0xf]
      %v374 = vld [vmem:[%s202 + $0x244] sm:$0xf]
      %v375 = vld [vmem:[%s202 + $0x248] sm:$0xf]
      %v376 = vld [vmem:[%s202 + $0x24c] sm:$0xf]
      %v377 = vld [vmem:[%s202 + $0x250] sm:$0xf]
      %v378 = vld [vmem:[%s202 + $0x254] sm:$0xf]
      %v379 = vld [vmem:[%s202 + $0x258] sm:$0xf]
      %v380 = vld [vmem:[%s202 + $0x25c] sm:$0xf]
      %v381 = vld [vmem:[%s202 + $0x260] sm:$0xf]
      %v382 = vld [vmem:[%s202 + $0x264] sm:$0xf]
      %v383 = vld [vmem:[%s202 + $0x268] sm:$0xf]
      %v384 = vld [vmem:[%s202 + $0x26c] sm:$0xf]
      %v385 = vld [vmem:[%s202 + $0x270] sm:$0xf]
      %v386 = vld [vmem:[%s202 + $0x274] sm:$0xf]
      %v387 = vld [vmem:[%s202 + $0x278] sm:$0xf]
      %v388 = vld [vmem:[%s202 + $0x27c] sm:$0xf]
      %v389 = vld [vmem:[%s202 + $0x280] sm:$0xf]
      %v390 = vld [vmem:[%s202 + $0x284] sm:$0xf]
      %v391 = vld [vmem:[%s202 + $0x288] sm:$0xf]
      %v392 = vld [vmem:[%s202 + $0x28c] sm:$0xf]
      %v393 = vld [vmem:[%s202 + $0x290] sm:$0xf]
      %v394 = vld [vmem:[%s202 + $0x294] sm:$0xf]
      %v395 = vld [vmem:[%s202 + $0x298] sm:$0xf]
      %v396 = vld [vmem:[%s202 + $0x29c] sm:$0xf]
      %v397 = vld [vmem:[%s202 + $0x2a0] sm:$0xf]
      %v398 = vld [vmem:[%s202 + $0x2a4] sm:$0xf]
      %v399 = vld [vmem:[%s202 + $0x2a8] sm:$0xf]
      %v400 = vld [vmem:[%s202 + $0x2ac] sm:$0xf]
      %v401 = vld [vmem:[%s202 + $0x2b0] sm:$0xf]
      %v402 = vld [vmem:[%s202 + $0x2b4] sm:$0xf]
      %v403 = vld [vmem:[%s202 + $0x2b8] sm:$0xf]
      %v404 = vld [vmem:[%s202 + $0x2bc] sm:$0xf]
      %v405 = vld [vmem:[%s202 + $0x2c0] sm:$0xf]
      %v406 = vld [vmem:[%s202 + $0x2c4] sm:$0xf]
      %v407 = vld [vmem:[%s202 + $0x2c8] sm:$0xf]
      %v408 = vld [vmem:[%s202 + $0x2cc] sm:$0xf]
      %v409 = vld [vmem:[%s202 + $0x2d0] sm:$0xf]
      %v410 = vld [vmem:[%s202 + $0x2d4] sm:$0xf]
      %v411 = vld [vmem:[%s202 + $0x2d8] sm:$0xf]
      %v412 = vld [vmem:[%s202 + $0x2dc] sm:$0xf]
      %v413 = vld [vmem:[%s202 + $0x2e0] sm:$0xf]
      %v414 = vld [vmem:[%s202 + $0x2e4] sm:$0xf]
      %v415 = vld [vmem:[%s202 + $0x2e8] sm:$0xf]
      %v416 = vld [vmem:[%s202 + $0x2ec] sm:$0xf]
      %v417 = vld [vmem:[%s202 + $0x2f0] sm:$0xf]
      %v418 = vld [vmem:[%s202 + $0x2f4] sm:$0xf]
      %v419 = vld [vmem:[%s202 + $0x2f8] sm:$0xf]
      %v420 = vld [vmem:[%s202 + $0x2fc] sm:$0xf]
      %v421 = vld [vmem:[%s202 + $0x300] sm:$0xf]
      %v422 = vld [vmem:[%s202 + $0x304] sm:$0xf]
      %v423 = vld [vmem:[%s202 + $0x308] sm:$0xf]
      %v424 = vld [vmem:[%s202 + $0x30c] sm:$0xf]
      %v425 = vld [vmem:[%s202 + $0x310] sm:$0xf]
      %v426 = vld [vmem:[%s202 + $0x314] sm:$0xf]
      %v427 = vld [vmem:[%s202 + $0x318] sm:$0xf]
      %v428 = vld [vmem:[%s202 + $0x31c] sm:$0xf]
      %v429 = vld [vmem:[%s202 + $0x320] sm:$0xf]
      %v430 = vld [vmem:[%s202 + $0x324] sm:$0xf]
      %v431 = vld [vmem:[%s202 + $0x328] sm:$0xf]
      %v432 = vld [vmem:[%s202 + $0x32c] sm:$0xf]
      %v433 = vld [vmem:[%s202 + $0x330] sm:$0xf]
      %v434 = vld [vmem:[%s202 + $0x334] sm:$0xf]
      %v435 = vld [vmem:[%s202 + $0x338] sm:$0xf]
      %v436 = vld [vmem:[%s202 + $0x33c] sm:$0xf]
      %v437 = vld [vmem:[%s202 + $0x340] sm:$0xf]
      %v438 = vld [vmem:[%s202 + $0x344] sm:$0xf]
      %v439 = vld [vmem:[%s202 + $0x348] sm:$0xf]
      %v440 = vld [vmem:[%s202 + $0x34c] sm:$0xf]
      %v441 = vld [vmem:[%s202 + $0x350] sm:$0xf]
      %v442 = vld [vmem:[%s202 + $0x354] sm:$0xf]
      %v443 = vld [vmem:[%s202 + $0x358] sm:$0xf]
      %v444 = vld [vmem:[%s202 + $0x35c] sm:$0xf]
      %v445 = vld [vmem:[%s202 + $0x360] sm:$0xf]
      %v446 = vld [vmem:[%s202 + $0x364] sm:$0xf]
      %v447 = vld [vmem:[%s202 + $0x368] sm:$0xf]
      %v448 = vld [vmem:[%s202 + $0x36c] sm:$0xf]
      %v449 = vld [vmem:[%s202 + $0x370] sm:$0xf]
      %v450 = vld [vmem:[%s202 + $0x374] sm:$0xf]
      %v451 = vld [vmem:[%s202 + $0x378] sm:$0xf]
      %v452 = vld [vmem:[%s202 + $0x37c] sm:$0xf]
      %v453 = vld [vmem:[%s202 + $0x380] sm:$0xf]
      %v454 = vld [vmem:[%s202 + $0x384] sm:$0xf]
      %v455 = vld [vmem:[%s202 + $0x388] sm:$0xf]
      %v456 = vld [vmem:[%s202 + $0x38c] sm:$0xf]
      %v457 = vld [vmem:[%s202 + $0x390] sm:$0xf]
      %v458 = vld [vmem:[%s202 + $0x394] sm:$0xf]
      %v459 = vld [vmem:[%s202 + $0x398] sm:$0xf]
      %v460 = vld [vmem:[%s202 + $0x39c] sm:$0xf]
      %v461 = vld [vmem:[%s202 + $0x3a0] sm:$0xf]
      %v462 = vld [vmem:[%s202 + $0x3a4] sm:$0xf]
      %v463 = vld [vmem:[%s202 + $0x3a8] sm:$0xf]
      %v464 = vld [vmem:[%s202 + $0x3ac] sm:$0xf]
      %v465 = vld [vmem:[%s202 + $0x3b0] sm:$0xf]
      %v466 = vld [vmem:[%s202 + $0x3b4] sm:$0xf]
      %v467 = vld [vmem:[%s202 + $0x3b8] sm:$0xf]
      %v468 = vld [vmem:[%s202 + $0x3bc] sm:$0xf]
      %v469 = vld [vmem:[%s202 + $0x3c0] sm:$0xf]
      %v470 = vld [vmem:[%s202 + $0x3c4] sm:$0xf]
      %v471 = vld [vmem:[%s202 + $0x3c8] sm:$0xf]
      %v472 = vld [vmem:[%s202 + $0x3cc] sm:$0xf]
      %v473 = vld [vmem:[%s202 + $0x3d0] sm:$0xf]
      %v474 = vld [vmem:[%s202 + $0x3d4] sm:$0xf]
      %v475 = vld [vmem:[%s202 + $0x3d8] sm:$0xf]
      %v476 = vld [vmem:[%s202 + $0x3dc] sm:$0xf]
      %v477 = vld [vmem:[%s202 + $0x3e0] sm:$0xf]
      %v478 = vld [vmem:[%s202 + $0x3e4] sm:$0xf]
      %v479 = vld [vmem:[%s202 + $0x3e8] sm:$0xf]
      %v480 = vld [vmem:[%s202 + $0x3ec] sm:$0xf]
      %v481 = vld [vmem:[%s202 + $0x3f0] sm:$0xf]
      %v482 = vld [vmem:[%s202 + $0x3f4] sm:$0xf]
      %v483 = vld [vmem:[%s202 + $0x3f8] sm:$0xf]
      %v484 = vld [vmem:[%s202 + $0x3fc] sm:$0xf]
      %v485 = vld [vmem:[%s202 + $0x400] sm:$0xf]
      %v486 = vld [vmem:[%s202 + $0x404] sm:$0xf]
      %v487 = vld [vmem:[%s202 + $0x408] sm:$0xf]
      %v488 = vld [vmem:[%s202 + $0x40c] sm:$0xf]
      %v489 = vld [vmem:[%s202 + $0x410] sm:$0xf]
      %v490 = vld [vmem:[%s202 + $0x414] sm:$0xf]
      %v491 = vld [vmem:[%s202 + $0x418] sm:$0xf]
      %v492 = vld [vmem:[%s202 + $0x41c] sm:$0xf]
      %v493 = vld [vmem:[%s202 + $0x420] sm:$0xf]
      %v494 = vld [vmem:[%s202 + $0x424] sm:$0xf]
      %v495 = vld [vmem:[%s202 + $0x428] sm:$0xf]
      %v496 = vld [vmem:[%s202 + $0x42c] sm:$0xf]
      %v497 = vld [vmem:[%s202 + $0x430] sm:$0xf]
      %v498 = vld [vmem:[%s202 + $0x434] sm:$0xf]
      %v499 = vld [vmem:[%s202 + $0x438] sm:$0xf]
      %v500 = vld [vmem:[%s202 + $0x43c] sm:$0xf]
      %v501 = vld [vmem:[%s202 + $0x440] sm:$0xf]
      %v502 = vld [vmem:[%s202 + $0x444] sm:$0xf]
      %v503 = vld [vmem:[%s202 + $0x448] sm:$0xf]
      %v504 = vld [vmem:[%s202 + $0x44c] sm:$0xf]
      %v505 = vld [vmem:[%s202 + $0x450] sm:$0xf]
      %v506 = vld [vmem:[%s202 + $0x454] sm:$0xf]
      %v507 = vld [vmem:[%s202 + $0x458] sm:$0xf]
      %v508 = vld [vmem:[%s202 + $0x45c] sm:$0xf]
      %v509 = vld [vmem:[%s202 + $0x460] sm:$0xf]
      %v510 = vld [vmem:[%s202 + $0x464] sm:$0xf]
      %v511 = vld [vmem:[%s202 + $0x468] sm:$0xf]
      %v512 = vld [vmem:[%s202 + $0x46c] sm:$0xf]
      %v513 = vld [vmem:[%s202 + $0x470] sm:$0xf]
      %v514 = vld [vmem:[%s202 + $0x474] sm:$0xf]
      %v515 = vld [vmem:[%s202 + $0x478] sm:$0xf]
      %v516 = vld [vmem:[%s202 + $0x47c] sm:$0xf]
      %v517 = vld [vmem:[%s202 + $0x480] sm:$0xf]
      %v518 = vld [vmem:[%s202 + $0x484] sm:$0xf]
      %v519 = vld [vmem:[%s202 + $0x488] sm:$0xf]
      %v520 = vld [vmem:[%s202 + $0x48c] sm:$0xf]
      %v521 = vld [vmem:[%s202 + $0x490] sm:$0xf]
      %v522 = vld [vmem:[%s202 + $0x494] sm:$0xf]
      %v523 = vld [vmem:[%s202 + $0x498] sm:$0xf]
      %v524 = vld [vmem:[%s202 + $0x49c] sm:$0xf]
      %v525 = vld [vmem:[%s202 + $0x4a0] sm:$0xf]
      %v526 = vld [vmem:[%s202 + $0x4a4] sm:$0xf]
      %v527 = vld [vmem:[%s202 + $0x4a8] sm:$0xf]
      %v528 = vld [vmem:[%s202 + $0x4ac] sm:$0xf]
      %v529 = vld [vmem:[%s202 + $0x4b0] sm:$0xf]
      %v530 = vld [vmem:[%s202 + $0x4b4] sm:$0xf]
      %v531 = vld [vmem:[%s202 + $0x4b8] sm:$0xf]
      %v532 = vld [vmem:[%s202 + $0x4bc] sm:$0xf]
      %v533 = vld [vmem:[%s202 + $0x4c0] sm:$0xf]
      %v534 = vld [vmem:[%s202 + $0x4c4] sm:$0xf]
      %v535 = vld [vmem:[%s202 + $0x4c8] sm:$0xf]
      %v536 = vld [vmem:[%s202 + $0x4cc] sm:$0xf]
      %v537 = vld [vmem:[%s202 + $0x4d0] sm:$0xf]
      %v538 = vld [vmem:[%s202 + $0x4d4] sm:$0xf]
      %v539 = vld [vmem:[%s202 + $0x4d8] sm:$0xf]
      %v540 = vld [vmem:[%s202 + $0x4dc] sm:$0xf]
      %v541 = vld [vmem:[%s202 + $0x4e0] sm:$0xf]
      %v542 = vld [vmem:[%s202 + $0x4e4] sm:$0xf]
      %v543 = vld [vmem:[%s202 + $0x4e8] sm:$0xf]
      %v544 = vld [vmem:[%s202 + $0x4ec] sm:$0xf]
      %v545 = vld [vmem:[%s202 + $0x4f0] sm:$0xf]
      %v546 = vld [vmem:[%s202 + $0x4f4] sm:$0xf]
      %v547 = vld [vmem:[%s202 + $0x4f8] sm:$0xf]
      %v548 = vld [vmem:[%s202 + $0x4fc] sm:$0xf]
      %v549 = vld [vmem:[%s202 + $0x500] sm:$0xf]
      %v550 = vld [vmem:[%s202 + $0x504] sm:$0xf]
      %v551 = vld [vmem:[%s202 + $0x508] sm:$0xf]
      %v552 = vld [vmem:[%s202 + $0x50c] sm:$0xf]
      %v553 = vld [vmem:[%s202 + $0x510] sm:$0xf]
      %v554 = vld [vmem:[%s202 + $0x514] sm:$0xf]
      %v555 = vld [vmem:[%s202 + $0x518] sm:$0xf]
      %v556 = vld [vmem:[%s202 + $0x51c] sm:$0xf]
      %v557 = vld [vmem:[%s202 + $0x520] sm:$0xf]
      %v558 = vld [vmem:[%s202 + $0x524] sm:$0xf]
      %v559 = vld [vmem:[%s202 + $0x528] sm:$0xf]
      %v560 = vld [vmem:[%s202 + $0x52c] sm:$0xf]
      %v561 = vld [vmem:[%s202 + $0x530] sm:$0xf]
      %v562 = vld [vmem:[%s202 + $0x534] sm:$0xf]
      %v563 = vld [vmem:[%s202 + $0x538] sm:$0xf]
      %v564 = vld [vmem:[%s202 + $0x53c] sm:$0xf]
      %v565 = vld [vmem:[%s202 + $0x540] sm:$0xf]
      %v566 = vld [vmem:[%s202 + $0x544] sm:$0xf]
      %v567 = vld [vmem:[%s202 + $0x548] sm:$0xf]
      %v568 = vld [vmem:[%s202 + $0x54c] sm:$0xf]
      %v569 = vld [vmem:[%s202 + $0x550] sm:$0xf]
      %v570 = vld [vmem:[%s202 + $0x554] sm:$0xf]
      %v571 = vld [vmem:[%s202 + $0x558] sm:$0xf]
      %v572 = vld [vmem:[%s202 + $0x55c] sm:$0xf]
      %v573 = vld [vmem:[%s202 + $0x560] sm:$0xf]
      %v574 = vld [vmem:[%s202 + $0x564] sm:$0xf]
      %v575 = vld [vmem:[%s202 + $0x568] sm:$0xf]
      %v576 = vld [vmem:[%s202 + $0x56c] sm:$0xf]
      %v577 = vld [vmem:[%s202 + $0x570] sm:$0xf]
      %v578 = vld [vmem:[%s202 + $0x574] sm:$0xf]
      %v579 = vld [vmem:[%s202 + $0x578] sm:$0xf]
      %v580 = vld [vmem:[%s202 + $0x57c] sm:$0xf]
      %v581 = vld [vmem:[%s202 + $0x580] sm:$0xf]
      %v582 = vld [vmem:[%s202 + $0x584] sm:$0xf]
      %v583 = vld [vmem:[%s202 + $0x588] sm:$0xf]
      %v584 = vld [vmem:[%s202 + $0x58c] sm:$0xf]
      %v585 = vld [vmem:[%s202 + $0x590] sm:$0xf]
      %v586 = vld [vmem:[%s202 + $0x594] sm:$0xf]
      %v587 = vld [vmem:[%s202 + $0x598] sm:$0xf]
      %v588 = vld [vmem:[%s202 + $0x59c] sm:$0xf]
      %v589 = vld [vmem:[%s202 + $0x5a0] sm:$0xf]
      %v590 = vld [vmem:[%s202 + $0x5a4] sm:$0xf]
      %v591 = vld [vmem:[%s202 + $0x5a8] sm:$0xf]
      %v592 = vld [vmem:[%s202 + $0x5ac] sm:$0xf]
      %v593 = vld [vmem:[%s202 + $0x5b0] sm:$0xf]
      %v594 = vld [vmem:[%s202 + $0x5b4] sm:$0xf]
      %v595 = vld [vmem:[%s202 + $0x5b8] sm:$0xf]
      %v596 = vld [vmem:[%s202 + $0x5bc] sm:$0xf]
      %v597 = vld [vmem:[%s202 + $0x5c0] sm:$0xf]
      %v598 = vld [vmem:[%s202 + $0x5c4] sm:$0xf]
      %v599 = vld [vmem:[%s202 + $0x5c8] sm:$0xf]
      %v600 = vld [vmem:[%s202 + $0x5cc] sm:$0xf]
      %v601 = vld [vmem:[%s202 + $0x5d0] sm:$0xf]
      %v602 = vld [vmem:[%s202 + $0x5d4] sm:$0xf]
      %v603 = vld [vmem:[%s202 + $0x5d8] sm:$0xf]
      %v604 = vld [vmem:[%s202 + $0x5dc] sm:$0xf]
      %v605 = vld [vmem:[%s202 + $0x5e0] sm:$0xf]
      %v606 = vld [vmem:[%s202 + $0x5e4] sm:$0xf]
      %v607 = vld [vmem:[%s202 + $0x5e8] sm:$0xf]
      %v608 = vld [vmem:[%s202 + $0x5ec] sm:$0xf]
      %v609 = vld [vmem:[%s202 + $0x5f0] sm:$0xf]
      %v610 = vld [vmem:[%s202 + $0x5f4] sm:$0xf]
      %v611 = vld [vmem:[%s202 + $0x5f8] sm:$0xf]
      %v612 = vld [vmem:[%s202 + $0x5fc] sm:$0xf]
      %v613 = vld [vmem:[%s202 + $0x600] sm:$0xf]
      %v614 = vld [vmem:[%s202 + $0x604] sm:$0xf]
      %v615 = vld [vmem:[%s202 + $0x608] sm:$0xf]
      %v616 = vld [vmem:[%s202 + $0x60c] sm:$0xf]
      %v617 = vld [vmem:[%s202 + $0x610] sm:$0xf]
      %v618 = vld [vmem:[%s202 + $0x614] sm:$0xf]
      %v619 = vld [vmem:[%s202 + $0x618] sm:$0xf]
      %v620 = vld [vmem:[%s202 + $0x61c] sm:$0xf]
      %v621 = vld [vmem:[%s202 + $0x620] sm:$0xf]
      %v622 = vld [vmem:[%s202 + $0x624] sm:$0xf]
      %v623 = vld [vmem:[%s202 + $0x628] sm:$0xf]
      %v624 = vld [vmem:[%s202 + $0x62c] sm:$0xf]
      %v625 = vld [vmem:[%s202 + $0x630] sm:$0xf]
      %v626 = vld [vmem:[%s202 + $0x634] sm:$0xf]
      %v627 = vld [vmem:[%s202 + $0x638] sm:$0xf]
      %v628 = vld [vmem:[%s202 + $0x63c] sm:$0xf]
      %v629 = vld [vmem:[%s202 + $0x640] sm:$0xf]
      %v630 = vld [vmem:[%s202 + $0x644] sm:$0xf]
      %v631 = vld [vmem:[%s202 + $0x648] sm:$0xf]
      %v632 = vld [vmem:[%s202 + $0x64c] sm:$0xf]
      %v633 = vld [vmem:[%s202 + $0x650] sm:$0xf]
      %v634 = vld [vmem:[%s202 + $0x654] sm:$0xf]
      %v635 = vld [vmem:[%s202 + $0x658] sm:$0xf]
      %v636 = vld [vmem:[%s202 + $0x65c] sm:$0xf]
      %v637 = vld [vmem:[%s202 + $0x660] sm:$0xf]
      %v638 = vld [vmem:[%s202 + $0x664] sm:$0xf]
      %v639 = vld [vmem:[%s202 + $0x668] sm:$0xf]
      %v640 = vld [vmem:[%s202 + $0x66c] sm:$0xf]
      %v641 = vld [vmem:[%s202 + $0x670] sm:$0xf]
      %v642 = vld [vmem:[%s202 + $0x674] sm:$0xf]
      %v643 = vld [vmem:[%s202 + $0x678] sm:$0xf]
      %v644 = vld [vmem:[%s202 + $0x67c] sm:$0xf]
      %v645 = vld [vmem:[%s202 + $0x680] sm:$0xf]
      %v646 = vld [vmem:[%s202 + $0x684] sm:$0xf]
      %v647 = vld [vmem:[%s202 + $0x688] sm:$0xf]
      %v648 = vld [vmem:[%s202 + $0x68c] sm:$0xf]
      %v649 = vld [vmem:[%s202 + $0x690] sm:$0xf]
      %v650 = vld [vmem:[%s202 + $0x694] sm:$0xf]
      %v651 = vld [vmem:[%s202 + $0x698] sm:$0xf]
      %v652 = vld [vmem:[%s202 + $0x69c] sm:$0xf]
      %v653 = vld [vmem:[%s202 + $0x6a0] sm:$0xf]
      %v654 = vld [vmem:[%s202 + $0x6a4] sm:$0xf]
      %v655 = vld [vmem:[%s202 + $0x6a8] sm:$0xf]
      %v656 = vld [vmem:[%s202 + $0x6ac] sm:$0xf]
      %v657 = vld [vmem:[%s202 + $0x6b0] sm:$0xf]
      %v658 = vld [vmem:[%s202 + $0x6b4] sm:$0xf]
      %v659 = vld [vmem:[%s202 + $0x6b8] sm:$0xf]
      %v660 = vld [vmem:[%s202 + $0x6bc] sm:$0xf]
      %v661 = vld [vmem:[%s202 + $0x6c0] sm:$0xf]
      %v662 = vld [vmem:[%s202 + $0x6c4] sm:$0xf]
      %v663 = vld [vmem:[%s202 + $0x6c8] sm:$0xf]
      %v664 = vld [vmem:[%s202 + $0x6cc] sm:$0xf]
      %v665 = vld [vmem:[%s202 + $0x6d0] sm:$0xf]
      %v666 = vld [vmem:[%s202 + $0x6d4] sm:$0xf]
      %v667 = vld [vmem:[%s202 + $0x6d8] sm:$0xf]
      %v668 = vld [vmem:[%s202 + $0x6dc] sm:$0xf]
      %v669 = vld [vmem:[%s202 + $0x6e0] sm:$0xf]
      %v670 = vld [vmem:[%s202 + $0x6e4] sm:$0xf]
      %v671 = vld [vmem:[%s202 + $0x6e8] sm:$0xf]
      %v672 = vld [vmem:[%s202 + $0x6ec] sm:$0xf]
      %v673 = vld [vmem:[%s202 + $0x6f0] sm:$0xf]
      %v674 = vld [vmem:[%s202 + $0x6f4] sm:$0xf]
      %v675 = vld [vmem:[%s202 + $0x6f8] sm:$0xf]
      %v676 = vld [vmem:[%s202 + $0x6fc] sm:$0xf]
      %v677 = vld [vmem:[%s202 + $0x700] sm:$0xf]
      %v678 = vld [vmem:[%s202 + $0x704] sm:$0xf]
      %v679 = vld [vmem:[%s202 + $0x708] sm:$0xf]
      %v680 = vld [vmem:[%s202 + $0x70c] sm:$0xf]
      %v681 = vld [vmem:[%s202 + $0x710] sm:$0xf]
      %v682 = vld [vmem:[%s202 + $0x714] sm:$0xf]
      %v683 = vld [vmem:[%s202 + $0x718] sm:$0xf]
      %v684 = vld [vmem:[%s202 + $0x71c] sm:$0xf]
      %v685 = vld [vmem:[%s202 + $0x720] sm:$0xf]
      %v686 = vld [vmem:[%s202 + $0x724] sm:$0xf]
      %v687 = vld [vmem:[%s202 + $0x728] sm:$0xf]
      %v688 = vld [vmem:[%s202 + $0x72c] sm:$0xf]
      %v689 = vld [vmem:[%s202 + $0x730] sm:$0xf]
      %v690 = vld [vmem:[%s202 + $0x734] sm:$0xf]
      %v691 = vld [vmem:[%s202 + $0x738] sm:$0xf]
      %v692 = vld [vmem:[%s202 + $0x73c] sm:$0xf]
      %v693 = vld [vmem:[%s202 + $0x740] sm:$0xf]
      %v694 = vld [vmem:[%s202 + $0x744] sm:$0xf]
      %v695 = vld [vmem:[%s202 + $0x748] sm:$0xf]
      %v696 = vld [vmem:[%s202 + $0x74c] sm:$0xf]
      %v697 = vld [vmem:[%s202 + $0x750] sm:$0xf]
      %v698 = vld [vmem:[%s202 + $0x754] sm:$0xf]
      %v699 = vld [vmem:[%s202 + $0x758] sm:$0xf]
      %v700 = vld [vmem:[%s202 + $0x75c] sm:$0xf]
      %v701 = vld [vmem:[%s202 + $0x760] sm:$0xf]
      %v702 = vld [vmem:[%s202 + $0x764] sm:$0xf]
      %v703 = vld [vmem:[%s202 + $0x768] sm:$0xf]
      %v704 = vld [vmem:[%s202 + $0x76c] sm:$0xf]
      %v705 = vld [vmem:[%s202 + $0x770] sm:$0xf]
      %v706 = vld [vmem:[%s202 + $0x774] sm:$0xf]
      %v707 = vld [vmem:[%s202 + $0x778] sm:$0xf]
      %v708 = vld [vmem:[%s202 + $0x77c] sm:$0xf]
      %v709 = vld [vmem:[%s202 + $0x780] sm:$0xf]
      %v710 = vld [vmem:[%s202 + $0x784] sm:$0xf]
      %v711 = vld [vmem:[%s202 + $0x788] sm:$0xf]
      %v712 = vld [vmem:[%s202 + $0x78c] sm:$0xf]
      %v713 = vld [vmem:[%s202 + $0x790] sm:$0xf]
      %v714 = vld [vmem:[%s202 + $0x794] sm:$0xf]
      %v715 = vld [vmem:[%s202 + $0x798] sm:$0xf]
      %v716 = vld [vmem:[%s202 + $0x79c] sm:$0xf]
      %v717 = vld [vmem:[%s202 + $0x7a0] sm:$0xf]
      %v718 = vld [vmem:[%s202 + $0x7a4] sm:$0xf]
      %v719 = vld [vmem:[%s202 + $0x7a8] sm:$0xf]
      %v720 = vld [vmem:[%s202 + $0x7ac] sm:$0xf]
      %v721 = vld [vmem:[%s202 + $0x7b0] sm:$0xf]
      %v722 = vld [vmem:[%s202 + $0x7b4] sm:$0xf]
      %v723 = vld [vmem:[%s202 + $0x7b8] sm:$0xf]
      %v724 = vld [vmem:[%s202 + $0x7bc] sm:$0xf]
      %v725 = vld [vmem:[%s202 + $0x7c0] sm:$0xf]
      %v726 = vld [vmem:[%s202 + $0x7c4] sm:$0xf]
      %v727 = vld [vmem:[%s202 + $0x7c8] sm:$0xf]
      %v728 = vld [vmem:[%s202 + $0x7cc] sm:$0xf]
      %v729 = vld [vmem:[%s202 + $0x7d0] sm:$0xf]
      %v730 = vld [vmem:[%s202 + $0x7d4] sm:$0xf]
      %v731 = vld [vmem:[%s202 + $0x7d8] sm:$0xf]
      %v732 = vld [vmem:[%s202 + $0x7dc] sm:$0xf]
      %v733 = vld [vmem:[%s202 + $0x7e0] sm:$0xf]
      %v734 = vld [vmem:[%s202 + $0x7e4] sm:$0xf]
      %v735 = vld [vmem:[%s202 + $0x7e8] sm:$0xf]
      %v736 = vld [vmem:[%s202 + $0x7ec] sm:$0xf]
      %v737 = vld [vmem:[%s202 + $0x7f0] sm:$0xf]
      %v738 = vld [vmem:[%s202 + $0x7f4] sm:$0xf]
      %v739 = vld [vmem:[%s202 + $0x7f8] sm:$0xf]
      %v740 = vld [vmem:[%s202 + $0x7fc] sm:$0xf]
      %v741 = vld [vmem:[%s202 + $0x800] sm:$0xf]
      %v742 = vld [vmem:[%s202 + $0x804] sm:$0xf]
      %v743 = vld [vmem:[%s202 + $0x808] sm:$0xf]
      %v744 = vld [vmem:[%s202 + $0x80c] sm:$0xf]
      %v745 = vld [vmem:[%s202 + $0x810] sm:$0xf]
      %v746 = vld [vmem:[%s202 + $0x814] sm:$0xf]
      %v747 = vld [vmem:[%s202 + $0x818] sm:$0xf]
      %v748 = vld [vmem:[%s202 + $0x81c] sm:$0xf]
      %v749 = vld [vmem:[%s202 + $0x820] sm:$0xf]
      %v750 = vld [vmem:[%s202 + $0x824] sm:$0xf]
      %v751 = vld [vmem:[%s202 + $0x828] sm:$0xf]
      %v752 = vld [vmem:[%s202 + $0x82c] sm:$0xf]
      %v753 = vld [vmem:[%s202 + $0x830] sm:$0xf]
      %v754 = vld [vmem:[%s202 + $0x834] sm:$0xf]
      %v755 = vld [vmem:[%s202 + $0x838] sm:$0xf]
      %v756 = vld [vmem:[%s202 + $0x83c] sm:$0xf]
      %v757 = vld [vmem:[%s202 + $0x840] sm:$0xf]
      %v758 = vld [vmem:[%s202 + $0x844] sm:$0xf]
      %v759 = vld [vmem:[%s202 + $0x848] sm:$0xf]
      %v760 = vld [vmem:[%s202 + $0x84c] sm:$0xf]
      %v761 = vld [vmem:[%s202 + $0x850] sm:$0xf]
      %v762 = vld [vmem:[%s202 + $0x854] sm:$0xf]
      %v763 = vld [vmem:[%s202 + $0x858] sm:$0xf]
      %v764 = vld [vmem:[%s202 + $0x85c] sm:$0xf]
      %v765 = vld [vmem:[%s202 + $0x860] sm:$0xf]
      %v766 = vld [vmem:[%s202 + $0x864] sm:$0xf]
      %v767 = vld [vmem:[%s202 + $0x868] sm:$0xf]
      %v768 = vld [vmem:[%s202 + $0x86c] sm:$0xf]
      %v769 = vld [vmem:[%s202 + $0x870] sm:$0xf]
      %v770 = vld [vmem:[%s202 + $0x874] sm:$0xf]
      %v771 = vld [vmem:[%s202 + $0x878] sm:$0xf]
      %v772 = vld [vmem:[%s202 + $0x87c] sm:$0xf]
      %v773 = vld [vmem:[%s202 + $0x880] sm:$0xf]
      %v774 = vld [vmem:[%s202 + $0x884] sm:$0xf]
      %v775 = vld [vmem:[%s202 + $0x888] sm:$0xf]
      %v776 = vld [vmem:[%s202 + $0x88c] sm:$0xf]
      %v777 = vld [vmem:[%s202 + $0x890] sm:$0xf]
      %v778 = vld [vmem:[%s202 + $0x894] sm:$0xf]
      %v779 = vld [vmem:[%s202 + $0x898] sm:$0xf]
      %v780 = vld [vmem:[%s202 + $0x89c] sm:$0xf]
      %v781 = vld [vmem:[%s202 + $0x8a0] sm:$0xf]
      %v782 = vld [vmem:[%s202 + $0x8a4] sm:$0xf]
      %v783 = vld [vmem:[%s202 + $0x8a8] sm:$0xf]
      %v784 = vld [vmem:[%s202 + $0x8ac] sm:$0xf]
      %v785 = vld [vmem:[%s202 + $0x8b0] sm:$0xf]
      %v786 = vld [vmem:[%s202 + $0x8b4] sm:$0xf]
      %v787 = vld [vmem:[%s202 + $0x8b8] sm:$0xf]
      %v788 = vld [vmem:[%s202 + $0x8bc] sm:$0xf]
      %v789 = vld [vmem:[%s202 + $0x8c0] sm:$0xf]
      %v790 = vld [vmem:[%s202 + $0x8c4] sm:$0xf]
      %v791 = vld [vmem:[%s202 + $0x8c8] sm:$0xf]
      %v792 = vld [vmem:[%s202 + $0x8cc] sm:$0xf]
      %v793 = vld [vmem:[%s202 + $0x8d0] sm:$0xf]
      %v794 = vld [vmem:[%s202 + $0x8d4] sm:$0xf]
      %v795 = vld [vmem:[%s202 + $0x8d8] sm:$0xf]
      %v796 = vld [vmem:[%s202 + $0x8dc] sm:$0xf]
      %v797 = vld [vmem:[%s202 + $0x8e0] sm:$0xf]
      %v798 = vld [vmem:[%s202 + $0x8e4] sm:$0xf]
      %v799 = vld [vmem:[%s202 + $0x8e8] sm:$0xf]
      %v800 = vld [vmem:[%s202 + $0x8ec] sm:$0xf]
      %v801 = vld [vmem:[%s202 + $0x8f0] sm:$0xf]
      %v802 = vld [vmem:[%s202 + $0x8f4] sm:$0xf]
      %v803 = vld [vmem:[%s202 + $0x8f8] sm:$0xf]
      %v804 = vld [vmem:[%s202 + $0x8fc] sm:$0xf]
      %v805 = vld [vmem:[%s202 + $0x900] sm:$0xf]
      %v806 = vld [vmem:[%s202 + $0x904] sm:$0xf]
      %v807 = vld [vmem:[%s202 + $0x908] sm:$0xf]
      %v808 = vld [vmem:[%s202 + $0x90c] sm:$0xf]
      %v809 = vld [vmem:[%s202 + $0x910] sm:$0xf]
      %v810 = vld [vmem:[%s202 + $0x914] sm:$0xf]
      %v811 = vld [vmem:[%s202 + $0x918] sm:$0xf]
      %v812 = vld [vmem:[%s202 + $0x91c] sm:$0xf]
      %v813 = vld [vmem:[%s202 + $0x920] sm:$0xf]
      %v814 = vld [vmem:[%s202 + $0x924] sm:$0xf]
      %v815 = vld [vmem:[%s202 + $0x928] sm:$0xf]
      %v816 = vld [vmem:[%s202 + $0x92c] sm:$0xf]
      %v817 = vld [vmem:[%s202 + $0x930] sm:$0xf]
      %v818 = vld [vmem:[%s202 + $0x934] sm:$0xf]
      %v819 = vld [vmem:[%s202 + $0x938] sm:$0xf]
      %v820 = vld [vmem:[%s202 + $0x93c] sm:$0xf]
      %v821 = vld [vmem:[%s202 + $0x940] sm:$0xf]
      %v822 = vld [vmem:[%s202 + $0x944] sm:$0xf]
      %v823 = vld [vmem:[%s202 + $0x948] sm:$0xf]
      %v824 = vld [vmem:[%s202 + $0x94c] sm:$0xf]
      %v825 = vld [vmem:[%s202 + $0x950] sm:$0xf]
      %v826 = vld [vmem:[%s202 + $0x954] sm:$0xf]
      %v827 = vld [vmem:[%s202 + $0x958] sm:$0xf]
      %v828 = vld [vmem:[%s202 + $0x95c] sm:$0xf]
      %v829 = vld [vmem:[%s202 + $0x960] sm:$0xf]
      %v830 = vld [vmem:[%s202 + $0x964] sm:$0xf]
      %v831 = vld [vmem:[%s202 + $0x968] sm:$0xf]
      %v832 = vld [vmem:[%s202 + $0x96c] sm:$0xf]
      %v833 = vld [vmem:[%s202 + $0x970] sm:$0xf]
      %v834 = vld [vmem:[%s202 + $0x974] sm:$0xf]
      %v835 = vld [vmem:[%s202 + $0x978] sm:$0xf]
      %v836 = vld [vmem:[%s202 + $0x97c] sm:$0xf]
      %v837 = vld [vmem:[%s202 + $0x980] sm:$0xf]
      %v838 = vld [vmem:[%s202 + $0x984] sm:$0xf]
      %v839 = vld [vmem:[%s202 + $0x988] sm:$0xf]
      %v840 = vld [vmem:[%s202 + $0x98c] sm:$0xf]
      %v841 = vld [vmem:[%s202 + $0x990] sm:$0xf]
      %v842 = vld [vmem:[%s202 + $0x994] sm:$0xf]
      %v843 = vld [vmem:[%s202 + $0x998] sm:$0xf]
      %v844 = vld [vmem:[%s202 + $0x99c] sm:$0xf]
      %v845 = vld [vmem:[%s202 + $0x9a0] sm:$0xf]
      %v846 = vld [vmem:[%s202 + $0x9a4] sm:$0xf]
      %v847 = vld [vmem:[%s202 + $0x9a8] sm:$0xf]
      %v848 = vld [vmem:[%s202 + $0x9ac] sm:$0xf]
      %v849 = vld [vmem:[%s202 + $0x9b0] sm:$0xf]
      %v850 = vld [vmem:[%s202 + $0x9b4] sm:$0xf]
      %v851 = vld [vmem:[%s202 + $0x9b8] sm:$0xf]
      %v852 = vld [vmem:[%s202 + $0x9bc] sm:$0xf]
      %v853 = vld [vmem:[%s202 + $0x9c0] sm:$0xf]
      %v854 = vld [vmem:[%s202 + $0x9c4] sm:$0xf]
      %v855 = vld [vmem:[%s202 + $0x9c8] sm:$0xf]
      %v856 = vld [vmem:[%s202 + $0x9cc] sm:$0xf]
      %v857 = vld [vmem:[%s202 + $0x9d0] sm:$0xf]
      %v858 = vld [vmem:[%s202 + $0x9d4] sm:$0xf]
      %v859 = vld [vmem:[%s202 + $0x9d8] sm:$0xf]
      %v860 = vld [vmem:[%s202 + $0x9dc] sm:$0xf]
      %v861 = vld [vmem:[%s202 + $0x9e0] sm:$0xf]
      %v862 = vld [vmem:[%s202 + $0x9e4] sm:$0xf]
      %v863 = vld [vmem:[%s202 + $0x9e8] sm:$0xf]
      %v864 = vld [vmem:[%s202 + $0x9ec] sm:$0xf]
      %v865 = vld [vmem:[%s202 + $0x9f0] sm:$0xf]
      %v866 = vld [vmem:[%s202 + $0x9f4] sm:$0xf]
      %v867 = vld [vmem:[%s202 + $0x9f8] sm:$0xf]
      %v868 = vld [vmem:[%s202 + $0x9fc] sm:$0xf]
      %v869 = vld [vmem:[%s202 + $0xa00] sm:$0xf]
      %v870 = vld [vmem:[%s202 + $0xa04] sm:$0xf]
      %v871 = vld [vmem:[%s202 + $0xa08] sm:$0xf]
      %v872 = vld [vmem:[%s202 + $0xa0c] sm:$0xf]
      %v873 = vld [vmem:[%s202 + $0xa10] sm:$0xf]
      %v874 = vld [vmem:[%s202 + $0xa14] sm:$0xf]
      %v875 = vld [vmem:[%s202 + $0xa18] sm:$0xf]
      %v876 = vld [vmem:[%s202 + $0xa1c] sm:$0xf]
      %v877 = vld [vmem:[%s202 + $0xa20] sm:$0xf]
      %v878 = vld [vmem:[%s202 + $0xa24] sm:$0xf]
      %v879 = vld [vmem:[%s202 + $0xa28] sm:$0xf]
      %v880 = vld [vmem:[%s202 + $0xa2c] sm:$0xf]
      %v881 = vld [vmem:[%s202 + $0xa30] sm:$0xf]
      %v882 = vld [vmem:[%s202 + $0xa34] sm:$0xf]
      %v883 = vld [vmem:[%s202 + $0xa38] sm:$0xf]
      %v884 = vld [vmem:[%s202 + $0xa3c] sm:$0xf]
      %v885 = vld [vmem:[%s202 + $0xa40] sm:$0xf]
      %v886 = vld [vmem:[%s202 + $0xa44] sm:$0xf]
      %v887 = vld [vmem:[%s202 + $0xa48] sm:$0xf]
      %v888 = vld [vmem:[%s202 + $0xa4c] sm:$0xf]
      %v889 = vld [vmem:[%s202 + $0xa50] sm:$0xf]
      %v890 = vld [vmem:[%s202 + $0xa54] sm:$0xf]
      %v891 = vld [vmem:[%s202 + $0xa58] sm:$0xf]
      %v892 = vld [vmem:[%s202 + $0xa5c] sm:$0xf]
      %v893 = vld [vmem:[%s202 + $0xa60] sm:$0xf]
      %v894 = vld [vmem:[%s202 + $0xa64] sm:$0xf]
      %v895 = vld [vmem:[%s202 + $0xa68] sm:$0xf]
      %v896 = vld [vmem:[%s202 + $0xa6c] sm:$0xf]
      %v897 = vld [vmem:[%s202 + $0xa70] sm:$0xf]
      %v898 = vld [vmem:[%s202 + $0xa74] sm:$0xf]
      %v899 = vld [vmem:[%s202 + $0xa78] sm:$0xf]
      %v900 = vld [vmem:[%s202 + $0xa7c] sm:$0xf]
      %v901 = vld [vmem:[%s202 + $0xa80] sm:$0xf]
      %v902 = vld [vmem:[%s202 + $0xa84] sm:$0xf]
      %v903 = vld [vmem:[%s202 + $0xa88] sm:$0xf]
      %v904 = vld [vmem:[%s202 + $0xa8c] sm:$0xf]
      %v905 = vld [vmem:[%s202 + $0xa90] sm:$0xf]
      %v906 = vld [vmem:[%s202 + $0xa94] sm:$0xf]
      %v907 = vld [vmem:[%s202 + $0xa98] sm:$0xf]
      %v908 = vld [vmem:[%s202 + $0xa9c] sm:$0xf]
      %v909 = vld [vmem:[%s202 + $0xaa0] sm:$0xf]
      %v910 = vld [vmem:[%s202 + $0xaa4] sm:$0xf]
      %v911 = vld [vmem:[%s202 + $0xaa8] sm:$0xf]
      %v912 = vld [vmem:[%s202 + $0xaac] sm:$0xf]
      %v913 = vld [vmem:[%s202 + $0xab0] sm:$0xf]
      %v914 = vld [vmem:[%s202 + $0xab4] sm:$0xf]
      %v915 = vld [vmem:[%s202 + $0xab8] sm:$0xf]
      %v916 = vld [vmem:[%s202 + $0xabc] sm:$0xf]
      %v917 = vld [vmem:[%s202 + $0xac0] sm:$0xf]
      %v918 = vld [vmem:[%s202 + $0xac4] sm:$0xf]
      %v919 = vld [vmem:[%s202 + $0xac8] sm:$0xf]
      %v920 = vld [vmem:[%s202 + $0xacc] sm:$0xf]
      %v921 = vld [vmem:[%s202 + $0xad0] sm:$0xf]
      %v922 = vld [vmem:[%s202 + $0xad4] sm:$0xf]
      %v923 = vld [vmem:[%s202 + $0xad8] sm:$0xf]
      %v924 = vld [vmem:[%s202 + $0xadc] sm:$0xf]
      %v925 = vld [vmem:[%s202 + $0xae0] sm:$0xf]
      %v926 = vld [vmem:[%s202 + $0xae4] sm:$0xf]
      %v927 = vld [vmem:[%s202 + $0xae8] sm:$0xf]
      %v928 = vld [vmem:[%s202 + $0xaec] sm:$0xf]
      %v929 = vld [vmem:[%s202 + $0xaf0] sm:$0xf]
      %v930 = vld [vmem:[%s202 + $0xaf4] sm:$0xf]
      %v931 = vld [vmem:[%s202 + $0xaf8] sm:$0xf]
      %v932 = vld [vmem:[%s202 + $0xafc] sm:$0xf]
      %v933 = vld [vmem:[%s202 + $0xb00] sm:$0xf]
      %v934 = vld [vmem:[%s202 + $0xb04] sm:$0xf]
      %v935 = vld [vmem:[%s202 + $0xb08] sm:$0xf]
      %v936 = vld [vmem:[%s202 + $0xb0c] sm:$0xf]
      %v937 = vld [vmem:[%s202 + $0xb10] sm:$0xf]
      %v938 = vld [vmem:[%s202 + $0xb14] sm:$0xf]
      %v939 = vld [vmem:[%s202 + $0xb18] sm:$0xf]
      %v940 = vld [vmem:[%s202 + $0xb1c] sm:$0xf]
      %v941 = vld [vmem:[%s202 + $0xb20] sm:$0xf]
      %v942 = vld [vmem:[%s202 + $0xb24] sm:$0xf]
      %v943 = vld [vmem:[%s202 + $0xb28] sm:$0xf]
      %v944 = vld [vmem:[%s202 + $0xb2c] sm:$0xf]
      %v945 = vld [vmem:[%s202 + $0xb30] sm:$0xf]
      %v946 = vld [vmem:[%s202 + $0xb34] sm:$0xf]
      %v947 = vld [vmem:[%s202 + $0xb38] sm:$0xf]
      %v948 = vld [vmem:[%s202 + $0xb3c] sm:$0xf]
      %v949 = vld [vmem:[%s202 + $0xb40] sm:$0xf]
      %v950 = vld [vmem:[%s202 + $0xb44] sm:$0xf]
      %v951 = vld [vmem:[%s202 + $0xb48] sm:$0xf]
      %v952 = vld [vmem:[%s202 + $0xb4c] sm:$0xf]
      %v953 = vld [vmem:[%s202 + $0xb50] sm:$0xf]
      %v954 = vld [vmem:[%s202 + $0xb54] sm:$0xf]
      %v955 = vld [vmem:[%s202 + $0xb58] sm:$0xf]
      %v956 = vld [vmem:[%s202 + $0xb5c] sm:$0xf]
      %v957 = vld [vmem:[%s202 + $0xb60] sm:$0xf]
      %v958 = vld [vmem:[%s202 + $0xb64] sm:$0xf]
      %v959 = vld [vmem:[%s202 + $0xb68] sm:$0xf]
      %v960 = vld [vmem:[%s202 + $0xb6c] sm:$0xf]
      %v961 = vld [vmem:[%s202 + $0xb70] sm:$0xf]
      %v962 = vld [vmem:[%s202 + $0xb74] sm:$0xf]
      %v963 = vld [vmem:[%s202 + $0xb78] sm:$0xf]
      %v964 = vld [vmem:[%s202 + $0xb7c] sm:$0xf]
      %v965 = vld [vmem:[%s202 + $0xb80] sm:$0xf]
      %v966 = vld [vmem:[%s202 + $0xb84] sm:$0xf]
      %v967 = vld [vmem:[%s202 + $0xb88] sm:$0xf]
      %v968 = vld [vmem:[%s202 + $0xb8c] sm:$0xf]
      %v969 = vld [vmem:[%s202 + $0xb90] sm:$0xf]
      %v970 = vld [vmem:[%s202 + $0xb94] sm:$0xf]
      %v971 = vld [vmem:[%s202 + $0xb98] sm:$0xf]
      %v972 = vld [vmem:[%s202 + $0xb9c] sm:$0xf]
      %v973 = vld [vmem:[%s202 + $0xba0] sm:$0xf]
      %v974 = vld [vmem:[%s202 + $0xba4] sm:$0xf]
      %v975 = vld [vmem:[%s202 + $0xba8] sm:$0xf]
      %v976 = vld [vmem:[%s202 + $0xbac] sm:$0xf]
      %v977 = vld [vmem:[%s202 + $0xbb0] sm:$0xf]
      %v978 = vld [vmem:[%s202 + $0xbb4] sm:$0xf]
      %v979 = vld [vmem:[%s202 + $0xbb8] sm:$0xf]
      %v980 = vld [vmem:[%s202 + $0xbbc] sm:$0xf]
      %v981 = vld [vmem:[%s202 + $0xbc0] sm:$0xf]
      %v982 = vld [vmem:[%s202 + $0xbc4] sm:$0xf]
      %v983 = vld [vmem:[%s202 + $0xbc8] sm:$0xf]
      %v984 = vld [vmem:[%s202 + $0xbcc] sm:$0xf]
      %v985 = vld [vmem:[%s202 + $0xbd0] sm:$0xf]
      %v986 = vld [vmem:[%s202 + $0xbd4] sm:$0xf]
      %v987 = vld [vmem:[%s202 + $0xbd8] sm:$0xf]
      %v988 = vld [vmem:[%s202 + $0xbdc] sm:$0xf]
      %v989 = vld [vmem:[%s202 + $0xbe0] sm:$0xf]
      %v990 = vld [vmem:[%s202 + $0xbe4] sm:$0xf]
      %v991 = vld [vmem:[%s202 + $0xbe8] sm:$0xf]
      %v992 = vld [vmem:[%s202 + $0xbec] sm:$0xf]
      %v993 = vld [vmem:[%s202 + $0xbf0] sm:$0xf]
      %v994 = vld [vmem:[%s202 + $0xbf4] sm:$0xf]
      %v995 = vld [vmem:[%s202 + $0xbf8] sm:$0xf]
      %v996 = vld [vmem:[%s202 + $0xbfc] sm:$0xf]
      %v997 = vld [vmem:[%s202 + $0xc00] sm:$0xf]
      %v998 = vld [vmem:[%s202 + $0xc04] sm:$0xf]
      %v999 = vld [vmem:[%s202 + $0xc08] sm:$0xf]
      %v1000 = vld [vmem:[%s202 + $0xc0c] sm:$0xf]
      %v1001 = vld [vmem:[%s202 + $0xc10] sm:$0xf]
      %v1002 = vld [vmem:[%s202 + $0xc14] sm:$0xf]
      %v1003 = vld [vmem:[%s202 + $0xc18] sm:$0xf]
      %v1004 = vld [vmem:[%s202 + $0xc1c] sm:$0xf]
      %v1005 = vld [vmem:[%s202 + $0xc20] sm:$0xf]
      %v1006 = vld [vmem:[%s202 + $0xc24] sm:$0xf]
      %v1007 = vld [vmem:[%s202 + $0xc28] sm:$0xf]
      %v1008 = vld [vmem:[%s202 + $0xc2c] sm:$0xf]
      %v1009 = vld [vmem:[%s202 + $0xc30] sm:$0xf]
      %v1010 = vld [vmem:[%s202 + $0xc34] sm:$0xf]
      %v1011 = vld [vmem:[%s202 + $0xc38] sm:$0xf]
      %v1012 = vld [vmem:[%s202 + $0xc3c] sm:$0xf]
      %v1013 = vld [vmem:[%s202 + $0xc40] sm:$0xf]
      %v1014 = vld [vmem:[%s202 + $0xc44] sm:$0xf]
      %v1015 = vld [vmem:[%s202 + $0xc48] sm:$0xf]
      %v1016 = vld [vmem:[%s202 + $0xc4c] sm:$0xf]
      %v1017 = vld [vmem:[%s202 + $0xc50] sm:$0xf]
      %v1018 = vld [vmem:[%s202 + $0xc54] sm:$0xf]
      %v1019 = vld [vmem:[%s202 + $0xc58] sm:$0xf]
      %v1020 = vld [vmem:[%s202 + $0xc5c] sm:$0xf]
      %v1021 = vld [vmem:[%s202 + $0xc60] sm:$0xf]
      %v1022 = vld [vmem:[%s202 + $0xc64] sm:$0xf]
      %v1023 = vld [vmem:[%s202 + $0xc68] sm:$0xf]
      %v1024 = vld [vmem:[%s202 + $0xc6c] sm:$0xf]
      %v1025 = vld [vmem:[%s202 + $0xc70] sm:$0xf]
      %v1026 = vld [vmem:[%s202 + $0xc74] sm:$0xf]
      %v1027 = vld [vmem:[%s202 + $0xc78] sm:$0xf]
      %v1028 = vld [vmem:[%s202 + $0xc7c] sm:$0xf]
      %v1029 = vld [vmem:[%s202 + $0xc80] sm:$0xf]
      %v1030 = vld [vmem:[%s202 + $0xc84] sm:$0xf]
      %v1031 = vld [vmem:[%s202 + $0xc88] sm:$0xf]
      %v1032 = vld [vmem:[%s202 + $0xc8c] sm:$0xf]
      %v1033 = vld [vmem:[%s202 + $0xc90] sm:$0xf]
      %v1034 = vld [vmem:[%s202 + $0xc94] sm:$0xf]
      %v1035 = vld [vmem:[%s202 + $0xc98] sm:$0xf]
      %v1036 = vld [vmem:[%s202 + $0xc9c] sm:$0xf]
      %v1037 = vld [vmem:[%s202 + $0xca0] sm:$0xf]
      %v1038 = vld [vmem:[%s202 + $0xca4] sm:$0xf]
      %v1039 = vld [vmem:[%s202 + $0xca8] sm:$0xf]
      %v1040 = vld [vmem:[%s202 + $0xcac] sm:$0xf]
      %v1041 = vld [vmem:[%s202 + $0xcb0] sm:$0xf]
      %v1042 = vld [vmem:[%s202 + $0xcb4] sm:$0xf]
      %v1043 = vld [vmem:[%s202 + $0xcb8] sm:$0xf]
      %v1044 = vld [vmem:[%s202 + $0xcbc] sm:$0xf]
      %v1045 = vld [vmem:[%s202 + $0xcc0] sm:$0xf]
      %v1046 = vld [vmem:[%s202 + $0xcc4] sm:$0xf]
      %v1047 = vld [vmem:[%s202 + $0xcc8] sm:$0xf]
      %v1048 = vld [vmem:[%s202 + $0xccc] sm:$0xf]
      %v1049 = vld [vmem:[%s202 + $0xcd0] sm:$0xf]
      %v1050 = vld [vmem:[%s202 + $0xcd4] sm:$0xf]
      %v1051 = vld [vmem:[%s202 + $0xcd8] sm:$0xf]
      %v1052 = vld [vmem:[%s202 + $0xcdc] sm:$0xf]
      %v1053 = vld [vmem:[%s202 + $0xce0] sm:$0xf]
      %v1054 = vld [vmem:[%s202 + $0xce4] sm:$0xf]
      %v1055 = vld [vmem:[%s202 + $0xce8] sm:$0xf]
      %v1056 = vld [vmem:[%s202 + $0xcec] sm:$0xf]
      %v1057 = vld [vmem:[%s202 + $0xcf0] sm:$0xf]
      %v1058 = vld [vmem:[%s202 + $0xcf4] sm:$0xf]
      %v1059 = vld [vmem:[%s202 + $0xcf8] sm:$0xf]
      %v1060 = vld [vmem:[%s202 + $0xcfc] sm:$0xf]
      %v1061 = vld [vmem:[%s202 + $0xd00] sm:$0xf]
      %v1062 = vld [vmem:[%s202 + $0xd04] sm:$0xf]
      %v1063 = vld [vmem:[%s202 + $0xd08] sm:$0xf]
      %v1064 = vld [vmem:[%s202 + $0xd0c] sm:$0xf]
      %v1065 = vld [vmem:[%s202 + $0xd10] sm:$0xf]
      %v1066 = vld [vmem:[%s202 + $0xd14] sm:$0xf]
      %v1067 = vld [vmem:[%s202 + $0xd18] sm:$0xf]
      %v1068 = vld [vmem:[%s202 + $0xd1c] sm:$0xf]
      %v1069 = vld [vmem:[%s202 + $0xd20] sm:$0xf]
      %v1070 = vld [vmem:[%s202 + $0xd24] sm:$0xf]
      %v1071 = vld [vmem:[%s202 + $0xd28] sm:$0xf]
      %v1072 = vld [vmem:[%s202 + $0xd2c] sm:$0xf]
      %v1073 = vld [vmem:[%s202 + $0xd30] sm:$0xf]
      %v1074 = vld [vmem:[%s202 + $0xd34] sm:$0xf]
      %v1075 = vld [vmem:[%s202 + $0xd38] sm:$0xf]
      %v1076 = vld [vmem:[%s202 + $0xd3c] sm:$0xf]
      %v1077 = vld [vmem:[%s202 + $0xd40] sm:$0xf]
      %v1078 = vld [vmem:[%s202 + $0xd44] sm:$0xf]
      %v1079 = vld [vmem:[%s202 + $0xd48] sm:$0xf]
      %v1080 = vld [vmem:[%s202 + $0xd4c] sm:$0xf]
      %v1081 = vld [vmem:[%s202 + $0xd50] sm:$0xf]
      %v1082 = vld [vmem:[%s202 + $0xd54] sm:$0xf]
      %v1083 = vld [vmem:[%s202 + $0xd58] sm:$0xf]
      %v1084 = vld [vmem:[%s202 + $0xd5c] sm:$0xf]
      %v1085 = vld [vmem:[%s202 + $0xd60] sm:$0xf]
      %v1086 = vld [vmem:[%s202 + $0xd64] sm:$0xf]
      %v1087 = vld [vmem:[%s202 + $0xd68] sm:$0xf]
      %v1088 = vld [vmem:[%s202 + $0xd6c] sm:$0xf]
      %v1089 = vld [vmem:[%s202 + $0xd70] sm:$0xf]
      %v1090 = vld [vmem:[%s202 + $0xd74] sm:$0xf]
      %v1091 = vld [vmem:[%s202 + $0xd78] sm:$0xf]
      %v1092 = vld [vmem:[%s202 + $0xd7c] sm:$0xf]
      %v1093 = vld [vmem:[%s202 + $0xd80] sm:$0xf]
      %v1094 = vld [vmem:[%s202 + $0xd84] sm:$0xf]
      %v1095 = vld [vmem:[%s202 + $0xd88] sm:$0xf]
      %v1096 = vld [vmem:[%s202 + $0xd8c] sm:$0xf]
      %v1097 = vld [vmem:[%s202 + $0xd90] sm:$0xf]
      %v1098 = vld [vmem:[%s202 + $0xd94] sm:$0xf]
      %v1099 = vld [vmem:[%s202 + $0xd98] sm:$0xf]
      %v1100 = vld [vmem:[%s202 + $0xd9c] sm:$0xf]
      %v1101 = vld [vmem:[%s202 + $0xda0] sm:$0xf]
      %v1102 = vld [vmem:[%s202 + $0xda4] sm:$0xf]
      %v1103 = vld [vmem:[%s202 + $0xda8] sm:$0xf]
      %v1104 = vld [vmem:[%s202 + $0xdac] sm:$0xf]
      %v1105 = vld [vmem:[%s202 + $0xdb0] sm:$0xf]
      %v1106 = vld [vmem:[%s202 + $0xdb4] sm:$0xf]
      %v1107 = vld [vmem:[%s202 + $0xdb8] sm:$0xf]
      %v1108 = vld [vmem:[%s202 + $0xdbc] sm:$0xf]
      %v1109 = vld [vmem:[%s202 + $0xdc0] sm:$0xf]
      %v1110 = vld [vmem:[%s202 + $0xdc4] sm:$0xf]
      %v1111 = vld [vmem:[%s202 + $0xdc8] sm:$0xf]
      %v1112 = vld [vmem:[%s202 + $0xdcc] sm:$0xf]
      %v1113 = vld [vmem:[%s202 + $0xdd0] sm:$0xf]
      %v1114 = vld [vmem:[%s202 + $0xdd4] sm:$0xf]
      %v1115 = vld [vmem:[%s202 + $0xdd8] sm:$0xf]
      %v1116 = vld [vmem:[%s202 + $0xddc] sm:$0xf]
      %v1117 = vld [vmem:[%s202 + $0xde0] sm:$0xf]
      %v1118 = vld [vmem:[%s202 + $0xde4] sm:$0xf]
      %v1119 = vld [vmem:[%s202 + $0xde8] sm:$0xf]
      %v1120 = vld [vmem:[%s202 + $0xdec] sm:$0xf]
      %v1121 = vld [vmem:[%s202 + $0xdf0] sm:$0xf]
      %v1122 = vld [vmem:[%s202 + $0xdf4] sm:$0xf]
      %v1123 = vld [vmem:[%s202 + $0xdf8] sm:$0xf]
      %v1124 = vld [vmem:[%s202 + $0xdfc] sm:$0xf]
      %v1125 = vld [vmem:[%s202 + $0xe00] sm:$0xf]
      %v1126 = vld [vmem:[%s202 + $0xe04] sm:$0xf]
      %v1127 = vld [vmem:[%s202 + $0xe08] sm:$0xf]
      %v1128 = vld [vmem:[%s202 + $0xe0c] sm:$0xf]
      %v1129 = vld [vmem:[%s202 + $0xe10] sm:$0xf]
      %v1130 = vld [vmem:[%s202 + $0xe14] sm:$0xf]
      %v1131 = vld [vmem:[%s202 + $0xe18] sm:$0xf]
      %v1132 = vld [vmem:[%s202 + $0xe1c] sm:$0xf]
      %v1133 = vld [vmem:[%s202 + $0xe20] sm:$0xf]
      %v1134 = vld [vmem:[%s202 + $0xe24] sm:$0xf]
      %v1135 = vld [vmem:[%s202 + $0xe28] sm:$0xf]
      %v1136 = vld [vmem:[%s202 + $0xe2c] sm:$0xf]
      %v1137 = vld [vmem:[%s202 + $0xe30] sm:$0xf]
      %v1138 = vld [vmem:[%s202 + $0xe34] sm:$0xf]
      %v1139 = vld [vmem:[%s202 + $0xe38] sm:$0xf]
      %v1140 = vld [vmem:[%s202 + $0xe3c] sm:$0xf]
      %v1141 = vld [vmem:[%s202 + $0xe40] sm:$0xf]
      %v1142 = vld [vmem:[%s202 + $0xe44] sm:$0xf]
      %v1143 = vld [vmem:[%s202 + $0xe48] sm:$0xf]
      %v1144 = vld [vmem:[%s202 + $0xe4c] sm:$0xf]
      %v1145 = vld [vmem:[%s202 + $0xe50] sm:$0xf]
      %v1146 = vld [vmem:[%s202 + $0xe54] sm:$0xf]
      %v1147 = vld [vmem:[%s202 + $0xe58] sm:$0xf]
      %v1148 = vld [vmem:[%s202 + $0xe5c] sm:$0xf]
      %v1149 = vld [vmem:[%s202 + $0xe60] sm:$0xf]
      %v1150 = vld [vmem:[%s202 + $0xe64] sm:$0xf]
      %v1151 = vld [vmem:[%s202 + $0xe68] sm:$0xf]
      %v1152 = vld [vmem:[%s202 + $0xe6c] sm:$0xf]
      %v1153 = vld [vmem:[%s202 + $0xe70] sm:$0xf]
      %v1154 = vld [vmem:[%s202 + $0xe74] sm:$0xf]
      %v1155 = vld [vmem:[%s202 + $0xe78] sm:$0xf]
      %v1156 = vld [vmem:[%s202 + $0xe7c] sm:$0xf]
      %v1157 = vld [vmem:[%s202 + $0xe80] sm:$0xf]
      %v1158 = vld [vmem:[%s202 + $0xe84] sm:$0xf]
      %v1159 = vld [vmem:[%s202 + $0xe88] sm:$0xf]
      %v1160 = vld [vmem:[%s202 + $0xe8c] sm:$0xf]
      %v1161 = vld [vmem:[%s202 + $0xe90] sm:$0xf]
      %v1162 = vld [vmem:[%s202 + $0xe94] sm:$0xf]
      %v1163 = vld [vmem:[%s202 + $0xe98] sm:$0xf]
      %v1164 = vld [vmem:[%s202 + $0xe9c] sm:$0xf]
      %v1165 = vld [vmem:[%s202 + $0xea0] sm:$0xf]
      %v1166 = vld [vmem:[%s202 + $0xea4] sm:$0xf]
      %v1167 = vld [vmem:[%s202 + $0xea8] sm:$0xf]
      %v1168 = vld [vmem:[%s202 + $0xeac] sm:$0xf]
      %v1169 = vld [vmem:[%s202 + $0xeb0] sm:$0xf]
      %v1170 = vld [vmem:[%s202 + $0xeb4] sm:$0xf]
      %v1171 = vld [vmem:[%s202 + $0xeb8] sm:$0xf]
      %v1172 = vld [vmem:[%s202 + $0xebc] sm:$0xf]
      %v1173 = vld [vmem:[%s202 + $0xec0] sm:$0xf]
      %v1174 = vld [vmem:[%s202 + $0xec4] sm:$0xf]
      %v1175 = vld [vmem:[%s202 + $0xec8] sm:$0xf]
      %v1176 = vld [vmem:[%s202 + $0xecc] sm:$0xf]
      %v1177 = vld [vmem:[%s202 + $0xed0] sm:$0xf]
      %v1178 = vld [vmem:[%s202 + $0xed4] sm:$0xf]
      %v1179 = vld [vmem:[%s202 + $0xed8] sm:$0xf]
      %v1180 = vld [vmem:[%s202 + $0xedc] sm:$0xf]
      %v1181 = vld [vmem:[%s202 + $0xee0] sm:$0xf]
      %v1182 = vld [vmem:[%s202 + $0xee4] sm:$0xf]
      %v1183 = vld [vmem:[%s202 + $0xee8] sm:$0xf]
      %v1184 = vld [vmem:[%s202 + $0xeec] sm:$0xf]
      %v1185 = vld [vmem:[%s202 + $0xef0] sm:$0xf]
      %v1186 = vld [vmem:[%s202 + $0xef4] sm:$0xf]
      %v1187 = vld [vmem:[%s202 + $0xef8] sm:$0xf]
      %v1188 = vld [vmem:[%s202 + $0xefc] sm:$0xf]
      %v1189 = vld [vmem:[%s202 + $0xf00] sm:$0xf]
      %v1190 = vld [vmem:[%s202 + $0xf04] sm:$0xf]
      %v1191 = vld [vmem:[%s202 + $0xf08] sm:$0xf]
      %v1192 = vld [vmem:[%s202 + $0xf0c] sm:$0xf]
      %v1193 = vld [vmem:[%s202 + $0xf10] sm:$0xf]
      %v1194 = vld [vmem:[%s202 + $0xf14] sm:$0xf]
      %v1195 = vld [vmem:[%s202 + $0xf18] sm:$0xf]
      %v1196 = vld [vmem:[%s202 + $0xf1c] sm:$0xf]
      %v1197 = vld [vmem:[%s202 + $0xf20] sm:$0xf]
      %v1198 = vld [vmem:[%s202 + $0xf24] sm:$0xf]
      %v1199 = vld [vmem:[%s202 + $0xf28] sm:$0xf]
      %v1200 = vld [vmem:[%s202 + $0xf2c] sm:$0xf]
      %v1201 = vld [vmem:[%s202 + $0xf30] sm:$0xf]
      %v1202 = vld [vmem:[%s202 + $0xf34] sm:$0xf]
      %v1203 = vld [vmem:[%s202 + $0xf38] sm:$0xf]
      %v1204 = vld [vmem:[%s202 + $0xf3c] sm:$0xf]
      %v1205 = vld [vmem:[%s202 + $0xf40] sm:$0xf]
      %v1206 = vld [vmem:[%s202 + $0xf44] sm:$0xf]
      %v1207 = vld [vmem:[%s202 + $0xf48] sm:$0xf]
      %v1208 = vld [vmem:[%s202 + $0xf4c] sm:$0xf]
      %v1209 = vld [vmem:[%s202 + $0xf50] sm:$0xf]
      %v1210 = vld [vmem:[%s202 + $0xf54] sm:$0xf]
      %v1211 = vld [vmem:[%s202 + $0xf58] sm:$0xf]
      %v1212 = vld [vmem:[%s202 + $0xf5c] sm:$0xf]
      %v1213 = vld [vmem:[%s202 + $0xf60] sm:$0xf]
      %v1214 = vld [vmem:[%s202 + $0xf64] sm:$0xf]
      %v1215 = vld [vmem:[%s202 + $0xf68] sm:$0xf]
      %v1216 = vld [vmem:[%s202 + $0xf6c] sm:$0xf]
      %v1217 = vld [vmem:[%s202 + $0xf70] sm:$0xf]
      %v1218 = vld [vmem:[%s202 + $0xf74] sm:$0xf]
      %v1219 = vld [vmem:[%s202 + $0xf78] sm:$0xf]
      %v1220 = vld [vmem:[%s202 + $0xf7c] sm:$0xf]
      %v1221 = vld [vmem:[%s202 + $0xf80] sm:$0xf]
      %v1222 = vld [vmem:[%s202 + $0xf84] sm:$0xf]
      %v1223 = vld [vmem:[%s202 + $0xf88] sm:$0xf]
      %v1224 = vld [vmem:[%s202 + $0xf8c] sm:$0xf]
      %v1225 = vld [vmem:[%s202 + $0xf90] sm:$0xf]
      %v1226 = vld [vmem:[%s202 + $0xf94] sm:$0xf]
      %v1227 = vld [vmem:[%s202 + $0xf98] sm:$0xf]
      %v1228 = vld [vmem:[%s202 + $0xf9c] sm:$0xf]
      %v1229 = vld [vmem:[%s202 + $0xfa0] sm:$0xf]
      %v1230 = vld [vmem:[%s202 + $0xfa4] sm:$0xf]
      %v1231 = vld [vmem:[%s202 + $0xfa8] sm:$0xf]
      %v1232 = vld [vmem:[%s202 + $0xfac] sm:$0xf]
      %v1233 = vld [vmem:[%s202 + $0xfb0] sm:$0xf]
      %v1234 = vld [vmem:[%s202 + $0xfb4] sm:$0xf]
      %v1235 = vld [vmem:[%s202 + $0xfb8] sm:$0xf]
      %v1236 = vld [vmem:[%s202 + $0xfbc] sm:$0xf]
      %v1237 = vld [vmem:[%s202 + $0xfc0] sm:$0xf]
      %v1238 = vld [vmem:[%s202 + $0xfc4] sm:$0xf]
      %v1239 = vld [vmem:[%s202 + $0xfc8] sm:$0xf]
      %v1240 = vld [vmem:[%s202 + $0xfcc] sm:$0xf]
      %v1241 = vld [vmem:[%s202 + $0xfd0] sm:$0xf]
      %v1242 = vld [vmem:[%s202 + $0xfd4] sm:$0xf]
      %v1243 = vld [vmem:[%s202 + $0xfd8] sm:$0xf]
      %v1244 = vld [vmem:[%s202 + $0xfdc] sm:$0xf]
      %v1245 = vld [vmem:[%s202 + $0xfe0] sm:$0xf]
      %v1246 = vld [vmem:[%s202 + $0xfe4] sm:$0xf]
      %v1247 = vld [vmem:[%s202 + $0xfe8] sm:$0xf]
      %v1248 = vld [vmem:[%s202 + $0xfec] sm:$0xf]
      %v1249 = vld [vmem:[%s202 + $0xff0] sm:$0xf]
      %v1250 = vld [vmem:[%s202 + $0xff4] sm:$0xf]
      %v1251 = vld [vmem:[%s202 + $0xff8] sm:$0xf]
      %v1252 = vld [vmem:[%s202 + $0xffc] sm:$0xf]
      %v1253 = vld [vmem:[%s202 + $0x1000] sm:$0xf]
      %v1254 = vld [vmem:[%s202 + $0x1004] sm:$0xf]
      %v1255 = vld [vmem:[%s202 + $0x1008] sm:$0xf]
      %v1256 = vld [vmem:[%s202 + $0x100c] sm:$0xf]
      %v1257 = vld [vmem:[%s202 + $0x1010] sm:$0xf]
      %v1258 = vld [vmem:[%s202 + $0x1014] sm:$0xf]
      %v1259 = vld [vmem:[%s202 + $0x1018] sm:$0xf]
      %v1260 = vld [vmem:[%s202 + $0x101c] sm:$0xf]
      %v1261 = vld [vmem:[%s202 + $0x1020] sm:$0xf]
      %v1262 = vld [vmem:[%s202 + $0x1024] sm:$0xf]
      %v1263 = vld [vmem:[%s202 + $0x1028] sm:$0xf]
      %v1264 = vld [vmem:[%s202 + $0x102c] sm:$0xf]
      %v1265 = vld [vmem:[%s202 + $0x1030] sm:$0xf]
      %v1266 = vld [vmem:[%s202 + $0x1034] sm:$0xf]
      %v1267 = vld [vmem:[%s202 + $0x1038] sm:$0xf]
      %v1268 = vld [vmem:[%s202 + $0x103c] sm:$0xf]
      %v1269 = vld [vmem:[%s202 + $0x1040] sm:$0xf]
      %v1270 = vld [vmem:[%s202 + $0x1044] sm:$0xf]
      %v1271 = vld [vmem:[%s202 + $0x1048] sm:$0xf]
      %v1272 = vld [vmem:[%s202 + $0x104c] sm:$0xf]
      %v1273 = vld [vmem:[%s202 + $0x1050] sm:$0xf]
      %v1274 = vld [vmem:[%s202 + $0x1054] sm:$0xf]
      %v1275 = vld [vmem:[%s202 + $0x1058] sm:$0xf]
      %v1276 = vld [vmem:[%s202 + $0x105c] sm:$0xf]
      %v1277 = vld [vmem:[%s202 + $0x1060] sm:$0xf]
      %v1278 = vld [vmem:[%s202 + $0x1064] sm:$0xf]
      %v1279 = vld [vmem:[%s202 + $0x1068] sm:$0xf]
      %v1280 = vld [vmem:[%s202 + $0x106c] sm:$0xf]
      %v1281 = vld [vmem:[%s202 + $0x1070] sm:$0xf]
      %v1282 = vld [vmem:[%s202 + $0x1074] sm:$0xf]
      %v1283 = vld [vmem:[%s202 + $0x1078] sm:$0xf]
      %v1284 = vld [vmem:[%s202 + $0x107c] sm:$0xf]
      %v1285 = vld [vmem:[%s202 + $0x1080] sm:$0xf]
      %v1286 = vld [vmem:[%s202 + $0x1084] sm:$0xf]
      %v1287 = vld [vmem:[%s202 + $0x1088] sm:$0xf]
      %v1288 = vld [vmem:[%s202 + $0x108c] sm:$0xf]
      %v1289 = vld [vmem:[%s202 + $0x1090] sm:$0xf]
      %v1290 = vld [vmem:[%s202 + $0x1094] sm:$0xf]
      %v1291 = vld [vmem:[%s202 + $0x1098] sm:$0xf]
      %v1292 = vld [vmem:[%s202 + $0x109c] sm:$0xf]
      %v1293 = vld [vmem:[%s202 + $0x10a0] sm:$0xf]
      %v1294 = vld [vmem:[%s202 + $0x10a4] sm:$0xf]
      %v1295 = vld [vmem:[%s202 + $0x10a8] sm:$0xf]
      %v1296 = vld [vmem:[%s202 + $0x10ac] sm:$0xf]
      %v1297 = vld [vmem:[%s202 + $0x10b0] sm:$0xf]
      %v1298 = vld [vmem:[%s202 + $0x10b4] sm:$0xf]
      %v1299 = vld [vmem:[%s202 + $0x10b8] sm:$0xf]
      %v1300 = vld [vmem:[%s202 + $0x10bc] sm:$0xf]
      %v1301 = vld [vmem:[%s202 + $0x10c0] sm:$0xf]
      %v1302 = vld [vmem:[%s202 + $0x10c4] sm:$0xf]
      %v1303 = vld [vmem:[%s202 + $0x10c8] sm:$0xf]
      %v1304 = vld [vmem:[%s202 + $0x10cc] sm:$0xf]
      %v1305 = vld [vmem:[%s202 + $0x10d0] sm:$0xf]
      %v1306 = vld [vmem:[%s202 + $0x10d4] sm:$0xf]
      %v1307 = vld [vmem:[%s202 + $0x10d8] sm:$0xf]
      %v1308 = vld [vmem:[%s202 + $0x10dc] sm:$0xf]
      %v1309 = vld [vmem:[%s202 + $0x10e0] sm:$0xf]
      %v1310 = vld [vmem:[%s202 + $0x10e4] sm:$0xf]
      %v1311 = vld [vmem:[%s202 + $0x10e8] sm:$0xf]
      %v1312 = vld [vmem:[%s202 + $0x10ec] sm:$0xf]
      %v1313 = vld [vmem:[%s202 + $0x10f0] sm:$0xf]
      %v1314 = vld [vmem:[%s202 + $0x10f4] sm:$0xf]
      %v1315 = vld [vmem:[%s202 + $0x10f8] sm:$0xf]
      %v1316 = vld [vmem:[%s202 + $0x10fc] sm:$0xf]
      %v1317 = vld [vmem:[%s202 + $0x1100] sm:$0xf]
      %v1318 = vld [vmem:[%s202 + $0x1104] sm:$0xf]
      %v1319 = vld [vmem:[%s202 + $0x1108] sm:$0xf]
      %v1320 = vld [vmem:[%s202 + $0x110c] sm:$0xf]
      %v1321 = vld [vmem:[%s202 + $0x1110] sm:$0xf]
      %v1322 = vld [vmem:[%s202 + $0x1114] sm:$0xf]
      %v1323 = vld [vmem:[%s202 + $0x1118] sm:$0xf]
      %v1324 = vld [vmem:[%s202 + $0x111c] sm:$0xf]
      %v1325 = vld [vmem:[%s202 + $0x1120] sm:$0xf]
      %v1326 = vld [vmem:[%s202 + $0x1124] sm:$0xf]
      %v1327 = vld [vmem:[%s202 + $0x1128] sm:$0xf]
      %v1328 = vld [vmem:[%s202 + $0x112c] sm:$0xf]
      %v1329 = vld [vmem:[%s202 + $0x1130] sm:$0xf]
      %v1330 = vld [vmem:[%s202 + $0x1134] sm:$0xf]
      %v1331 = vld [vmem:[%s202 + $0x1138] sm:$0xf]
      %v1332 = vld [vmem:[%s202 + $0x113c] sm:$0xf]
      %v1333 = vld [vmem:[%s202 + $0x1140] sm:$0xf]
      %v1334 = vld [vmem:[%s202 + $0x1144] sm:$0xf]
      %v1335 = vld [vmem:[%s202 + $0x1148] sm:$0xf]
      %v1336 = vld [vmem:[%s202 + $0x114c] sm:$0xf]
      %v1337 = vld [vmem:[%s202 + $0x1150] sm:$0xf]
      %v1338 = vld [vmem:[%s202 + $0x1154] sm:$0xf]
      %v1339 = vld [vmem:[%s202 + $0x1158] sm:$0xf]
      %v1340 = vld [vmem:[%s202 + $0x115c] sm:$0xf]
      %v1341 = vld [vmem:[%s202 + $0x1160] sm:$0xf]
      %v1342 = vld [vmem:[%s202 + $0x1164] sm:$0xf]
      %v1343 = vld [vmem:[%s202 + $0x1168] sm:$0xf]
      %v1344 = vld [vmem:[%s202 + $0x116c] sm:$0xf]
      %v1345 = vld [vmem:[%s202 + $0x1170] sm:$0xf]
      %v1346 = vld [vmem:[%s202 + $0x1174] sm:$0xf]
      %v1347 = vld [vmem:[%s202 + $0x1178] sm:$0xf]
      %v1348 = vld [vmem:[%s202 + $0x117c] sm:$0xf]
      %v1349 = vld [vmem:[%s202 + $0x1180] sm:$0xf]
      %v1350 = vld [vmem:[%s202 + $0x1184] sm:$0xf]
      %v1351 = vld [vmem:[%s202 + $0x1188] sm:$0xf]
      %v1352 = vld [vmem:[%s202 + $0x118c] sm:$0xf]
      %v1353 = vld [vmem:[%s202 + $0x1190] sm:$0xf]
      %v1354 = vld [vmem:[%s202 + $0x1194] sm:$0xf]
      %v1355 = vld [vmem:[%s202 + $0x1198] sm:$0xf]
      %v1356 = vld [vmem:[%s202 + $0x119c] sm:$0xf]
      %v1357 = vld [vmem:[%s202 + $0x11a0] sm:$0xf]
      %v1358 = vld [vmem:[%s202 + $0x11a4] sm:$0xf]
      %v1359 = vld [vmem:[%s202 + $0x11a8] sm:$0xf]
      %v1360 = vld [vmem:[%s202 + $0x11ac] sm:$0xf]
      %v1361 = vld [vmem:[%s202 + $0x11b0] sm:$0xf]
      %v1362 = vld [vmem:[%s202 + $0x11b4] sm:$0xf]
      %v1363 = vld [vmem:[%s202 + $0x11b8] sm:$0xf]
      %v1364 = vld [vmem:[%s202 + $0x11bc] sm:$0xf]
      %v1365 = vld [vmem:[%s202 + $0x11c0] sm:$0xf]
      %v1366 = vld [vmem:[%s202 + $0x11c4] sm:$0xf]
      %v1367 = vld [vmem:[%s202 + $0x11c8] sm:$0xf]
      %v1368 = vld [vmem:[%s202 + $0x11cc] sm:$0xf]
      %v1369 = vld [vmem:[%s202 + $0x11d0] sm:$0xf]
      %v1370 = vld [vmem:[%s202 + $0x11d4] sm:$0xf]
      %v1371 = vld [vmem:[%s202 + $0x11d8] sm:$0xf]
      %v1372 = vld [vmem:[%s202 + $0x11dc] sm:$0xf]
      %v1373 = vld [vmem:[%s202 + $0x11e0] sm:$0xf]
      %v1374 = vld [vmem:[%s202 + $0x11e4] sm:$0xf]
      %v1375 = vld [vmem:[%s202 + $0x11e8] sm:$0xf]
      %v1376 = vld [vmem:[%s202 + $0x11ec] sm:$0xf]
      %v1377 = vld [vmem:[%s202 + $0x11f0] sm:$0xf]
      %v1378 = vld [vmem:[%s202 + $0x11f4] sm:$0xf]
      %v1379 = vld [vmem:[%s202 + $0x11f8] sm:$0xf]
      %v1380 = vld [vmem:[%s202 + $0x11fc] sm:$0xf]
      %1382 = vst [vmem:[#allocation1] ss:$9 sm:$0xff] %v220
      %v1383 = vld [vmem:[#allocation1] sm:$0xff]
      %v1384 = vld [vmem:[#allocation1 + $0x9] sm:$0xff]
      %v1385 = vld [vmem:[#allocation1 + $0x12] sm:$0xff]
      %v1386 = vld [vmem:[#allocation1 + $0x1b] sm:$0xff]
      %v1387 = vld [vmem:[#allocation1 + $0x24] sm:$0xff]
      %v1388 = vld [vmem:[#allocation1 + $0x2d] sm:$0xff]
      %v1389 = vld [vmem:[#allocation1 + $0x36] sm:$0xff]
      %v1390 = vld [vmem:[#allocation1 + $0x3f] sm:$0xff]
      %1392 = vst [vmem:[#allocation1] ss:$9 sm:$0xff] %v221
      %v1393 = vld [vmem:[#allocation1] sm:$0xff]
      %v1394 = vld [vmem:[#allocation1 + $0x9] sm:$0xff]
      %v1395 = vld [vmem:[#allocation1 + $0x12] sm:$0xff]
      %v1396 = vld [vmem:[#allocation1 + $0x1b] sm:$0xff]
      %v1397 = vld [vmem:[#allocation1 + $0x24] sm:$0xff]
      %v1398 = vld [vmem:[#allocation1 + $0x2d] sm:$0xff]
      %v1399 = vld [vmem:[#allocation1 + $0x36] sm:$0xff]
      %v1400 = vld [vmem:[#allocation1 + $0x3f] sm:$0xff]
      %1402 = vst [vmem:[#allocation1] ss:$9 sm:$0xff] %v222
      %v1403 = vld [vmem:[#allocation1] sm:$0xff]
      %v1404 = vld [vmem:[#allocation1 + $0x9] sm:$0xff]
      %v1405 = vld [vmem:[#allocation1 + $0x12] sm:$0xff]
      %v1406 = vld [vmem:[#allocation1 + $0x1b] sm:$0xff]
      %v1407 = vld [vmem:[#allocation1 + $0x24] sm:$0xff]
      %v1408 = vld [vmem:[#allocation1 + $0x2d] sm:$0xff]
      %v1409 = vld [vmem:[#allocation1 + $0x36] sm:$0xff]
      %v1410 = vld [vmem:[#allocation1 + $0x3f] sm:$0xff]
      %1412 = vst [vmem:[#allocation1] ss:$9 sm:$0xff] %v223
      %v1413 = vld [vmem:[#allocation1] sm:$0xff]
      %v1414 = vld [vmem:[#allocation1 + $0x9] sm:$0xff]
      %v1415 = vld [vmem:[#allocation1 + $0x12] sm:$0xff]
      %v1416 = vld [vmem:[#allocation1 + $0x1b] sm:$0xff]
      %v1417 = vld [vmem:[#allocation1 + $0x24] sm:$0xff]
      %v1418 = vld [vmem:[#allocation1 + $0x2d] sm:$0xff]
      %v1419 = vld [vmem:[#allocation1 + $0x36] sm:$0xff]
      %v1420 = vld [vmem:[#allocation1 + $0x3f] sm:$0xff]
      %1422 = vst [vmem:[#allocation1] ss:$9 sm:$0xff] %v224
      %v1423 = vld [vmem:[#allocation1] sm:$0xff]
      %v1424 = vld [vmem:[#allocation1 + $0x9] sm:$0xff]
      %v1425 = vld [vmem:[#allocation1 + $0x12] sm:$0xff]
      %v1426 = vld [vmem:[#allocation1 + $0x1b] sm:$0xff]
      %v1427 = vld [vmem:[#allocation1 + $0x24] sm:$0xff]
      %v1428 = vld [vmem:[#allocation1 + $0x2d] sm:$0xff]
      %v1429 = vld [vmem:[#allocation1 + $0x36] sm:$0xff]
      %v1430 = vld [vmem:[#allocation1 + $0x3f] sm:$0xff]
      %1432 = vst [vmem:[#allocation1] ss:$9 sm:$0xff] %v225
      %v1433 = vld [vmem:[#allocation1] sm:$0xff]
      %v1434 = vld [vmem:[#allocation1 + $0x9] sm:$0xff]
      %v1435 = vld [vmem:[#allocation1 + $0x12] sm:$0xff]
      %v1436 = vld [vmem:[#allocation1 + $0x1b] sm:$0xff]
      %v1437 = vld [vmem:[#allocation1 + $0x24] sm:$0xff]
      %v1438 = vld [vmem:[#allocation1 + $0x2d] sm:$0xff]
      %v1439 = vld [vmem:[#allocation1 + $0x36] sm:$0xff]
      %v1440 = vld [vmem:[#allocation1 + $0x3f] sm:$0xff]
      %1442 = vst [vmem:[#allocation1] ss:$9 sm:$0xff] %v226
      %v1443 = vld [vmem:[#allocation1] sm:$0xff]
      %v1444 = vld [vmem:[#allocation1 + $0x9] sm:$0xff]
      %v1445 = vld [vmem:[#allocation1 + $0x12] sm:$0xff]
      %v1446 = vld [vmem:[#allocation1 + $0x1b] sm:$0xff]
      %v1447 = vld [vmem:[#allocation1 + $0x24] sm:$0xff]
      %v1448 = vld [vmem:[#allocation1 + $0x2d] sm:$0xff]
      %v1449 = vld [vmem:[#allocation1 + $0x36] sm:$0xff]
      %v1450 = vld [vmem:[#allocation1 + $0x3f] sm:$0xff]
      %1452 = vst [vmem:[#allocation1] ss:$9 sm:$0xff] %v227
      %v1453 = vld [vmem:[#allocation1] sm:$0xff]
      %v1454 = vld [vmem:[#allocation1 + $0x9] sm:$0xff]
      %v1455 = vld [vmem:[#allocation1 + $0x12] sm:$0xff]
      %v1456 = vld [vmem:[#allocation1 + $0x1b] sm:$0xff]
      %v1457 = vld [vmem:[#allocation1 + $0x24] sm:$0xff]
      %v1458 = vld [vmem:[#allocation1 + $0x2d] sm:$0xff]
      %v1459 = vld [vmem:[#allocation1 + $0x36] sm:$0xff]
      %v1460 = vld [vmem:[#allocation1 + $0x3f] sm:$0xff]
      %1462 = vst [vmem:[#allocation1] ss:$9 sm:$0xff] %v228
      %v1463 = vld [vmem:[#allocation1] sm:$0xff]
      %v1464 = vld [vmem:[#allocation1 + $0x9] sm:$0xff]
      %v1465 = vld [vmem:[#allocation1 + $0x12] sm:$0xff]
      %v1466 = vld [vmem:[#allocation1 + $0x1b] sm:$0xff]
      %v1467 = vld [vmem:[#allocation1 + $0x24] sm:$0xff]
      %v1468 = vld [vmem:[#allocation1 + $0x2d] sm:$0xff]
      %v1469 = vld [vmem:[#allocation1 + $0x36] sm:$0xff]
      %v1470 = vld [vmem:[#allocation1 + $0x3f] sm:$0xff]
      %v2695 = vunpack.c.l.b16 %v229
      %v2696 = vunpack.c.l.b16 %v230
      %v2697 = vunpack.c.l.b16 %v231
      %v2698 = vunpack.c.l.b16 %v232
      %v2699 = vunpack.c.l.b16 %v233
      %v2700 = vunpack.c.l.b16 %v234
      %v2701 = vunpack.c.l.b16 %v235
      %v2702 = vunpack.c.l.b16 %v236
      %v2703 = vunpack.c.l.b16 %v237
      %v2704 = vunpack.c.l.b16 %v238
      %v2705 = vunpack.c.l.b16 %v239
      %v2706 = vunpack.c.l.b16 %v240
      %v2707 = vunpack.c.l.b16 %v241
      %v2708 = vunpack.c.l.b16 %v242
      %v2709 = vunpack.c.l.b16 %v243
      %v2710 = vunpack.c.l.b16 %v244
      %v2711 = vunpack.c.l.b16 %v245
      %v2712 = vunpack.c.l.b16 %v246
      %v2713 = vunpack.c.l.b16 %v247
      %v2714 = vunpack.c.l.b16 %v248
      %v2715 = vunpack.c.l.b16 %v249
      %v2716 = vunpack.c.l.b16 %v250
      %v2717 = vunpack.c.l.b16 %v251
      %v2718 = vunpack.c.l.b16 %v252
      %v2719 = vunpack.c.l.b16 %v253
      %v2720 = vunpack.c.l.b16 %v254
      %v2721 = vunpack.c.l.b16 %v255
      %v2722 = vunpack.c.l.b16 %v256
      %v2723 = vunpack.c.l.b16 %v257
      %v2724 = vunpack.c.l.b16 %v258
      %v2725 = vunpack.c.l.b16 %v259
      %v2726 = vunpack.c.l.b16 %v260
      %v2727 = vunpack.c.l.b16 %v261
      %v2728 = vunpack.c.l.b16 %v262
      %v2729 = vunpack.c.l.b16 %v263
      %v2730 = vunpack.c.l.b16 %v264
      %v2731 = vunpack.c.l.b16 %v265
      %v2732 = vunpack.c.l.b16 %v266
      %v2733 = vunpack.c.l.b16 %v267
      %v2734 = vunpack.c.l.b16 %v268
      %v2735 = vunpack.c.l.b16 %v269
      %v2736 = vunpack.c.l.b16 %v270
      %v2737 = vunpack.c.l.b16 %v271
      %v2738 = vunpack.c.l.b16 %v272
      %v2739 = vunpack.c.l.b16 %v273
      %v2740 = vunpack.c.l.b16 %v274
      %v2741 = vunpack.c.l.b16 %v275
      %v2742 = vunpack.c.l.b16 %v276
      %v2743 = vunpack.c.l.b16 %v277
      %v2744 = vunpack.c.l.b16 %v278
      %v2745 = vunpack.c.l.b16 %v279
      %v2746 = vunpack.c.l.b16 %v280
      %v2747 = vunpack.c.l.b16 %v281
      %v2748 = vunpack.c.l.b16 %v282
      %v2749 = vunpack.c.l.b16 %v283
      %v2750 = vunpack.c.l.b16 %v284
      %v2751 = vunpack.c.l.b16 %v285
      %v2752 = vunpack.c.l.b16 %v286
      %v2753 = vunpack.c.l.b16 %v287
      %v2754 = vunpack.c.l.b16 %v288
      %v2755 = vunpack.c.l.b16 %v289
      %v2756 = vunpack.c.l.b16 %v290
      %v2757 = vunpack.c.l.b16 %v291
      %v2758 = vunpack.c.l.b16 %v292
      %v2759 = vunpack.c.l.b16 %v293
      %v2760 = vunpack.c.l.b16 %v294
      %v2761 = vunpack.c.l.b16 %v295
      %v2762 = vunpack.c.l.b16 %v296
      %v2763 = vunpack.c.l.b16 %v297
      %v2764 = vunpack.c.l.b16 %v298
      %v2765 = vunpack.c.l.b16 %v299
      %v2766 = vunpack.c.l.b16 %v300
      %v2767 = vunpack.c.l.b16 %v301
      %v2768 = vunpack.c.l.b16 %v302
      %v2769 = vunpack.c.l.b16 %v303
      %v2770 = vunpack.c.l.b16 %v304
      %v2771 = vunpack.c.l.b16 %v305
      %v2772 = vunpack.c.l.b16 %v306
      %v2773 = vunpack.c.l.b16 %v307
      %v2774 = vunpack.c.l.b16 %v308
      %v2775 = vunpack.c.l.b16 %v309
      %v2776 = vunpack.c.l.b16 %v310
      %v2777 = vunpack.c.l.b16 %v311
      %v2778 = vunpack.c.l.b16 %v312
      %v2779 = vunpack.c.l.b16 %v313
      %v2780 = vunpack.c.l.b16 %v314
      %v2781 = vunpack.c.l.b16 %v315
      %v2782 = vunpack.c.l.b16 %v316
      %v2783 = vunpack.c.l.b16 %v317
      %v2784 = vunpack.c.l.b16 %v318
      %v2785 = vunpack.c.l.b16 %v319
      %v2786 = vunpack.c.l.b16 %v320
      %v2787 = vunpack.c.l.b16 %v321
      %v2788 = vunpack.c.l.b16 %v322
      %v2789 = vunpack.c.l.b16 %v323
      %v2790 = vunpack.c.l.b16 %v324
      %v2791 = vunpack.c.l.b16 %v325
      %v2792 = vunpack.c.l.b16 %v326
      %v2793 = vunpack.c.l.b16 %v327
      %v2794 = vunpack.c.l.b16 %v328
      %v2795 = vunpack.c.l.b16 %v329
      %v2796 = vunpack.c.l.b16 %v330
      %v2797 = vunpack.c.l.b16 %v331
      %v2798 = vunpack.c.l.b16 %v332
      %v2799 = vunpack.c.l.b16 %v333
      %v2800 = vunpack.c.l.b16 %v334
      %v2801 = vunpack.c.l.b16 %v335
      %v2802 = vunpack.c.l.b16 %v336
      %v2803 = vunpack.c.l.b16 %v337
      %v2804 = vunpack.c.l.b16 %v338
      %v2805 = vunpack.c.l.b16 %v339
      %v2806 = vunpack.c.l.b16 %v340
      %v2807 = vunpack.c.l.b16 %v341
      %v2808 = vunpack.c.l.b16 %v342
      %v2809 = vunpack.c.l.b16 %v343
      %v2810 = vunpack.c.l.b16 %v344
      %v2811 = vunpack.c.l.b16 %v345
      %v2812 = vunpack.c.l.b16 %v346
      %v2813 = vunpack.c.l.b16 %v347
      %v2814 = vunpack.c.l.b16 %v348
      %v2815 = vunpack.c.l.b16 %v349
      %v2816 = vunpack.c.l.b16 %v350
      %v2817 = vunpack.c.l.b16 %v351
      %v2818 = vunpack.c.l.b16 %v352
      %v2819 = vunpack.c.l.b16 %v353
      %v2820 = vunpack.c.l.b16 %v354
      %v2821 = vunpack.c.l.b16 %v355
      %v2822 = vunpack.c.l.b16 %v356
      %v2823 = vunpack.c.l.b16 %v357
      %v2824 = vunpack.c.l.b16 %v358
      %v2825 = vunpack.c.l.b16 %v359
      %v2826 = vunpack.c.l.b16 %v360
      %v2827 = vunpack.c.l.b16 %v361
      %v2828 = vunpack.c.l.b16 %v362
      %v2829 = vunpack.c.l.b16 %v363
      %v2830 = vunpack.c.l.b16 %v364
      %v2831 = vunpack.c.l.b16 %v365
      %v2832 = vunpack.c.l.b16 %v366
      %v2833 = vunpack.c.l.b16 %v367
      %v2834 = vunpack.c.l.b16 %v368
      %v2835 = vunpack.c.l.b16 %v369
      %v2836 = vunpack.c.l.b16 %v370
      %v2837 = vunpack.c.l.b16 %v371
      %v2838 = vunpack.c.l.b16 %v372
      %v2839 = vunpack.c.l.b16 %v373
      %v2840 = vunpack.c.l.b16 %v374
      %v2841 = vunpack.c.l.b16 %v375
      %v2842 = vunpack.c.l.b16 %v376
      %v2843 = vunpack.c.l.b16 %v377
      %v2844 = vunpack.c.l.b16 %v378
      %v2845 = vunpack.c.l.b16 %v379
      %v2846 = vunpack.c.l.b16 %v380
      %v2847 = vunpack.c.l.b16 %v381
      %v2848 = vunpack.c.l.b16 %v382
      %v2849 = vunpack.c.l.b16 %v383
      %v2850 = vunpack.c.l.b16 %v384
      %v2851 = vunpack.c.l.b16 %v385
      %v2852 = vunpack.c.l.b16 %v386
      %v2853 = vunpack.c.l.b16 %v387
      %v2854 = vunpack.c.l.b16 %v388
      %v2855 = vunpack.c.l.b16 %v389
      %v2856 = vunpack.c.l.b16 %v390
      %v2857 = vunpack.c.l.b16 %v391
      %v2858 = vunpack.c.l.b16 %v392
      %v2859 = vunpack.c.l.b16 %v393
      %v2860 = vunpack.c.l.b16 %v394
      %v2861 = vunpack.c.l.b16 %v395
      %v2862 = vunpack.c.l.b16 %v396
      %v2863 = vunpack.c.l.b16 %v397
      %v2864 = vunpack.c.l.b16 %v398
      %v2865 = vunpack.c.l.b16 %v399
      %v2866 = vunpack.c.l.b16 %v400
      %v2867 = vunpack.c.l.b16 %v401
      %v2868 = vunpack.c.l.b16 %v402
      %v2869 = vunpack.c.l.b16 %v403
      %v2870 = vunpack.c.l.b16 %v404
      %v2871 = vunpack.c.l.b16 %v405
      %v2872 = vunpack.c.l.b16 %v406
      %v2873 = vunpack.c.l.b16 %v407
      %v2874 = vunpack.c.l.b16 %v408
      %v2875 = vunpack.c.l.b16 %v409
      %v2876 = vunpack.c.l.b16 %v410
      %v2877 = vunpack.c.l.b16 %v411
      %v2878 = vunpack.c.l.b16 %v412
      %v2879 = vunpack.c.l.b16 %v413
      %v2880 = vunpack.c.l.b16 %v414
      %v2881 = vunpack.c.l.b16 %v415
      %v2882 = vunpack.c.l.b16 %v416
      %v2883 = vunpack.c.l.b16 %v417
      %v2884 = vunpack.c.l.b16 %v418
      %v2885 = vunpack.c.l.b16 %v419
      %v2886 = vunpack.c.l.b16 %v420
      %v2887 = vunpack.c.l.b16 %v421
      %v2888 = vunpack.c.l.b16 %v422
      %v2889 = vunpack.c.l.b16 %v423
      %v2890 = vunpack.c.l.b16 %v424
      %v2891 = vunpack.c.l.b16 %v425
      %v2892 = vunpack.c.l.b16 %v426
      %v2893 = vunpack.c.l.b16 %v427
      %v2894 = vunpack.c.l.b16 %v428
      %v2895 = vunpack.c.l.b16 %v429
      %v2896 = vunpack.c.l.b16 %v430
      %v2897 = vunpack.c.l.b16 %v431
      %v2898 = vunpack.c.l.b16 %v432
      %v2899 = vunpack.c.l.b16 %v433
      %v2900 = vunpack.c.l.b16 %v434
      %v2901 = vunpack.c.l.b16 %v435
      %v2902 = vunpack.c.l.b16 %v436
      %v2903 = vunpack.c.l.b16 %v437
      %v2904 = vunpack.c.l.b16 %v438
      %v2905 = vunpack.c.l.b16 %v439
      %v2906 = vunpack.c.l.b16 %v440
      %v2907 = vunpack.c.l.b16 %v441
      %v2908 = vunpack.c.l.b16 %v442
      %v2909 = vunpack.c.l.b16 %v443
      %v2910 = vunpack.c.l.b16 %v444
      %v2911 = vunpack.c.l.b16 %v445
      %v2912 = vunpack.c.l.b16 %v446
      %v2913 = vunpack.c.l.b16 %v447
      %v2914 = vunpack.c.l.b16 %v448
      %v2915 = vunpack.c.l.b16 %v449
      %v2916 = vunpack.c.l.b16 %v450
      %v2917 = vunpack.c.l.b16 %v451
      %v2918 = vunpack.c.l.b16 %v452
      %v2919 = vunpack.c.l.b16 %v453
      %v2920 = vunpack.c.l.b16 %v454
      %v2921 = vunpack.c.l.b16 %v455
      %v2922 = vunpack.c.l.b16 %v456
      %v2923 = vunpack.c.l.b16 %v457
      %v2924 = vunpack.c.l.b16 %v458
      %v2925 = vunpack.c.l.b16 %v459
      %v2926 = vunpack.c.l.b16 %v460
      %v2927 = vunpack.c.l.b16 %v461
      %v2928 = vunpack.c.l.b16 %v462
      %v2929 = vunpack.c.l.b16 %v463
      %v2930 = vunpack.c.l.b16 %v464
      %v2931 = vunpack.c.l.b16 %v465
      %v2932 = vunpack.c.l.b16 %v466
      %v2933 = vunpack.c.l.b16 %v467
      %v2934 = vunpack.c.l.b16 %v468
      %v2935 = vunpack.c.l.b16 %v469
      %v2936 = vunpack.c.l.b16 %v470
      %v2937 = vunpack.c.l.b16 %v471
      %v2938 = vunpack.c.l.b16 %v472
      %v2939 = vunpack.c.l.b16 %v473
      %v2940 = vunpack.c.l.b16 %v474
      %v2941 = vunpack.c.l.b16 %v475
      %v2942 = vunpack.c.l.b16 %v476
      %v2943 = vunpack.c.l.b16 %v477
      %v2944 = vunpack.c.l.b16 %v478
      %v2945 = vunpack.c.l.b16 %v479
      %v2946 = vunpack.c.l.b16 %v480
      %v2947 = vunpack.c.l.b16 %v481
      %v2948 = vunpack.c.l.b16 %v482
      %v2949 = vunpack.c.l.b16 %v483
      %v2950 = vunpack.c.l.b16 %v484
      %v2951 = vunpack.c.l.b16 %v485
      %v2952 = vunpack.c.l.b16 %v486
      %v2953 = vunpack.c.l.b16 %v487
      %v2954 = vunpack.c.l.b16 %v488
      %v2955 = vunpack.c.l.b16 %v489
      %v2956 = vunpack.c.l.b16 %v490
      %v2957 = vunpack.c.l.b16 %v491
      %v2958 = vunpack.c.l.b16 %v492
      %v2959 = vunpack.c.l.b16 %v493
      %v2960 = vunpack.c.l.b16 %v494
      %v2961 = vunpack.c.l.b16 %v495
      %v2962 = vunpack.c.l.b16 %v496
      %v2963 = vunpack.c.l.b16 %v497
      %v2964 = vunpack.c.l.b16 %v498
      %v2965 = vunpack.c.l.b16 %v499
      %v2966 = vunpack.c.l.b16 %v500
      %v2967 = vunpack.c.l.b16 %v501
      %v2968 = vunpack.c.l.b16 %v502
      %v2969 = vunpack.c.l.b16 %v503
      %v2970 = vunpack.c.l.b16 %v504
      %v2971 = vunpack.c.l.b16 %v505
      %v2972 = vunpack.c.l.b16 %v506
      %v2973 = vunpack.c.l.b16 %v507
      %v2974 = vunpack.c.l.b16 %v508
      %v2975 = vunpack.c.l.b16 %v509
      %v2976 = vunpack.c.l.b16 %v510
      %v2977 = vunpack.c.l.b16 %v511
      %v2978 = vunpack.c.l.b16 %v512
      %v2979 = vunpack.c.l.b16 %v513
      %v2980 = vunpack.c.l.b16 %v514
      %v2981 = vunpack.c.l.b16 %v515
      %v2982 = vunpack.c.l.b16 %v516
      %v2983 = vunpack.c.l.b16 %v517
      %v2984 = vunpack.c.l.b16 %v518
      %v2985 = vunpack.c.l.b16 %v519
      %v2986 = vunpack.c.l.b16 %v520
      %v2987 = vunpack.c.l.b16 %v521
      %v2988 = vunpack.c.l.b16 %v522
      %v2989 = vunpack.c.l.b16 %v523
      %v2990 = vunpack.c.l.b16 %v524
      %v2991 = vunpack.c.l.b16 %v525
      %v2992 = vunpack.c.l.b16 %v526
      %v2993 = vunpack.c.l.b16 %v527
      %v2994 = vunpack.c.l.b16 %v528
      %v2995 = vunpack.c.l.b16 %v529
      %v2996 = vunpack.c.l.b16 %v530
      %v2997 = vunpack.c.l.b16 %v531
      %v2998 = vunpack.c.l.b16 %v532
      %v2999 = vunpack.c.l.b16 %v533
      %v3000 = vunpack.c.l.b16 %v534
      %v3001 = vunpack.c.l.b16 %v535
      %v3002 = vunpack.c.l.b16 %v536
      %v3003 = vunpack.c.l.b16 %v537
      %v3004 = vunpack.c.l.b16 %v538
      %v3005 = vunpack.c.l.b16 %v539
      %v3006 = vunpack.c.l.b16 %v540
      %v3007 = vunpack.c.l.b16 %v541
      %v3008 = vunpack.c.l.b16 %v542
      %v3009 = vunpack.c.l.b16 %v543
      %v3010 = vunpack.c.l.b16 %v544
      %v3011 = vunpack.c.l.b16 %v545
      %v3012 = vunpack.c.l.b16 %v546
      %v3013 = vunpack.c.l.b16 %v547
      %v3014 = vunpack.c.l.b16 %v548
      %v3015 = vunpack.c.l.b16 %v549
      %v3016 = vunpack.c.l.b16 %v550
      %v3017 = vunpack.c.l.b16 %v551
      %v3018 = vunpack.c.l.b16 %v552
      %v3019 = vunpack.c.l.b16 %v553
      %v3020 = vunpack.c.l.b16 %v554
      %v3021 = vunpack.c.l.b16 %v555
      %v3022 = vunpack.c.l.b16 %v556
      %v3023 = vunpack.c.l.b16 %v557
      %v3024 = vunpack.c.l.b16 %v558
      %v3025 = vunpack.c.l.b16 %v559
      %v3026 = vunpack.c.l.b16 %v560
      %v3027 = vunpack.c.l.b16 %v561
      %v3028 = vunpack.c.l.b16 %v562
      %v3029 = vunpack.c.l.b16 %v563
      %v3030 = vunpack.c.l.b16 %v564
      %v3031 = vunpack.c.l.b16 %v565
      %v3032 = vunpack.c.l.b16 %v566
      %v3033 = vunpack.c.l.b16 %v567
      %v3034 = vunpack.c.l.b16 %v568
      %v3035 = vunpack.c.l.b16 %v569
      %v3036 = vunpack.c.l.b16 %v570
      %v3037 = vunpack.c.l.b16 %v571
      %v3038 = vunpack.c.l.b16 %v572
      %v3039 = vunpack.c.l.b16 %v573
      %v3040 = vunpack.c.l.b16 %v574
      %v3041 = vunpack.c.l.b16 %v575
      %v3042 = vunpack.c.l.b16 %v576
      %v3043 = vunpack.c.l.b16 %v577
      %v3044 = vunpack.c.l.b16 %v578
      %v3045 = vunpack.c.l.b16 %v579
      %v3046 = vunpack.c.l.b16 %v580
      %v3047 = vunpack.c.l.b16 %v581
      %v3048 = vunpack.c.l.b16 %v582
      %v3049 = vunpack.c.l.b16 %v583
      %v3050 = vunpack.c.l.b16 %v584
      %v3051 = vunpack.c.l.b16 %v585
      %v3052 = vunpack.c.l.b16 %v586
      %v3053 = vunpack.c.l.b16 %v587
      %v3054 = vunpack.c.l.b16 %v588
      %v3055 = vunpack.c.l.b16 %v589
      %v3056 = vunpack.c.l.b16 %v590
      %v3057 = vunpack.c.l.b16 %v591
      %v3058 = vunpack.c.l.b16 %v592
      %v3059 = vunpack.c.l.b16 %v593
      %v3060 = vunpack.c.l.b16 %v594
      %v3061 = vunpack.c.l.b16 %v595
      %v3062 = vunpack.c.l.b16 %v596
      %v3063 = vunpack.c.l.b16 %v597
      %v3064 = vunpack.c.l.b16 %v598
      %v3065 = vunpack.c.l.b16 %v599
      %v3066 = vunpack.c.l.b16 %v600
      %v3067 = vunpack.c.l.b16 %v601
      %v3068 = vunpack.c.l.b16 %v602
      %v3069 = vunpack.c.l.b16 %v603
      %v3070 = vunpack.c.l.b16 %v604
      %v3071 = vunpack.c.l.b16 %v605
      %v3072 = vunpack.c.l.b16 %v606
      %v3073 = vunpack.c.l.b16 %v607
      %v3074 = vunpack.c.l.b16 %v608
      %v3075 = vunpack.c.l.b16 %v609
      %v3076 = vunpack.c.l.b16 %v610
      %v3077 = vunpack.c.l.b16 %v611
      %v3078 = vunpack.c.l.b16 %v612
      %v3079 = vunpack.c.l.b16 %v613
      %v3080 = vunpack.c.l.b16 %v614
      %v3081 = vunpack.c.l.b16 %v615
      %v3082 = vunpack.c.l.b16 %v616
      %v3083 = vunpack.c.l.b16 %v617
      %v3084 = vunpack.c.l.b16 %v618
      %v3085 = vunpack.c.l.b16 %v619
      %v3086 = vunpack.c.l.b16 %v620
      %v3087 = vunpack.c.l.b16 %v621
      %v3088 = vunpack.c.l.b16 %v622
      %v3089 = vunpack.c.l.b16 %v623
      %v3090 = vunpack.c.l.b16 %v624
      %v3091 = vunpack.c.l.b16 %v625
      %v3092 = vunpack.c.l.b16 %v626
      %v3093 = vunpack.c.l.b16 %v627
      %v3094 = vunpack.c.l.b16 %v628
      %v3095 = vunpack.c.l.b16 %v629
      %v3096 = vunpack.c.l.b16 %v630
      %v3097 = vunpack.c.l.b16 %v631
      %v3098 = vunpack.c.l.b16 %v632
      %v3099 = vunpack.c.l.b16 %v633
      %v3100 = vunpack.c.l.b16 %v634
      %v3101 = vunpack.c.l.b16 %v635
      %v3102 = vunpack.c.l.b16 %v636
      %v3103 = vunpack.c.l.b16 %v637
      %v3104 = vunpack.c.l.b16 %v638
      %v3105 = vunpack.c.l.b16 %v639
      %v3106 = vunpack.c.l.b16 %v640
      %v3107 = vunpack.c.l.b16 %v641
      %v3108 = vunpack.c.l.b16 %v642
      %v3109 = vunpack.c.l.b16 %v643
      %v3110 = vunpack.c.l.b16 %v644
      %v3111 = vunpack.c.l.b16 %v645
      %v3112 = vunpack.c.l.b16 %v646
      %v3113 = vunpack.c.l.b16 %v647
      %v3114 = vunpack.c.l.b16 %v648
      %v3115 = vunpack.c.l.b16 %v649
      %v3116 = vunpack.c.l.b16 %v650
      %v3117 = vunpack.c.l.b16 %v651
      %v3118 = vunpack.c.l.b16 %v652
      %v3119 = vunpack.c.l.b16 %v653
      %v3120 = vunpack.c.l.b16 %v654
      %v3121 = vunpack.c.l.b16 %v655
      %v3122 = vunpack.c.l.b16 %v656
      %v3123 = vunpack.c.l.b16 %v657
      %v3124 = vunpack.c.l.b16 %v658
      %v3125 = vunpack.c.l.b16 %v659
      %v3126 = vunpack.c.l.b16 %v660
      %v3127 = vunpack.c.l.b16 %v661
      %v3128 = vunpack.c.l.b16 %v662
      %v3129 = vunpack.c.l.b16 %v663
      %v3130 = vunpack.c.l.b16 %v664
      %v3131 = vunpack.c.l.b16 %v665
      %v3132 = vunpack.c.l.b16 %v666
      %v3133 = vunpack.c.l.b16 %v667
      %v3134 = vunpack.c.l.b16 %v668
      %v3135 = vunpack.c.l.b16 %v669
      %v3136 = vunpack.c.l.b16 %v670
      %v3137 = vunpack.c.l.b16 %v671
      %v3138 = vunpack.c.l.b16 %v672
      %v3139 = vunpack.c.l.b16 %v673
      %v3140 = vunpack.c.l.b16 %v674
      %v3141 = vunpack.c.l.b16 %v675
      %v3142 = vunpack.c.l.b16 %v676
      %v3143 = vunpack.c.l.b16 %v677
      %v3144 = vunpack.c.l.b16 %v678
      %v3145 = vunpack.c.l.b16 %v679
      %v3146 = vunpack.c.l.b16 %v680
      %v3147 = vunpack.c.l.b16 %v681
      %v3148 = vunpack.c.l.b16 %v682
      %v3149 = vunpack.c.l.b16 %v683
      %v3150 = vunpack.c.l.b16 %v684
      %v3151 = vunpack.c.l.b16 %v685
      %v3152 = vunpack.c.l.b16 %v686
      %v3153 = vunpack.c.l.b16 %v687
      %v3154 = vunpack.c.l.b16 %v688
      %v3155 = vunpack.c.l.b16 %v689
      %v3156 = vunpack.c.l.b16 %v690
      %v3157 = vunpack.c.l.b16 %v691
      %v3158 = vunpack.c.l.b16 %v692
      %v3159 = vunpack.c.l.b16 %v693
      %v3160 = vunpack.c.l.b16 %v694
      %v3161 = vunpack.c.l.b16 %v695
      %v3162 = vunpack.c.l.b16 %v696
      %v3163 = vunpack.c.l.b16 %v697
      %v3164 = vunpack.c.l.b16 %v698
      %v3165 = vunpack.c.l.b16 %v699
      %v3166 = vunpack.c.l.b16 %v700
      %v3167 = vunpack.c.l.b16 %v701
      %v3168 = vunpack.c.l.b16 %v702
      %v3169 = vunpack.c.l.b16 %v703
      %v3170 = vunpack.c.l.b16 %v704
      %v3171 = vunpack.c.l.b16 %v705
      %v3172 = vunpack.c.l.b16 %v706
      %v3173 = vunpack.c.l.b16 %v707
      %v3174 = vunpack.c.l.b16 %v708
      %v3175 = vunpack.c.l.b16 %v709
      %v3176 = vunpack.c.l.b16 %v710
      %v3177 = vunpack.c.l.b16 %v711
      %v3178 = vunpack.c.l.b16 %v712
      %v3179 = vunpack.c.l.b16 %v713
      %v3180 = vunpack.c.l.b16 %v714
      %v3181 = vunpack.c.l.b16 %v715
      %v3182 = vunpack.c.l.b16 %v716
      %v3183 = vunpack.c.l.b16 %v717
      %v3184 = vunpack.c.l.b16 %v718
      %v3185 = vunpack.c.l.b16 %v719
      %v3186 = vunpack.c.l.b16 %v720
      %v3187 = vunpack.c.l.b16 %v721
      %v3188 = vunpack.c.l.b16 %v722
      %v3189 = vunpack.c.l.b16 %v723
      %v3190 = vunpack.c.l.b16 %v724
      %v3191 = vunpack.c.l.b16 %v725
      %v3192 = vunpack.c.l.b16 %v726
      %v3193 = vunpack.c.l.b16 %v727
      %v3194 = vunpack.c.l.b16 %v728
      %v3195 = vunpack.c.l.b16 %v729
      %v3196 = vunpack.c.l.b16 %v730
      %v3197 = vunpack.c.l.b16 %v731
      %v3198 = vunpack.c.l.b16 %v732
      %v3199 = vunpack.c.l.b16 %v733
      %v3200 = vunpack.c.l.b16 %v734
      %v3201 = vunpack.c.l.b16 %v735
      %v3202 = vunpack.c.l.b16 %v736
      %v3203 = vunpack.c.l.b16 %v737
      %v3204 = vunpack.c.l.b16 %v738
      %v3205 = vunpack.c.l.b16 %v739
      %v3206 = vunpack.c.l.b16 %v740
      %v3207 = vunpack.c.l.b16 %v741
      %v3208 = vunpack.c.l.b16 %v742
      %v3209 = vunpack.c.l.b16 %v743
      %v3210 = vunpack.c.l.b16 %v744
      %v3211 = vunpack.c.l.b16 %v745
      %v3212 = vunpack.c.l.b16 %v746
      %v3213 = vunpack.c.l.b16 %v747
      %v3214 = vunpack.c.l.b16 %v748
      %v3215 = vunpack.c.l.b16 %v749
      %v3216 = vunpack.c.l.b16 %v750
      %v3217 = vunpack.c.l.b16 %v751
      %v3218 = vunpack.c.l.b16 %v752
      %v3219 = vunpack.c.l.b16 %v753
      %v3220 = vunpack.c.l.b16 %v754
      %v3221 = vunpack.c.l.b16 %v755
      %v3222 = vunpack.c.l.b16 %v756
      %v3223 = vunpack.c.l.b16 %v757
      %v3224 = vunpack.c.l.b16 %v758
      %v3225 = vunpack.c.l.b16 %v759
      %v3226 = vunpack.c.l.b16 %v760
      %v3227 = vunpack.c.l.b16 %v761
      %v3228 = vunpack.c.l.b16 %v762
      %v3229 = vunpack.c.l.b16 %v763
      %v3230 = vunpack.c.l.b16 %v764
      %v3231 = vunpack.c.l.b16 %v765
      %v3232 = vunpack.c.l.b16 %v766
      %v3233 = vunpack.c.l.b16 %v767
      %v3234 = vunpack.c.l.b16 %v768
      %v3235 = vunpack.c.l.b16 %v769
      %v3236 = vunpack.c.l.b16 %v770
      %v3237 = vunpack.c.l.b16 %v771
      %v3238 = vunpack.c.l.b16 %v772
      %v3239 = vunpack.c.l.b16 %v773
      %v3240 = vunpack.c.l.b16 %v774
      %v3241 = vunpack.c.l.b16 %v775
      %v3242 = vunpack.c.l.b16 %v776
      %v3243 = vunpack.c.l.b16 %v777
      %v3244 = vunpack.c.l.b16 %v778
      %v3245 = vunpack.c.l.b16 %v779
      %v3246 = vunpack.c.l.b16 %v780
      %v3247 = vunpack.c.l.b16 %v781
      %v3248 = vunpack.c.l.b16 %v782
      %v3249 = vunpack.c.l.b16 %v783
      %v3250 = vunpack.c.l.b16 %v784
      %v3251 = vunpack.c.l.b16 %v785
      %v3252 = vunpack.c.l.b16 %v786
      %v3253 = vunpack.c.l.b16 %v787
      %v3254 = vunpack.c.l.b16 %v788
      %v3255 = vunpack.c.l.b16 %v789
      %v3256 = vunpack.c.l.b16 %v790
      %v3257 = vunpack.c.l.b16 %v791
      %v3258 = vunpack.c.l.b16 %v792
      %v3259 = vunpack.c.l.b16 %v793
      %v3260 = vunpack.c.l.b16 %v794
      %v3261 = vunpack.c.l.b16 %v795
      %v3262 = vunpack.c.l.b16 %v796
      %v3263 = vunpack.c.l.b16 %v797
      %v3264 = vunpack.c.l.b16 %v798
      %v3265 = vunpack.c.l.b16 %v799
      %v3266 = vunpack.c.l.b16 %v800
      %v3267 = vunpack.c.l.b16 %v801
      %v3268 = vunpack.c.l.b16 %v802
      %v3269 = vunpack.c.l.b16 %v803
      %v3270 = vunpack.c.l.b16 %v804
      %v3271 = vunpack.c.l.b16 %v805
      %v3272 = vunpack.c.l.b16 %v806
      %v3273 = vunpack.c.l.b16 %v807
      %v3274 = vunpack.c.l.b16 %v808
      %v3275 = vunpack.c.l.b16 %v809
      %v3276 = vunpack.c.l.b16 %v810
      %v3277 = vunpack.c.l.b16 %v811
      %v3278 = vunpack.c.l.b16 %v812
      %v3279 = vunpack.c.l.b16 %v813
      %v3280 = vunpack.c.l.b16 %v814
      %v3281 = vunpack.c.l.b16 %v815
      %v3282 = vunpack.c.l.b16 %v816
      %v3283 = vunpack.c.l.b16 %v817
      %v3284 = vunpack.c.l.b16 %v818
      %v3285 = vunpack.c.l.b16 %v819
      %v3286 = vunpack.c.l.b16 %v820
      %v3287 = vunpack.c.l.b16 %v821
      %v3288 = vunpack.c.l.b16 %v822
      %v3289 = vunpack.c.l.b16 %v823
      %v3290 = vunpack.c.l.b16 %v824
      %v3291 = vunpack.c.l.b16 %v825
      %v3292 = vunpack.c.l.b16 %v826
      %v3293 = vunpack.c.l.b16 %v827
      %v3294 = vunpack.c.l.b16 %v828
      %v3295 = vunpack.c.l.b16 %v829
      %v3296 = vunpack.c.l.b16 %v830
      %v3297 = vunpack.c.l.b16 %v831
      %v3298 = vunpack.c.l.b16 %v832
      %v3299 = vunpack.c.l.b16 %v833
      %v3300 = vunpack.c.l.b16 %v834
      %v3301 = vunpack.c.l.b16 %v835
      %v3302 = vunpack.c.l.b16 %v836
      %v3303 = vunpack.c.l.b16 %v837
      %v3304 = vunpack.c.l.b16 %v838
      %v3305 = vunpack.c.l.b16 %v839
      %v3306 = vunpack.c.l.b16 %v840
      %v3307 = vunpack.c.l.b16 %v841
      %v3308 = vunpack.c.l.b16 %v842
      %v3309 = vunpack.c.l.b16 %v843
      %v3310 = vunpack.c.l.b16 %v844
      %v3311 = vunpack.c.l.b16 %v845
      %v3312 = vunpack.c.l.b16 %v846
      %v3313 = vunpack.c.l.b16 %v847
      %v3314 = vunpack.c.l.b16 %v848
      %v3315 = vunpack.c.l.b16 %v849
      %v3316 = vunpack.c.l.b16 %v850
      %v3317 = vunpack.c.l.b16 %v851
      %v3318 = vunpack.c.l.b16 %v852
      %v3319 = vunpack.c.l.b16 %v853
      %v3320 = vunpack.c.l.b16 %v854
      %v3321 = vunpack.c.l.b16 %v855
      %v3322 = vunpack.c.l.b16 %v856
      %v3323 = vunpack.c.l.b16 %v857
      %v3324 = vunpack.c.l.b16 %v858
      %v3325 = vunpack.c.l.b16 %v859
      %v3326 = vunpack.c.l.b16 %v860
      %v3327 = vunpack.c.l.b16 %v861
      %v3328 = vunpack.c.l.b16 %v862
      %v3329 = vunpack.c.l.b16 %v863
      %v3330 = vunpack.c.l.b16 %v864
      %v3331 = vunpack.c.l.b16 %v865
      %v3332 = vunpack.c.l.b16 %v866
      %v3333 = vunpack.c.l.b16 %v867
      %v3334 = vunpack.c.l.b16 %v868
      %v3335 = vunpack.c.l.b16 %v869
      %v3336 = vunpack.c.l.b16 %v870
      %v3337 = vunpack.c.l.b16 %v871
      %v3338 = vunpack.c.l.b16 %v872
      %v3339 = vunpack.c.l.b16 %v873
      %v3340 = vunpack.c.l.b16 %v874
      %v3341 = vunpack.c.l.b16 %v875
      %v3342 = vunpack.c.l.b16 %v876
      %v3343 = vunpack.c.l.b16 %v877
      %v3344 = vunpack.c.l.b16 %v878
      %v3345 = vunpack.c.l.b16 %v879
      %v3346 = vunpack.c.l.b16 %v880
      %v3347 = vunpack.c.l.b16 %v881
      %v3348 = vunpack.c.l.b16 %v882
      %v3349 = vunpack.c.l.b16 %v883
      %v3350 = vunpack.c.l.b16 %v884
      %v3351 = vunpack.c.l.b16 %v885
      %v3352 = vunpack.c.l.b16 %v886
      %v3353 = vunpack.c.l.b16 %v887
      %v3354 = vunpack.c.l.b16 %v888
      %v3355 = vunpack.c.l.b16 %v889
      %v3356 = vunpack.c.l.b16 %v890
      %v3357 = vunpack.c.l.b16 %v891
      %v3358 = vunpack.c.l.b16 %v892
      %v3359 = vunpack.c.l.b16 %v893
      %v3360 = vunpack.c.l.b16 %v894
      %v3361 = vunpack.c.l.b16 %v895
      %v3362 = vunpack.c.l.b16 %v896
      %v3363 = vunpack.c.l.b16 %v897
      %v3364 = vunpack.c.l.b16 %v898
      %v3365 = vunpack.c.l.b16 %v899
      %v3366 = vunpack.c.l.b16 %v900
      %v3367 = vunpack.c.l.b16 %v901
      %v3368 = vunpack.c.l.b16 %v902
      %v3369 = vunpack.c.l.b16 %v903
      %v3370 = vunpack.c.l.b16 %v904
      %v3371 = vunpack.c.l.b16 %v905
      %v3372 = vunpack.c.l.b16 %v906
      %v3373 = vunpack.c.l.b16 %v907
      %v3374 = vunpack.c.l.b16 %v908
      %v3375 = vunpack.c.l.b16 %v909
      %v3376 = vunpack.c.l.b16 %v910
      %v3377 = vunpack.c.l.b16 %v911
      %v3378 = vunpack.c.l.b16 %v912
      %v3379 = vunpack.c.l.b16 %v913
      %v3380 = vunpack.c.l.b16 %v914
      %v3381 = vunpack.c.l.b16 %v915
      %v3382 = vunpack.c.l.b16 %v916
      %v3383 = vunpack.c.l.b16 %v917
      %v3384 = vunpack.c.l.b16 %v918
      %v3385 = vunpack.c.l.b16 %v919
      %v3386 = vunpack.c.l.b16 %v920
      %v3387 = vunpack.c.l.b16 %v921
      %v3388 = vunpack.c.l.b16 %v922
      %v3389 = vunpack.c.l.b16 %v923
      %v3390 = vunpack.c.l.b16 %v924
      %v3391 = vunpack.c.l.b16 %v925
      %v3392 = vunpack.c.l.b16 %v926
      %v3393 = vunpack.c.l.b16 %v927
      %v3394 = vunpack.c.l.b16 %v928
      %v3395 = vunpack.c.l.b16 %v929
      %v3396 = vunpack.c.l.b16 %v930
      %v3397 = vunpack.c.l.b16 %v931
      %v3398 = vunpack.c.l.b16 %v932
      %v3399 = vunpack.c.l.b16 %v933
      %v3400 = vunpack.c.l.b16 %v934
      %v3401 = vunpack.c.l.b16 %v935
      %v3402 = vunpack.c.l.b16 %v936
      %v3403 = vunpack.c.l.b16 %v937
      %v3404 = vunpack.c.l.b16 %v938
      %v3405 = vunpack.c.l.b16 %v939
      %v3406 = vunpack.c.l.b16 %v940
      %v3407 = vunpack.c.l.b16 %v941
      %v3408 = vunpack.c.l.b16 %v942
      %v3409 = vunpack.c.l.b16 %v943
      %v3410 = vunpack.c.l.b16 %v944
      %v3411 = vunpack.c.l.b16 %v945
      %v3412 = vunpack.c.l.b16 %v946
      %v3413 = vunpack.c.l.b16 %v947
      %v3414 = vunpack.c.l.b16 %v948
      %v3415 = vunpack.c.l.b16 %v949
      %v3416 = vunpack.c.l.b16 %v950
      %v3417 = vunpack.c.l.b16 %v951
      %v3418 = vunpack.c.l.b16 %v952
      %v3419 = vunpack.c.l.b16 %v953
      %v3420 = vunpack.c.l.b16 %v954
      %v3421 = vunpack.c.l.b16 %v955
      %v3422 = vunpack.c.l.b16 %v956
      %v3423 = vunpack.c.l.b16 %v957
      %v3424 = vunpack.c.l.b16 %v958
      %v3425 = vunpack.c.l.b16 %v959
      %v3426 = vunpack.c.l.b16 %v960
      %v3427 = vunpack.c.l.b16 %v961
      %v3428 = vunpack.c.l.b16 %v962
      %v3429 = vunpack.c.l.b16 %v963
      %v3430 = vunpack.c.l.b16 %v964
      %v3431 = vunpack.c.l.b16 %v965
      %v3432 = vunpack.c.l.b16 %v966
      %v3433 = vunpack.c.l.b16 %v967
      %v3434 = vunpack.c.l.b16 %v968
      %v3435 = vunpack.c.l.b16 %v969
      %v3436 = vunpack.c.l.b16 %v970
      %v3437 = vunpack.c.l.b16 %v971
      %v3438 = vunpack.c.l.b16 %v972
      %v3439 = vunpack.c.l.b16 %v973
      %v3440 = vunpack.c.l.b16 %v974
      %v3441 = vunpack.c.l.b16 %v975
      %v3442 = vunpack.c.l.b16 %v976
      %v3443 = vunpack.c.l.b16 %v977
      %v3444 = vunpack.c.l.b16 %v978
      %v3445 = vunpack.c.l.b16 %v979
      %v3446 = vunpack.c.l.b16 %v980
      %v3447 = vunpack.c.l.b16 %v981
      %v3448 = vunpack.c.l.b16 %v982
      %v3449 = vunpack.c.l.b16 %v983
      %v3450 = vunpack.c.l.b16 %v984
      %v3451 = vunpack.c.l.b16 %v985
      %v3452 = vunpack.c.l.b16 %v986
      %v3453 = vunpack.c.l.b16 %v987
      %v3454 = vunpack.c.l.b16 %v988
      %v3455 = vunpack.c.l.b16 %v989
      %v3456 = vunpack.c.l.b16 %v990
      %v3457 = vunpack.c.l.b16 %v991
      %v3458 = vunpack.c.l.b16 %v992
      %v3459 = vunpack.c.l.b16 %v993
      %v3460 = vunpack.c.l.b16 %v994
      %v3461 = vunpack.c.l.b16 %v995
      %v3462 = vunpack.c.l.b16 %v996
      %v3463 = vunpack.c.l.b16 %v997
      %v3464 = vunpack.c.l.b16 %v998
      %v3465 = vunpack.c.l.b16 %v999
      %v3466 = vunpack.c.l.b16 %v1000
      %v3467 = vunpack.c.l.b16 %v1001
      %v3468 = vunpack.c.l.b16 %v1002
      %v3469 = vunpack.c.l.b16 %v1003
      %v3470 = vunpack.c.l.b16 %v1004
      %v3471 = vunpack.c.l.b16 %v1005
      %v3472 = vunpack.c.l.b16 %v1006
      %v3473 = vunpack.c.l.b16 %v1007
      %v3474 = vunpack.c.l.b16 %v1008
      %v3475 = vunpack.c.l.b16 %v1009
      %v3476 = vunpack.c.l.b16 %v1010
      %v3477 = vunpack.c.l.b16 %v1011
      %v3478 = vunpack.c.l.b16 %v1012
      %v3479 = vunpack.c.l.b16 %v1013
      %v3480 = vunpack.c.l.b16 %v1014
      %v3481 = vunpack.c.l.b16 %v1015
      %v3482 = vunpack.c.l.b16 %v1016
      %v3483 = vunpack.c.l.b16 %v1017
      %v3484 = vunpack.c.l.b16 %v1018
      %v3485 = vunpack.c.l.b16 %v1019
      %v3486 = vunpack.c.l.b16 %v1020
      %v3487 = vunpack.c.l.b16 %v1021
      %v3488 = vunpack.c.l.b16 %v1022
      %v3489 = vunpack.c.l.b16 %v1023
      %v3490 = vunpack.c.l.b16 %v1024
      %v3491 = vunpack.c.l.b16 %v1025
      %v3492 = vunpack.c.l.b16 %v1026
      %v3493 = vunpack.c.l.b16 %v1027
      %v3494 = vunpack.c.l.b16 %v1028
      %v3495 = vunpack.c.l.b16 %v1029
      %v3496 = vunpack.c.l.b16 %v1030
      %v3497 = vunpack.c.l.b16 %v1031
      %v3498 = vunpack.c.l.b16 %v1032
      %v3499 = vunpack.c.l.b16 %v1033
      %v3500 = vunpack.c.l.b16 %v1034
      %v3501 = vunpack.c.l.b16 %v1035
      %v3502 = vunpack.c.l.b16 %v1036
      %v3503 = vunpack.c.l.b16 %v1037
      %v3504 = vunpack.c.l.b16 %v1038
      %v3505 = vunpack.c.l.b16 %v1039
      %v3506 = vunpack.c.l.b16 %v1040
      %v3507 = vunpack.c.l.b16 %v1041
      %v3508 = vunpack.c.l.b16 %v1042
      %v3509 = vunpack.c.l.b16 %v1043
      %v3510 = vunpack.c.l.b16 %v1044
      %v3511 = vunpack.c.l.b16 %v1045
      %v3512 = vunpack.c.l.b16 %v1046
      %v3513 = vunpack.c.l.b16 %v1047
      %v3514 = vunpack.c.l.b16 %v1048
      %v3515 = vunpack.c.l.b16 %v1049
      %v3516 = vunpack.c.l.b16 %v1050
      %v3517 = vunpack.c.l.b16 %v1051
      %v3518 = vunpack.c.l.b16 %v1052
      %v3519 = vunpack.c.l.b16 %v1053
      %v3520 = vunpack.c.l.b16 %v1054
      %v3521 = vunpack.c.l.b16 %v1055
      %v3522 = vunpack.c.l.b16 %v1056
      %v3523 = vunpack.c.l.b16 %v1057
      %v3524 = vunpack.c.l.b16 %v1058
      %v3525 = vunpack.c.l.b16 %v1059
      %v3526 = vunpack.c.l.b16 %v1060
      %v3527 = vunpack.c.l.b16 %v1061
      %v3528 = vunpack.c.l.b16 %v1062
      %v3529 = vunpack.c.l.b16 %v1063
      %v3530 = vunpack.c.l.b16 %v1064
      %v3531 = vunpack.c.l.b16 %v1065
      %v3532 = vunpack.c.l.b16 %v1066
      %v3533 = vunpack.c.l.b16 %v1067
      %v3534 = vunpack.c.l.b16 %v1068
      %v3535 = vunpack.c.l.b16 %v1069
      %v3536 = vunpack.c.l.b16 %v1070
      %v3537 = vunpack.c.l.b16 %v1071
      %v3538 = vunpack.c.l.b16 %v1072
      %v3539 = vunpack.c.l.b16 %v1073
      %v3540 = vunpack.c.l.b16 %v1074
      %v3541 = vunpack.c.l.b16 %v1075
      %v3542 = vunpack.c.l.b16 %v1076
      %v3543 = vunpack.c.l.b16 %v1077
      %v3544 = vunpack.c.l.b16 %v1078
      %v3545 = vunpack.c.l.b16 %v1079
      %v3546 = vunpack.c.l.b16 %v1080
      %v3547 = vunpack.c.l.b16 %v1081
      %v3548 = vunpack.c.l.b16 %v1082
      %v3549 = vunpack.c.l.b16 %v1083
      %v3550 = vunpack.c.l.b16 %v1084
      %v3551 = vunpack.c.l.b16 %v1085
      %v3552 = vunpack.c.l.b16 %v1086
      %v3553 = vunpack.c.l.b16 %v1087
      %v3554 = vunpack.c.l.b16 %v1088
      %v3555 = vunpack.c.l.b16 %v1089
      %v3556 = vunpack.c.l.b16 %v1090
      %v3557 = vunpack.c.l.b16 %v1091
      %v3558 = vunpack.c.l.b16 %v1092
      %v3559 = vunpack.c.l.b16 %v1093
      %v3560 = vunpack.c.l.b16 %v1094
      %v3561 = vunpack.c.l.b16 %v1095
      %v3562 = vunpack.c.l.b16 %v1096
      %v3563 = vunpack.c.l.b16 %v1097
      %v3564 = vunpack.c.l.b16 %v1098
      %v3565 = vunpack.c.l.b16 %v1099
      %v3566 = vunpack.c.l.b16 %v1100
      %v3567 = vunpack.c.l.b16 %v1101
      %v3568 = vunpack.c.l.b16 %v1102
      %v3569 = vunpack.c.l.b16 %v1103
      %v3570 = vunpack.c.l.b16 %v1104
      %v3571 = vunpack.c.l.b16 %v1105
      %v3572 = vunpack.c.l.b16 %v1106
      %v3573 = vunpack.c.l.b16 %v1107
      %v3574 = vunpack.c.l.b16 %v1108
      %v3575 = vunpack.c.l.b16 %v1109
      %v3576 = vunpack.c.l.b16 %v1110
      %v3577 = vunpack.c.l.b16 %v1111
      %v3578 = vunpack.c.l.b16 %v1112
      %v3579 = vunpack.c.l.b16 %v1113
      %v3580 = vunpack.c.l.b16 %v1114
      %v3581 = vunpack.c.l.b16 %v1115
      %v3582 = vunpack.c.l.b16 %v1116
      %v3583 = vunpack.c.l.b16 %v1117
      %v3584 = vunpack.c.l.b16 %v1118
      %v3585 = vunpack.c.l.b16 %v1119
      %v3586 = vunpack.c.l.b16 %v1120
      %v3587 = vunpack.c.l.b16 %v1121
      %v3588 = vunpack.c.l.b16 %v1122
      %v3589 = vunpack.c.l.b16 %v1123
      %v3590 = vunpack.c.l.b16 %v1124
      %v3591 = vunpack.c.l.b16 %v1125
      %v3592 = vunpack.c.l.b16 %v1126
      %v3593 = vunpack.c.l.b16 %v1127
      %v3594 = vunpack.c.l.b16 %v1128
      %v3595 = vunpack.c.l.b16 %v1129
      %v3596 = vunpack.c.l.b16 %v1130
      %v3597 = vunpack.c.l.b16 %v1131
      %v3598 = vunpack.c.l.b16 %v1132
      %v3599 = vunpack.c.l.b16 %v1133
      %v3600 = vunpack.c.l.b16 %v1134
      %v3601 = vunpack.c.l.b16 %v1135
      %v3602 = vunpack.c.l.b16 %v1136
      %v3603 = vunpack.c.l.b16 %v1137
      %v3604 = vunpack.c.l.b16 %v1138
      %v3605 = vunpack.c.l.b16 %v1139
      %v3606 = vunpack.c.l.b16 %v1140
      %v3607 = vunpack.c.l.b16 %v1141
      %v3608 = vunpack.c.l.b16 %v1142
      %v3609 = vunpack.c.l.b16 %v1143
      %v3610 = vunpack.c.l.b16 %v1144
      %v3611 = vunpack.c.l.b16 %v1145
      %v3612 = vunpack.c.l.b16 %v1146
      %v3613 = vunpack.c.l.b16 %v1147
      %v3614 = vunpack.c.l.b16 %v1148
      %v3615 = vunpack.c.l.b16 %v1149
      %v3616 = vunpack.c.l.b16 %v1150
      %v3617 = vunpack.c.l.b16 %v1151
      %v3618 = vunpack.c.l.b16 %v1152
      %v3619 = vunpack.c.l.b16 %v1153
      %v3620 = vunpack.c.l.b16 %v1154
      %v3621 = vunpack.c.l.b16 %v1155
      %v3622 = vunpack.c.l.b16 %v1156
      %v3623 = vunpack.c.l.b16 %v1157
      %v3624 = vunpack.c.l.b16 %v1158
      %v3625 = vunpack.c.l.b16 %v1159
      %v3626 = vunpack.c.l.b16 %v1160
      %v3627 = vunpack.c.l.b16 %v1161
      %v3628 = vunpack.c.l.b16 %v1162
      %v3629 = vunpack.c.l.b16 %v1163
      %v3630 = vunpack.c.l.b16 %v1164
      %v3631 = vunpack.c.l.b16 %v1165
      %v3632 = vunpack.c.l.b16 %v1166
      %v3633 = vunpack.c.l.b16 %v1167
      %v3634 = vunpack.c.l.b16 %v1168
      %v3635 = vunpack.c.l.b16 %v1169
      %v3636 = vunpack.c.l.b16 %v1170
      %v3637 = vunpack.c.l.b16 %v1171
      %v3638 = vunpack.c.l.b16 %v1172
      %v3639 = vunpack.c.l.b16 %v1173
      %v3640 = vunpack.c.l.b16 %v1174
      %v3641 = vunpack.c.l.b16 %v1175
      %v3642 = vunpack.c.l.b16 %v1176
      %v3643 = vunpack.c.l.b16 %v1177
      %v3644 = vunpack.c.l.b16 %v1178
      %v3645 = vunpack.c.l.b16 %v1179
      %v3646 = vunpack.c.l.b16 %v1180
      %v3647 = vunpack.c.l.b16 %v1181
      %v3648 = vunpack.c.l.b16 %v1182
      %v3649 = vunpack.c.l.b16 %v1183
      %v3650 = vunpack.c.l.b16 %v1184
      %v3651 = vunpack.c.l.b16 %v1185
      %v3652 = vunpack.c.l.b16 %v1186
      %v3653 = vunpack.c.l.b16 %v1187
      %v3654 = vunpack.c.l.b16 %v1188
      %v3655 = vunpack.c.l.b16 %v1189
      %v3656 = vunpack.c.l.b16 %v1190
      %v3657 = vunpack.c.l.b16 %v1191
      %v3658 = vunpack.c.l.b16 %v1192
      %v3659 = vunpack.c.l.b16 %v1193
      %v3660 = vunpack.c.l.b16 %v1194
      %v3661 = vunpack.c.l.b16 %v1195
      %v3662 = vunpack.c.l.b16 %v1196
      %v3663 = vunpack.c.l.b16 %v1197
      %v3664 = vunpack.c.l.b16 %v1198
      %v3665 = vunpack.c.l.b16 %v1199
      %v3666 = vunpack.c.l.b16 %v1200
      %v3667 = vunpack.c.l.b16 %v1201
      %v3668 = vunpack.c.l.b16 %v1202
      %v3669 = vunpack.c.l.b16 %v1203
      %v3670 = vunpack.c.l.b16 %v1204
      %v3671 = vunpack.c.l.b16 %v1205
      %v3672 = vunpack.c.l.b16 %v1206
      %v3673 = vunpack.c.l.b16 %v1207
      %v3674 = vunpack.c.l.b16 %v1208
      %v3675 = vunpack.c.l.b16 %v1209
      %v3676 = vunpack.c.l.b16 %v1210
      %v3677 = vunpack.c.l.b16 %v1211
      %v3678 = vunpack.c.l.b16 %v1212
      %v3679 = vunpack.c.l.b16 %v1213
      %v3680 = vunpack.c.l.b16 %v1214
      %v3681 = vunpack.c.l.b16 %v1215
      %v3682 = vunpack.c.l.b16 %v1216
      %v3683 = vunpack.c.l.b16 %v1217
      %v3684 = vunpack.c.l.b16 %v1218
      %v3685 = vunpack.c.l.b16 %v1219
      %v3686 = vunpack.c.l.b16 %v1220
      %v3687 = vunpack.c.l.b16 %v1221
      %v3688 = vunpack.c.l.b16 %v1222
      %v3689 = vunpack.c.l.b16 %v1223
      %v3690 = vunpack.c.l.b16 %v1224
      %v3691 = vunpack.c.l.b16 %v1225
      %v3692 = vunpack.c.l.b16 %v1226
      %v3693 = vunpack.c.l.b16 %v1227
      %v3694 = vunpack.c.l.b16 %v1228
      %v3695 = vunpack.c.l.b16 %v1229
      %v3696 = vunpack.c.l.b16 %v1230
      %v3697 = vunpack.c.l.b16 %v1231
      %v3698 = vunpack.c.l.b16 %v1232
      %v3699 = vunpack.c.l.b16 %v1233
      %v3700 = vunpack.c.l.b16 %v1234
      %v3701 = vunpack.c.l.b16 %v1235
      %v3702 = vunpack.c.l.b16 %v1236
      %v3703 = vunpack.c.l.b16 %v1237
      %v3704 = vunpack.c.l.b16 %v1238
      %v3705 = vunpack.c.l.b16 %v1239
      %v3706 = vunpack.c.l.b16 %v1240
      %v3707 = vunpack.c.l.b16 %v1241
      %v3708 = vunpack.c.l.b16 %v1242
      %v3709 = vunpack.c.l.b16 %v1243
      %v3710 = vunpack.c.l.b16 %v1244
      %v3711 = vunpack.c.l.b16 %v1245
      %v3712 = vunpack.c.l.b16 %v1246
      %v3713 = vunpack.c.l.b16 %v1247
      %v3714 = vunpack.c.l.b16 %v1248
      %v3715 = vunpack.c.l.b16 %v1249
      %v3716 = vunpack.c.l.b16 %v1250
      %v3717 = vunpack.c.l.b16 %v1251
      %v3718 = vunpack.c.l.b16 %v1252
      %v3719 = vunpack.c.l.b16 %v1253
      %v3720 = vunpack.c.l.b16 %v1254
      %v3721 = vunpack.c.l.b16 %v1255
      %v3722 = vunpack.c.l.b16 %v1256
      %v3723 = vunpack.c.l.b16 %v1257
      %v3724 = vunpack.c.l.b16 %v1258
      %v3725 = vunpack.c.l.b16 %v1259
      %v3726 = vunpack.c.l.b16 %v1260
      %v3727 = vunpack.c.l.b16 %v1261
      %v3728 = vunpack.c.l.b16 %v1262
      %v3729 = vunpack.c.l.b16 %v1263
      %v3730 = vunpack.c.l.b16 %v1264
      %v3731 = vunpack.c.l.b16 %v1265
      %v3732 = vunpack.c.l.b16 %v1266
      %v3733 = vunpack.c.l.b16 %v1267
      %v3734 = vunpack.c.l.b16 %v1268
      %v3735 = vunpack.c.l.b16 %v1269
      %v3736 = vunpack.c.l.b16 %v1270
      %v3737 = vunpack.c.l.b16 %v1271
      %v3738 = vunpack.c.l.b16 %v1272
      %v3739 = vunpack.c.l.b16 %v1273
      %v3740 = vunpack.c.l.b16 %v1274
      %v3741 = vunpack.c.l.b16 %v1275
      %v3742 = vunpack.c.l.b16 %v1276
      %v3743 = vunpack.c.l.b16 %v1277
      %v3744 = vunpack.c.l.b16 %v1278
      %v3745 = vunpack.c.l.b16 %v1279
      %v3746 = vunpack.c.l.b16 %v1280
      %v3747 = vunpack.c.l.b16 %v1281
      %v3748 = vunpack.c.l.b16 %v1282
      %v3749 = vunpack.c.l.b16 %v1283
      %v3750 = vunpack.c.l.b16 %v1284
      %v3751 = vunpack.c.l.b16 %v1285
      %v3752 = vunpack.c.l.b16 %v1286
      %v3753 = vunpack.c.l.b16 %v1287
      %v3754 = vunpack.c.l.b16 %v1288
      %v3755 = vunpack.c.l.b16 %v1289
      %v3756 = vunpack.c.l.b16 %v1290
      %v3757 = vunpack.c.l.b16 %v1291
      %v3758 = vunpack.c.l.b16 %v1292
      %v3759 = vunpack.c.l.b16 %v1293
      %v3760 = vunpack.c.l.b16 %v1294
      %v3761 = vunpack.c.l.b16 %v1295
      %v3762 = vunpack.c.l.b16 %v1296
      %v3763 = vunpack.c.l.b16 %v1297
      %v3764 = vunpack.c.l.b16 %v1298
      %v3765 = vunpack.c.l.b16 %v1299
      %v3766 = vunpack.c.l.b16 %v1300
      %v3767 = vunpack.c.l.b16 %v1301
      %v3768 = vunpack.c.l.b16 %v1302
      %v3769 = vunpack.c.l.b16 %v1303
      %v3770 = vunpack.c.l.b16 %v1304
      %v3771 = vunpack.c.l.b16 %v1305
      %v3772 = vunpack.c.l.b16 %v1306
      %v3773 = vunpack.c.l.b16 %v1307
      %v3774 = vunpack.c.l.b16 %v1308
      %v3775 = vunpack.c.l.b16 %v1309
      %v3776 = vunpack.c.l.b16 %v1310
      %v3777 = vunpack.c.l.b16 %v1311
      %v3778 = vunpack.c.l.b16 %v1312
      %v3779 = vunpack.c.l.b16 %v1313
      %v3780 = vunpack.c.l.b16 %v1314
      %v3781 = vunpack.c.l.b16 %v1315
      %v3782 = vunpack.c.l.b16 %v1316
      %v3783 = vunpack.c.l.b16 %v1317
      %v3784 = vunpack.c.l.b16 %v1318
      %v3785 = vunpack.c.l.b16 %v1319
      %v3786 = vunpack.c.l.b16 %v1320
      %v3787 = vunpack.c.l.b16 %v1321
      %v3788 = vunpack.c.l.b16 %v1322
      %v3789 = vunpack.c.l.b16 %v1323
      %v3790 = vunpack.c.l.b16 %v1324
      %v3791 = vunpack.c.l.b16 %v1325
      %v3792 = vunpack.c.l.b16 %v1326
      %v3793 = vunpack.c.l.b16 %v1327
      %v3794 = vunpack.c.l.b16 %v1328
      %v3795 = vunpack.c.l.b16 %v1329
      %v3796 = vunpack.c.l.b16 %v1330
      %v3797 = vunpack.c.l.b16 %v1331
      %v3798 = vunpack.c.l.b16 %v1332
      %v3799 = vunpack.c.l.b16 %v1333
      %v3800 = vunpack.c.l.b16 %v1334
      %v3801 = vunpack.c.l.b16 %v1335
      %v3802 = vunpack.c.l.b16 %v1336
      %v3803 = vunpack.c.l.b16 %v1337
      %v3804 = vunpack.c.l.b16 %v1338
      %v3805 = vunpack.c.l.b16 %v1339
      %v3806 = vunpack.c.l.b16 %v1340
      %v3807 = vunpack.c.l.b16 %v1341
      %v3808 = vunpack.c.l.b16 %v1342
      %v3809 = vunpack.c.l.b16 %v1343
      %v3810 = vunpack.c.l.b16 %v1344
      %v3811 = vunpack.c.l.b16 %v1345
      %v3812 = vunpack.c.l.b16 %v1346
      %v3813 = vunpack.c.l.b16 %v1347
      %v3814 = vunpack.c.l.b16 %v1348
      %v3815 = vunpack.c.l.b16 %v1349
      %v3816 = vunpack.c.l.b16 %v1350
      %v3817 = vunpack.c.l.b16 %v1351
      %v3818 = vunpack.c.l.b16 %v1352
      %v3819 = vunpack.c.l.b16 %v1353
      %v3820 = vunpack.c.l.b16 %v1354
      %v3821 = vunpack.c.l.b16 %v1355
      %v3822 = vunpack.c.l.b16 %v1356
      %v3823 = vunpack.c.l.b16 %v1357
      %v3824 = vunpack.c.l.b16 %v1358
      %v3825 = vunpack.c.l.b16 %v1359
      %v3826 = vunpack.c.l.b16 %v1360
      %v3827 = vunpack.c.l.b16 %v1361
      %v3828 = vunpack.c.l.b16 %v1362
      %v3829 = vunpack.c.l.b16 %v1363
      %v3830 = vunpack.c.l.b16 %v1364
      %v3831 = vunpack.c.l.b16 %v1365
      %v3832 = vunpack.c.l.b16 %v1366
      %v3833 = vunpack.c.l.b16 %v1367
      %v3834 = vunpack.c.l.b16 %v1368
      %v3835 = vunpack.c.l.b16 %v1369
      %v3836 = vunpack.c.l.b16 %v1370
      %v3837 = vunpack.c.l.b16 %v1371
      %v3838 = vunpack.c.l.b16 %v1372
      %v3839 = vunpack.c.l.b16 %v1373
      %v3840 = vunpack.c.l.b16 %v1374
      %v3841 = vunpack.c.l.b16 %v1375
      %v3842 = vunpack.c.l.b16 %v1376
      %v3843 = vunpack.c.l.b16 %v1377
      %v3844 = vunpack.c.l.b16 %v1378
      %v3845 = vunpack.c.l.b16 %v1379
      %v3846 = vunpack.c.l.b16 %v1380
      %v3847 = vpack.c.b16 %v2696, %v2695
      %v3848 = vpack.c.b16 %v2698, %v2697
      %v3849 = vpack.c.b16 %v2700, %v2699
      %v3850 = vpack.c.b16 %v2702, %v2701
      %v3851 = vpack.c.b16 %v2704, %v2703
      %v3852 = vpack.c.b16 %v2706, %v2705
      %v3853 = vpack.c.b16 %v2708, %v2707
      %v3854 = vpack.c.b16 %v2710, %v2709
      %v3855 = vpack.c.b16 %v2712, %v2711
      %v3856 = vpack.c.b16 %v2714, %v2713
      %v3857 = vpack.c.b16 %v2716, %v2715
      %v3858 = vpack.c.b16 %v2718, %v2717
      %v3859 = vpack.c.b16 %v2720, %v2719
      %v3860 = vpack.c.b16 %v2722, %v2721
      %v3861 = vpack.c.b16 %v2724, %v2723
      %v3862 = vpack.c.b16 %v2726, %v2725
      %v3863 = vpack.c.b16 %v2728, %v2727
      %v3864 = vpack.c.b16 %v2730, %v2729
      %v3865 = vpack.c.b16 %v2732, %v2731
      %v3866 = vpack.c.b16 %v2734, %v2733
      %v3867 = vpack.c.b16 %v2736, %v2735
      %v3868 = vpack.c.b16 %v2738, %v2737
      %v3869 = vpack.c.b16 %v2740, %v2739
      %v3870 = vpack.c.b16 %v2742, %v2741
      %v3871 = vpack.c.b16 %v2744, %v2743
      %v3872 = vpack.c.b16 %v2746, %v2745
      %v3873 = vpack.c.b16 %v2748, %v2747
      %v3874 = vpack.c.b16 %v2750, %v2749
      %v3875 = vpack.c.b16 %v2752, %v2751
      %v3876 = vpack.c.b16 %v2754, %v2753
      %v3877 = vpack.c.b16 %v2756, %v2755
      %v3878 = vpack.c.b16 %v2758, %v2757
      %v3879 = vpack.c.b16 %v2760, %v2759
      %v3880 = vpack.c.b16 %v2762, %v2761
      %v3881 = vpack.c.b16 %v2764, %v2763
      %v3882 = vpack.c.b16 %v2766, %v2765
      %v3883 = vpack.c.b16 %v2768, %v2767
      %v3884 = vpack.c.b16 %v2770, %v2769
      %v3885 = vpack.c.b16 %v2772, %v2771
      %v3886 = vpack.c.b16 %v2774, %v2773
      %v3887 = vpack.c.b16 %v2776, %v2775
      %v3888 = vpack.c.b16 %v2778, %v2777
      %v3889 = vpack.c.b16 %v2780, %v2779
      %v3890 = vpack.c.b16 %v2782, %v2781
      %v3891 = vpack.c.b16 %v2784, %v2783
      %v3892 = vpack.c.b16 %v2786, %v2785
      %v3893 = vpack.c.b16 %v2788, %v2787
      %v3894 = vpack.c.b16 %v2790, %v2789
      %v3895 = vpack.c.b16 %v2792, %v2791
      %v3896 = vpack.c.b16 %v2794, %v2793
      %v3897 = vpack.c.b16 %v2796, %v2795
      %v3898 = vpack.c.b16 %v2798, %v2797
      %v3899 = vpack.c.b16 %v2800, %v2799
      %v3900 = vpack.c.b16 %v2802, %v2801
      %v3901 = vpack.c.b16 %v2804, %v2803
      %v3902 = vpack.c.b16 %v2806, %v2805
      %v3903 = vpack.c.b16 %v2808, %v2807
      %v3904 = vpack.c.b16 %v2810, %v2809
      %v3905 = vpack.c.b16 %v2812, %v2811
      %v3906 = vpack.c.b16 %v2814, %v2813
      %v3907 = vpack.c.b16 %v2816, %v2815
      %v3908 = vpack.c.b16 %v2818, %v2817
      %v3909 = vpack.c.b16 %v2820, %v2819
      %v3910 = vpack.c.b16 %v2822, %v2821
      %v3911 = vpack.c.b16 %v2824, %v2823
      %v3912 = vpack.c.b16 %v2826, %v2825
      %v3913 = vpack.c.b16 %v2828, %v2827
      %v3914 = vpack.c.b16 %v2830, %v2829
      %v3915 = vpack.c.b16 %v2832, %v2831
      %v3916 = vpack.c.b16 %v2834, %v2833
      %v3917 = vpack.c.b16 %v2836, %v2835
      %v3918 = vpack.c.b16 %v2838, %v2837
      %v3919 = vpack.c.b16 %v2840, %v2839
      %v3920 = vpack.c.b16 %v2842, %v2841
      %v3921 = vpack.c.b16 %v2844, %v2843
      %v3922 = vpack.c.b16 %v2846, %v2845
      %v3923 = vpack.c.b16 %v2848, %v2847
      %v3924 = vpack.c.b16 %v2850, %v2849
      %v3925 = vpack.c.b16 %v2852, %v2851
      %v3926 = vpack.c.b16 %v2854, %v2853
      %v3927 = vpack.c.b16 %v2856, %v2855
      %v3928 = vpack.c.b16 %v2858, %v2857
      %v3929 = vpack.c.b16 %v2860, %v2859
      %v3930 = vpack.c.b16 %v2862, %v2861
      %v3931 = vpack.c.b16 %v2864, %v2863
      %v3932 = vpack.c.b16 %v2866, %v2865
      %v3933 = vpack.c.b16 %v2868, %v2867
      %v3934 = vpack.c.b16 %v2870, %v2869
      %v3935 = vpack.c.b16 %v2872, %v2871
      %v3936 = vpack.c.b16 %v2874, %v2873
      %v3937 = vpack.c.b16 %v2876, %v2875
      %v3938 = vpack.c.b16 %v2878, %v2877
      %v3939 = vpack.c.b16 %v2880, %v2879
      %v3940 = vpack.c.b16 %v2882, %v2881
      %v3941 = vpack.c.b16 %v2884, %v2883
      %v3942 = vpack.c.b16 %v2886, %v2885
      %v3943 = vpack.c.b16 %v2888, %v2887
      %v3944 = vpack.c.b16 %v2890, %v2889
      %v3945 = vpack.c.b16 %v2892, %v2891
      %v3946 = vpack.c.b16 %v2894, %v2893
      %v3947 = vpack.c.b16 %v2896, %v2895
      %v3948 = vpack.c.b16 %v2898, %v2897
      %v3949 = vpack.c.b16 %v2900, %v2899
      %v3950 = vpack.c.b16 %v2902, %v2901
      %v3951 = vpack.c.b16 %v2904, %v2903
      %v3952 = vpack.c.b16 %v2906, %v2905
      %v3953 = vpack.c.b16 %v2908, %v2907
      %v3954 = vpack.c.b16 %v2910, %v2909
      %v3955 = vpack.c.b16 %v2912, %v2911
      %v3956 = vpack.c.b16 %v2914, %v2913
      %v3957 = vpack.c.b16 %v2916, %v2915
      %v3958 = vpack.c.b16 %v2918, %v2917
      %v3959 = vpack.c.b16 %v2920, %v2919
      %v3960 = vpack.c.b16 %v2922, %v2921
      %v3961 = vpack.c.b16 %v2924, %v2923
      %v3962 = vpack.c.b16 %v2926, %v2925
      %v3963 = vpack.c.b16 %v2928, %v2927
      %v3964 = vpack.c.b16 %v2930, %v2929
      %v3965 = vpack.c.b16 %v2932, %v2931
      %v3966 = vpack.c.b16 %v2934, %v2933
      %v3967 = vpack.c.b16 %v2936, %v2935
      %v3968 = vpack.c.b16 %v2938, %v2937
      %v3969 = vpack.c.b16 %v2940, %v2939
      %v3970 = vpack.c.b16 %v2942, %v2941
      %v3971 = vpack.c.b16 %v2944, %v2943
      %v3972 = vpack.c.b16 %v2946, %v2945
      %v3973 = vpack.c.b16 %v2948, %v2947
      %v3974 = vpack.c.b16 %v2950, %v2949
      %v3975 = vpack.c.b16 %v2952, %v2951
      %v3976 = vpack.c.b16 %v2954, %v2953
      %v3977 = vpack.c.b16 %v2956, %v2955
      %v3978 = vpack.c.b16 %v2958, %v2957
      %v3979 = vpack.c.b16 %v2960, %v2959
      %v3980 = vpack.c.b16 %v2962, %v2961
      %v3981 = vpack.c.b16 %v2964, %v2963
      %v3982 = vpack.c.b16 %v2966, %v2965
      %v3983 = vpack.c.b16 %v2968, %v2967
      %v3984 = vpack.c.b16 %v2970, %v2969
      %v3985 = vpack.c.b16 %v2972, %v2971
      %v3986 = vpack.c.b16 %v2974, %v2973
      %v3987 = vpack.c.b16 %v2976, %v2975
      %v3988 = vpack.c.b16 %v2978, %v2977
      %v3989 = vpack.c.b16 %v2980, %v2979
      %v3990 = vpack.c.b16 %v2982, %v2981
      %v3991 = vpack.c.b16 %v2984, %v2983
      %v3992 = vpack.c.b16 %v2986, %v2985
      %v3993 = vpack.c.b16 %v2988, %v2987
      %v3994 = vpack.c.b16 %v2990, %v2989
      %v3995 = vpack.c.b16 %v2992, %v2991
      %v3996 = vpack.c.b16 %v2994, %v2993
      %v3997 = vpack.c.b16 %v2996, %v2995
      %v3998 = vpack.c.b16 %v2998, %v2997
      %v3999 = vpack.c.b16 %v3000, %v2999
      %v4000 = vpack.c.b16 %v3002, %v3001
      %v4001 = vpack.c.b16 %v3004, %v3003
      %v4002 = vpack.c.b16 %v3006, %v3005
      %v4003 = vpack.c.b16 %v3008, %v3007
      %v4004 = vpack.c.b16 %v3010, %v3009
      %v4005 = vpack.c.b16 %v3012, %v3011
      %v4006 = vpack.c.b16 %v3014, %v3013
      %v4007 = vpack.c.b16 %v3016, %v3015
      %v4008 = vpack.c.b16 %v3018, %v3017
      %v4009 = vpack.c.b16 %v3020, %v3019
      %v4010 = vpack.c.b16 %v3022, %v3021
      %v4011 = vpack.c.b16 %v3024, %v3023
      %v4012 = vpack.c.b16 %v3026, %v3025
      %v4013 = vpack.c.b16 %v3028, %v3027
      %v4014 = vpack.c.b16 %v3030, %v3029
      %v4015 = vpack.c.b16 %v3032, %v3031
      %v4016 = vpack.c.b16 %v3034, %v3033
      %v4017 = vpack.c.b16 %v3036, %v3035
      %v4018 = vpack.c.b16 %v3038, %v3037
      %v4019 = vpack.c.b16 %v3040, %v3039
      %v4020 = vpack.c.b16 %v3042, %v3041
      %v4021 = vpack.c.b16 %v3044, %v3043
      %v4022 = vpack.c.b16 %v3046, %v3045
      %v4023 = vpack.c.b16 %v3048, %v3047
      %v4024 = vpack.c.b16 %v3050, %v3049
      %v4025 = vpack.c.b16 %v3052, %v3051
      %v4026 = vpack.c.b16 %v3054, %v3053
      %v4027 = vpack.c.b16 %v3056, %v3055
      %v4028 = vpack.c.b16 %v3058, %v3057
      %v4029 = vpack.c.b16 %v3060, %v3059
      %v4030 = vpack.c.b16 %v3062, %v3061
      %v4031 = vpack.c.b16 %v3064, %v3063
      %v4032 = vpack.c.b16 %v3066, %v3065
      %v4033 = vpack.c.b16 %v3068, %v3067
      %v4034 = vpack.c.b16 %v3070, %v3069
      %v4035 = vpack.c.b16 %v3072, %v3071
      %v4036 = vpack.c.b16 %v3074, %v3073
      %v4037 = vpack.c.b16 %v3076, %v3075
      %v4038 = vpack.c.b16 %v3078, %v3077
      %v4039 = vpack.c.b16 %v3080, %v3079
      %v4040 = vpack.c.b16 %v3082, %v3081
      %v4041 = vpack.c.b16 %v3084, %v3083
      %v4042 = vpack.c.b16 %v3086, %v3085
      %v4043 = vpack.c.b16 %v3088, %v3087
      %v4044 = vpack.c.b16 %v3090, %v3089
      %v4045 = vpack.c.b16 %v3092, %v3091
      %v4046 = vpack.c.b16 %v3094, %v3093
      %v4047 = vpack.c.b16 %v3096, %v3095
      %v4048 = vpack.c.b16 %v3098, %v3097
      %v4049 = vpack.c.b16 %v3100, %v3099
      %v4050 = vpack.c.b16 %v3102, %v3101
      %v4051 = vpack.c.b16 %v3104, %v3103
      %v4052 = vpack.c.b16 %v3106, %v3105
      %v4053 = vpack.c.b16 %v3108, %v3107
      %v4054 = vpack.c.b16 %v3110, %v3109
      %v4055 = vpack.c.b16 %v3112, %v3111
      %v4056 = vpack.c.b16 %v3114, %v3113
      %v4057 = vpack.c.b16 %v3116, %v3115
      %v4058 = vpack.c.b16 %v3118, %v3117
      %v4059 = vpack.c.b16 %v3120, %v3119
      %v4060 = vpack.c.b16 %v3122, %v3121
      %v4061 = vpack.c.b16 %v3124, %v3123
      %v4062 = vpack.c.b16 %v3126, %v3125
      %v4063 = vpack.c.b16 %v3128, %v3127
      %v4064 = vpack.c.b16 %v3130, %v3129
      %v4065 = vpack.c.b16 %v3132, %v3131
      %v4066 = vpack.c.b16 %v3134, %v3133
      %v4067 = vpack.c.b16 %v3136, %v3135
      %v4068 = vpack.c.b16 %v3138, %v3137
      %v4069 = vpack.c.b16 %v3140, %v3139
      %v4070 = vpack.c.b16 %v3142, %v3141
      %v4071 = vpack.c.b16 %v3144, %v3143
      %v4072 = vpack.c.b16 %v3146, %v3145
      %v4073 = vpack.c.b16 %v3148, %v3147
      %v4074 = vpack.c.b16 %v3150, %v3149
      %v4075 = vpack.c.b16 %v3152, %v3151
      %v4076 = vpack.c.b16 %v3154, %v3153
      %v4077 = vpack.c.b16 %v3156, %v3155
      %v4078 = vpack.c.b16 %v3158, %v3157
      %v4079 = vpack.c.b16 %v3160, %v3159
      %v4080 = vpack.c.b16 %v3162, %v3161
      %v4081 = vpack.c.b16 %v3164, %v3163
      %v4082 = vpack.c.b16 %v3166, %v3165
      %v4083 = vpack.c.b16 %v3168, %v3167
      %v4084 = vpack.c.b16 %v3170, %v3169
      %v4085 = vpack.c.b16 %v3172, %v3171
      %v4086 = vpack.c.b16 %v3174, %v3173
      %v4087 = vpack.c.b16 %v3176, %v3175
      %v4088 = vpack.c.b16 %v3178, %v3177
      %v4089 = vpack.c.b16 %v3180, %v3179
      %v4090 = vpack.c.b16 %v3182, %v3181
      %v4091 = vpack.c.b16 %v3184, %v3183
      %v4092 = vpack.c.b16 %v3186, %v3185
      %v4093 = vpack.c.b16 %v3188, %v3187
      %v4094 = vpack.c.b16 %v3190, %v3189
      %v4095 = vpack.c.b16 %v3192, %v3191
      %v4096 = vpack.c.b16 %v3194, %v3193
      %v4097 = vpack.c.b16 %v3196, %v3195
      %v4098 = vpack.c.b16 %v3198, %v3197
      %v4099 = vpack.c.b16 %v3200, %v3199
      %v4100 = vpack.c.b16 %v3202, %v3201
      %v4101 = vpack.c.b16 %v3204, %v3203
      %v4102 = vpack.c.b16 %v3206, %v3205
      %v4103 = vpack.c.b16 %v3208, %v3207
      %v4104 = vpack.c.b16 %v3210, %v3209
      %v4105 = vpack.c.b16 %v3212, %v3211
      %v4106 = vpack.c.b16 %v3214, %v3213
      %v4107 = vpack.c.b16 %v3216, %v3215
      %v4108 = vpack.c.b16 %v3218, %v3217
      %v4109 = vpack.c.b16 %v3220, %v3219
      %v4110 = vpack.c.b16 %v3222, %v3221
      %v4111 = vpack.c.b16 %v3224, %v3223
      %v4112 = vpack.c.b16 %v3226, %v3225
      %v4113 = vpack.c.b16 %v3228, %v3227
      %v4114 = vpack.c.b16 %v3230, %v3229
      %v4115 = vpack.c.b16 %v3232, %v3231
      %v4116 = vpack.c.b16 %v3234, %v3233
      %v4117 = vpack.c.b16 %v3236, %v3235
      %v4118 = vpack.c.b16 %v3238, %v3237
      %v4119 = vpack.c.b16 %v3240, %v3239
      %v4120 = vpack.c.b16 %v3242, %v3241
      %v4121 = vpack.c.b16 %v3244, %v3243
      %v4122 = vpack.c.b16 %v3246, %v3245
      %v4123 = vpack.c.b16 %v3248, %v3247
      %v4124 = vpack.c.b16 %v3250, %v3249
      %v4125 = vpack.c.b16 %v3252, %v3251
      %v4126 = vpack.c.b16 %v3254, %v3253
      %v4127 = vpack.c.b16 %v3256, %v3255
      %v4128 = vpack.c.b16 %v3258, %v3257
      %v4129 = vpack.c.b16 %v3260, %v3259
      %v4130 = vpack.c.b16 %v3262, %v3261
      %v4131 = vpack.c.b16 %v3264, %v3263
      %v4132 = vpack.c.b16 %v3266, %v3265
      %v4133 = vpack.c.b16 %v3268, %v3267
      %v4134 = vpack.c.b16 %v3270, %v3269
      %v4135 = vpack.c.b16 %v3272, %v3271
      %v4136 = vpack.c.b16 %v3274, %v3273
      %v4137 = vpack.c.b16 %v3276, %v3275
      %v4138 = vpack.c.b16 %v3278, %v3277
      %v4139 = vpack.c.b16 %v3280, %v3279
      %v4140 = vpack.c.b16 %v3282, %v3281
      %v4141 = vpack.c.b16 %v3284, %v3283
      %v4142 = vpack.c.b16 %v3286, %v3285
      %v4143 = vpack.c.b16 %v3288, %v3287
      %v4144 = vpack.c.b16 %v3290, %v3289
      %v4145 = vpack.c.b16 %v3292, %v3291
      %v4146 = vpack.c.b16 %v3294, %v3293
      %v4147 = vpack.c.b16 %v3296, %v3295
      %v4148 = vpack.c.b16 %v3298, %v3297
      %v4149 = vpack.c.b16 %v3300, %v3299
      %v4150 = vpack.c.b16 %v3302, %v3301
      %v4151 = vpack.c.b16 %v3304, %v3303
      %v4152 = vpack.c.b16 %v3306, %v3305
      %v4153 = vpack.c.b16 %v3308, %v3307
      %v4154 = vpack.c.b16 %v3310, %v3309
      %v4155 = vpack.c.b16 %v3312, %v3311
      %v4156 = vpack.c.b16 %v3314, %v3313
      %v4157 = vpack.c.b16 %v3316, %v3315
      %v4158 = vpack.c.b16 %v3318, %v3317
      %v4159 = vpack.c.b16 %v3320, %v3319
      %v4160 = vpack.c.b16 %v3322, %v3321
      %v4161 = vpack.c.b16 %v3324, %v3323
      %v4162 = vpack.c.b16 %v3326, %v3325
      %v4163 = vpack.c.b16 %v3328, %v3327
      %v4164 = vpack.c.b16 %v3330, %v3329
      %v4165 = vpack.c.b16 %v3332, %v3331
      %v4166 = vpack.c.b16 %v3334, %v3333
      %v4167 = vpack.c.b16 %v3336, %v3335
      %v4168 = vpack.c.b16 %v3338, %v3337
      %v4169 = vpack.c.b16 %v3340, %v3339
      %v4170 = vpack.c.b16 %v3342, %v3341
      %v4171 = vpack.c.b16 %v3344, %v3343
      %v4172 = vpack.c.b16 %v3346, %v3345
      %v4173 = vpack.c.b16 %v3348, %v3347
      %v4174 = vpack.c.b16 %v3350, %v3349
      %v4175 = vpack.c.b16 %v3352, %v3351
      %v4176 = vpack.c.b16 %v3354, %v3353
      %v4177 = vpack.c.b16 %v3356, %v3355
      %v4178 = vpack.c.b16 %v3358, %v3357
      %v4179 = vpack.c.b16 %v3360, %v3359
      %v4180 = vpack.c.b16 %v3362, %v3361
      %v4181 = vpack.c.b16 %v3364, %v3363
      %v4182 = vpack.c.b16 %v3366, %v3365
      %v4183 = vpack.c.b16 %v3368, %v3367
      %v4184 = vpack.c.b16 %v3370, %v3369
      %v4185 = vpack.c.b16 %v3372, %v3371
      %v4186 = vpack.c.b16 %v3374, %v3373
      %v4187 = vpack.c.b16 %v3376, %v3375
      %v4188 = vpack.c.b16 %v3378, %v3377
      %v4189 = vpack.c.b16 %v3380, %v3379
      %v4190 = vpack.c.b16 %v3382, %v3381
      %v4191 = vpack.c.b16 %v3384, %v3383
      %v4192 = vpack.c.b16 %v3386, %v3385
      %v4193 = vpack.c.b16 %v3388, %v3387
      %v4194 = vpack.c.b16 %v3390, %v3389
      %v4195 = vpack.c.b16 %v3392, %v3391
      %v4196 = vpack.c.b16 %v3394, %v3393
      %v4197 = vpack.c.b16 %v3396, %v3395
      %v4198 = vpack.c.b16 %v3398, %v3397
      %v4199 = vpack.c.b16 %v3400, %v3399
      %v4200 = vpack.c.b16 %v3402, %v3401
      %v4201 = vpack.c.b16 %v3404, %v3403
      %v4202 = vpack.c.b16 %v3406, %v3405
      %v4203 = vpack.c.b16 %v3408, %v3407
      %v4204 = vpack.c.b16 %v3410, %v3409
      %v4205 = vpack.c.b16 %v3412, %v3411
      %v4206 = vpack.c.b16 %v3414, %v3413
      %v4207 = vpack.c.b16 %v3416, %v3415
      %v4208 = vpack.c.b16 %v3418, %v3417
      %v4209 = vpack.c.b16 %v3420, %v3419
      %v4210 = vpack.c.b16 %v3422, %v3421
      %v4211 = vpack.c.b16 %v3424, %v3423
      %v4212 = vpack.c.b16 %v3426, %v3425
      %v4213 = vpack.c.b16 %v3428, %v3427
      %v4214 = vpack.c.b16 %v3430, %v3429
      %v4215 = vpack.c.b16 %v3432, %v3431
      %v4216 = vpack.c.b16 %v3434, %v3433
      %v4217 = vpack.c.b16 %v3436, %v3435
      %v4218 = vpack.c.b16 %v3438, %v3437
      %v4219 = vpack.c.b16 %v3440, %v3439
      %v4220 = vpack.c.b16 %v3442, %v3441
      %v4221 = vpack.c.b16 %v3444, %v3443
      %v4222 = vpack.c.b16 %v3446, %v3445
      %v4223 = vpack.c.b16 %v3448, %v3447
      %v4224 = vpack.c.b16 %v3450, %v3449
      %v4225 = vpack.c.b16 %v3452, %v3451
      %v4226 = vpack.c.b16 %v3454, %v3453
      %v4227 = vpack.c.b16 %v3456, %v3455
      %v4228 = vpack.c.b16 %v3458, %v3457
      %v4229 = vpack.c.b16 %v3460, %v3459
      %v4230 = vpack.c.b16 %v3462, %v3461
      %v4231 = vpack.c.b16 %v3464, %v3463
      %v4232 = vpack.c.b16 %v3466, %v3465
      %v4233 = vpack.c.b16 %v3468, %v3467
      %v4234 = vpack.c.b16 %v3470, %v3469
      %v4235 = vpack.c.b16 %v3472, %v3471
      %v4236 = vpack.c.b16 %v3474, %v3473
      %v4237 = vpack.c.b16 %v3476, %v3475
      %v4238 = vpack.c.b16 %v3478, %v3477
      %v4239 = vpack.c.b16 %v3480, %v3479
      %v4240 = vpack.c.b16 %v3482, %v3481
      %v4241 = vpack.c.b16 %v3484, %v3483
      %v4242 = vpack.c.b16 %v3486, %v3485
      %v4243 = vpack.c.b16 %v3488, %v3487
      %v4244 = vpack.c.b16 %v3490, %v3489
      %v4245 = vpack.c.b16 %v3492, %v3491
      %v4246 = vpack.c.b16 %v3494, %v3493
      %v4247 = vpack.c.b16 %v3496, %v3495
      %v4248 = vpack.c.b16 %v3498, %v3497
      %v4249 = vpack.c.b16 %v3500, %v3499
      %v4250 = vpack.c.b16 %v3502, %v3501
      %v4251 = vpack.c.b16 %v3504, %v3503
      %v4252 = vpack.c.b16 %v3506, %v3505
      %v4253 = vpack.c.b16 %v3508, %v3507
      %v4254 = vpack.c.b16 %v3510, %v3509
      %v4255 = vpack.c.b16 %v3512, %v3511
      %v4256 = vpack.c.b16 %v3514, %v3513
      %v4257 = vpack.c.b16 %v3516, %v3515
      %v4258 = vpack.c.b16 %v3518, %v3517
      %v4259 = vpack.c.b16 %v3520, %v3519
      %v4260 = vpack.c.b16 %v3522, %v3521
      %v4261 = vpack.c.b16 %v3524, %v3523
      %v4262 = vpack.c.b16 %v3526, %v3525
      %v4263 = vpack.c.b16 %v3528, %v3527
      %v4264 = vpack.c.b16 %v3530, %v3529
      %v4265 = vpack.c.b16 %v3532, %v3531
      %v4266 = vpack.c.b16 %v3534, %v3533
      %v4267 = vpack.c.b16 %v3536, %v3535
      %v4268 = vpack.c.b16 %v3538, %v3537
      %v4269 = vpack.c.b16 %v3540, %v3539
      %v4270 = vpack.c.b16 %v3542, %v3541
      %v4271 = vpack.c.b16 %v3544, %v3543
      %v4272 = vpack.c.b16 %v3546, %v3545
      %v4273 = vpack.c.b16 %v3548, %v3547
      %v4274 = vpack.c.b16 %v3550, %v3549
      %v4275 = vpack.c.b16 %v3552, %v3551
      %v4276 = vpack.c.b16 %v3554, %v3553
      %v4277 = vpack.c.b16 %v3556, %v3555
      %v4278 = vpack.c.b16 %v3558, %v3557
      %v4279 = vpack.c.b16 %v3560, %v3559
      %v4280 = vpack.c.b16 %v3562, %v3561
      %v4281 = vpack.c.b16 %v3564, %v3563
      %v4282 = vpack.c.b16 %v3566, %v3565
      %v4283 = vpack.c.b16 %v3568, %v3567
      %v4284 = vpack.c.b16 %v3570, %v3569
      %v4285 = vpack.c.b16 %v3572, %v3571
      %v4286 = vpack.c.b16 %v3574, %v3573
      %v4287 = vpack.c.b16 %v3576, %v3575
      %v4288 = vpack.c.b16 %v3578, %v3577
      %v4289 = vpack.c.b16 %v3580, %v3579
      %v4290 = vpack.c.b16 %v3582, %v3581
      %v4291 = vpack.c.b16 %v3584, %v3583
      %v4292 = vpack.c.b16 %v3586, %v3585
      %v4293 = vpack.c.b16 %v3588, %v3587
      %v4294 = vpack.c.b16 %v3590, %v3589
      %v4295 = vpack.c.b16 %v3592, %v3591
      %v4296 = vpack.c.b16 %v3594, %v3593
      %v4297 = vpack.c.b16 %v3596, %v3595
      %v4298 = vpack.c.b16 %v3598, %v3597
      %v4299 = vpack.c.b16 %v3600, %v3599
      %v4300 = vpack.c.b16 %v3602, %v3601
      %v4301 = vpack.c.b16 %v3604, %v3603
      %v4302 = vpack.c.b16 %v3606, %v3605
      %v4303 = vpack.c.b16 %v3608, %v3607
      %v4304 = vpack.c.b16 %v3610, %v3609
      %v4305 = vpack.c.b16 %v3612, %v3611
      %v4306 = vpack.c.b16 %v3614, %v3613
      %v4307 = vpack.c.b16 %v3616, %v3615
      %v4308 = vpack.c.b16 %v3618, %v3617
      %v4309 = vpack.c.b16 %v3620, %v3619
      %v4310 = vpack.c.b16 %v3622, %v3621
      %v4311 = vpack.c.b16 %v3624, %v3623
      %v4312 = vpack.c.b16 %v3626, %v3625
      %v4313 = vpack.c.b16 %v3628, %v3627
      %v4314 = vpack.c.b16 %v3630, %v3629
      %v4315 = vpack.c.b16 %v3632, %v3631
      %v4316 = vpack.c.b16 %v3634, %v3633
      %v4317 = vpack.c.b16 %v3636, %v3635
      %v4318 = vpack.c.b16 %v3638, %v3637
      %v4319 = vpack.c.b16 %v3640, %v3639
      %v4320 = vpack.c.b16 %v3642, %v3641
      %v4321 = vpack.c.b16 %v3644, %v3643
      %v4322 = vpack.c.b16 %v3646, %v3645
      %v4323 = vpack.c.b16 %v3648, %v3647
      %v4324 = vpack.c.b16 %v3650, %v3649
      %v4325 = vpack.c.b16 %v3652, %v3651
      %v4326 = vpack.c.b16 %v3654, %v3653
      %v4327 = vpack.c.b16 %v3656, %v3655
      %v4328 = vpack.c.b16 %v3658, %v3657
      %v4329 = vpack.c.b16 %v3660, %v3659
      %v4330 = vpack.c.b16 %v3662, %v3661
      %v4331 = vpack.c.b16 %v3664, %v3663
      %v4332 = vpack.c.b16 %v3666, %v3665
      %v4333 = vpack.c.b16 %v3668, %v3667
      %v4334 = vpack.c.b16 %v3670, %v3669
      %v4335 = vpack.c.b16 %v3672, %v3671
      %v4336 = vpack.c.b16 %v3674, %v3673
      %v4337 = vpack.c.b16 %v3676, %v3675
      %v4338 = vpack.c.b16 %v3678, %v3677
      %v4339 = vpack.c.b16 %v3680, %v3679
      %v4340 = vpack.c.b16 %v3682, %v3681
      %v4341 = vpack.c.b16 %v3684, %v3683
      %v4342 = vpack.c.b16 %v3686, %v3685
      %v4343 = vpack.c.b16 %v3688, %v3687
      %v4344 = vpack.c.b16 %v3690, %v3689
      %v4345 = vpack.c.b16 %v3692, %v3691
      %v4346 = vpack.c.b16 %v3694, %v3693
      %v4347 = vpack.c.b16 %v3696, %v3695
      %v4348 = vpack.c.b16 %v3698, %v3697
      %v4349 = vpack.c.b16 %v3700, %v3699
      %v4350 = vpack.c.b16 %v3702, %v3701
      %v4351 = vpack.c.b16 %v3704, %v3703
      %v4352 = vpack.c.b16 %v3706, %v3705
      %v4353 = vpack.c.b16 %v3708, %v3707
      %v4354 = vpack.c.b16 %v3710, %v3709
      %v4355 = vpack.c.b16 %v3712, %v3711
      %v4356 = vpack.c.b16 %v3714, %v3713
      %v4357 = vpack.c.b16 %v3716, %v3715
      %v4358 = vpack.c.b16 %v3718, %v3717
      %v4359 = vpack.c.b16 %v3720, %v3719
      %v4360 = vpack.c.b16 %v3722, %v3721
      %v4361 = vpack.c.b16 %v3724, %v3723
      %v4362 = vpack.c.b16 %v3726, %v3725
      %v4363 = vpack.c.b16 %v3728, %v3727
      %v4364 = vpack.c.b16 %v3730, %v3729
      %v4365 = vpack.c.b16 %v3732, %v3731
      %v4366 = vpack.c.b16 %v3734, %v3733
      %v4367 = vpack.c.b16 %v3736, %v3735
      %v4368 = vpack.c.b16 %v3738, %v3737
      %v4369 = vpack.c.b16 %v3740, %v3739
      %v4370 = vpack.c.b16 %v3742, %v3741
      %v4371 = vpack.c.b16 %v3744, %v3743
      %v4372 = vpack.c.b16 %v3746, %v3745
      %v4373 = vpack.c.b16 %v3748, %v3747
      %v4374 = vpack.c.b16 %v3750, %v3749
      %v4375 = vpack.c.b16 %v3752, %v3751
      %v4376 = vpack.c.b16 %v3754, %v3753
      %v4377 = vpack.c.b16 %v3756, %v3755
      %v4378 = vpack.c.b16 %v3758, %v3757
      %v4379 = vpack.c.b16 %v3760, %v3759
      %v4380 = vpack.c.b16 %v3762, %v3761
      %v4381 = vpack.c.b16 %v3764, %v3763
      %v4382 = vpack.c.b16 %v3766, %v3765
      %v4383 = vpack.c.b16 %v3768, %v3767
      %v4384 = vpack.c.b16 %v3770, %v3769
      %v4385 = vpack.c.b16 %v3772, %v3771
      %v4386 = vpack.c.b16 %v3774, %v3773
      %v4387 = vpack.c.b16 %v3776, %v3775
      %v4388 = vpack.c.b16 %v3778, %v3777
      %v4389 = vpack.c.b16 %v3780, %v3779
      %v4390 = vpack.c.b16 %v3782, %v3781
      %v4391 = vpack.c.b16 %v3784, %v3783
      %v4392 = vpack.c.b16 %v3786, %v3785
      %v4393 = vpack.c.b16 %v3788, %v3787
      %v4394 = vpack.c.b16 %v3790, %v3789
      %v4395 = vpack.c.b16 %v3792, %v3791
      %v4396 = vpack.c.b16 %v3794, %v3793
      %v4397 = vpack.c.b16 %v3796, %v3795
      %v4398 = vpack.c.b16 %v3798, %v3797
      %v4399 = vpack.c.b16 %v3800, %v3799
      %v4400 = vpack.c.b16 %v3802, %v3801
      %v4401 = vpack.c.b16 %v3804, %v3803
      %v4402 = vpack.c.b16 %v3806, %v3805
      %v4403 = vpack.c.b16 %v3808, %v3807
      %v4404 = vpack.c.b16 %v3810, %v3809
      %v4405 = vpack.c.b16 %v3812, %v3811
      %v4406 = vpack.c.b16 %v3814, %v3813
      %v4407 = vpack.c.b16 %v3816, %v3815
      %v4408 = vpack.c.b16 %v3818, %v3817
      %v4409 = vpack.c.b16 %v3820, %v3819
      %v4410 = vpack.c.b16 %v3822, %v3821
      %v4411 = vpack.c.b16 %v3824, %v3823
      %v4412 = vpack.c.b16 %v3826, %v3825
      %v4413 = vpack.c.b16 %v3828, %v3827
      %v4414 = vpack.c.b16 %v3830, %v3829
      %v4415 = vpack.c.b16 %v3832, %v3831
      %v4416 = vpack.c.b16 %v3834, %v3833
      %v4417 = vpack.c.b16 %v3836, %v3835
      %v4418 = vpack.c.b16 %v3838, %v3837
      %v4419 = vpack.c.b16 %v3840, %v3839
      %v4420 = vpack.c.b16 %v3842, %v3841
      %v4421 = vpack.c.b16 %v3844, %v3843
      %v4422 = vpack.c.b16 %v3846, %v3845
      %4999 = vmatpush.bf16.msra.mxu0 %v3854
      %5000 = vmatpush.bf16.msra.mxu0 %v3853
      %5001 = vmatpush.bf16.msra.mxu0 %v3852
      %5002 = vmatpush.bf16.msra.mxu0 %v3851
      %5003 = vmatpush.bf16.msra.mxu0 %v3850
      %5004 = vmatpush.bf16.msra.mxu0 %v3849
      %5005 = vmatpush.bf16.msra.mxu0 %v3848
      %5006 = vmatpush.bf16.msra.mxu0 %v3847
      %5007 = vmatmul.bf16.gmra.mxu0 %v1383
      %v5008 = vpop.f32.mrf.mxu0
      %v5009 = vadd.f32 0.0, %v5008
      %v5010 = vpop.f32.mrf.mxu0
      %5011 = vdwg.mxu0
      %5012 = vmatpush.bf16.msra.mxu0 %v3862
      %5013 = vmatpush.bf16.msra.mxu0 %v3861
      %5014 = vmatpush.bf16.msra.mxu0 %v3860
      %5015 = vmatpush.bf16.msra.mxu0 %v3859
      %5016 = vmatpush.bf16.msra.mxu0 %v3858
      %5017 = vmatpush.bf16.msra.mxu0 %v3857
      %5018 = vmatpush.bf16.msra.mxu0 %v3856
      %5019 = vmatpush.bf16.msra.mxu0 %v3855
      %5020 = vmatmul.bf16.gmra.mxu0 %v1384
      %v5021 = vpop.f32.mrf.mxu0
      %v5022 = vadd.f32 %v5009, %v5021
      %v5023 = vpop.f32.mrf.mxu0
      %5024 = vdwg.mxu0
      %5025 = vmatpush.bf16.msra.mxu0 %v3870
      %5026 = vmatpush.bf16.msra.mxu0 %v3869
      %5027 = vmatpush.bf16.msra.mxu0 %v3868
      %5028 = vmatpush.bf16.msra.mxu0 %v3867
      %5029 = vmatpush.bf16.msra.mxu0 %v3866
      %5030 = vmatpush.bf16.msra.mxu0 %v3865
      %5031 = vmatpush.bf16.msra.mxu0 %v3864
      %5032 = vmatpush.bf16.msra.mxu0 %v3863
      %5033 = vmatmul.bf16.gmra.mxu0 %v1385
      %v5034 = vpop.f32.mrf.mxu0
      %v5035 = vadd.f32 %v5022, %v5034
      %v5036 = vpop.f32.mrf.mxu0
      %5037 = vdwg.mxu0
      %5038 = vmatpush.bf16.msra.mxu0 %v3878
      %5039 = vmatpush.bf16.msra.mxu0 %v3877
      %5040 = vmatpush.bf16.msra.mxu0 %v3876
      %5041 = vmatpush.bf16.msra.mxu0 %v3875
      %5042 = vmatpush.bf16.msra.mxu0 %v3874
      %5043 = vmatpush.bf16.msra.mxu0 %v3873
      %5044 = vmatpush.bf16.msra.mxu0 %v3872
      %5045 = vmatpush.bf16.msra.mxu0 %v3871
      %5046 = vmatmul.bf16.gmra.mxu0 %v1386
      %v5047 = vpop.f32.mrf.mxu0
      %v5048 = vadd.f32 %v5035, %v5047
      %v5049 = vpop.f32.mrf.mxu0
      %5050 = vdwg.mxu0
      %5051 = vmatpush.bf16.msra.mxu0 %v3886
      %5052 = vmatpush.bf16.msra.mxu0 %v3885
      %5053 = vmatpush.bf16.msra.mxu0 %v3884
      %5054 = vmatpush.bf16.msra.mxu0 %v3883
      %5055 = vmatpush.bf16.msra.mxu0 %v3882
      %5056 = vmatpush.bf16.msra.mxu0 %v3881
      %5057 = vmatpush.bf16.msra.mxu0 %v3880
      %5058 = vmatpush.bf16.msra.mxu0 %v3879
      %5059 = vmatmul.bf16.gmra.mxu0 %v1387
      %v5060 = vpop.f32.mrf.mxu0
      %v5061 = vadd.f32 %v5048, %v5060
      %v5062 = vpop.f32.mrf.mxu0
      %5063 = vdwg.mxu0
      %5064 = vmatpush.bf16.msra.mxu0 %v3894
      %5065 = vmatpush.bf16.msra.mxu0 %v3893
      %5066 = vmatpush.bf16.msra.mxu0 %v3892
      %5067 = vmatpush.bf16.msra.mxu0 %v3891
      %5068 = vmatpush.bf16.msra.mxu0 %v3890
      %5069 = vmatpush.bf16.msra.mxu0 %v3889
      %5070 = vmatpush.bf16.msra.mxu0 %v3888
      %5071 = vmatpush.bf16.msra.mxu0 %v3887
      %5072 = vmatmul.bf16.gmra.mxu0 %v1388
      %v5073 = vpop.f32.mrf.mxu0
      %v5074 = vadd.f32 %v5061, %v5073
      %v5075 = vpop.f32.mrf.mxu0
      %5076 = vdwg.mxu0
      %5077 = vmatpush.bf16.msra.mxu0 %v3902
      %5078 = vmatpush.bf16.msra.mxu0 %v3901
      %5079 = vmatpush.bf16.msra.mxu0 %v3900
      %5080 = vmatpush.bf16.msra.mxu0 %v3899
      %5081 = vmatpush.bf16.msra.mxu0 %v3898
      %5082 = vmatpush.bf16.msra.mxu0 %v3897
      %5083 = vmatpush.bf16.msra.mxu0 %v3896
      %5084 = vmatpush.bf16.msra.mxu0 %v3895
      %5085 = vmatmul.bf16.gmra.mxu0 %v1389
      %v5086 = vpop.f32.mrf.mxu0
      %v5087 = vadd.f32 %v5074, %v5086
      %v5088 = vpop.f32.mrf.mxu0
      %5089 = vdwg.mxu0
      %5090 = vmatpush.bf16.msra.mxu0 %v3910
      %5091 = vmatpush.bf16.msra.mxu0 %v3909
      %5092 = vmatpush.bf16.msra.mxu0 %v3908
      %5093 = vmatpush.bf16.msra.mxu0 %v3907
      %5094 = vmatpush.bf16.msra.mxu0 %v3906
      %5095 = vmatpush.bf16.msra.mxu0 %v3905
      %5096 = vmatpush.bf16.msra.mxu0 %v3904
      %5097 = vmatpush.bf16.msra.mxu0 %v3903
      %5098 = vmatmul.bf16.gmra.mxu0 %v1390
      %v5099 = vpop.f32.mrf.mxu0
      %v5100 = vadd.f32 %v5087, %v5099
      %v5101 = vpop.f32.mrf.mxu0
      %5102 = vdwg.mxu0
      %5103 = vmatpush.bf16.msra.mxu0 %v3918
      %5104 = vmatpush.bf16.msra.mxu0 %v3917
      %5105 = vmatpush.bf16.msra.mxu0 %v3916
      %5106 = vmatpush.bf16.msra.mxu0 %v3915
      %5107 = vmatpush.bf16.msra.mxu0 %v3914
      %5108 = vmatpush.bf16.msra.mxu0 %v3913
      %5109 = vmatpush.bf16.msra.mxu0 %v3912
      %5110 = vmatpush.bf16.msra.mxu0 %v3911
      %5111 = vmatmul.bf16.gmra.mxu0 %v1393
      %v5112 = vpop.f32.mrf.mxu0
      %v5113 = vadd.f32 %v5100, %v5112
      %v5114 = vpop.f32.mrf.mxu0
      %5115 = vdwg.mxu0
      %5116 = vmatpush.bf16.msra.mxu0 %v3926
      %5117 = vmatpush.bf16.msra.mxu0 %v3925
      %5118 = vmatpush.bf16.msra.mxu0 %v3924
      %5119 = vmatpush.bf16.msra.mxu0 %v3923
      %5120 = vmatpush.bf16.msra.mxu0 %v3922
      %5121 = vmatpush.bf16.msra.mxu0 %v3921
      %5122 = vmatpush.bf16.msra.mxu0 %v3920
      %5123 = vmatpush.bf16.msra.mxu0 %v3919
      %5124 = vmatmul.bf16.gmra.mxu0 %v1394
      %v5125 = vpop.f32.mrf.mxu0
      %v5126 = vadd.f32 %v5113, %v5125
      %v5127 = vpop.f32.mrf.mxu0
      %5128 = vdwg.mxu0
      %5129 = vmatpush.bf16.msra.mxu0 %v3934
      %5130 = vmatpush.bf16.msra.mxu0 %v3933
      %5131 = vmatpush.bf16.msra.mxu0 %v3932
      %5132 = vmatpush.bf16.msra.mxu0 %v3931
      %5133 = vmatpush.bf16.msra.mxu0 %v3930
      %5134 = vmatpush.bf16.msra.mxu0 %v3929
      %5135 = vmatpush.bf16.msra.mxu0 %v3928
      %5136 = vmatpush.bf16.msra.mxu0 %v3927
      %5137 = vmatmul.bf16.gmra.mxu0 %v1395
      %v5138 = vpop.f32.mrf.mxu0
      %v5139 = vadd.f32 %v5126, %v5138
      %v5140 = vpop.f32.mrf.mxu0
      %5141 = vdwg.mxu0
      %5142 = vmatpush.bf16.msra.mxu0 %v3942
      %5143 = vmatpush.bf16.msra.mxu0 %v3941
      %5144 = vmatpush.bf16.msra.mxu0 %v3940
      %5145 = vmatpush.bf16.msra.mxu0 %v3939
      %5146 = vmatpush.bf16.msra.mxu0 %v3938
      %5147 = vmatpush.bf16.msra.mxu0 %v3937
      %5148 = vmatpush.bf16.msra.mxu0 %v3936
      %5149 = vmatpush.bf16.msra.mxu0 %v3935
      %5150 = vmatmul.bf16.gmra.mxu0 %v1396
      %v5151 = vpop.f32.mrf.mxu0
      %v5152 = vadd.f32 %v5139, %v5151
      %v5153 = vpop.f32.mrf.mxu0
      %5154 = vdwg.mxu0
      %5155 = vmatpush.bf16.msra.mxu0 %v3950
      %5156 = vmatpush.bf16.msra.mxu0 %v3949
      %5157 = vmatpush.bf16.msra.mxu0 %v3948
      %5158 = vmatpush.bf16.msra.mxu0 %v3947
      %5159 = vmatpush.bf16.msra.mxu0 %v3946
      %5160 = vmatpush.bf16.msra.mxu0 %v3945
      %5161 = vmatpush.bf16.msra.mxu0 %v3944
      %5162 = vmatpush.bf16.msra.mxu0 %v3943
      %5163 = vmatmul.bf16.gmra.mxu0 %v1397
      %v5164 = vpop.f32.mrf.mxu0
      %v5165 = vadd.f32 %v5152, %v5164
      %v5166 = vpop.f32.mrf.mxu0
      %5167 = vdwg.mxu0
      %5168 = vmatpush.bf16.msra.mxu0 %v3958
      %5169 = vmatpush.bf16.msra.mxu0 %v3957
      %5170 = vmatpush.bf16.msra.mxu0 %v3956
      %5171 = vmatpush.bf16.msra.mxu0 %v3955
      %5172 = vmatpush.bf16.msra.mxu0 %v3954
      %5173 = vmatpush.bf16.msra.mxu0 %v3953
      %5174 = vmatpush.bf16.msra.mxu0 %v3952
      %5175 = vmatpush.bf16.msra.mxu0 %v3951
      %5176 = vmatmul.bf16.gmra.mxu0 %v1398
      %v5177 = vpop.f32.mrf.mxu0
      %v5178 = vadd.f32 %v5165, %v5177
      %v5179 = vpop.f32.mrf.mxu0
      %5180 = vdwg.mxu0
      %5181 = vmatpush.bf16.msra.mxu0 %v3966
      %5182 = vmatpush.bf16.msra.mxu0 %v3965
      %5183 = vmatpush.bf16.msra.mxu0 %v3964
      %5184 = vmatpush.bf16.msra.mxu0 %v3963
      %5185 = vmatpush.bf16.msra.mxu0 %v3962
      %5186 = vmatpush.bf16.msra.mxu0 %v3961
      %5187 = vmatpush.bf16.msra.mxu0 %v3960
      %5188 = vmatpush.bf16.msra.mxu0 %v3959
      %5189 = vmatmul.bf16.gmra.mxu0 %v1399
      %v5190 = vpop.f32.mrf.mxu0
      %v5191 = vadd.f32 %v5178, %v5190
      %v5192 = vpop.f32.mrf.mxu0
      %5193 = vdwg.mxu0
      %5194 = vmatpush.bf16.msra.mxu0 %v3974
      %5195 = vmatpush.bf16.msra.mxu0 %v3973
      %5196 = vmatpush.bf16.msra.mxu0 %v3972
      %5197 = vmatpush.bf16.msra.mxu0 %v3971
      %5198 = vmatpush.bf16.msra.mxu0 %v3970
      %5199 = vmatpush.bf16.msra.mxu0 %v3969
      %5200 = vmatpush.bf16.msra.mxu0 %v3968
      %5201 = vmatpush.bf16.msra.mxu0 %v3967
      %5202 = vmatmul.bf16.gmra.mxu0 %v1400
      %v5203 = vpop.f32.mrf.mxu0
      %v5204 = vadd.f32 %v5191, %v5203
      %v5205 = vpop.f32.mrf.mxu0
      %5206 = vdwg.mxu0
      %5207 = vmatpush.bf16.msra.mxu0 %v3982
      %5208 = vmatpush.bf16.msra.mxu0 %v3981
      %5209 = vmatpush.bf16.msra.mxu0 %v3980
      %5210 = vmatpush.bf16.msra.mxu0 %v3979
      %5211 = vmatpush.bf16.msra.mxu0 %v3978
      %5212 = vmatpush.bf16.msra.mxu0 %v3977
      %5213 = vmatpush.bf16.msra.mxu0 %v3976
      %5214 = vmatpush.bf16.msra.mxu0 %v3975
      %5215 = vmatmul.bf16.gmra.mxu0 %v1403
      %v5216 = vpop.f32.mrf.mxu0
      %v5217 = vadd.f32 %v5204, %v5216
      %v5218 = vpop.f32.mrf.mxu0
      %5219 = vdwg.mxu0
      %5220 = vmatpush.bf16.msra.mxu0 %v3990
      %5221 = vmatpush.bf16.msra.mxu0 %v3989
      %5222 = vmatpush.bf16.msra.mxu0 %v3988
      %5223 = vmatpush.bf16.msra.mxu0 %v3987
      %5224 = vmatpush.bf16.msra.mxu0 %v3986
      %5225 = vmatpush.bf16.msra.mxu0 %v3985
      %5226 = vmatpush.bf16.msra.mxu0 %v3984
      %5227 = vmatpush.bf16.msra.mxu0 %v3983
      %5228 = vmatmul.bf16.gmra.mxu0 %v1404
      %v5229 = vpop.f32.mrf.mxu0
      %v5230 = vadd.f32 %v5217, %v5229
      %v5231 = vpop.f32.mrf.mxu0
      %5232 = vdwg.mxu0
      %5233 = vmatpush.bf16.msra.mxu0 %v3998
      %5234 = vmatpush.bf16.msra.mxu0 %v3997
      %5235 = vmatpush.bf16.msra.mxu0 %v3996
      %5236 = vmatpush.bf16.msra.mxu0 %v3995
      %5237 = vmatpush.bf16.msra.mxu0 %v3994
      %5238 = vmatpush.bf16.msra.mxu0 %v3993
      %5239 = vmatpush.bf16.msra.mxu0 %v3992
      %5240 = vmatpush.bf16.msra.mxu0 %v3991
      %5241 = vmatmul.bf16.gmra.mxu0 %v1405
      %v5242 = vpop.f32.mrf.mxu0
      %v5243 = vadd.f32 %v5230, %v5242
      %v5244 = vpop.f32.mrf.mxu0
      %5245 = vdwg.mxu0
      %5246 = vmatpush.bf16.msra.mxu0 %v4006
      %5247 = vmatpush.bf16.msra.mxu0 %v4005
      %5248 = vmatpush.bf16.msra.mxu0 %v4004
      %5249 = vmatpush.bf16.msra.mxu0 %v4003
      %5250 = vmatpush.bf16.msra.mxu0 %v4002
      %5251 = vmatpush.bf16.msra.mxu0 %v4001
      %5252 = vmatpush.bf16.msra.mxu0 %v4000
      %5253 = vmatpush.bf16.msra.mxu0 %v3999
      %5254 = vmatmul.bf16.gmra.mxu0 %v1406
      %v5255 = vpop.f32.mrf.mxu0
      %v5256 = vadd.f32 %v5243, %v5255
      %v5257 = vpop.f32.mrf.mxu0
      %5258 = vdwg.mxu0
      %5259 = vmatpush.bf16.msra.mxu0 %v4014
      %5260 = vmatpush.bf16.msra.mxu0 %v4013
      %5261 = vmatpush.bf16.msra.mxu0 %v4012
      %5262 = vmatpush.bf16.msra.mxu0 %v4011
      %5263 = vmatpush.bf16.msra.mxu0 %v4010
      %5264 = vmatpush.bf16.msra.mxu0 %v4009
      %5265 = vmatpush.bf16.msra.mxu0 %v4008
      %5266 = vmatpush.bf16.msra.mxu0 %v4007
      %5267 = vmatmul.bf16.gmra.mxu0 %v1407
      %v5268 = vpop.f32.mrf.mxu0
      %v5269 = vadd.f32 %v5256, %v5268
      %v5270 = vpop.f32.mrf.mxu0
      %5271 = vdwg.mxu0
      %5272 = vmatpush.bf16.msra.mxu0 %v4022
      %5273 = vmatpush.bf16.msra.mxu0 %v4021
      %5274 = vmatpush.bf16.msra.mxu0 %v4020
      %5275 = vmatpush.bf16.msra.mxu0 %v4019
      %5276 = vmatpush.bf16.msra.mxu0 %v4018
      %5277 = vmatpush.bf16.msra.mxu0 %v4017
      %5278 = vmatpush.bf16.msra.mxu0 %v4016
      %5279 = vmatpush.bf16.msra.mxu0 %v4015
      %5280 = vmatmul.bf16.gmra.mxu0 %v1408
      %v5281 = vpop.f32.mrf.mxu0
      %v5282 = vadd.f32 %v5269, %v5281
      %v5283 = vpop.f32.mrf.mxu0
      %5284 = vdwg.mxu0
      %5285 = vmatpush.bf16.msra.mxu0 %v4030
      %5286 = vmatpush.bf16.msra.mxu0 %v4029
      %5287 = vmatpush.bf16.msra.mxu0 %v4028
      %5288 = vmatpush.bf16.msra.mxu0 %v4027
      %5289 = vmatpush.bf16.msra.mxu0 %v4026
      %5290 = vmatpush.bf16.msra.mxu0 %v4025
      %5291 = vmatpush.bf16.msra.mxu0 %v4024
      %5292 = vmatpush.bf16.msra.mxu0 %v4023
      %5293 = vmatmul.bf16.gmra.mxu0 %v1409
      %v5294 = vpop.f32.mrf.mxu0
      %v5295 = vadd.f32 %v5282, %v5294
      %v5296 = vpop.f32.mrf.mxu0
      %5297 = vdwg.mxu0
      %5298 = vmatpush.bf16.msra.mxu0 %v4038
      %5299 = vmatpush.bf16.msra.mxu0 %v4037
      %5300 = vmatpush.bf16.msra.mxu0 %v4036
      %5301 = vmatpush.bf16.msra.mxu0 %v4035
      %5302 = vmatpush.bf16.msra.mxu0 %v4034
      %5303 = vmatpush.bf16.msra.mxu0 %v4033
      %5304 = vmatpush.bf16.msra.mxu0 %v4032
      %5305 = vmatpush.bf16.msra.mxu0 %v4031
      %5306 = vmatmul.bf16.gmra.mxu0 %v1410
      %v5307 = vpop.f32.mrf.mxu0
      %v5308 = vadd.f32 %v5295, %v5307
      %v5309 = vpop.f32.mrf.mxu0
      %5310 = vdwg.mxu0
      %5311 = vmatpush.bf16.msra.mxu0 %v4046
      %5312 = vmatpush.bf16.msra.mxu0 %v4045
      %5313 = vmatpush.bf16.msra.mxu0 %v4044
      %5314 = vmatpush.bf16.msra.mxu0 %v4043
      %5315 = vmatpush.bf16.msra.mxu0 %v4042
      %5316 = vmatpush.bf16.msra.mxu0 %v4041
      %5317 = vmatpush.bf16.msra.mxu0 %v4040
      %5318 = vmatpush.bf16.msra.mxu0 %v4039
      %5319 = vmatmul.bf16.gmra.mxu0 %v1413
      %v5320 = vpop.f32.mrf.mxu0
      %v5321 = vadd.f32 %v5308, %v5320
      %v5322 = vpop.f32.mrf.mxu0
      %5323 = vdwg.mxu0
      %5324 = vmatpush.bf16.msra.mxu0 %v4054
      %5325 = vmatpush.bf16.msra.mxu0 %v4053
      %5326 = vmatpush.bf16.msra.mxu0 %v4052
      %5327 = vmatpush.bf16.msra.mxu0 %v4051
      %5328 = vmatpush.bf16.msra.mxu0 %v4050
      %5329 = vmatpush.bf16.msra.mxu0 %v4049
      %5330 = vmatpush.bf16.msra.mxu0 %v4048
      %5331 = vmatpush.bf16.msra.mxu0 %v4047
      %5332 = vmatmul.bf16.gmra.mxu0 %v1414
      %v5333 = vpop.f32.mrf.mxu0
      %v5334 = vadd.f32 %v5321, %v5333
      %v5335 = vpop.f32.mrf.mxu0
      %5336 = vdwg.mxu0
      %5337 = vmatpush.bf16.msra.mxu0 %v4062
      %5338 = vmatpush.bf16.msra.mxu0 %v4061
      %5339 = vmatpush.bf16.msra.mxu0 %v4060
      %5340 = vmatpush.bf16.msra.mxu0 %v4059
      %5341 = vmatpush.bf16.msra.mxu0 %v4058
      %5342 = vmatpush.bf16.msra.mxu0 %v4057
      %5343 = vmatpush.bf16.msra.mxu0 %v4056
      %5344 = vmatpush.bf16.msra.mxu0 %v4055
      %5345 = vmatmul.bf16.gmra.mxu0 %v1415
      %v5346 = vpop.f32.mrf.mxu0
      %v5347 = vadd.f32 %v5334, %v5346
      %v5348 = vpop.f32.mrf.mxu0
      %5349 = vdwg.mxu0
      %5350 = vmatpush.bf16.msra.mxu0 %v4070
      %5351 = vmatpush.bf16.msra.mxu0 %v4069
      %5352 = vmatpush.bf16.msra.mxu0 %v4068
      %5353 = vmatpush.bf16.msra.mxu0 %v4067
      %5354 = vmatpush.bf16.msra.mxu0 %v4066
      %5355 = vmatpush.bf16.msra.mxu0 %v4065
      %5356 = vmatpush.bf16.msra.mxu0 %v4064
      %5357 = vmatpush.bf16.msra.mxu0 %v4063
      %5358 = vmatmul.bf16.gmra.mxu0 %v1416
      %v5359 = vpop.f32.mrf.mxu0
      %v5360 = vadd.f32 %v5347, %v5359
      %v5361 = vpop.f32.mrf.mxu0
      %5362 = vdwg.mxu0
      %5363 = vmatpush.bf16.msra.mxu0 %v4078
      %5364 = vmatpush.bf16.msra.mxu0 %v4077
      %5365 = vmatpush.bf16.msra.mxu0 %v4076
      %5366 = vmatpush.bf16.msra.mxu0 %v4075
      %5367 = vmatpush.bf16.msra.mxu0 %v4074
      %5368 = vmatpush.bf16.msra.mxu0 %v4073
      %5369 = vmatpush.bf16.msra.mxu0 %v4072
      %5370 = vmatpush.bf16.msra.mxu0 %v4071
      %5371 = vmatmul.bf16.gmra.mxu0 %v1417
      %v5372 = vpop.f32.mrf.mxu0
      %v5373 = vadd.f32 %v5360, %v5372
      %v5374 = vpop.f32.mrf.mxu0
      %5375 = vdwg.mxu0
      %5376 = vmatpush.bf16.msra.mxu0 %v4086
      %5377 = vmatpush.bf16.msra.mxu0 %v4085
      %5378 = vmatpush.bf16.msra.mxu0 %v4084
      %5379 = vmatpush.bf16.msra.mxu0 %v4083
      %5380 = vmatpush.bf16.msra.mxu0 %v4082
      %5381 = vmatpush.bf16.msra.mxu0 %v4081
      %5382 = vmatpush.bf16.msra.mxu0 %v4080
      %5383 = vmatpush.bf16.msra.mxu0 %v4079
      %5384 = vmatmul.bf16.gmra.mxu0 %v1418
      %v5385 = vpop.f32.mrf.mxu0
      %v5386 = vadd.f32 %v5373, %v5385
      %v5387 = vpop.f32.mrf.mxu0
      %5388 = vdwg.mxu0
      %5389 = vmatpush.bf16.msra.mxu0 %v4094
      %5390 = vmatpush.bf16.msra.mxu0 %v4093
      %5391 = vmatpush.bf16.msra.mxu0 %v4092
      %5392 = vmatpush.bf16.msra.mxu0 %v4091
      %5393 = vmatpush.bf16.msra.mxu0 %v4090
      %5394 = vmatpush.bf16.msra.mxu0 %v4089
      %5395 = vmatpush.bf16.msra.mxu0 %v4088
      %5396 = vmatpush.bf16.msra.mxu0 %v4087
      %5397 = vmatmul.bf16.gmra.mxu0 %v1419
      %v5398 = vpop.f32.mrf.mxu0
      %v5399 = vadd.f32 %v5386, %v5398
      %v5400 = vpop.f32.mrf.mxu0
      %5401 = vdwg.mxu0
      %5402 = vmatpush.bf16.msra.mxu0 %v4102
      %5403 = vmatpush.bf16.msra.mxu0 %v4101
      %5404 = vmatpush.bf16.msra.mxu0 %v4100
      %5405 = vmatpush.bf16.msra.mxu0 %v4099
      %5406 = vmatpush.bf16.msra.mxu0 %v4098
      %5407 = vmatpush.bf16.msra.mxu0 %v4097
      %5408 = vmatpush.bf16.msra.mxu0 %v4096
      %5409 = vmatpush.bf16.msra.mxu0 %v4095
      %5410 = vmatmul.bf16.gmra.mxu0 %v1420
      %v5411 = vpop.f32.mrf.mxu0
      %v5412 = vadd.f32 %v5399, %v5411
      %v5413 = vpop.f32.mrf.mxu0
      %5414 = vdwg.mxu0
      %5415 = vmatpush.bf16.msra.mxu0 %v4110
      %5416 = vmatpush.bf16.msra.mxu0 %v4109
      %5417 = vmatpush.bf16.msra.mxu0 %v4108
      %5418 = vmatpush.bf16.msra.mxu0 %v4107
      %5419 = vmatpush.bf16.msra.mxu0 %v4106
      %5420 = vmatpush.bf16.msra.mxu0 %v4105
      %5421 = vmatpush.bf16.msra.mxu0 %v4104
      %5422 = vmatpush.bf16.msra.mxu0 %v4103
      %5423 = vmatmul.bf16.gmra.mxu0 %v1423
      %v5424 = vpop.f32.mrf.mxu0
      %v5425 = vadd.f32 %v5412, %v5424
      %v5426 = vpop.f32.mrf.mxu0
      %5427 = vdwg.mxu0
      %5428 = vmatpush.bf16.msra.mxu0 %v4118
      %5429 = vmatpush.bf16.msra.mxu0 %v4117
      %5430 = vmatpush.bf16.msra.mxu0 %v4116
      %5431 = vmatpush.bf16.msra.mxu0 %v4115
      %5432 = vmatpush.bf16.msra.mxu0 %v4114
      %5433 = vmatpush.bf16.msra.mxu0 %v4113
      %5434 = vmatpush.bf16.msra.mxu0 %v4112
      %5435 = vmatpush.bf16.msra.mxu0 %v4111
      %5436 = vmatmul.bf16.gmra.mxu0 %v1424
      %v5437 = vpop.f32.mrf.mxu0
      %v5438 = vadd.f32 %v5425, %v5437
      %v5439 = vpop.f32.mrf.mxu0
      %5440 = vdwg.mxu0
      %5441 = vmatpush.bf16.msra.mxu0 %v4126
      %5442 = vmatpush.bf16.msra.mxu0 %v4125
      %5443 = vmatpush.bf16.msra.mxu0 %v4124
      %5444 = vmatpush.bf16.msra.mxu0 %v4123
      %5445 = vmatpush.bf16.msra.mxu0 %v4122
      %5446 = vmatpush.bf16.msra.mxu0 %v4121
      %5447 = vmatpush.bf16.msra.mxu0 %v4120
      %5448 = vmatpush.bf16.msra.mxu0 %v4119
      %5449 = vmatmul.bf16.gmra.mxu0 %v1425
      %v5450 = vpop.f32.mrf.mxu0
      %v5451 = vadd.f32 %v5438, %v5450
      %v5452 = vpop.f32.mrf.mxu0
      %5453 = vdwg.mxu0
      %5454 = vmatpush.bf16.msra.mxu0 %v4134
      %5455 = vmatpush.bf16.msra.mxu0 %v4133
      %5456 = vmatpush.bf16.msra.mxu0 %v4132
      %5457 = vmatpush.bf16.msra.mxu0 %v4131
      %5458 = vmatpush.bf16.msra.mxu0 %v4130
      %5459 = vmatpush.bf16.msra.mxu0 %v4129
      %5460 = vmatpush.bf16.msra.mxu0 %v4128
      %5461 = vmatpush.bf16.msra.mxu0 %v4127
      %5462 = vmatmul.bf16.gmra.mxu0 %v1426
      %v5463 = vpop.f32.mrf.mxu0
      %v5464 = vadd.f32 %v5451, %v5463
      %v5465 = vpop.f32.mrf.mxu0
      %5466 = vdwg.mxu0
      %5467 = vmatpush.bf16.msra.mxu0 %v4142
      %5468 = vmatpush.bf16.msra.mxu0 %v4141
      %5469 = vmatpush.bf16.msra.mxu0 %v4140
      %5470 = vmatpush.bf16.msra.mxu0 %v4139
      %5471 = vmatpush.bf16.msra.mxu0 %v4138
      %5472 = vmatpush.bf16.msra.mxu0 %v4137
      %5473 = vmatpush.bf16.msra.mxu0 %v4136
      %5474 = vmatpush.bf16.msra.mxu0 %v4135
      %5475 = vmatmul.bf16.gmra.mxu0 %v1427
      %v5476 = vpop.f32.mrf.mxu0
      %v5477 = vadd.f32 %v5464, %v5476
      %v5478 = vpop.f32.mrf.mxu0
      %5479 = vdwg.mxu0
      %5480 = vmatpush.bf16.msra.mxu0 %v4150
      %5481 = vmatpush.bf16.msra.mxu0 %v4149
      %5482 = vmatpush.bf16.msra.mxu0 %v4148
      %5483 = vmatpush.bf16.msra.mxu0 %v4147
      %5484 = vmatpush.bf16.msra.mxu0 %v4146
      %5485 = vmatpush.bf16.msra.mxu0 %v4145
      %5486 = vmatpush.bf16.msra.mxu0 %v4144
      %5487 = vmatpush.bf16.msra.mxu0 %v4143
      %5488 = vmatmul.bf16.gmra.mxu0 %v1428
      %v5489 = vpop.f32.mrf.mxu0
      %v5490 = vadd.f32 %v5477, %v5489
      %v5491 = vpop.f32.mrf.mxu0
      %5492 = vdwg.mxu0
      %5493 = vmatpush.bf16.msra.mxu0 %v4158
      %5494 = vmatpush.bf16.msra.mxu0 %v4157
      %5495 = vmatpush.bf16.msra.mxu0 %v4156
      %5496 = vmatpush.bf16.msra.mxu0 %v4155
      %5497 = vmatpush.bf16.msra.mxu0 %v4154
      %5498 = vmatpush.bf16.msra.mxu0 %v4153
      %5499 = vmatpush.bf16.msra.mxu0 %v4152
      %5500 = vmatpush.bf16.msra.mxu0 %v4151
      %5501 = vmatmul.bf16.gmra.mxu0 %v1429
      %v5502 = vpop.f32.mrf.mxu0
      %v5503 = vadd.f32 %v5490, %v5502
      %v5504 = vpop.f32.mrf.mxu0
      %5505 = vdwg.mxu0
      %5506 = vmatpush.bf16.msra.mxu0 %v4166
      %5507 = vmatpush.bf16.msra.mxu0 %v4165
      %5508 = vmatpush.bf16.msra.mxu0 %v4164
      %5509 = vmatpush.bf16.msra.mxu0 %v4163
      %5510 = vmatpush.bf16.msra.mxu0 %v4162
      %5511 = vmatpush.bf16.msra.mxu0 %v4161
      %5512 = vmatpush.bf16.msra.mxu0 %v4160
      %5513 = vmatpush.bf16.msra.mxu0 %v4159
      %5514 = vmatmul.bf16.gmra.mxu0 %v1430
      %v5515 = vpop.f32.mrf.mxu0
      %v5516 = vadd.f32 %v5503, %v5515
      %v5517 = vpop.f32.mrf.mxu0
      %5518 = vdwg.mxu0
      %5519 = vmatpush.bf16.msra.mxu0 %v4174
      %5520 = vmatpush.bf16.msra.mxu0 %v4173
      %5521 = vmatpush.bf16.msra.mxu0 %v4172
      %5522 = vmatpush.bf16.msra.mxu0 %v4171
      %5523 = vmatpush.bf16.msra.mxu0 %v4170
      %5524 = vmatpush.bf16.msra.mxu0 %v4169
      %5525 = vmatpush.bf16.msra.mxu0 %v4168
      %5526 = vmatpush.bf16.msra.mxu0 %v4167
      %5527 = vmatmul.bf16.gmra.mxu0 %v1433
      %v5528 = vpop.f32.mrf.mxu0
      %v5529 = vadd.f32 %v5516, %v5528
      %v5530 = vpop.f32.mrf.mxu0
      %5531 = vdwg.mxu0
      %5532 = vmatpush.bf16.msra.mxu0 %v4182
      %5533 = vmatpush.bf16.msra.mxu0 %v4181
      %5534 = vmatpush.bf16.msra.mxu0 %v4180
      %5535 = vmatpush.bf16.msra.mxu0 %v4179
      %5536 = vmatpush.bf16.msra.mxu0 %v4178
      %5537 = vmatpush.bf16.msra.mxu0 %v4177
      %5538 = vmatpush.bf16.msra.mxu0 %v4176
      %5539 = vmatpush.bf16.msra.mxu0 %v4175
      %5540 = vmatmul.bf16.gmra.mxu0 %v1434
      %v5541 = vpop.f32.mrf.mxu0
      %v5542 = vadd.f32 %v5529, %v5541
      %v5543 = vpop.f32.mrf.mxu0
      %5544 = vdwg.mxu0
      %5545 = vmatpush.bf16.msra.mxu0 %v4190
      %5546 = vmatpush.bf16.msra.mxu0 %v4189
      %5547 = vmatpush.bf16.msra.mxu0 %v4188
      %5548 = vmatpush.bf16.msra.mxu0 %v4187
      %5549 = vmatpush.bf16.msra.mxu0 %v4186
      %5550 = vmatpush.bf16.msra.mxu0 %v4185
      %5551 = vmatpush.bf16.msra.mxu0 %v4184
      %5552 = vmatpush.bf16.msra.mxu0 %v4183
      %5553 = vmatmul.bf16.gmra.mxu0 %v1435
      %v5554 = vpop.f32.mrf.mxu0
      %v5555 = vadd.f32 %v5542, %v5554
      %v5556 = vpop.f32.mrf.mxu0
      %5557 = vdwg.mxu0
      %5558 = vmatpush.bf16.msra.mxu0 %v4198
      %5559 = vmatpush.bf16.msra.mxu0 %v4197
      %5560 = vmatpush.bf16.msra.mxu0 %v4196
      %5561 = vmatpush.bf16.msra.mxu0 %v4195
      %5562 = vmatpush.bf16.msra.mxu0 %v4194
      %5563 = vmatpush.bf16.msra.mxu0 %v4193
      %5564 = vmatpush.bf16.msra.mxu0 %v4192
      %5565 = vmatpush.bf16.msra.mxu0 %v4191
      %5566 = vmatmul.bf16.gmra.mxu0 %v1436
      %v5567 = vpop.f32.mrf.mxu0
      %v5568 = vadd.f32 %v5555, %v5567
      %v5569 = vpop.f32.mrf.mxu0
      %5570 = vdwg.mxu0
      %5571 = vmatpush.bf16.msra.mxu0 %v4206
      %5572 = vmatpush.bf16.msra.mxu0 %v4205
      %5573 = vmatpush.bf16.msra.mxu0 %v4204
      %5574 = vmatpush.bf16.msra.mxu0 %v4203
      %5575 = vmatpush.bf16.msra.mxu0 %v4202
      %5576 = vmatpush.bf16.msra.mxu0 %v4201
      %5577 = vmatpush.bf16.msra.mxu0 %v4200
      %5578 = vmatpush.bf16.msra.mxu0 %v4199
      %5579 = vmatmul.bf16.gmra.mxu0 %v1437
      %v5580 = vpop.f32.mrf.mxu0
      %v5581 = vadd.f32 %v5568, %v5580
      %v5582 = vpop.f32.mrf.mxu0
      %5583 = vdwg.mxu0
      %5584 = vmatpush.bf16.msra.mxu0 %v4214
      %5585 = vmatpush.bf16.msra.mxu0 %v4213
      %5586 = vmatpush.bf16.msra.mxu0 %v4212
      %5587 = vmatpush.bf16.msra.mxu0 %v4211
      %5588 = vmatpush.bf16.msra.mxu0 %v4210
      %5589 = vmatpush.bf16.msra.mxu0 %v4209
      %5590 = vmatpush.bf16.msra.mxu0 %v4208
      %5591 = vmatpush.bf16.msra.mxu0 %v4207
      %5592 = vmatmul.bf16.gmra.mxu0 %v1438
      %v5593 = vpop.f32.mrf.mxu0
      %v5594 = vadd.f32 %v5581, %v5593
      %v5595 = vpop.f32.mrf.mxu0
      %5596 = vdwg.mxu0
      %5597 = vmatpush.bf16.msra.mxu0 %v4222
      %5598 = vmatpush.bf16.msra.mxu0 %v4221
      %5599 = vmatpush.bf16.msra.mxu0 %v4220
      %5600 = vmatpush.bf16.msra.mxu0 %v4219
      %5601 = vmatpush.bf16.msra.mxu0 %v4218
      %5602 = vmatpush.bf16.msra.mxu0 %v4217
      %5603 = vmatpush.bf16.msra.mxu0 %v4216
      %5604 = vmatpush.bf16.msra.mxu0 %v4215
      %5605 = vmatmul.bf16.gmra.mxu0 %v1439
      %v5606 = vpop.f32.mrf.mxu0
      %v5607 = vadd.f32 %v5594, %v5606
      %v5608 = vpop.f32.mrf.mxu0
      %5609 = vdwg.mxu0
      %5610 = vmatpush.bf16.msra.mxu0 %v4230
      %5611 = vmatpush.bf16.msra.mxu0 %v4229
      %5612 = vmatpush.bf16.msra.mxu0 %v4228
      %5613 = vmatpush.bf16.msra.mxu0 %v4227
      %5614 = vmatpush.bf16.msra.mxu0 %v4226
      %5615 = vmatpush.bf16.msra.mxu0 %v4225
      %5616 = vmatpush.bf16.msra.mxu0 %v4224
      %5617 = vmatpush.bf16.msra.mxu0 %v4223
      %5618 = vmatmul.bf16.gmra.mxu0 %v1440
      %v5619 = vpop.f32.mrf.mxu0
      %v5620 = vadd.f32 %v5607, %v5619
      %v5621 = vpop.f32.mrf.mxu0
      %5622 = vdwg.mxu0
      %5623 = vmatpush.bf16.msra.mxu0 %v4238
      %5624 = vmatpush.bf16.msra.mxu0 %v4237
      %5625 = vmatpush.bf16.msra.mxu0 %v4236
      %5626 = vmatpush.bf16.msra.mxu0 %v4235
      %5627 = vmatpush.bf16.msra.mxu0 %v4234
      %5628 = vmatpush.bf16.msra.mxu0 %v4233
      %5629 = vmatpush.bf16.msra.mxu0 %v4232
      %5630 = vmatpush.bf16.msra.mxu0 %v4231
      %5631 = vmatmul.bf16.gmra.mxu0 %v1443
      %v5632 = vpop.f32.mrf.mxu0
      %v5633 = vadd.f32 %v5620, %v5632
      %v5634 = vpop.f32.mrf.mxu0
      %5635 = vdwg.mxu0
      %5636 = vmatpush.bf16.msra.mxu0 %v4246
      %5637 = vmatpush.bf16.msra.mxu0 %v4245
      %5638 = vmatpush.bf16.msra.mxu0 %v4244
      %5639 = vmatpush.bf16.msra.mxu0 %v4243
      %5640 = vmatpush.bf16.msra.mxu0 %v4242
      %5641 = vmatpush.bf16.msra.mxu0 %v4241
      %5642 = vmatpush.bf16.msra.mxu0 %v4240
      %5643 = vmatpush.bf16.msra.mxu0 %v4239
      %5644 = vmatmul.bf16.gmra.mxu0 %v1444
      %v5645 = vpop.f32.mrf.mxu0
      %v5646 = vadd.f32 %v5633, %v5645
      %v5647 = vpop.f32.mrf.mxu0
      %5648 = vdwg.mxu0
      %5649 = vmatpush.bf16.msra.mxu0 %v4254
      %5650 = vmatpush.bf16.msra.mxu0 %v4253
      %5651 = vmatpush.bf16.msra.mxu0 %v4252
      %5652 = vmatpush.bf16.msra.mxu0 %v4251
      %5653 = vmatpush.bf16.msra.mxu0 %v4250
      %5654 = vmatpush.bf16.msra.mxu0 %v4249
      %5655 = vmatpush.bf16.msra.mxu0 %v4248
      %5656 = vmatpush.bf16.msra.mxu0 %v4247
      %5657 = vmatmul.bf16.gmra.mxu0 %v1445
      %v5658 = vpop.f32.mrf.mxu0
      %v5659 = vadd.f32 %v5646, %v5658
      %v5660 = vpop.f32.mrf.mxu0
      %5661 = vdwg.mxu0
      %5662 = vmatpush.bf16.msra.mxu0 %v4262
      %5663 = vmatpush.bf16.msra.mxu0 %v4261
      %5664 = vmatpush.bf16.msra.mxu0 %v4260
      %5665 = vmatpush.bf16.msra.mxu0 %v4259
      %5666 = vmatpush.bf16.msra.mxu0 %v4258
      %5667 = vmatpush.bf16.msra.mxu0 %v4257
      %5668 = vmatpush.bf16.msra.mxu0 %v4256
      %5669 = vmatpush.bf16.msra.mxu0 %v4255
      %5670 = vmatmul.bf16.gmra.mxu0 %v1446
      %v5671 = vpop.f32.mrf.mxu0
      %v5672 = vadd.f32 %v5659, %v5671
      %v5673 = vpop.f32.mrf.mxu0
      %5674 = vdwg.mxu0
      %5675 = vmatpush.bf16.msra.mxu0 %v4270
      %5676 = vmatpush.bf16.msra.mxu0 %v4269
      %5677 = vmatpush.bf16.msra.mxu0 %v4268
      %5678 = vmatpush.bf16.msra.mxu0 %v4267
      %5679 = vmatpush.bf16.msra.mxu0 %v4266
      %5680 = vmatpush.bf16.msra.mxu0 %v4265
      %5681 = vmatpush.bf16.msra.mxu0 %v4264
      %5682 = vmatpush.bf16.msra.mxu0 %v4263
      %5683 = vmatmul.bf16.gmra.mxu0 %v1447
      %v5684 = vpop.f32.mrf.mxu0
      %v5685 = vadd.f32 %v5672, %v5684
      %v5686 = vpop.f32.mrf.mxu0
      %5687 = vdwg.mxu0
      %5688 = vmatpush.bf16.msra.mxu0 %v4278
      %5689 = vmatpush.bf16.msra.mxu0 %v4277
      %5690 = vmatpush.bf16.msra.mxu0 %v4276
      %5691 = vmatpush.bf16.msra.mxu0 %v4275
      %5692 = vmatpush.bf16.msra.mxu0 %v4274
      %5693 = vmatpush.bf16.msra.mxu0 %v4273
      %5694 = vmatpush.bf16.msra.mxu0 %v4272
      %5695 = vmatpush.bf16.msra.mxu0 %v4271
      %5696 = vmatmul.bf16.gmra.mxu0 %v1448
      %v5697 = vpop.f32.mrf.mxu0
      %v5698 = vadd.f32 %v5685, %v5697
      %v5699 = vpop.f32.mrf.mxu0
      %5700 = vdwg.mxu0
      %5701 = vmatpush.bf16.msra.mxu0 %v4286
      %5702 = vmatpush.bf16.msra.mxu0 %v4285
      %5703 = vmatpush.bf16.msra.mxu0 %v4284
      %5704 = vmatpush.bf16.msra.mxu0 %v4283
      %5705 = vmatpush.bf16.msra.mxu0 %v4282
      %5706 = vmatpush.bf16.msra.mxu0 %v4281
      %5707 = vmatpush.bf16.msra.mxu0 %v4280
      %5708 = vmatpush.bf16.msra.mxu0 %v4279
      %5709 = vmatmul.bf16.gmra.mxu0 %v1449
      %v5710 = vpop.f32.mrf.mxu0
      %v5711 = vadd.f32 %v5698, %v5710
      %v5712 = vpop.f32.mrf.mxu0
      %5713 = vdwg.mxu0
      %5714 = vmatpush.bf16.msra.mxu0 %v4294
      %5715 = vmatpush.bf16.msra.mxu0 %v4293
      %5716 = vmatpush.bf16.msra.mxu0 %v4292
      %5717 = vmatpush.bf16.msra.mxu0 %v4291
      %5718 = vmatpush.bf16.msra.mxu0 %v4290
      %5719 = vmatpush.bf16.msra.mxu0 %v4289
      %5720 = vmatpush.bf16.msra.mxu0 %v4288
      %5721 = vmatpush.bf16.msra.mxu0 %v4287
      %5722 = vmatmul.bf16.gmra.mxu0 %v1450
      %v5723 = vpop.f32.mrf.mxu0
      %v5724 = vadd.f32 %v5711, %v5723
      %v5725 = vpop.f32.mrf.mxu0
      %5726 = vdwg.mxu0
      %5727 = vmatpush.bf16.msra.mxu0 %v4302
      %5728 = vmatpush.bf16.msra.mxu0 %v4301
      %5729 = vmatpush.bf16.msra.mxu0 %v4300
      %5730 = vmatpush.bf16.msra.mxu0 %v4299
      %5731 = vmatpush.bf16.msra.mxu0 %v4298
      %5732 = vmatpush.bf16.msra.mxu0 %v4297
      %5733 = vmatpush.bf16.msra.mxu0 %v4296
      %5734 = vmatpush.bf16.msra.mxu0 %v4295
      %5735 = vmatmul.bf16.gmra.mxu0 %v1453
      %v5736 = vpop.f32.mrf.mxu0
      %v5737 = vadd.f32 %v5724, %v5736
      %v5738 = vpop.f32.mrf.mxu0
      %5739 = vdwg.mxu0
      %5740 = vmatpush.bf16.msra.mxu0 %v4310
      %5741 = vmatpush.bf16.msra.mxu0 %v4309
      %5742 = vmatpush.bf16.msra.mxu0 %v4308
      %5743 = vmatpush.bf16.msra.mxu0 %v4307
      %5744 = vmatpush.bf16.msra.mxu0 %v4306
      %5745 = vmatpush.bf16.msra.mxu0 %v4305
      %5746 = vmatpush.bf16.msra.mxu0 %v4304
      %5747 = vmatpush.bf16.msra.mxu0 %v4303
      %5748 = vmatmul.bf16.gmra.mxu0 %v1454
      %v5749 = vpop.f32.mrf.mxu0
      %v5750 = vadd.f32 %v5737, %v5749
      %v5751 = vpop.f32.mrf.mxu0
      %5752 = vdwg.mxu0
      %5753 = vmatpush.bf16.msra.mxu0 %v4318
      %5754 = vmatpush.bf16.msra.mxu0 %v4317
      %5755 = vmatpush.bf16.msra.mxu0 %v4316
      %5756 = vmatpush.bf16.msra.mxu0 %v4315
      %5757 = vmatpush.bf16.msra.mxu0 %v4314
      %5758 = vmatpush.bf16.msra.mxu0 %v4313
      %5759 = vmatpush.bf16.msra.mxu0 %v4312
      %5760 = vmatpush.bf16.msra.mxu0 %v4311
      %5761 = vmatmul.bf16.gmra.mxu0 %v1455
      %v5762 = vpop.f32.mrf.mxu0
      %v5763 = vadd.f32 %v5750, %v5762
      %v5764 = vpop.f32.mrf.mxu0
      %5765 = vdwg.mxu0
      %5766 = vmatpush.bf16.msra.mxu0 %v4326
      %5767 = vmatpush.bf16.msra.mxu0 %v4325
      %5768 = vmatpush.bf16.msra.mxu0 %v4324
      %5769 = vmatpush.bf16.msra.mxu0 %v4323
      %5770 = vmatpush.bf16.msra.mxu0 %v4322
      %5771 = vmatpush.bf16.msra.mxu0 %v4321
      %5772 = vmatpush.bf16.msra.mxu0 %v4320
      %5773 = vmatpush.bf16.msra.mxu0 %v4319
      %5774 = vmatmul.bf16.gmra.mxu0 %v1456
      %v5775 = vpop.f32.mrf.mxu0
      %v5776 = vadd.f32 %v5763, %v5775
      %v5777 = vpop.f32.mrf.mxu0
      %5778 = vdwg.mxu0
      %5779 = vmatpush.bf16.msra.mxu0 %v4334
      %5780 = vmatpush.bf16.msra.mxu0 %v4333
      %5781 = vmatpush.bf16.msra.mxu0 %v4332
      %5782 = vmatpush.bf16.msra.mxu0 %v4331
      %5783 = vmatpush.bf16.msra.mxu0 %v4330
      %5784 = vmatpush.bf16.msra.mxu0 %v4329
      %5785 = vmatpush.bf16.msra.mxu0 %v4328
      %5786 = vmatpush.bf16.msra.mxu0 %v4327
      %5787 = vmatmul.bf16.gmra.mxu0 %v1457
      %v5788 = vpop.f32.mrf.mxu0
      %v5789 = vadd.f32 %v5776, %v5788
      %v5790 = vpop.f32.mrf.mxu0
      %5791 = vdwg.mxu0
      %5792 = vmatpush.bf16.msra.mxu0 %v4342
      %5793 = vmatpush.bf16.msra.mxu0 %v4341
      %5794 = vmatpush.bf16.msra.mxu0 %v4340
      %5795 = vmatpush.bf16.msra.mxu0 %v4339
      %5796 = vmatpush.bf16.msra.mxu0 %v4338
      %5797 = vmatpush.bf16.msra.mxu0 %v4337
      %5798 = vmatpush.bf16.msra.mxu0 %v4336
      %5799 = vmatpush.bf16.msra.mxu0 %v4335
      %5800 = vmatmul.bf16.gmra.mxu0 %v1458
      %v5801 = vpop.f32.mrf.mxu0
      %v5802 = vadd.f32 %v5789, %v5801
      %v5803 = vpop.f32.mrf.mxu0
      %5804 = vdwg.mxu0
      %5805 = vmatpush.bf16.msra.mxu0 %v4350
      %5806 = vmatpush.bf16.msra.mxu0 %v4349
      %5807 = vmatpush.bf16.msra.mxu0 %v4348
      %5808 = vmatpush.bf16.msra.mxu0 %v4347
      %5809 = vmatpush.bf16.msra.mxu0 %v4346
      %5810 = vmatpush.bf16.msra.mxu0 %v4345
      %5811 = vmatpush.bf16.msra.mxu0 %v4344
      %5812 = vmatpush.bf16.msra.mxu0 %v4343
      %5813 = vmatmul.bf16.gmra.mxu0 %v1459
      %v5814 = vpop.f32.mrf.mxu0
      %v5815 = vadd.f32 %v5802, %v5814
      %v5816 = vpop.f32.mrf.mxu0
      %5817 = vdwg.mxu0
      %5818 = vmatpush.bf16.msra.mxu0 %v4358
      %5819 = vmatpush.bf16.msra.mxu0 %v4357
      %5820 = vmatpush.bf16.msra.mxu0 %v4356
      %5821 = vmatpush.bf16.msra.mxu0 %v4355
      %5822 = vmatpush.bf16.msra.mxu0 %v4354
      %5823 = vmatpush.bf16.msra.mxu0 %v4353
      %5824 = vmatpush.bf16.msra.mxu0 %v4352
      %5825 = vmatpush.bf16.msra.mxu0 %v4351
      %5826 = vmatmul.bf16.gmra.mxu0 %v1460
      %v5827 = vpop.f32.mrf.mxu0
      %v5828 = vadd.f32 %v5815, %v5827
      %v5829 = vpop.f32.mrf.mxu0
      %5830 = vdwg.mxu0
      %5831 = vmatpush.bf16.msra.mxu0 %v4366
      %5832 = vmatpush.bf16.msra.mxu0 %v4365
      %5833 = vmatpush.bf16.msra.mxu0 %v4364
      %5834 = vmatpush.bf16.msra.mxu0 %v4363
      %5835 = vmatpush.bf16.msra.mxu0 %v4362
      %5836 = vmatpush.bf16.msra.mxu0 %v4361
      %5837 = vmatpush.bf16.msra.mxu0 %v4360
      %5838 = vmatpush.bf16.msra.mxu0 %v4359
      %5839 = vmatmul.bf16.gmra.mxu0 %v1463
      %v5840 = vpop.f32.mrf.mxu0
      %v5841 = vadd.f32 %v5828, %v5840
      %v5842 = vpop.f32.mrf.mxu0
      %5843 = vdwg.mxu0
      %5844 = vmatpush.bf16.msra.mxu0 %v4374
      %5845 = vmatpush.bf16.msra.mxu0 %v4373
      %5846 = vmatpush.bf16.msra.mxu0 %v4372
      %5847 = vmatpush.bf16.msra.mxu0 %v4371
      %5848 = vmatpush.bf16.msra.mxu0 %v4370
      %5849 = vmatpush.bf16.msra.mxu0 %v4369
      %5850 = vmatpush.bf16.msra.mxu0 %v4368
      %5851 = vmatpush.bf16.msra.mxu0 %v4367
      %5852 = vmatmul.bf16.gmra.mxu0 %v1464
      %v5853 = vpop.f32.mrf.mxu0
      %v5854 = vadd.f32 %v5841, %v5853
      %v5855 = vpop.f32.mrf.mxu0
      %5856 = vdwg.mxu0
      %5857 = vmatpush.bf16.msra.mxu0 %v4382
      %5858 = vmatpush.bf16.msra.mxu0 %v4381
      %5859 = vmatpush.bf16.msra.mxu0 %v4380
      %5860 = vmatpush.bf16.msra.mxu0 %v4379
      %5861 = vmatpush.bf16.msra.mxu0 %v4378
      %5862 = vmatpush.bf16.msra.mxu0 %v4377
      %5863 = vmatpush.bf16.msra.mxu0 %v4376
      %5864 = vmatpush.bf16.msra.mxu0 %v4375
      %5865 = vmatmul.bf16.gmra.mxu0 %v1465
      %v5866 = vpop.f32.mrf.mxu0
      %v5867 = vadd.f32 %v5854, %v5866
      %v5868 = vpop.f32.mrf.mxu0
      %5869 = vdwg.mxu0
      %5870 = vmatpush.bf16.msra.mxu0 %v4390
      %5871 = vmatpush.bf16.msra.mxu0 %v4389
      %5872 = vmatpush.bf16.msra.mxu0 %v4388
      %5873 = vmatpush.bf16.msra.mxu0 %v4387
      %5874 = vmatpush.bf16.msra.mxu0 %v4386
      %5875 = vmatpush.bf16.msra.mxu0 %v4385
      %5876 = vmatpush.bf16.msra.mxu0 %v4384
      %5877 = vmatpush.bf16.msra.mxu0 %v4383
      %5878 = vmatmul.bf16.gmra.mxu0 %v1466
      %v5879 = vpop.f32.mrf.mxu0
      %v5880 = vadd.f32 %v5867, %v5879
      %v5881 = vpop.f32.mrf.mxu0
      %5882 = vdwg.mxu0
      %5883 = vmatpush.bf16.msra.mxu0 %v4398
      %5884 = vmatpush.bf16.msra.mxu0 %v4397
      %5885 = vmatpush.bf16.msra.mxu0 %v4396
      %5886 = vmatpush.bf16.msra.mxu0 %v4395
      %5887 = vmatpush.bf16.msra.mxu0 %v4394
      %5888 = vmatpush.bf16.msra.mxu0 %v4393
      %5889 = vmatpush.bf16.msra.mxu0 %v4392
      %5890 = vmatpush.bf16.msra.mxu0 %v4391
      %5891 = vmatmul.bf16.gmra.mxu0 %v1467
      %v5892 = vpop.f32.mrf.mxu0
      %v5893 = vadd.f32 %v5880, %v5892
      %v5894 = vpop.f32.mrf.mxu0
      %5895 = vdwg.mxu0
      %5896 = vmatpush.bf16.msra.mxu0 %v4406
      %5897 = vmatpush.bf16.msra.mxu0 %v4405
      %5898 = vmatpush.bf16.msra.mxu0 %v4404
      %5899 = vmatpush.bf16.msra.mxu0 %v4403
      %5900 = vmatpush.bf16.msra.mxu0 %v4402
      %5901 = vmatpush.bf16.msra.mxu0 %v4401
      %5902 = vmatpush.bf16.msra.mxu0 %v4400
      %5903 = vmatpush.bf16.msra.mxu0 %v4399
      %5904 = vmatmul.bf16.gmra.mxu0 %v1468
      %v5905 = vpop.f32.mrf.mxu0
      %v5906 = vadd.f32 %v5893, %v5905
      %v5907 = vpop.f32.mrf.mxu0
      %5908 = vdwg.mxu0
      %5909 = vmatpush.bf16.msra.mxu0 %v4414
      %5910 = vmatpush.bf16.msra.mxu0 %v4413
      %5911 = vmatpush.bf16.msra.mxu0 %v4412
      %5912 = vmatpush.bf16.msra.mxu0 %v4411
      %5913 = vmatpush.bf16.msra.mxu0 %v4410
      %5914 = vmatpush.bf16.msra.mxu0 %v4409
      %5915 = vmatpush.bf16.msra.mxu0 %v4408
      %5916 = vmatpush.bf16.msra.mxu0 %v4407
      %5917 = vmatmul.bf16.gmra.mxu0 %v1469
      %v5918 = vpop.f32.mrf.mxu0
      %v5919 = vadd.f32 %v5906, %v5918
      %v5920 = vpop.f32.mrf.mxu0
      %5921 = vdwg.mxu0
      %5922 = vmatpush.bf16.msra.mxu0 %v4422
      %5923 = vmatpush.bf16.msra.mxu0 %v4421
      %5924 = vmatpush.bf16.msra.mxu0 %v4420
      %5925 = vmatpush.bf16.msra.mxu0 %v4419
      %5926 = vmatpush.bf16.msra.mxu0 %v4418
      %5927 = vmatpush.bf16.msra.mxu0 %v4417
      %5928 = vmatpush.bf16.msra.mxu0 %v4416
      %5929 = vmatpush.bf16.msra.mxu0 %v4415
      %5930 = vmatmul.bf16.gmra.mxu0 %v1470
      %v5931 = vpop.f32.mrf.mxu0
      %v5932 = vadd.f32 %v5919, %v5931
      %v5933 = vpop.f32.mrf.mxu0
      %5934 = vdwg.mxu0
      %v5935 = vadd.f32 %v217, %v5932
      %vm5936 = vcmask 517120
      %5937 = vst.msk [vmem:[#allocation2] sm:$0x3] %vm5936, %v5935
      %p5938 = scmp.eq.s32.totalorder %s19, 1
      // Predicated region
      $region37: #{custom_cnn_forward.5} parent=31 // pred_check
        %p5939 = pneg %p5938
      $region38: #{custom_cnn_forward.5} parent=31 // pred_check_branch
        %5941 = sbr.rel (%p5939) target = $region40
      $region39: #{custom_cnn_forward.5} parent=31 // pred_region
        %v5942 = vld [vmem:[#allocation2] sm:$0x3]
        %v5943 = vld [vmem:[%s206] sm:$0x1]
        %v5945 = vperm.slane %v5943, 0
        %v5947 = vadd.f32 %v5942, %v5945
        %v5948 = vmax.f32 %v5947, 0.0
        %5949 = vst.msk [vmem:[%s210] sm:$0x3] %vm5936, %v5948
      $region40: #{custom_cnn_forward.5} parent=31 // pred_fallthru
        _
      %p5950 = scmp.lt.s32.totalorder %s18, 1
      %s5951 = scalar_select %p5950, %s18, 1
      %s5952 = smul.addr %s5951, 2
      %s5953 = scalar_lea.vmem %s3, %s5952
      // Predicated region
      $region41: #{custom_cnn_forward.5} parent=31 // pred_check
        %p5954 = pneg %p119
      $region42: #{custom_cnn_forward.5} parent=31 // pred_check_branch
        %5956 = sbr.rel (%p5954) target = $region44
      $region43: #{custom_cnn_forward.5} parent=31 // pred_region
        _
      $region44: #{custom_cnn_forward.5} parent=31 // pred_fallthru
        _
    $region32: #{custom_cnn_forward.5} parent=5 // pred_fallthru
      _
    %p5957 = scmp.le.s32.totalorder 2, %s9
    // Predicated region
    $region45: #{custom_cnn_forward.5} parent=5 // pred_check
      %p5958 = pneg %p5957
    $region46: #{custom_cnn_forward.5} parent=5 // pred_check_branch
      %5960 = sbr.rel (%p5958) target = $region48
    $region47: #{custom_cnn_forward.5} parent=5 // pred_region
      %s5961 = ssub.s32 %s9, 2
      // Predicated region
      $region49: #{custom_cnn_forward.5} parent=47 // pred_check
        %p5962 = pneg %p125
      $region50: #{custom_cnn_forward.5} parent=47 // pred_check_branch
        %5964 = sbr.rel (%p5962) target = $region52
      $region51: #{custom_cnn_forward.5} parent=47 // pred_region
        %p5965 = scmp.lt.s32.totalorder %s20, 1
        %s5966 = scalar_select %p5965, %s20, 1
        %s5967 = smul.addr %s5966, 2
        %s5968 = scalar_lea.vmem %s3, %s5967
      $region52: #{custom_cnn_forward.5} parent=47 // pred_fallthru
        _
    $region48: #{custom_cnn_forward.5} parent=5 // pred_fallthru
      _
  $region6: #{custom_cnn_forward.5} parent=0 // loop_footer
    %s13 = sadd.s32 1, %s9
  $region7: #{custom_cnn_forward.5} parent=0 // loop_footer_branch
    %8 = sbr.rel target = $region3
  $region8: #{custom_cnn_forward.5} parent=0 // loop_exit
    _

</llo_original>
